<compile_context>
chip_gen: v7x
topology: tpu7x:2x2x1
jax: 0.10.0
libtpu: 0.0.40
codegen_flags: <defaults>
</compile_context>

<pallas_src>
import functools
import jax
import jax.numpy as jnp
from jax.experimental import pallas as pl
from jax.experimental.pallas import tpu as pltpu


def _round_up(x, m):
    return ((x + m - 1) // m) * m


# ----------------------------------------------------------------------------
# Pallas kernels
# ----------------------------------------------------------------------------
def _leaky(y):
    return jnp.where(y >= 0, y, 0.05 * y)          # F.leaky_relu(., 0.05)


def _fused_matmul_kernel(a_ref, b_ref, bias_ref, o_ref, *, act):
    # bf16 MXU operands, f32 accumulation; f32 epilogue (v5e has no bf16
    # VPU/EUP), cast only at the store so intermediates are written as bf16.
    y = jnp.dot(a_ref[...], b_ref[...], preferred_element_type=jnp.float32)
    y = y + bias_ref[...]                           # folded conv bias + BN shift
    if act == "lrelu":
        y = _leaky(y)
    elif act == "tanh":
        y = jnp.tanh(y)
    o_ref[...] = y.astype(o_ref.dtype)


def _tail_kernel(h_ref, code_ref, w4_ref, b4_ref, wfc_ref, bfc_ref,
                 wd1a_ref, wd1b_ref, bd1_ref,
                 outc_ref, outcc_ref, d1_ref):
    """Fused M=2 tail: conv4 -> leaky -> {fc, concat(code) -> deconv1 -> leaky}.

    conv4 (k=4,s=1,p=0 on a 4x4 input) is a single matmul; deconv1 (1x1
    spatial input, k=stride=4, p=0) is a single matmul on concat([outc, code]),
    implemented as two matmuls (outc @ Wa + code @ Wb) so the tiny
    intermediates never leave VMEM.
    """
    y4 = jnp.dot(h_ref[...], w4_ref[...], preferred_element_type=jnp.float32)
    y4 = _leaky(y4 + b4_ref[...])
    outc_ref[...] = y4                                    # f32, returned
    y4b = y4.astype(jnp.bfloat16)

    outcc_ref[...] = (jnp.dot(y4b, wfc_ref[...],
                              preferred_element_type=jnp.float32)
                      + bfc_ref[...])                     # fc: no BN, no act

    yd1 = jnp.dot(y4b, wd1a_ref[...], preferred_element_type=jnp.float32)
    yd1 = yd1 + jnp.dot(code_ref[...], wd1b_ref[...],
                        preferred_element_type=jnp.float32)
    yd1 = _leaky(yd1 + bd1_ref[...])
    d1_ref[...] = yd1.astype(d1_ref.dtype)                # bf16, feeds deconv2


# ----------------------------------------------------------------------------
# Kernel wrappers
# ----------------------------------------------------------------------------
def _choose_tm(M):
    Mp = _round_up(M, 8)
    if Mp <= 1024:
        return Mp      # single grid step: per-step overhead > MXU work here
    return 512         # large batch: split M so v7x's two TCs both get work


def fused_matmul(a, w_p, bias_p, *, act, C, out_dtype):
    """a: (M, K) activations, w_p: (Kp, Cp) bf16 pre-packed, bias_p: (1, Cp) f32."""
    M, K = a.shape
    Kp, Cp = w_p.shape
    tm = _choose_tm(M)
    Mp = _round_up(M, tm)
    a_p = jnp.pad(a.astype(jnp.bfloat16), ((0, Mp - M), (0, Kp - K)))

    kernel = functools.partial(_fused_matmul_kernel, act=act)
    out = pl.pallas_call(
        kernel,
        out_shape=jax.ShapeDtypeStruct((Mp, Cp), out_dtype),
        grid_spec=pltpu.PrefetchScalarGridSpec(
            num_scalar_prefetch=0,
            grid=(Mp // tm,),
            in_specs=[
                pl.BlockSpec((tm, Kp), lambda i: (i, 0)),
                pl.BlockSpec((Kp, Cp), lambda i: (0, 0)),
                pl.BlockSpec((1, Cp), lambda i: (0, 0)),
            ],
            out_specs=pl.BlockSpec((tm, Cp), lambda i: (i, 0)),
        ),
        compiler_params=pltpu.CompilerParams(
            dimension_semantics=("parallel",),
        ),
    )(a_p, w_p, bias_p)
    return out[:M, :C]


def fused_tail(h, code, tail, cd):
    """conv4 -> fc -> concat(code) -> deconv1 in one pallas_call (M = batch)."""
    N = h.shape[0]
    (w4, b4), (wfc, bfc), (wd1a, wd1b, bd1) = tail
    Mp = _round_up(N, 8)
    Kp4, Cp4 = w4.shape
    Cpfc = wfc.shape[1]
    Cpd1 = wd1a.shape[1]

    K4 = 4 * 4 * 4 * cd
    h_flat = h.reshape(N, K4).astype(jnp.bfloat16)       # conv4 == full matmul
    h_p = jnp.pad(h_flat, ((0, Mp - N), (0, Kp4 - K4)))
    code_p = jnp.pad(code.astype(jnp.bfloat16),
                     ((0, Mp - N), (0, wd1b.shape[0] - code.shape[1])))

    def full(shape):
        return pl.BlockSpec(shape, lambda i: (0,) * len(shape))

    outc_all, outcc_all, d1_all = pl.pallas_call(
        _tail_kernel,
        out_shape=(
            jax.ShapeDtypeStruct((Mp, Cp4), jnp.float32),
            jax.ShapeDtypeStruct((Mp, Cpfc), jnp.float32),
            jax.ShapeDtypeStruct((Mp, Cpd1), jnp.bfloat16),
        ),
        grid_spec=pltpu.PrefetchScalarGridSpec(
            num_scalar_prefetch=0,
            grid=(1,),
            in_specs=[
                full(h_p.shape), full(code_p.shape),
                full(w4.shape), full(b4.shape),
                full(wfc.shape), full(bfc.shape),
                full(wd1a.shape), full(wd1b.shape), full(bd1.shape),
            ],
            out_specs=[full((Mp, Cp4)), full((Mp, Cpfc)), full((Mp, Cpd1))],
        ),
        compiler_params=pltpu.CompilerParams(
            dimension_semantics=("arbitrary",),
        ),
    )(h_p, code_p, w4, b4, wfc, bfc, wd1a, wd1b, bd1)

    outc = outc_all[:N, :8 * cd]                           # (N, 8cd)  f32
    outcc = outcc_all[:N, :10]                             # (N, 10)   f32
    d1 = d1_all[:N, :16 * 4 * cd].reshape(N, 4, 4, 4 * cd)  # (N,4,4,4cd) bf16
    return outc, outcc, d1


# ----------------------------------------------------------------------------
# JAX glue: im2col + layer wrappers (fused by XLA under jit)
# ----------------------------------------------------------------------------
def im2col(x, k, stride, pad):
    """x: (N,H,W,C) bf16 -> ((N*Ho*Wo, k*k*C), Ho, Wo); K ordering is (kh,kw,C)."""
    N, H, W, C = x.shape
    xp = jnp.pad(x, ((0, 0), (pad, pad), (pad, pad), (0, 0)))
    Ho = (H + 2 * pad - k) // stride + 1
    Wo = (W + 2 * pad - k) // stride + 1
    cols = []
    for i in range(k):
        for j in range(k):
            cols.append(xp[:, i:i + stride * Ho:stride,
                              j:j + stride * Wo:stride, :])       # (N,Ho,Wo,C)
    patches = jnp.stack(cols, axis=-2)                            # (N,Ho,Wo,k*k,C)
    return patches.reshape(N * Ho * Wo, k * k * C), Ho, Wo


def conv_layer(x, layer, *, k, stride, pad, C_out, act="lrelu",
               out_dtype=jnp.bfloat16):
    w_p, bias_p = layer
    N = x.shape[0]
    patches, Ho, Wo = im2col(x, k, stride, pad)
    out = fused_matmul(patches, w_p, bias_p, act=act, C=C_out, out_dtype=out_dtype)
    return out.reshape(N, Ho, Wo, C_out)


def deconv_s2_layer(x, layer, *, C_out, act, out_dtype=jnp.bfloat16):
    """ConvTranspose2d(k=4, stride=2, pad=1) via sub-pixel decomposition:
    one 3x3 stride-1 im2col on the (pad-1) input covers all four output
    phases; no structural-zero (dilated) work."""
    w_p, bias_p = layer
    N, H, W, _ = x.shape
    xp = jnp.pad(x, ((0, 0), (1, 1), (1, 1), (0, 0)))
    patches, _, _ = im2col(xp, 3, 1, 0)                           # (N*H*W, 9*C_in)
    out = fused_matmul(patches, w_p, bias_p, act=act, C=4 * C_out,
                       out_dtype=out_dtype)                       # (N*H*W, 4*C_out)
    out = out.reshape(N, H, W, 2, 2, C_out)
    out = jnp.transpose(out, (0, 1, 3, 2, 4, 5)).reshape(N, 2 * H, 2 * W, C_out)
    return out


# ----------------------------------------------------------------------------
# Parameters: synthetic init, BN fold, and ONE-TIME weight packing (not jitted)
# ----------------------------------------------------------------------------
def _bn_fold(key, c, eps=1e-5):
    k1, k2, k3, k4 = jax.random.split(key, 4)
    gamma = jax.random.uniform(k1, (c,), minval=0.5, maxval=1.5)
    beta = 0.1 * jax.random.normal(k2, (c,))
    mean = 0.1 * jax.random.normal(k3, (c,))
    var = jax.random.uniform(k4, (c,), minval=0.5, maxval=1.5)
    scale = gamma / jnp.sqrt(var + eps)
    shift = beta - mean * scale
    return scale.astype(jnp.float32), shift.astype(jnp.float32)


def _layer_params(key, c_in, c_out, k, bn=True, transpose=False):
    kw, kb, kbn = jax.random.split(key, 3)
    bound = 1.0 / float((c_in * k * k) ** 0.5)
    shape = (c_in, c_out, k, k) if transpose else (c_out, c_in, k, k)
    w = jax.random.uniform(kw, shape, minval=-bound, maxval=bound,
                           dtype=jnp.float32)
    b = jax.random.uniform(kb, (c_out,), minval=-bound, maxval=bound,
                           dtype=jnp.float32)
    if bn:
        scale, shift = _bn_fold(kbn, c_out)
        if transpose:
            w = w * scale[None, :, None, None]
        else:
            w = w * scale[:, None, None, None]
        b = b * scale + shift
    return (w, b)


def init_params(key, cd):
    ks = jax.random.split(key, 9)
    return {
        "conv1":   _layer_params(ks[0], 3,          cd,     5, bn=True),
        "conv2":   _layer_params(ks[1], cd,         cd * 2, 5, bn=True),
        "conv3":   _layer_params(ks[2], cd * 2,     cd * 4, 5, bn=True),
        "conv4":   _layer_params(ks[3], cd * 4,     cd * 8, 4, bn=True),
        "fc":      _layer_params(ks[4], cd * 8,     10,     1, bn=False),
        "deconv1": _layer_params(ks[5], cd * 8 + 2, cd * 4, 4, bn=True,  transpose=True),
        "deconv2": _layer_params(ks[6], cd * 4,     cd * 2, 4, bn=True,  transpose=True),
        "deconv3": _layer_params(ks[7], cd * 2,     cd,     4, bn=True,  transpose=True),
        "deconv4": _layer_params(ks[8], cd,         3,      4, bn=False, transpose=True),
    }


def _pack_matmul(w_mat, bias, Kp=None, Cp=None):
    K, C = w_mat.shape
    Kp = _round_up(K, 128) if Kp is None else Kp
    Cp = _round_up(C, 128) if Cp is None else Cp
    w_p = jnp.pad(w_mat, ((0, Kp - K), (0, Cp - C))).astype(jnp.bfloat16)
    b_p = jnp.pad(bias.astype(jnp.float32), (0, Cp - C)).reshape(1, Cp)
    return w_p, b_p


def _pack_conv(w, b, k):
    C_out, C_in = w.shape[0], w.shape[1]
    w_mat = jnp.transpose(w, (2, 3, 1, 0)).reshape(k * k * C_in, C_out)
    return _pack_matmul(w_mat, b)


def _pack_deconv_s2(w_t, b):
    """Combined sub-pixel weight Wc[(u,v,ci),(ry,rx,co)] for k=4,s=2,p=1."""
    C_in, C_out = w_t.shape[0], w_t.shape[1]
    wc = jnp.zeros((3, 3, C_in, 2, 2, C_out), w_t.dtype)
    for ry in range(2):
        for rx in range(2):
            for u in range(ry, ry + 2):
                for v in range(rx, rx + 2):
                    ky = 3 + ry - 2 * u
                    kx = 3 + rx - 2 * v
                    wc = wc.at[u, v, :, ry, rx, :].set(w_t[:, :, ky, kx])
    wc = wc.reshape(9 * C_in, 4 * C_out)
    return _pack_matmul(wc, jnp.tile(b, 4))


def pack_params(params, cd):
    """One-time host-side packing: pad/transpose/cast everything the kernels need."""
    packed = {
        "conv1":   _pack_conv(*params["conv1"], k=5),
        "conv2":   _pack_conv(*params["conv2"], k=5),
        "conv3":   _pack_conv(*params["conv3"], k=5),
        "deconv2": _pack_deconv_s2(*params["deconv2"]),
        "deconv3": _pack_deconv_s2(*params["deconv3"]),
        "deconv4": _pack_deconv_s2(*params["deconv4"]),
    }

    # Fused tail: conv4 -> fc -> concat(code) -> deconv1.
    Cp4 = _round_up(8 * cd, 128)
    w4, b4 = params["conv4"]
    w4_mat = jnp.transpose(w4, (2, 3, 1, 0)).reshape(4 * 4 * 4 * cd, 8 * cd)
    w4_p, b4_p = _pack_matmul(w4_mat, b4, Cp=Cp4)

    wfc, bfc = params["fc"]
    wfc_mat = jnp.transpose(wfc, (2, 3, 1, 0)).reshape(8 * cd, 10)
    wfc_p, bfc_p = _pack_matmul(wfc_mat, bfc, Kp=Cp4)

    wd1, bd1 = params["deconv1"]      # (8cd+2, 4cd, 4, 4) transposed-conv layout
    wd1_mat = jnp.transpose(wd1, (0, 2, 3, 1)).reshape(8 * cd + 2, 16 * 4 * cd)
    bd1_t = jnp.tile(bd1, 16)                          # columns ordered (ky,kx,co)
    wd1a_p, bd1_p = _pack_matmul(wd1_mat[:8 * cd], bd1_t, Kp=Cp4)
    wd1b_p, _ = _pack_matmul(wd1_mat[8 * cd:], bd1_t, Kp=128)

    packed["tail"] = ((w4_p, b4_p), (wfc_p, bfc_p), (wd1a_p, wd1b_p, bd1_p))
    return packed


# ----------------------------------------------------------------------------
# Forward pass (matches G.forward)
# ----------------------------------------------------------------------------
@functools.partial(jax.jit, static_argnames=("cd",))
def generator_forward(packed, x_nchw, code_nchw, *, cd):
    N = x_nchw.shape[0]
    x = jnp.transpose(x_nchw, (0, 2, 3, 1)).astype(jnp.bfloat16)  # NCHW -> NHWC
    code = code_nchw.reshape(N, 2)

    h = conv_layer(x, packed["conv1"], k=5, stride=2, pad=2, C_out=cd)         # (N,16,16,cd)
    h = conv_layer(h, packed["conv2"], k=5, stride=2, pad=2, C_out=2 * cd)     # (N,8,8,2cd)
    h = conv_layer(h, packed["conv3"], k=5, stride=2, pad=2, C_out=4 * cd)     # (N,4,4,4cd)

    outc, outcc, h = fused_tail(h, code, packed["tail"], cd)                   # h: (N,4,4,4cd)

    h = deconv_s2_layer(h, packed["deconv2"], C_out=2 * cd, act="lrelu")       # (N,8,8,2cd)
    h = deconv_s2_layer(h, packed["deconv3"], C_out=cd, act="lrelu")           # (N,16,16,cd)
    h = deconv_s2_layer(h, packed["deconv4"], C_out=3, act="tanh",
                        out_dtype=jnp.float32)                                 # (N,32,32,3)

    out = jnp.transpose(h, (0, 3, 1, 2))                  # NHWC -> NCHW
    outc_nchw = outc.reshape(N, 8 * cd, 1, 1)             # (N, 8cd, 1, 1)
    outcc_sq = jnp.squeeze(outcc)                         # matches torch .squeeze()
    return out, outc_nchw, outcc_sq


# ----------------------------------------------------------------------------
if __name__ == "__main__":
    conv_dim = 16          # small, shape-consistent with the module
    batch = 2
    key = jax.random.PRNGKey(0)
    kp, kx, kc = jax.random.split(key, 3)

    params = init_params(kp, conv_dim)
    packed = pack_params(params, conv_dim)     # one-time weight packing

    x = jax.random.normal(kx, (batch, 3, 32, 32), jnp.float32)
    code = jax.random.normal(kc, (batch, 2, 1, 1), jnp.float32)

    out, outc, outcc = generator_forward(packed, x, code, cd=conv_dim)
    jax.block_until_ready((out, outc, outcc))

    assert out.shape == (batch, 3, 32, 32)
    assert outc.shape == (batch, conv_dim * 8, 1, 1)
    assert outcc.shape == (batch, 10)
    assert bool(jnp.all(jnp.abs(out) <= 1.0))   # tanh range
    print("KERNEL_OK")
</pallas_src>

<mosaic_0001>
module attributes {stable_mosaic.version = 11 : i64} {
  func.func @_fused_matmul_kernel(%arg0: i32, %arg1: memref<512x128xbf16, #tpu.memory_space<vmem>>, %arg2: memref<128x128xbf16, #tpu.memory_space<vmem>>, %arg3: memref<1x128xf32, #tpu.memory_space<vmem>>, %arg4: memref<512x128xbf16, #tpu.memory_space<vmem>>) attributes {dimension_semantics = [#tpu.dimension_semantics<parallel>], iteration_bounds = array<i64: 1>, scalar_prefetch = 0 : i64, scratch_operands = 0 : i64, tpu.core_type = #tpu.core_type<tc>, window_params = [{transform_indices = @transform_0, window_bounds = array<i64: 512, 128>}, {pipeline_mode = #tpu.pipeline_mode<synchronous>, transform_indices = @transform_1, window_bounds = array<i64: 128, 128>}, {pipeline_mode = #tpu.pipeline_mode<synchronous>, transform_indices = @transform_2, window_bounds = array<i64: 1, 128>}, {transform_indices = @transform_3, window_bounds = array<i64: 512, 128>}]} {
    %c0 = arith.constant 0 : index
    %c0_0 = arith.constant 0 : index
    %0 = vector.load %arg1[%c0, %c0_0] : memref<512x128xbf16, #tpu.memory_space<vmem>>, vector<512x128xbf16>
    %c0_1 = arith.constant 0 : index
    %c0_2 = arith.constant 0 : index
    %1 = vector.load %arg2[%c0_1, %c0_2] : memref<128x128xbf16, #tpu.memory_space<vmem>>, vector<128x128xbf16>
    %cst = arith.constant dense<0.000000e+00> : vector<512x128xf32>
    %2 = tpu.matmul %0, %1, %cst {dimension_numbers = #tpu.dot_dimension_numbers<[1], [0], [0], [1], [0, 0, 1, 1], [], []>} : vector<512x128xbf16>, vector<128x128xbf16>, vector<512x128xf32> -> vector<512x128xf32>
    %c0_3 = arith.constant 0 : index
    %c0_4 = arith.constant 0 : index
    %3 = vector.load %arg3[%c0_3, %c0_4] : memref<1x128xf32, #tpu.memory_space<vmem>>, vector<1x128xf32>
    %4 = vector.broadcast %3 : vector<1x128xf32> to vector<512x128xf32>
    %5 = arith.addf %2, %4 : vector<512x128xf32>
    %cst_5 = arith.constant 0.000000e+00 : f32
    %6 = vector.broadcast %cst_5 : f32 to vector<512x128xf32>
    %7 = arith.cmpf oge, %5, %6 : vector<512x128xf32>
    %cst_6 = arith.constant 5.000000e-02 : f32
    %8 = vector.broadcast %cst_6 : f32 to vector<512x128xf32>
    %9 = arith.mulf %8, %5 : vector<512x128xf32>
    %10 = arith.select %7, %5, %9 : vector<512x128xi1>, vector<512x128xf32>
    %11 = arith.truncf %10 : vector<512x128xf32> to vector<512x128xbf16>
    %c0_7 = arith.constant 0 : index
    %c0_8 = arith.constant 0 : index
    %12 = vector.load %arg4[%c0_7, %c0_8] : memref<512x128xbf16, #tpu.memory_space<vmem>>, vector<512x128xbf16>
    tpu.vector_store %arg4[%c0_7, %c0_8], %11 {strides = array<i32>} : memref<512x128xbf16, #tpu.memory_space<vmem>>, vector<512x128xbf16>,
    return
  }
  func.func @transform_0(%arg0: i32) -> (i32, i32) {
    %c0_i32 = arith.constant 0 : i32
    %c0_i32_0 = arith.constant 0 : i32
    return %arg0, %c0_i32 : i32, i32
  }
  func.func @transform_1(%arg0: i32) -> (i32, i32) {
    %c0_i32 = arith.constant 0 : i32
    %c0_i32_0 = arith.constant 0 : i32
    %c0_i32_1 = arith.constant 0 : i32
    return %c0_i32, %c0_i32_0 : i32, i32
  }
  func.func @transform_2(%arg0: i32) -> (i32, i32) {
    %c0_i32 = arith.constant 0 : i32
    %c0_i32_0 = arith.constant 0 : i32
    %c0_i32_1 = arith.constant 0 : i32
    return %c0_i32, %c0_i32_0 : i32, i32
  }
  func.func @transform_3(%arg0: i32) -> (i32, i32) {
    %c0_i32 = arith.constant 0 : i32
    %c0_i32_0 = arith.constant 0 : i32
    return %arg0, %c0_i32 : i32, i32
  }
}

module attributes {stable_mosaic.version = 11 : i64} {
  func.func @_fused_matmul_kernel(%arg0: i32, %arg1: memref<128x512xbf16, #tpu.memory_space<vmem>>, %arg2: memref<512x128xbf16, #tpu.memory_space<vmem>>, %arg3: memref<1x128xf32, #tpu.memory_space<vmem>>, %arg4: memref<128x128xbf16, #tpu.memory_space<vmem>>) attributes {dimension_semantics = [#tpu.dimension_semantics<parallel>], iteration_bounds = array<i64: 1>, scalar_prefetch = 0 : i64, scratch_operands = 0 : i64, tpu.core_type = #tpu.core_type<tc>, window_params = [{transform_indices = @transform_0, window_bounds = array<i64: 128, 512>}, {pipeline_mode = #tpu.pipeline_mode<synchronous>, transform_indices = @transform_1, window_bounds = array<i64: 512, 128>}, {pipeline_mode = #tpu.pipeline_mode<synchronous>, transform_indices = @transform_2, window_bounds = array<i64: 1, 128>}, {transform_indices = @transform_3, window_bounds = array<i64: 128, 128>}]} {
    %c0 = arith.constant 0 : index
    %c0_0 = arith.constant 0 : index
    %0 = vector.load %arg1[%c0, %c0_0] : memref<128x512xbf16, #tpu.memory_space<vmem>>, vector<128x512xbf16>
    %c0_1 = arith.constant 0 : index
    %c0_2 = arith.constant 0 : index
    %1 = vector.load %arg2[%c0_1, %c0_2] : memref<512x128xbf16, #tpu.memory_space<vmem>>, vector<512x128xbf16>
    %cst = arith.constant dense<0.000000e+00> : vector<128x128xf32>
    %2 = tpu.matmul %0, %1, %cst {dimension_numbers = #tpu.dot_dimension_numbers<[1], [0], [0], [1], [0, 0, 1, 1], [], []>} : vector<128x512xbf16>, vector<512x128xbf16>, vector<128x128xf32> -> vector<128x128xf32>
    %c0_3 = arith.constant 0 : index
    %c0_4 = arith.constant 0 : index
    %3 = vector.load %arg3[%c0_3, %c0_4] : memref<1x128xf32, #tpu.memory_space<vmem>>, vector<1x128xf32>
    %4 = vector.broadcast %3 : vector<1x128xf32> to vector<128x128xf32>
    %5 = arith.addf %2, %4 : vector<128x128xf32>
    %cst_5 = arith.constant 0.000000e+00 : f32
    %6 = vector.broadcast %cst_5 : f32 to vector<128x128xf32>
    %7 = arith.cmpf oge, %5, %6 : vector<128x128xf32>
    %cst_6 = arith.constant 5.000000e-02 : f32
    %8 = vector.broadcast %cst_6 : f32 to vector<128x128xf32>
    %9 = arith.mulf %8, %5 : vector<128x128xf32>
    %10 = arith.select %7, %5, %9 : vector<128x128xi1>, vector<128x128xf32>
    %11 = arith.truncf %10 : vector<128x128xf32> to vector<128x128xbf16>
    %c0_7 = arith.constant 0 : index
    %c0_8 = arith.constant 0 : index
    %12 = vector.load %arg4[%c0_7, %c0_8] : memref<128x128xbf16, #tpu.memory_space<vmem>>, vector<128x128xbf16>
    tpu.vector_store %arg4[%c0_7, %c0_8], %11 {strides = array<i32>} : memref<128x128xbf16, #tpu.memory_space<vmem>>, vector<128x128xbf16>,
    return
  }
  func.func @transform_0(%arg0: i32) -> (i32, i32) {
    %c0_i32 = arith.constant 0 : i32
    %c0_i32_0 = arith.constant 0 : i32
    return %arg0, %c0_i32 : i32, i32
  }
  func.func @transform_1(%arg0: i32) -> (i32, i32) {
    %c0_i32 = arith.constant 0 : i32
    %c0_i32_0 = arith.constant 0 : i32
    %c0_i32_1 = arith.constant 0 : i32
    return %c0_i32, %c0_i32_0 : i32, i32
  }
  func.func @transform_2(%arg0: i32) -> (i32, i32) {
    %c0_i32 = arith.constant 0 : i32
    %c0_i32_0 = arith.constant 0 : i32
    %c0_i32_1 = arith.constant 0 : i32
    return %c0_i32, %c0_i32_0 : i32, i32
  }
  func.func @transform_3(%arg0: i32) -> (i32, i32) {
    %c0_i32 = arith.constant 0 : i32
    %c0_i32_0 = arith.constant 0 : i32
    return %arg0, %c0_i32 : i32, i32
  }
}

module attributes {stable_mosaic.version = 11 : i64} {
  func.func @_fused_matmul_kernel(%arg0: i32, %arg1: memref<32x896xbf16, #tpu.memory_space<vmem>>, %arg2: memref<896x128xbf16, #tpu.memory_space<vmem>>, %arg3: memref<1x128xf32, #tpu.memory_space<vmem>>, %arg4: memref<32x128xbf16, #tpu.memory_space<vmem>>) attributes {dimension_semantics = [#tpu.dimension_semantics<parallel>], iteration_bounds = array<i64: 1>, scalar_prefetch = 0 : i64, scratch_operands = 0 : i64, tpu.core_type = #tpu.core_type<tc>, window_params = [{transform_indices = @transform_0, window_bounds = array<i64: 32, 896>}, {pipeline_mode = #tpu.pipeline_mode<synchronous>, transform_indices = @transform_1, window_bounds = array<i64: 896, 128>}, {pipeline_mode = #tpu.pipeline_mode<synchronous>, transform_indices = @transform_2, window_bounds = array<i64: 1, 128>}, {transform_indices = @transform_3, window_bounds = array<i64: 32, 128>}]} {
    %c0 = arith.constant 0 : index
    %c0_0 = arith.constant 0 : index
    %0 = vector.load %arg1[%c0, %c0_0] : memref<32x896xbf16, #tpu.memory_space<vmem>>, vector<32x896xbf16>
    %c0_1 = arith.constant 0 : index
    %c0_2 = arith.constant 0 : index
    %1 = vector.load %arg2[%c0_1, %c0_2] : memref<896x128xbf16, #tpu.memory_space<vmem>>, vector<896x128xbf16>
    %cst = arith.constant dense<0.000000e+00> : vector<32x128xf32>
    %2 = tpu.matmul %0, %1, %cst {dimension_numbers = #tpu.dot_dimension_numbers<[1], [0], [0], [1], [0, 0, 1, 1], [], []>} : vector<32x896xbf16>, vector<896x128xbf16>, vector<32x128xf32> -> vector<32x128xf32>
    %c0_3 = arith.constant 0 : index
    %c0_4 = arith.constant 0 : index
    %3 = vector.load %arg3[%c0_3, %c0_4] : memref<1x128xf32, #tpu.memory_space<vmem>>, vector<1x128xf32>
    %4 = vector.broadcast %3 : vector<1x128xf32> to vector<32x128xf32>
    %5 = arith.addf %2, %4 : vector<32x128xf32>
    %cst_5 = arith.constant 0.000000e+00 : f32
    %6 = vector.broadcast %cst_5 : f32 to vector<32x128xf32>
    %7 = arith.cmpf oge, %5, %6 : vector<32x128xf32>
    %cst_6 = arith.constant 5.000000e-02 : f32
    %8 = vector.broadcast %cst_6 : f32 to vector<32x128xf32>
    %9 = arith.mulf %8, %5 : vector<32x128xf32>
    %10 = arith.select %7, %5, %9 : vector<32x128xi1>, vector<32x128xf32>
    %11 = arith.truncf %10 : vector<32x128xf32> to vector<32x128xbf16>
    %c0_7 = arith.constant 0 : index
    %c0_8 = arith.constant 0 : index
    %12 = vector.load %arg4[%c0_7, %c0_8] : memref<32x128xbf16, #tpu.memory_space<vmem>>, vector<32x128xbf16>
    tpu.vector_store %arg4[%c0_7, %c0_8], %11 {strides = array<i32>} : memref<32x128xbf16, #tpu.memory_space<vmem>>, vector<32x128xbf16>,
    return
  }
  func.func @transform_0(%arg0: i32) -> (i32, i32) {
    %c0_i32 = arith.constant 0 : i32
    %c0_i32_0 = arith.constant 0 : i32
    return %arg0, %c0_i32 : i32, i32
  }
  func.func @transform_1(%arg0: i32) -> (i32, i32) {
    %c0_i32 = arith.constant 0 : i32
    %c0_i32_0 = arith.constant 0 : i32
    %c0_i32_1 = arith.constant 0 : i32
    return %c0_i32, %c0_i32_0 : i32, i32
  }
  func.func @transform_2(%arg0: i32) -> (i32, i32) {
    %c0_i32 = arith.constant 0 : i32
    %c0_i32_0 = arith.constant 0 : i32
    %c0_i32_1 = arith.constant 0 : i32
    return %c0_i32, %c0_i32_0 : i32, i32
  }
  func.func @transform_3(%arg0: i32) -> (i32, i32) {
    %c0_i32 = arith.constant 0 : i32
    %c0_i32_0 = arith.constant 0 : i32
    return %arg0, %c0_i32 : i32, i32
  }
}

module attributes {stable_mosaic.version = 11 : i64} {
  func.func @_tail_kernel(%arg0: i32, %arg1: memref<8x1024xbf16, #tpu.memory_space<vmem>>, %arg2: memref<8x128xbf16, #tpu.memory_space<vmem>>, %arg3: memref<1024x128xbf16, #tpu.memory_space<vmem>>, %arg4: memref<1x128xf32, #tpu.memory_space<vmem>>, %arg5: memref<128x128xbf16, #tpu.memory_space<vmem>>, %arg6: memref<1x128xf32, #tpu.memory_space<vmem>>, %arg7: memref<128x1024xbf16, #tpu.memory_space<vmem>>, %arg8: memref<128x1024xbf16, #tpu.memory_space<vmem>>, %arg9: memref<1x1024xf32, #tpu.memory_space<vmem>>, %arg10: memref<8x128xf32, #tpu.memory_space<vmem>>, %arg11: memref<8x128xf32, #tpu.memory_space<vmem>>, %arg12: memref<8x1024xbf16, #tpu.memory_space<vmem>>) attributes {dimension_semantics = [#tpu.dimension_semantics<arbitrary>], iteration_bounds = array<i64: 1>, scalar_prefetch = 0 : i64, scratch_operands = 0 : i64, tpu.core_type = #tpu.core_type<tc>, window_params = [{pipeline_mode = #tpu.pipeline_mode<synchronous>, transform_indices = @transform_0, window_bounds = array<i64: 8, 1024>}, {pipeline_mode = #tpu.pipeline_mode<synchronous>, transform_indices = @transform_1, window_bounds = array<i64: 8, 128>}, {pipeline_mode = #tpu.pipeline_mode<synchronous>, transform_indices = @transform_2, window_bounds = array<i64: 1024, 128>}, {pipeline_mode = #tpu.pipeline_mode<synchronous>, transform_indices = @transform_3, window_bounds = array<i64: 1, 128>}, {pipeline_mode = #tpu.pipeline_mode<synchronous>, transform_indices = @transform_4, window_bounds = array<i64: 128, 128>}, {pipeline_mode = #tpu.pipeline_mode<synchronous>, transform_indices = @transform_5, window_bounds = array<i64: 1, 128>}, {pipeline_mode = #tpu.pipeline_mode<synchronous>, transform_indices = @transform_6, window_bounds = array<i64: 128, 1024>}, {pipeline_mode = #tpu.pipeline_mode<synchronous>, transform_indices = @transform_7, window_bounds = array<i64: 128, 1024>}, {pipeline_mode = #tpu.pipeline_mode<synchronous>, transform_indices = @transform_8, window_bounds = array<i64: 1, 1024>}, {pipeline_mode = #tpu.pipeline_mode<synchronous>, transform_indices = @transform_9, window_bounds = array<i64: 8, 128>}, {pipeline_mode = #tpu.pipeline_mode<synchronous>, transform_indices = @transform_10, window_bounds = array<i64: 8, 128>}, {pipeline_mode = #tpu.pipeline_mode<synchronous>, transform_indices = @transform_11, window_bounds = array<i64: 8, 1024>}]} {
    %c0 = arith.constant 0 : index
    %c0_0 = arith.constant 0 : index
    %0 = vector.load %arg1[%c0, %c0_0] : memref<8x1024xbf16, #tpu.memory_space<vmem>>, vector<8x1024xbf16>
    %c0_1 = arith.constant 0 : index
    %c0_2 = arith.constant 0 : index
    %1 = vector.load %arg3[%c0_1, %c0_2] : memref<1024x128xbf16, #tpu.memory_space<vmem>>, vector<1024x128xbf16>
    %cst = arith.constant dense<0.000000e+00> : vector<8x128xf32>
    %2 = tpu.matmul %0, %1, %cst {dimension_numbers = #tpu.dot_dimension_numbers<[1], [0], [0], [1], [0, 0, 1, 1], [], []>} : vector<8x1024xbf16>, vector<1024x128xbf16>, vector<8x128xf32> -> vector<8x128xf32>
    %c0_3 = arith.constant 0 : index
    %c0_4 = arith.constant 0 : index
    %3 = vector.load %arg4[%c0_3, %c0_4] : memref<1x128xf32, #tpu.memory_space<vmem>>, vector<1x128xf32>
    %4 = vector.broadcast %3 : vector<1x128xf32> to vector<8x128xf32>
    %5 = arith.addf %2, %4 : vector<8x128xf32>
    %cst_5 = arith.constant 0.000000e+00 : f32
    %6 = vector.broadcast %cst_5 : f32 to vector<8x128xf32>
    %7 = arith.cmpf oge, %5, %6 : vector<8x128xf32>
    %cst_6 = arith.constant 5.000000e-02 : f32
    %8 = vector.broadcast %cst_6 : f32 to vector<8x128xf32>
    %9 = arith.mulf %8, %5 : vector<8x128xf32>
    %10 = arith.select %7, %5, %9 : vector<8x128xi1>, vector<8x128xf32>
    %c0_7 = arith.constant 0 : index
    %c0_8 = arith.constant 0 : index
    %11 = vector.load %arg10[%c0_7, %c0_8] : memref<8x128xf32, #tpu.memory_space<vmem>>, vector<8x128xf32>
    tpu.vector_store %arg10[%c0_7, %c0_8], %10 {strides = array<i32>} : memref<8x128xf32, #tpu.memory_space<vmem>>, vector<8x128xf32>,
    %12 = arith.truncf %10 : vector<8x128xf32> to vector<8x128xbf16>
    %c0_9 = arith.constant 0 : index
    %c0_10 = arith.constant 0 : index
    %13 = vector.load %arg5[%c0_9, %c0_10] : memref<128x128xbf16, #tpu.memory_space<vmem>>, vector<128x128xbf16>
    %cst_11 = arith.constant dense<0.000000e+00> : vector<8x128xf32>
    %14 = tpu.matmul %12, %13, %cst_11 {dimension_numbers = #tpu.dot_dimension_numbers<[1], [0], [0], [1], [0, 0, 1, 1], [], []>} : vector<8x128xbf16>, vector<128x128xbf16>, vector<8x128xf32> -> vector<8x128xf32>
    %c0_12 = arith.constant 0 : index
    %c0_13 = arith.constant 0 : index
    %15 = vector.load %arg6[%c0_12, %c0_13] : memref<1x128xf32, #tpu.memory_space<vmem>>, vector<1x128xf32>
    %16 = vector.broadcast %15 : vector<1x128xf32> to vector<8x128xf32>
    %17 = arith.addf %14, %16 : vector<8x128xf32>
    %c0_14 = arith.constant 0 : index
    %c0_15 = arith.constant 0 : index
    %18 = vector.load %arg11[%c0_14, %c0_15] : memref<8x128xf32, #tpu.memory_space<vmem>>, vector<8x128xf32>
    tpu.vector_store %arg11[%c0_14, %c0_15], %17 {strides = array<i32>} : memref<8x128xf32, #tpu.memory_space<vmem>>, vector<8x128xf32>,
    %c0_16 = arith.constant 0 : index
    %c0_17 = arith.constant 0 : index
    %19 = vector.load %arg7[%c0_16, %c0_17] : memref<128x1024xbf16, #tpu.memory_space<vmem>>, vector<128x1024xbf16>
    %cst_18 = arith.constant dense<0.000000e+00> : vector<8x1024xf32>
    %20 = tpu.matmul %12, %19, %cst_18 {dimension_numbers = #tpu.dot_dimension_numbers<[1], [0], [0], [1], [0, 0, 1, 1], [], []>} : vector<8x128xbf16>, vector<128x1024xbf16>, vector<8x1024xf32> -> vector<8x1024xf32>
    %c0_19 = arith.constant 0 : index
    %c0_20 = arith.constant 0 : index
    %21 = vector.load %arg2[%c0_19, %c0_20] : memref<8x128xbf16, #tpu.memory_space<vmem>>, vector<8x128xbf16>
    %c0_21 = arith.constant 0 : index
    %c0_22 = arith.constant 0 : index
    %22 = vector.load %arg8[%c0_21, %c0_22] : memref<128x1024xbf16, #tpu.memory_space<vmem>>, vector<128x1024xbf16>
    %cst_23 = arith.constant dense<0.000000e+00> : vector<8x1024xf32>
    %23 = tpu.matmul %21, %22, %cst_23 {dimension_numbers = #tpu.dot_dimension_numbers<[1], [0], [0], [1], [0, 0, 1, 1], [], []>} : vector<8x128xbf16>, vector<128x1024xbf16>, vector<8x1024xf32> -> vector<8x1024xf32>
    %24 = arith.addf %20, %23 : vector<8x1024xf32>
    %c0_24 = arith.constant 0 : index
    %c0_25 = arith.constant 0 : index
    %25 = vector.load %arg9[%c0_24, %c0_25] : memref<1x1024xf32, #tpu.memory_space<vmem>>, vector<1x1024xf32>
    %26 = vector.broadcast %25 : vector<1x1024xf32> to vector<8x1024xf32>
    %27 = arith.addf %24, %26 : vector<8x1024xf32>
    %cst_26 = arith.constant 0.000000e+00 : f32
    %28 = vector.broadcast %cst_26 : f32 to vector<8x1024xf32>
    %29 = arith.cmpf oge, %27, %28 : vector<8x1024xf32>
    %cst_27 = arith.constant 5.000000e-02 : f32
    %30 = vector.broadcast %cst_27 : f32 to vector<8x1024xf32>
    %31 = arith.mulf %30, %27 : vector<8x1024xf32>
    %32 = arith.select %29, %27, %31 : vector<8x1024xi1>, vector<8x1024xf32>
    %33 = arith.truncf %32 : vector<8x1024xf32> to vector<8x1024xbf16>
    %c0_28 = arith.constant 0 : index
    %c0_29 = arith.constant 0 : index
    %34 = vector.load %arg12[%c0_28, %c0_29] : memref<8x1024xbf16, #tpu.memory_space<vmem>>, vector<8x1024xbf16>
    tpu.vector_store %arg12[%c0_28, %c0_29], %33 {strides = array<i32>} : memref<8x1024xbf16, #tpu.memory_space<vmem>>, vector<8x1024xbf16>,
    return
  }
  func.func @transform_0(%arg0: i32) -> (i32, i32) {
    %c0_i32 = arith.constant 0 : i32
    %c0_i32_0 = arith.constant 0 : i32
    %c0_i32_1 = arith.constant 0 : i32
    return %c0_i32, %c0_i32_0 : i32, i32
  }
  func.func @transform_1(%arg0: i32) -> (i32, i32) {
    %c0_i32 = arith.constant 0 : i32
    %c0_i32_0 = arith.constant 0 : i32
    %c0_i32_1 = arith.constant 0 : i32
    return %c0_i32, %c0_i32_0 : i32, i32
  }
  func.func @transform_2(%arg0: i32) -> (i32, i32) {
    %c0_i32 = arith.constant 0 : i32
    %c0_i32_0 = arith.constant 0 : i32
    %c0_i32_1 = arith.constant 0 : i32
    return %c0_i32, %c0_i32_0 : i32, i32
  }
  func.func @transform_3(%arg0: i32) -> (i32, i32) {
    %c0_i32 = arith.constant 0 : i32
    %c0_i32_0 = arith.constant 0 : i32
    %c0_i32_1 = arith.constant 0 : i32
    return %c0_i32, %c0_i32_0 : i32, i32
  }
  func.func @transform_4(%arg0: i32) -> (i32, i32) {
    %c0_i32 = arith.constant 0 : i32
    %c0_i32_0 = arith.constant 0 : i32
    %c0_i32_1 = arith.constant 0 : i32
    return %c0_i32, %c0_i32_0 : i32, i32
  }
  func.func @transform_5(%arg0: i32) -> (i32, i32) {
    %c0_i32 = arith.constant 0 : i32
    %c0_i32_0 = arith.constant 0 : i32
    %c0_i32_1 = arith.constant 0 : i32
    return %c0_i32, %c0_i32_0 : i32, i32
  }
  func.func @transform_6(%arg0: i32) -> (i32, i32) {
    %c0_i32 = arith.constant 0 : i32
    %c0_i32_0 = arith.constant 0 : i32
    %c0_i32_1 = arith.constant 0 : i32
    return %c0_i32, %c0_i32_0 : i32, i32
  }
  func.func @transform_7(%arg0: i32) -> (i32, i32) {
    %c0_i32 = arith.constant 0 : i32
    %c0_i32_0 = arith.constant 0 : i32
    %c0_i32_1 = arith.constant 0 : i32
    return %c0_i32, %c0_i32_0 : i32, i32
  }
  func.func @transform_8(%arg0: i32) -> (i32, i32) {
    %c0_i32 = arith.constant 0 : i32
    %c0_i32_0 = arith.constant 0 : i32
    %c0_i32_1 = arith.constant 0 : i32
    return %c0_i32, %c0_i32_0 : i32, i32
  }
  func.func @transform_9(%arg0: i32) -> (i32, i32) {
    %c0_i32 = arith.constant 0 : i32
    %c0_i32_0 = arith.constant 0 : i32
    %c0_i32_1 = arith.constant 0 : i32
    return %c0_i32, %c0_i32_0 : i32, i32
  }
  func.func @transform_10(%arg0: i32) -> (i32, i32) {
    %c0_i32 = arith.constant 0 : i32
    %c0_i32_0 = arith.constant 0 : i32
    %c0_i32_1 = arith.constant 0 : i32
    return %c0_i32, %c0_i32_0 : i32, i32
  }
  func.func @transform_11(%arg0: i32) -> (i32, i32) {
    %c0_i32 = arith.constant 0 : i32
    %c0_i32_0 = arith.constant 0 : i32
    %c0_i32_1 = arith.constant 0 : i32
    return %c0_i32, %c0_i32_0 : i32, i32
  }
}

module attributes {stable_mosaic.version = 11 : i64} {
  func.func @_fused_matmul_kernel(%arg0: i32, %arg1: memref<32x640xbf16, #tpu.memory_space<vmem>>, %arg2: memref<640x128xbf16, #tpu.memory_space<vmem>>, %arg3: memref<1x128xf32, #tpu.memory_space<vmem>>, %arg4: memref<32x128xbf16, #tpu.memory_space<vmem>>) attributes {dimension_semantics = [#tpu.dimension_semantics<parallel>], iteration_bounds = array<i64: 1>, scalar_prefetch = 0 : i64, scratch_operands = 0 : i64, tpu.core_type = #tpu.core_type<tc>, window_params = [{transform_indices = @transform_0, window_bounds = array<i64: 32, 640>}, {pipeline_mode = #tpu.pipeline_mode<synchronous>, transform_indices = @transform_1, window_bounds = array<i64: 640, 128>}, {pipeline_mode = #tpu.pipeline_mode<synchronous>, transform_indices = @transform_2, window_bounds = array<i64: 1, 128>}, {transform_indices = @transform_3, window_bounds = array<i64: 32, 128>}]} {
    %c0 = arith.constant 0 : index
    %c0_0 = arith.constant 0 : index
    %0 = vector.load %arg1[%c0, %c0_0] : memref<32x640xbf16, #tpu.memory_space<vmem>>, vector<32x640xbf16>
    %c0_1 = arith.constant 0 : index
    %c0_2 = arith.constant 0 : index
    %1 = vector.load %arg2[%c0_1, %c0_2] : memref<640x128xbf16, #tpu.memory_space<vmem>>, vector<640x128xbf16>
    %cst = arith.constant dense<0.000000e+00> : vector<32x128xf32>
    %2 = tpu.matmul %0, %1, %cst {dimension_numbers = #tpu.dot_dimension_numbers<[1], [0], [0], [1], [0, 0, 1, 1], [], []>} : vector<32x640xbf16>, vector<640x128xbf16>, vector<32x128xf32> -> vector<32x128xf32>
    %c0_3 = arith.constant 0 : index
    %c0_4 = arith.constant 0 : index
    %3 = vector.load %arg3[%c0_3, %c0_4] : memref<1x128xf32, #tpu.memory_space<vmem>>, vector<1x128xf32>
    %4 = vector.broadcast %3 : vector<1x128xf32> to vector<32x128xf32>
    %5 = arith.addf %2, %4 : vector<32x128xf32>
    %cst_5 = arith.constant 0.000000e+00 : f32
    %6 = vector.broadcast %cst_5 : f32 to vector<32x128xf32>
    %7 = arith.cmpf oge, %5, %6 : vector<32x128xf32>
    %cst_6 = arith.constant 5.000000e-02 : f32
    %8 = vector.broadcast %cst_6 : f32 to vector<32x128xf32>
    %9 = arith.mulf %8, %5 : vector<32x128xf32>
    %10 = arith.select %7, %5, %9 : vector<32x128xi1>, vector<32x128xf32>
    %11 = arith.truncf %10 : vector<32x128xf32> to vector<32x128xbf16>
    %c0_7 = arith.constant 0 : index
    %c0_8 = arith.constant 0 : index
    %12 = vector.load %arg4[%c0_7, %c0_8] : memref<32x128xbf16, #tpu.memory_space<vmem>>, vector<32x128xbf16>
    tpu.vector_store %arg4[%c0_7, %c0_8], %11 {strides = array<i32>} : memref<32x128xbf16, #tpu.memory_space<vmem>>, vector<32x128xbf16>,
    return
  }
  func.func @transform_0(%arg0: i32) -> (i32, i32) {
    %c0_i32 = arith.constant 0 : i32
    %c0_i32_0 = arith.constant 0 : i32
    return %arg0, %c0_i32 : i32, i32
  }
  func.func @transform_1(%arg0: i32) -> (i32, i32) {
    %c0_i32 = arith.constant 0 : i32
    %c0_i32_0 = arith.constant 0 : i32
    %c0_i32_1 = arith.constant 0 : i32
    return %c0_i32, %c0_i32_0 : i32, i32
  }
  func.func @transform_2(%arg0: i32) -> (i32, i32) {
    %c0_i32 = arith.constant 0 : i32
    %c0_i32_0 = arith.constant 0 : i32
    %c0_i32_1 = arith.constant 0 : i32
    return %c0_i32, %c0_i32_0 : i32, i32
  }
  func.func @transform_3(%arg0: i32) -> (i32, i32) {
    %c0_i32 = arith.constant 0 : i32
    %c0_i32_0 = arith.constant 0 : i32
    return %arg0, %c0_i32 : i32, i32
  }
}

module attributes {stable_mosaic.version = 11 : i64} {
  func.func @_fused_matmul_kernel(%arg0: i32, %arg1: memref<128x384xbf16, #tpu.memory_space<vmem>>, %arg2: memref<384x128xbf16, #tpu.memory_space<vmem>>, %arg3: memref<1x128xf32, #tpu.memory_space<vmem>>, %arg4: memref<128x128xbf16, #tpu.memory_space<vmem>>) attributes {dimension_semantics = [#tpu.dimension_semantics<parallel>], iteration_bounds = array<i64: 1>, scalar_prefetch = 0 : i64, scratch_operands = 0 : i64, tpu.core_type = #tpu.core_type<tc>, window_params = [{transform_indices = @transform_0, window_bounds = array<i64: 128, 384>}, {pipeline_mode = #tpu.pipeline_mode<synchronous>, transform_indices = @transform_1, window_bounds = array<i64: 384, 128>}, {pipeline_mode = #tpu.pipeline_mode<synchronous>, transform_indices = @transform_2, window_bounds = array<i64: 1, 128>}, {transform_indices = @transform_3, window_bounds = array<i64: 128, 128>}]} {
    %c0 = arith.constant 0 : index
    %c0_0 = arith.constant 0 : index
    %0 = vector.load %arg1[%c0, %c0_0] : memref<128x384xbf16, #tpu.memory_space<vmem>>, vector<128x384xbf16>
    %c0_1 = arith.constant 0 : index
    %c0_2 = arith.constant 0 : index
    %1 = vector.load %arg2[%c0_1, %c0_2] : memref<384x128xbf16, #tpu.memory_space<vmem>>, vector<384x128xbf16>
    %cst = arith.constant dense<0.000000e+00> : vector<128x128xf32>
    %2 = tpu.matmul %0, %1, %cst {dimension_numbers = #tpu.dot_dimension_numbers<[1], [0], [0], [1], [0, 0, 1, 1], [], []>} : vector<128x384xbf16>, vector<384x128xbf16>, vector<128x128xf32> -> vector<128x128xf32>
    %c0_3 = arith.constant 0 : index
    %c0_4 = arith.constant 0 : index
    %3 = vector.load %arg3[%c0_3, %c0_4] : memref<1x128xf32, #tpu.memory_space<vmem>>, vector<1x128xf32>
    %4 = vector.broadcast %3 : vector<1x128xf32> to vector<128x128xf32>
    %5 = arith.addf %2, %4 : vector<128x128xf32>
    %cst_5 = arith.constant 0.000000e+00 : f32
    %6 = vector.broadcast %cst_5 : f32 to vector<128x128xf32>
    %7 = arith.cmpf oge, %5, %6 : vector<128x128xf32>
    %cst_6 = arith.constant 5.000000e-02 : f32
    %8 = vector.broadcast %cst_6 : f32 to vector<128x128xf32>
    %9 = arith.mulf %8, %5 : vector<128x128xf32>
    %10 = arith.select %7, %5, %9 : vector<128x128xi1>, vector<128x128xf32>
    %11 = arith.truncf %10 : vector<128x128xf32> to vector<128x128xbf16>
    %c0_7 = arith.constant 0 : index
    %c0_8 = arith.constant 0 : index
    %12 = vector.load %arg4[%c0_7, %c0_8] : memref<128x128xbf16, #tpu.memory_space<vmem>>, vector<128x128xbf16>
    tpu.vector_store %arg4[%c0_7, %c0_8], %11 {strides = array<i32>} : memref<128x128xbf16, #tpu.memory_space<vmem>>, vector<128x128xbf16>,
    return
  }
  func.func @transform_0(%arg0: i32) -> (i32, i32) {
    %c0_i32 = arith.constant 0 : i32
    %c0_i32_0 = arith.constant 0 : i32
    return %arg0, %c0_i32 : i32, i32
  }
  func.func @transform_1(%arg0: i32) -> (i32, i32) {
    %c0_i32 = arith.constant 0 : i32
    %c0_i32_0 = arith.constant 0 : i32
    %c0_i32_1 = arith.constant 0 : i32
    return %c0_i32, %c0_i32_0 : i32, i32
  }
  func.func @transform_2(%arg0: i32) -> (i32, i32) {
    %c0_i32 = arith.constant 0 : i32
    %c0_i32_0 = arith.constant 0 : i32
    %c0_i32_1 = arith.constant 0 : i32
    return %c0_i32, %c0_i32_0 : i32, i32
  }
  func.func @transform_3(%arg0: i32) -> (i32, i32) {
    %c0_i32 = arith.constant 0 : i32
    %c0_i32_0 = arith.constant 0 : i32
    return %arg0, %c0_i32 : i32, i32
  }
}

module attributes {stable_mosaic.version = 11 : i64} {
  func.func @_fused_matmul_kernel(%arg0: i32, %arg1: memref<512x256xbf16, #tpu.memory_space<vmem>>, %arg2: memref<256x128xbf16, #tpu.memory_space<vmem>>, %arg3: memref<1x128xf32, #tpu.memory_space<vmem>>, %arg4: memref<512x128xf32, #tpu.memory_space<vmem>>) attributes {dimension_semantics = [#tpu.dimension_semantics<parallel>], iteration_bounds = array<i64: 1>, scalar_prefetch = 0 : i64, scratch_operands = 0 : i64, tpu.core_type = #tpu.core_type<tc>, window_params = [{transform_indices = @transform_0, window_bounds = array<i64: 512, 256>}, {pipeline_mode = #tpu.pipeline_mode<synchronous>, transform_indices = @transform_1, window_bounds = array<i64: 256, 128>}, {pipeline_mode = #tpu.pipeline_mode<synchronous>, transform_indices = @transform_2, window_bounds = array<i64: 1, 128>}, {transform_indices = @transform_3, window_bounds = array<i64: 512, 128>}]} {
    %c0 = arith.constant 0 : index
    %c0_0 = arith.constant 0 : index
    %0 = vector.load %arg1[%c0, %c0_0] : memref<512x256xbf16, #tpu.memory_space<vmem>>, vector<512x256xbf16>
    %c0_1 = arith.constant 0 : index
    %c0_2 = arith.constant 0 : index
    %1 = vector.load %arg2[%c0_1, %c0_2] : memref<256x128xbf16, #tpu.memory_space<vmem>>, vector<256x128xbf16>
    %cst = arith.constant dense<0.000000e+00> : vector<512x128xf32>
    %2 = tpu.matmul %0, %1, %cst {dimension_numbers = #tpu.dot_dimension_numbers<[1], [0], [0], [1], [0, 0, 1, 1], [], []>} : vector<512x256xbf16>, vector<256x128xbf16>, vector<512x128xf32> -> vector<512x128xf32>
    %c0_3 = arith.constant 0 : index
    %c0_4 = arith.constant 0 : index
    %3 = vector.load %arg3[%c0_3, %c0_4] : memref<1x128xf32, #tpu.memory_space<vmem>>, vector<1x128xf32>
    %4 = vector.broadcast %3 : vector<1x128xf32> to vector<512x128xf32>
    %5 = arith.addf %2, %4 : vector<512x128xf32>
    %6 = math.tanh %5 : vector<512x128xf32>
    %c0_5 = arith.constant 0 : index
    %c0_6 = arith.constant 0 : index
    %7 = vector.load %arg4[%c0_5, %c0_6] : memref<512x128xf32, #tpu.memory_space<vmem>>, vector<512x128xf32>
    tpu.vector_store %arg4[%c0_5, %c0_6], %6 {strides = array<i32>} : memref<512x128xf32, #tpu.memory_space<vmem>>, vector<512x128xf32>,
    return
  }
  func.func @transform_0(%arg0: i32) -> (i32, i32) {
    %c0_i32 = arith.constant 0 : i32
    %c0_i32_0 = arith.constant 0 : i32
    return %arg0, %c0_i32 : i32, i32
  }
  func.func @transform_1(%arg0: i32) -> (i32, i32) {
    %c0_i32 = arith.constant 0 : i32
    %c0_i32_0 = arith.constant 0 : i32
    %c0_i32_1 = arith.constant 0 : i32
    return %c0_i32, %c0_i32_0 : i32, i32
  }
  func.func @transform_2(%arg0: i32) -> (i32, i32) {
    %c0_i32 = arith.constant 0 : i32
    %c0_i32_0 = arith.constant 0 : i32
    %c0_i32_1 = arith.constant 0 : i32
    return %c0_i32, %c0_i32_0 : i32, i32
  }
  func.func @transform_3(%arg0: i32) -> (i32, i32) {
    %c0_i32 = arith.constant 0 : i32
    %c0_i32_0 = arith.constant 0 : i32
    return %arg0, %c0_i32 : i32, i32
  }
}

</mosaic_0001>

<llo_original>
// kernel: generator_forward.7
$region0: #{generator_forward.7}
  #allocation0 [shape = 'u32[]', space=smem, size = 0x4, offset = 0x4, fixed_abs, tag = 'smem constant byte address 0x4 - core index']
  #allocation1 [shape = 'u32[144,128]{1,0:T(1,128)}', space=vmem, size = 0x12000, scoped, tag = 'internal scratch']
  %s0 = inlined_call_operand.vmem [shape: bf16[512,128], index: 0, kind: input, shape index: {}]
  %s1 = inlined_call_operand.vmem [shape: bf16[128,128], index: 1, kind: input, shape index: {}]
  %s2 = inlined_call_operand.vmem [shape: f32[1,128], index: 2, kind: input, shape index: {}]
  %s3 = inlined_call_operand.vmem [shape: bf16[512,128], index: 3, kind: output, shape index: {}]
  %s4 = sld [smem:[#allocation0]]
  $region22: #{generator_forward.7} parent=0
    _
  %s6 = ssub.s32 1, %s4
  %s7 = scalar_select 0, %s6, %s4
  // Predicated region
  $region2: #{generator_forward.7} parent=0 // pred_check
    _
  $region3: #{generator_forward.7} parent=0 // pred_check_branch
    %9 = sbr.rel (0) target = $region5
  $region4: #{generator_forward.7} parent=0 // pred_region
    _
  $region5: #{generator_forward.7} parent=0 // pred_fallthru
    _
  // Predicated region
  $region6: #{generator_forward.7} parent=0 // pred_check
    _
  $region7: #{generator_forward.7} parent=0 // pred_check_branch
    %11 = sbr.rel (0) target = $region9
  $region8: #{generator_forward.7} parent=0 // pred_region
    _
  $region9: #{generator_forward.7} parent=0 // pred_fallthru
    _
  // Predicated region
  $region10: #{generator_forward.7} parent=0 // pred_check
    _
  $region11: #{generator_forward.7} parent=0 // pred_check_branch
    %13 = sbr.rel (0) target = $region13
  $region12: #{generator_forward.7} parent=0 // pred_region
    _
  $region13: #{generator_forward.7} parent=0 // pred_fallthru
    _
  %v15 = vld [vmem:[%s0] sm:$0xf]
  %v16 = vld [vmem:[%s0 + $0x4] sm:$0xf]
  %v17 = vld [vmem:[%s0 + $0x8] sm:$0xf]
  %v18 = vld [vmem:[%s0 + $0xc] sm:$0xf]
  %v19 = vld [vmem:[%s0 + $0x10] sm:$0xf]
  %v20 = vld [vmem:[%s0 + $0x14] sm:$0xf]
  %v21 = vld [vmem:[%s0 + $0x18] sm:$0xf]
  %v22 = vld [vmem:[%s0 + $0x1c] sm:$0xf]
  %v23 = vld [vmem:[%s0 + $0x20] sm:$0xf]
  %v24 = vld [vmem:[%s0 + $0x24] sm:$0xf]
  %v25 = vld [vmem:[%s0 + $0x28] sm:$0xf]
  %v26 = vld [vmem:[%s0 + $0x2c] sm:$0xf]
  %v27 = vld [vmem:[%s0 + $0x30] sm:$0xf]
  %v28 = vld [vmem:[%s0 + $0x34] sm:$0xf]
  %v29 = vld [vmem:[%s0 + $0x38] sm:$0xf]
  %v30 = vld [vmem:[%s0 + $0x3c] sm:$0xf]
  %v31 = vld [vmem:[%s0 + $0x40] sm:$0xf]
  %v32 = vld [vmem:[%s0 + $0x44] sm:$0xf]
  %v33 = vld [vmem:[%s0 + $0x48] sm:$0xf]
  %v34 = vld [vmem:[%s0 + $0x4c] sm:$0xf]
  %v35 = vld [vmem:[%s0 + $0x50] sm:$0xf]
  %v36 = vld [vmem:[%s0 + $0x54] sm:$0xf]
  %v37 = vld [vmem:[%s0 + $0x58] sm:$0xf]
  %v38 = vld [vmem:[%s0 + $0x5c] sm:$0xf]
  %v39 = vld [vmem:[%s0 + $0x60] sm:$0xf]
  %v40 = vld [vmem:[%s0 + $0x64] sm:$0xf]
  %v41 = vld [vmem:[%s0 + $0x68] sm:$0xf]
  %v42 = vld [vmem:[%s0 + $0x6c] sm:$0xf]
  %v43 = vld [vmem:[%s0 + $0x70] sm:$0xf]
  %v44 = vld [vmem:[%s0 + $0x74] sm:$0xf]
  %v45 = vld [vmem:[%s0 + $0x78] sm:$0xf]
  %v46 = vld [vmem:[%s0 + $0x7c] sm:$0xf]
  %v47 = vld [vmem:[%s0 + $0x80] sm:$0xf]
  %v48 = vld [vmem:[%s0 + $0x84] sm:$0xf]
  %v49 = vld [vmem:[%s0 + $0x88] sm:$0xf]
  %v50 = vld [vmem:[%s0 + $0x8c] sm:$0xf]
  %v51 = vld [vmem:[%s0 + $0x90] sm:$0xf]
  %v52 = vld [vmem:[%s0 + $0x94] sm:$0xf]
  %v53 = vld [vmem:[%s0 + $0x98] sm:$0xf]
  %v54 = vld [vmem:[%s0 + $0x9c] sm:$0xf]
  %v55 = vld [vmem:[%s0 + $0xa0] sm:$0xf]
  %v56 = vld [vmem:[%s0 + $0xa4] sm:$0xf]
  %v57 = vld [vmem:[%s0 + $0xa8] sm:$0xf]
  %v58 = vld [vmem:[%s0 + $0xac] sm:$0xf]
  %v59 = vld [vmem:[%s0 + $0xb0] sm:$0xf]
  %v60 = vld [vmem:[%s0 + $0xb4] sm:$0xf]
  %v61 = vld [vmem:[%s0 + $0xb8] sm:$0xf]
  %v62 = vld [vmem:[%s0 + $0xbc] sm:$0xf]
  %v63 = vld [vmem:[%s0 + $0xc0] sm:$0xf]
  %v64 = vld [vmem:[%s0 + $0xc4] sm:$0xf]
  %v65 = vld [vmem:[%s0 + $0xc8] sm:$0xf]
  %v66 = vld [vmem:[%s0 + $0xcc] sm:$0xf]
  %v67 = vld [vmem:[%s0 + $0xd0] sm:$0xf]
  %v68 = vld [vmem:[%s0 + $0xd4] sm:$0xf]
  %v69 = vld [vmem:[%s0 + $0xd8] sm:$0xf]
  %v70 = vld [vmem:[%s0 + $0xdc] sm:$0xf]
  %v71 = vld [vmem:[%s0 + $0xe0] sm:$0xf]
  %v72 = vld [vmem:[%s0 + $0xe4] sm:$0xf]
  %v73 = vld [vmem:[%s0 + $0xe8] sm:$0xf]
  %v74 = vld [vmem:[%s0 + $0xec] sm:$0xf]
  %v75 = vld [vmem:[%s0 + $0xf0] sm:$0xf]
  %v76 = vld [vmem:[%s0 + $0xf4] sm:$0xf]
  %v77 = vld [vmem:[%s0 + $0xf8] sm:$0xf]
  %v78 = vld [vmem:[%s0 + $0xfc] sm:$0xf]
  %v79 = vld [vmem:[%s1] sm:$0xf]
  %v80 = vld [vmem:[%s1 + $0x4] sm:$0xf]
  %v81 = vld [vmem:[%s1 + $0x8] sm:$0xf]
  %v82 = vld [vmem:[%s1 + $0xc] sm:$0xf]
  %v83 = vld [vmem:[%s1 + $0x10] sm:$0xf]
  %v84 = vld [vmem:[%s1 + $0x14] sm:$0xf]
  %v85 = vld [vmem:[%s1 + $0x18] sm:$0xf]
  %v86 = vld [vmem:[%s1 + $0x1c] sm:$0xf]
  %v87 = vld [vmem:[%s1 + $0x20] sm:$0xf]
  %v88 = vld [vmem:[%s1 + $0x24] sm:$0xf]
  %v89 = vld [vmem:[%s1 + $0x28] sm:$0xf]
  %v90 = vld [vmem:[%s1 + $0x2c] sm:$0xf]
  %v91 = vld [vmem:[%s1 + $0x30] sm:$0xf]
  %v92 = vld [vmem:[%s1 + $0x34] sm:$0xf]
  %v93 = vld [vmem:[%s1 + $0x38] sm:$0xf]
  %v94 = vld [vmem:[%s1 + $0x3c] sm:$0xf]
  %v95 = vld [vmem:[%s2] sm:$0x1]
  %v97 = vlaneseq
  %v98 = vshrl.u32 %v97, 7
  %v99 = vsub.s32 0, %v98
  %v100 = vrot.slane %v95, %v99
  %v166 = vunpack.c.l.b16 %v15
  %v167 = vunpack.c.l.b16 %v16
  %v168 = vunpack.c.l.b16 %v17
  %v169 = vunpack.c.l.b16 %v18
  %v170 = vunpack.c.l.b16 %v19
  %v171 = vunpack.c.l.b16 %v20
  %v172 = vunpack.c.l.b16 %v21
  %v173 = vunpack.c.l.b16 %v22
  %v174 = vunpack.c.l.b16 %v23
  %v175 = vunpack.c.l.b16 %v24
  %v176 = vunpack.c.l.b16 %v25
  %v177 = vunpack.c.l.b16 %v26
  %v178 = vunpack.c.l.b16 %v27
  %v179 = vunpack.c.l.b16 %v28
  %v180 = vunpack.c.l.b16 %v29
  %v181 = vunpack.c.l.b16 %v30
  %v182 = vunpack.c.l.b16 %v31
  %v183 = vunpack.c.l.b16 %v32
  %v184 = vunpack.c.l.b16 %v33
  %v185 = vunpack.c.l.b16 %v34
  %v186 = vunpack.c.l.b16 %v35
  %v187 = vunpack.c.l.b16 %v36
  %v188 = vunpack.c.l.b16 %v37
  %v189 = vunpack.c.l.b16 %v38
  %v190 = vunpack.c.l.b16 %v39
  %v191 = vunpack.c.l.b16 %v40
  %v192 = vunpack.c.l.b16 %v41
  %v193 = vunpack.c.l.b16 %v42
  %v194 = vunpack.c.l.b16 %v43
  %v195 = vunpack.c.l.b16 %v44
  %v196 = vunpack.c.l.b16 %v45
  %v197 = vunpack.c.l.b16 %v46
  %v198 = vunpack.c.l.b16 %v47
  %v199 = vunpack.c.l.b16 %v48
  %v200 = vunpack.c.l.b16 %v49
  %v201 = vunpack.c.l.b16 %v50
  %v202 = vunpack.c.l.b16 %v51
  %v203 = vunpack.c.l.b16 %v52
  %v204 = vunpack.c.l.b16 %v53
  %v205 = vunpack.c.l.b16 %v54
  %v206 = vunpack.c.l.b16 %v55
  %v207 = vunpack.c.l.b16 %v56
  %v208 = vunpack.c.l.b16 %v57
  %v209 = vunpack.c.l.b16 %v58
  %v210 = vunpack.c.l.b16 %v59
  %v211 = vunpack.c.l.b16 %v60
  %v212 = vunpack.c.l.b16 %v61
  %v213 = vunpack.c.l.b16 %v62
  %v214 = vunpack.c.l.b16 %v63
  %v215 = vunpack.c.l.b16 %v64
  %v216 = vunpack.c.l.b16 %v65
  %v217 = vunpack.c.l.b16 %v66
  %v218 = vunpack.c.l.b16 %v67
  %v219 = vunpack.c.l.b16 %v68
  %v220 = vunpack.c.l.b16 %v69
  %v221 = vunpack.c.l.b16 %v70
  %v222 = vunpack.c.l.b16 %v71
  %v223 = vunpack.c.l.b16 %v72
  %v224 = vunpack.c.l.b16 %v73
  %v225 = vunpack.c.l.b16 %v74
  %v226 = vunpack.c.l.b16 %v75
  %v227 = vunpack.c.l.b16 %v76
  %v228 = vunpack.c.l.b16 %v77
  %v229 = vunpack.c.l.b16 %v78
  %v230 = vpack.c.b16 %v167, %v166
  %v231 = vpack.c.b16 %v169, %v168
  %v232 = vpack.c.b16 %v171, %v170
  %v233 = vpack.c.b16 %v173, %v172
  %v234 = vpack.c.b16 %v175, %v174
  %v235 = vpack.c.b16 %v177, %v176
  %v236 = vpack.c.b16 %v179, %v178
  %v237 = vpack.c.b16 %v181, %v180
  %v238 = vpack.c.b16 %v183, %v182
  %v239 = vpack.c.b16 %v185, %v184
  %v240 = vpack.c.b16 %v187, %v186
  %v241 = vpack.c.b16 %v189, %v188
  %v242 = vpack.c.b16 %v191, %v190
  %v243 = vpack.c.b16 %v193, %v192
  %v244 = vpack.c.b16 %v195, %v194
  %v245 = vpack.c.b16 %v197, %v196
  %v246 = vpack.c.b16 %v199, %v198
  %v247 = vpack.c.b16 %v201, %v200
  %v248 = vpack.c.b16 %v203, %v202
  %v249 = vpack.c.b16 %v205, %v204
  %v250 = vpack.c.b16 %v207, %v206
  %v251 = vpack.c.b16 %v209, %v208
  %v252 = vpack.c.b16 %v211, %v210
  %v253 = vpack.c.b16 %v213, %v212
  %v254 = vpack.c.b16 %v215, %v214
  %v255 = vpack.c.b16 %v217, %v216
  %v256 = vpack.c.b16 %v219, %v218
  %v257 = vpack.c.b16 %v221, %v220
  %v258 = vpack.c.b16 %v223, %v222
  %v259 = vpack.c.b16 %v225, %v224
  %v260 = vpack.c.b16 %v227, %v226
  %v261 = vpack.c.b16 %v229, %v228
  %v310 = vunpack.c.l.b16 %v79
  %v311 = vunpack.c.l.b16 %v80
  %v312 = vunpack.c.l.b16 %v81
  %v313 = vunpack.c.l.b16 %v82
  %v314 = vunpack.c.l.b16 %v83
  %v315 = vunpack.c.l.b16 %v84
  %v316 = vunpack.c.l.b16 %v85
  %v317 = vunpack.c.l.b16 %v86
  %v318 = vunpack.c.l.b16 %v87
  %v319 = vunpack.c.l.b16 %v88
  %v320 = vunpack.c.l.b16 %v89
  %v321 = vunpack.c.l.b16 %v90
  %v322 = vunpack.c.l.b16 %v91
  %v323 = vunpack.c.l.b16 %v92
  %v324 = vunpack.c.l.b16 %v93
  %v325 = vunpack.c.l.b16 %v94
  %v326 = vpack.c.b16 %v311, %v310
  %v327 = vpack.c.b16 %v313, %v312
  %v328 = vpack.c.b16 %v315, %v314
  %v329 = vpack.c.b16 %v317, %v316
  %v330 = vpack.c.b16 %v319, %v318
  %v331 = vpack.c.b16 %v321, %v320
  %v332 = vpack.c.b16 %v323, %v322
  %v333 = vpack.c.b16 %v325, %v324
  %342 = vmatprep.subr.bf16.mxu0 0
  %343 = vmatpush1.bf16.msra.mxu0 %v326
  %344 = vmatprep.subr.bf16.mxu0 0
  %345 = vmatpush1.bf16.msra.mxu0 %v327
  %346 = vmatprep.subr.bf16.mxu0 0
  %347 = vmatpush1.bf16.msra.mxu0 %v328
  %348 = vmatprep.subr.bf16.mxu0 0
  %349 = vmatpush1.bf16.msra.mxu0 %v329
  %350 = vmatprep.subr.bf16.mxu0 0
  %351 = vmatpush1.bf16.msra.mxu0 %v330
  %352 = vmatprep.subr.bf16.mxu0 0
  %353 = vmatpush1.bf16.msra.mxu0 %v331
  %354 = vmatprep.subr.bf16.mxu0 0
  %355 = vmatpush1.bf16.msra.mxu0 %v332
  %356 = vmatprep.subr.bf16.mxu0 0
  %357 = vmatpush1.bf16.msra.mxu0 %v333
  %358 = vmatprep.subr.bf16.mxu0 0
  %359 = vmatpush1.bf16.msra.mxu0 0
  %360 = vmatprep.subr.bf16.mxu0 0
  %361 = vmatpush1.bf16.msra.mxu0 0
  %362 = vmatprep.subr.bf16.mxu0 0
  %363 = vmatpush1.bf16.msra.mxu0 0
  %364 = vmatprep.subr.bf16.mxu0 0
  %365 = vmatpush1.bf16.msra.mxu0 0
  %366 = vmatprep.subr.bf16.mxu0 0
  %367 = vmatpush1.bf16.msra.mxu0 0
  %368 = vmatprep.subr.bf16.mxu0 0
  %369 = vmatpush1.bf16.msra.mxu0 0
  %370 = vmatprep.subr.bf16.mxu0 0
  %371 = vmatpush1.bf16.msra.mxu0 0
  %372 = vmatprep.subr.bf16.mxu0 0
  %373 = vmatpush1.bf16.msra.mxu0 0
  %374 = vmatprep.mubr.bf16.mxu0 0
  %375 = vmatmul.mubr.bf16.gmra.mrb[0].mxu0 %v230
  %v376 = vpop.f32.mrb[0].mxu0
  %v377 = vadd.f32 %v100, %v376
  %v378 = vpop.f32.mrb[0].mxu0
  %v379 = vpop.f32.mrb[0].mxu0
  %v380 = vadd.f32 %v100, %v379
  %v381 = vpop.f32.mrb[0].mxu0
  %382 = vmatprep.mubr.bf16.mxu0 0
  %383 = vmatmul.mubr.bf16.gmra.mrb[0].mxu0 %v231
  %v384 = vpop.f32.mrb[0].mxu0
  %v385 = vadd.f32 %v100, %v384
  %v386 = vpop.f32.mrb[0].mxu0
  %v387 = vpop.f32.mrb[0].mxu0
  %v388 = vadd.f32 %v100, %v387
  %v389 = vpop.f32.mrb[0].mxu0
  %390 = vmatprep.mubr.bf16.mxu0 0
  %391 = vmatmul.mubr.bf16.gmra.mrb[0].mxu0 %v232
  %v392 = vpop.f32.mrb[0].mxu0
  %v393 = vadd.f32 %v100, %v392
  %v394 = vpop.f32.mrb[0].mxu0
  %v395 = vpop.f32.mrb[0].mxu0
  %v396 = vadd.f32 %v100, %v395
  %v397 = vpop.f32.mrb[0].mxu0
  %398 = vmatprep.mubr.bf16.mxu0 0
  %399 = vmatmul.mubr.bf16.gmra.mrb[0].mxu0 %v233
  %v400 = vpop.f32.mrb[0].mxu0
  %v401 = vadd.f32 %v100, %v400
  %v402 = vpop.f32.mrb[0].mxu0
  %v403 = vpop.f32.mrb[0].mxu0
  %v404 = vadd.f32 %v100, %v403
  %v405 = vpop.f32.mrb[0].mxu0
  %406 = vmatprep.mubr.bf16.mxu0 0
  %407 = vmatmul.mubr.bf16.gmra.mrb[0].mxu0 %v234
  %v408 = vpop.f32.mrb[0].mxu0
  %v409 = vadd.f32 %v100, %v408
  %v410 = vpop.f32.mrb[0].mxu0
  %v411 = vpop.f32.mrb[0].mxu0
  %v412 = vadd.f32 %v100, %v411
  %v413 = vpop.f32.mrb[0].mxu0
  %414 = vmatprep.mubr.bf16.mxu0 0
  %415 = vmatmul.mubr.bf16.gmra.mrb[0].mxu0 %v235
  %v416 = vpop.f32.mrb[0].mxu0
  %v417 = vadd.f32 %v100, %v416
  %v418 = vpop.f32.mrb[0].mxu0
  %v419 = vpop.f32.mrb[0].mxu0
  %v420 = vadd.f32 %v100, %v419
  %v421 = vpop.f32.mrb[0].mxu0
  %422 = vmatprep.mubr.bf16.mxu0 0
  %423 = vmatmul.mubr.bf16.gmra.mrb[0].mxu0 %v236
  %v424 = vpop.f32.mrb[0].mxu0
  %v425 = vadd.f32 %v100, %v424
  %v426 = vpop.f32.mrb[0].mxu0
  %v427 = vpop.f32.mrb[0].mxu0
  %v428 = vadd.f32 %v100, %v427
  %v429 = vpop.f32.mrb[0].mxu0
  %430 = vmatprep.mubr.bf16.mxu0 0
  %431 = vmatmul.mubr.bf16.gmra.mrb[0].mxu0 %v237
  %v432 = vpop.f32.mrb[0].mxu0
  %v433 = vadd.f32 %v100, %v432
  %v434 = vpop.f32.mrb[0].mxu0
  %v435 = vpop.f32.mrb[0].mxu0
  %v436 = vadd.f32 %v100, %v435
  %v437 = vpop.f32.mrb[0].mxu0
  %438 = vmatprep.mubr.bf16.mxu0 0
  %439 = vmatmul.mubr.bf16.gmra.mrb[0].mxu0 %v238
  %v440 = vpop.f32.mrb[0].mxu0
  %v441 = vadd.f32 %v100, %v440
  %v442 = vpop.f32.mrb[0].mxu0
  %v443 = vpop.f32.mrb[0].mxu0
  %v444 = vadd.f32 %v100, %v443
  %v445 = vpop.f32.mrb[0].mxu0
  %446 = vmatprep.mubr.bf16.mxu0 0
  %447 = vmatmul.mubr.bf16.gmra.mrb[0].mxu0 %v239
  %v448 = vpop.f32.mrb[0].mxu0
  %v449 = vadd.f32 %v100, %v448
  %v450 = vpop.f32.mrb[0].mxu0
  %v451 = vpop.f32.mrb[0].mxu0
  %v452 = vadd.f32 %v100, %v451
  %v453 = vpop.f32.mrb[0].mxu0
  %454 = vmatprep.mubr.bf16.mxu0 0
  %455 = vmatmul.mubr.bf16.gmra.mrb[0].mxu0 %v240
  %v456 = vpop.f32.mrb[0].mxu0
  %v457 = vadd.f32 %v100, %v456
  %v458 = vpop.f32.mrb[0].mxu0
  %v459 = vpop.f32.mrb[0].mxu0
  %v460 = vadd.f32 %v100, %v459
  %v461 = vpop.f32.mrb[0].mxu0
  %462 = vmatprep.mubr.bf16.mxu0 0
  %463 = vmatmul.mubr.bf16.gmra.mrb[0].mxu0 %v241
  %v464 = vpop.f32.mrb[0].mxu0
  %v465 = vadd.f32 %v100, %v464
  %v466 = vpop.f32.mrb[0].mxu0
  %v467 = vpop.f32.mrb[0].mxu0
  %v468 = vadd.f32 %v100, %v467
  %v469 = vpop.f32.mrb[0].mxu0
  %470 = vmatprep.mubr.bf16.mxu0 0
  %471 = vmatmul.mubr.bf16.gmra.mrb[0].mxu0 %v242
  %v472 = vpop.f32.mrb[0].mxu0
  %v473 = vadd.f32 %v100, %v472
  %v474 = vpop.f32.mrb[0].mxu0
  %v475 = vpop.f32.mrb[0].mxu0
  %v476 = vadd.f32 %v100, %v475
  %v477 = vpop.f32.mrb[0].mxu0
  %478 = vmatprep.mubr.bf16.mxu0 0
  %479 = vmatmul.mubr.bf16.gmra.mrb[0].mxu0 %v243
  %v480 = vpop.f32.mrb[0].mxu0
  %v481 = vadd.f32 %v100, %v480
  %v482 = vpop.f32.mrb[0].mxu0
  %v483 = vpop.f32.mrb[0].mxu0
  %v484 = vadd.f32 %v100, %v483
  %v485 = vpop.f32.mrb[0].mxu0
  %486 = vmatprep.mubr.bf16.mxu0 0
  %487 = vmatmul.mubr.bf16.gmra.mrb[0].mxu0 %v244
  %v488 = vpop.f32.mrb[0].mxu0
  %v489 = vadd.f32 %v100, %v488
  %v490 = vpop.f32.mrb[0].mxu0
  %v491 = vpop.f32.mrb[0].mxu0
  %v492 = vadd.f32 %v100, %v491
  %v493 = vpop.f32.mrb[0].mxu0
  %494 = vmatprep.mubr.bf16.mxu0 0
  %495 = vmatmul.mubr.bf16.gmra.mrb[0].mxu0 %v245
  %v496 = vpop.f32.mrb[0].mxu0
  %v497 = vadd.f32 %v100, %v496
  %v498 = vpop.f32.mrb[0].mxu0
  %v499 = vpop.f32.mrb[0].mxu0
  %v500 = vadd.f32 %v100, %v499
  %v501 = vpop.f32.mrb[0].mxu0
  %502 = vmatprep.mubr.bf16.mxu0 0
  %503 = vmatmul.mubr.bf16.gmra.mrb[0].mxu0 %v246
  %v504 = vpop.f32.mrb[0].mxu0
  %v505 = vadd.f32 %v100, %v504
  %v506 = vpop.f32.mrb[0].mxu0
  %v507 = vpop.f32.mrb[0].mxu0
  %v508 = vadd.f32 %v100, %v507
  %v509 = vpop.f32.mrb[0].mxu0
  %510 = vmatprep.mubr.bf16.mxu0 0
  %511 = vmatmul.mubr.bf16.gmra.mrb[0].mxu0 %v247
  %v512 = vpop.f32.mrb[0].mxu0
  %v513 = vadd.f32 %v100, %v512
  %v514 = vpop.f32.mrb[0].mxu0
  %v515 = vpop.f32.mrb[0].mxu0
  %v516 = vadd.f32 %v100, %v515
  %v517 = vpop.f32.mrb[0].mxu0
  %518 = vmatprep.mubr.bf16.mxu0 0
  %519 = vmatmul.mubr.bf16.gmra.mrb[0].mxu0 %v248
  %v520 = vpop.f32.mrb[0].mxu0
  %v521 = vadd.f32 %v100, %v520
  %v522 = vpop.f32.mrb[0].mxu0
  %v523 = vpop.f32.mrb[0].mxu0
  %v524 = vadd.f32 %v100, %v523
  %v525 = vpop.f32.mrb[0].mxu0
  %526 = vmatprep.mubr.bf16.mxu0 0
  %527 = vmatmul.mubr.bf16.gmra.mrb[0].mxu0 %v249
  %v528 = vpop.f32.mrb[0].mxu0
  %v529 = vadd.f32 %v100, %v528
  %v530 = vpop.f32.mrb[0].mxu0
  %v531 = vpop.f32.mrb[0].mxu0
  %v532 = vadd.f32 %v100, %v531
  %v533 = vpop.f32.mrb[0].mxu0
  %534 = vmatprep.mubr.bf16.mxu0 0
  %535 = vmatmul.mubr.bf16.gmra.mrb[0].mxu0 %v250
  %v536 = vpop.f32.mrb[0].mxu0
  %v537 = vadd.f32 %v100, %v536
  %v538 = vpop.f32.mrb[0].mxu0
  %v539 = vpop.f32.mrb[0].mxu0
  %v540 = vadd.f32 %v100, %v539
  %v541 = vpop.f32.mrb[0].mxu0
  %542 = vmatprep.mubr.bf16.mxu0 0
  %543 = vmatmul.mubr.bf16.gmra.mrb[0].mxu0 %v251
  %v544 = vpop.f32.mrb[0].mxu0
  %v545 = vadd.f32 %v100, %v544
  %v546 = vpop.f32.mrb[0].mxu0
  %v547 = vpop.f32.mrb[0].mxu0
  %v548 = vadd.f32 %v100, %v547
  %v549 = vpop.f32.mrb[0].mxu0
  %550 = vmatprep.mubr.bf16.mxu0 0
  %551 = vmatmul.mubr.bf16.gmra.mrb[0].mxu0 %v252
  %v552 = vpop.f32.mrb[0].mxu0
  %v553 = vadd.f32 %v100, %v552
  %v554 = vpop.f32.mrb[0].mxu0
  %v555 = vpop.f32.mrb[0].mxu0
  %v556 = vadd.f32 %v100, %v555
  %v557 = vpop.f32.mrb[0].mxu0
  %558 = vmatprep.mubr.bf16.mxu0 0
  %559 = vmatmul.mubr.bf16.gmra.mrb[0].mxu0 %v253
  %v560 = vpop.f32.mrb[0].mxu0
  %v561 = vadd.f32 %v100, %v560
  %v562 = vpop.f32.mrb[0].mxu0
  %v563 = vpop.f32.mrb[0].mxu0
  %v564 = vadd.f32 %v100, %v563
  %v565 = vpop.f32.mrb[0].mxu0
  %566 = vmatprep.mubr.bf16.mxu0 0
  %567 = vmatmul.mubr.bf16.gmra.mrb[0].mxu0 %v254
  %v568 = vpop.f32.mrb[0].mxu0
  %v569 = vadd.f32 %v100, %v568
  %v570 = vpop.f32.mrb[0].mxu0
  %v571 = vpop.f32.mrb[0].mxu0
  %v572 = vadd.f32 %v100, %v571
  %v573 = vpop.f32.mrb[0].mxu0
  %574 = vmatprep.mubr.bf16.mxu0 0
  %575 = vmatmul.mubr.bf16.gmra.mrb[0].mxu0 %v255
  %v576 = vpop.f32.mrb[0].mxu0
  %v577 = vadd.f32 %v100, %v576
  %v578 = vpop.f32.mrb[0].mxu0
  %v579 = vpop.f32.mrb[0].mxu0
  %v580 = vadd.f32 %v100, %v579
  %v581 = vpop.f32.mrb[0].mxu0
  %582 = vmatprep.mubr.bf16.mxu0 0
  %583 = vmatmul.mubr.bf16.gmra.mrb[0].mxu0 %v256
  %v584 = vpop.f32.mrb[0].mxu0
  %v585 = vadd.f32 %v100, %v584
  %v586 = vpop.f32.mrb[0].mxu0
  %v587 = vpop.f32.mrb[0].mxu0
  %v588 = vadd.f32 %v100, %v587
  %v589 = vpop.f32.mrb[0].mxu0
  %590 = vmatprep.mubr.bf16.mxu0 0
  %591 = vmatmul.mubr.bf16.gmra.mrb[0].mxu0 %v257
  %v592 = vpop.f32.mrb[0].mxu0
  %v593 = vadd.f32 %v100, %v592
  %v594 = vpop.f32.mrb[0].mxu0
  %v595 = vpop.f32.mrb[0].mxu0
  %v596 = vadd.f32 %v100, %v595
  %v597 = vpop.f32.mrb[0].mxu0
  %598 = vmatprep.mubr.bf16.mxu0 0
  %599 = vmatmul.mubr.bf16.gmra.mrb[0].mxu0 %v258
  %v600 = vpop.f32.mrb[0].mxu0
  %v601 = vadd.f32 %v100, %v600
  %v602 = vpop.f32.mrb[0].mxu0
  %v603 = vpop.f32.mrb[0].mxu0
  %v604 = vadd.f32 %v100, %v603
  %v605 = vpop.f32.mrb[0].mxu0
  %606 = vmatprep.mubr.bf16.mxu0 0
  %607 = vmatmul.mubr.bf16.gmra.mrb[0].mxu0 %v259
  %v608 = vpop.f32.mrb[0].mxu0
  %v609 = vadd.f32 %v100, %v608
  %v610 = vpop.f32.mrb[0].mxu0
  %v611 = vpop.f32.mrb[0].mxu0
  %v612 = vadd.f32 %v100, %v611
  %v613 = vpop.f32.mrb[0].mxu0
  %614 = vmatprep.mubr.bf16.mxu0 0
  %615 = vmatmul.mubr.bf16.gmra.mrb[0].mxu0 %v260
  %v616 = vpop.f32.mrb[0].mxu0
  %v617 = vadd.f32 %v100, %v616
  %v618 = vpop.f32.mrb[0].mxu0
  %v619 = vpop.f32.mrb[0].mxu0
  %v620 = vadd.f32 %v100, %v619
  %v621 = vpop.f32.mrb[0].mxu0
  %622 = vmatprep.mubr.bf16.mxu0 0
  %623 = vmatmul.mubr.bf16.gmra.mrb[0].mxu0 %v261
  %v624 = vpop.f32.mrb[0].mxu0
  %v625 = vadd.f32 %v100, %v624
  %v626 = vpop.f32.mrb[0].mxu0
  %v627 = vpop.f32.mrb[0].mxu0
  %v628 = vadd.f32 %v100, %v627
  %v629 = vpop.f32.mrb[0].mxu0
  %630 = vdwg.mxu0
  %vm631 = vcmp.ge.f32.partialorder %v377, 0.0
  %vm632 = vcmp.ge.f32.partialorder %v380, 0.0
  %vm633 = vcmp.ge.f32.partialorder %v385, 0.0
  %vm634 = vcmp.ge.f32.partialorder %v388, 0.0
  %vm635 = vcmp.ge.f32.partialorder %v393, 0.0
  %vm636 = vcmp.ge.f32.partialorder %v396, 0.0
  %vm637 = vcmp.ge.f32.partialorder %v401, 0.0
  %vm638 = vcmp.ge.f32.partialorder %v404, 0.0
  %vm639 = vcmp.ge.f32.partialorder %v409, 0.0
  %vm640 = vcmp.ge.f32.partialorder %v412, 0.0
  %vm641 = vcmp.ge.f32.partialorder %v417, 0.0
  %vm642 = vcmp.ge.f32.partialorder %v420, 0.0
  %vm643 = vcmp.ge.f32.partialorder %v425, 0.0
  %vm644 = vcmp.ge.f32.partialorder %v428, 0.0
  %vm645 = vcmp.ge.f32.partialorder %v433, 0.0
  %vm646 = vcmp.ge.f32.partialorder %v436, 0.0
  %vm647 = vcmp.ge.f32.partialorder %v441, 0.0
  %vm648 = vcmp.ge.f32.partialorder %v444, 0.0
  %vm649 = vcmp.ge.f32.partialorder %v449, 0.0
  %vm650 = vcmp.ge.f32.partialorder %v452, 0.0
  %vm651 = vcmp.ge.f32.partialorder %v457, 0.0
  %vm652 = vcmp.ge.f32.partialorder %v460, 0.0
  %vm653 = vcmp.ge.f32.partialorder %v465, 0.0
  %vm654 = vcmp.ge.f32.partialorder %v468, 0.0
  %vm655 = vcmp.ge.f32.partialorder %v473, 0.0
  %vm656 = vcmp.ge.f32.partialorder %v476, 0.0
  %vm657 = vcmp.ge.f32.partialorder %v481, 0.0
  %vm658 = vcmp.ge.f32.partialorder %v484, 0.0
  %vm659 = vcmp.ge.f32.partialorder %v489, 0.0
  %vm660 = vcmp.ge.f32.partialorder %v492, 0.0
  %vm661 = vcmp.ge.f32.partialorder %v497, 0.0
  %vm662 = vcmp.ge.f32.partialorder %v500, 0.0
  %vm663 = vcmp.ge.f32.partialorder %v505, 0.0
  %vm664 = vcmp.ge.f32.partialorder %v508, 0.0
  %vm665 = vcmp.ge.f32.partialorder %v513, 0.0
  %vm666 = vcmp.ge.f32.partialorder %v516, 0.0
  %vm667 = vcmp.ge.f32.partialorder %v521, 0.0
  %vm668 = vcmp.ge.f32.partialorder %v524, 0.0
  %vm669 = vcmp.ge.f32.partialorder %v529, 0.0
  %vm670 = vcmp.ge.f32.partialorder %v532, 0.0
  %vm671 = vcmp.ge.f32.partialorder %v537, 0.0
  %vm672 = vcmp.ge.f32.partialorder %v540, 0.0
  %vm673 = vcmp.ge.f32.partialorder %v545, 0.0
  %vm674 = vcmp.ge.f32.partialorder %v548, 0.0
  %vm675 = vcmp.ge.f32.partialorder %v553, 0.0
  %vm676 = vcmp.ge.f32.partialorder %v556, 0.0
  %vm677 = vcmp.ge.f32.partialorder %v561, 0.0
  %vm678 = vcmp.ge.f32.partialorder %v564, 0.0
  %vm679 = vcmp.ge.f32.partialorder %v569, 0.0
  %vm680 = vcmp.ge.f32.partialorder %v572, 0.0
  %vm681 = vcmp.ge.f32.partialorder %v577, 0.0
  %vm682 = vcmp.ge.f32.partialorder %v580, 0.0
  %vm683 = vcmp.ge.f32.partialorder %v585, 0.0
  %vm684 = vcmp.ge.f32.partialorder %v588, 0.0
  %vm685 = vcmp.ge.f32.partialorder %v593, 0.0
  %vm686 = vcmp.ge.f32.partialorder %v596, 0.0
  %vm687 = vcmp.ge.f32.partialorder %v601, 0.0
  %vm688 = vcmp.ge.f32.partialorder %v604, 0.0
  %vm689 = vcmp.ge.f32.partialorder %v609, 0.0
  %vm690 = vcmp.ge.f32.partialorder %v612, 0.0
  %vm691 = vcmp.ge.f32.partialorder %v617, 0.0
  %vm692 = vcmp.ge.f32.partialorder %v620, 0.0
  %vm693 = vcmp.ge.f32.partialorder %v625, 0.0
  %vm694 = vcmp.ge.f32.partialorder %v628, 0.0
  %v695 = vmul.f32 %v377, 0.05
  %v696 = vmul.f32 %v380, 0.05
  %v697 = vmul.f32 %v385, 0.05
  %v698 = vmul.f32 %v388, 0.05
  %v699 = vmul.f32 %v393, 0.05
  %v700 = vmul.f32 %v396, 0.05
  %v701 = vmul.f32 %v401, 0.05
  %v702 = vmul.f32 %v404, 0.05
  %v703 = vmul.f32 %v409, 0.05
  %v704 = vmul.f32 %v412, 0.05
  %v705 = vmul.f32 %v417, 0.05
  %v706 = vmul.f32 %v420, 0.05
  %v707 = vmul.f32 %v425, 0.05
  %v708 = vmul.f32 %v428, 0.05
  %v709 = vmul.f32 %v433, 0.05
  %v710 = vmul.f32 %v436, 0.05
  %v711 = vmul.f32 %v441, 0.05
  %v712 = vmul.f32 %v444, 0.05
  %v713 = vmul.f32 %v449, 0.05
  %v714 = vmul.f32 %v452, 0.05
  %v715 = vmul.f32 %v457, 0.05
  %v716 = vmul.f32 %v460, 0.05
  %v717 = vmul.f32 %v465, 0.05
  %v718 = vmul.f32 %v468, 0.05
  %v719 = vmul.f32 %v473, 0.05
  %v720 = vmul.f32 %v476, 0.05
  %v721 = vmul.f32 %v481, 0.05
  %v722 = vmul.f32 %v484, 0.05
  %v723 = vmul.f32 %v489, 0.05
  %v724 = vmul.f32 %v492, 0.05
  %v725 = vmul.f32 %v497, 0.05
  %v726 = vmul.f32 %v500, 0.05
  %v727 = vmul.f32 %v505, 0.05
  %v728 = vmul.f32 %v508, 0.05
  %v729 = vmul.f32 %v513, 0.05
  %v730 = vmul.f32 %v516, 0.05
  %v731 = vmul.f32 %v521, 0.05
  %v732 = vmul.f32 %v524, 0.05
  %v733 = vmul.f32 %v529, 0.05
  %v734 = vmul.f32 %v532, 0.05
  %v735 = vmul.f32 %v537, 0.05
  %v736 = vmul.f32 %v540, 0.05
  %v737 = vmul.f32 %v545, 0.05
  %v738 = vmul.f32 %v548, 0.05
  %v739 = vmul.f32 %v553, 0.05
  %v740 = vmul.f32 %v556, 0.05
  %v741 = vmul.f32 %v561, 0.05
  %v742 = vmul.f32 %v564, 0.05
  %v743 = vmul.f32 %v569, 0.05
  %v744 = vmul.f32 %v572, 0.05
  %v745 = vmul.f32 %v577, 0.05
  %v746 = vmul.f32 %v580, 0.05
  %v747 = vmul.f32 %v585, 0.05
  %v748 = vmul.f32 %v588, 0.05
  %v749 = vmul.f32 %v593, 0.05
  %v750 = vmul.f32 %v596, 0.05
  %v751 = vmul.f32 %v601, 0.05
  %v752 = vmul.f32 %v604, 0.05
  %v753 = vmul.f32 %v609, 0.05
  %v754 = vmul.f32 %v612, 0.05
  %v755 = vmul.f32 %v617, 0.05
  %v756 = vmul.f32 %v620, 0.05
  %v757 = vmul.f32 %v625, 0.05
  %v758 = vmul.f32 %v628, 0.05
  %v759 = vsel %vm631, %v377, %v695
  %v760 = vsel %vm632, %v380, %v696
  %v761 = vsel %vm633, %v385, %v697
  %v762 = vsel %vm634, %v388, %v698
  %v763 = vsel %vm635, %v393, %v699
  %v764 = vsel %vm636, %v396, %v700
  %v765 = vsel %vm637, %v401, %v701
  %v766 = vsel %vm638, %v404, %v702
  %v767 = vsel %vm639, %v409, %v703
  %v768 = vsel %vm640, %v412, %v704
  %v769 = vsel %vm641, %v417, %v705
  %v770 = vsel %vm642, %v420, %v706
  %v771 = vsel %vm643, %v425, %v707
  %v772 = vsel %vm644, %v428, %v708
  %v773 = vsel %vm645, %v433, %v709
  %v774 = vsel %vm646, %v436, %v710
  %v775 = vsel %vm647, %v441, %v711
  %v776 = vsel %vm648, %v444, %v712
  %v777 = vsel %vm649, %v449, %v713
  %v778 = vsel %vm650, %v452, %v714
  %v779 = vsel %vm651, %v457, %v715
  %v780 = vsel %vm652, %v460, %v716
  %v781 = vsel %vm653, %v465, %v717
  %v782 = vsel %vm654, %v468, %v718
  %v783 = vsel %vm655, %v473, %v719
  %v784 = vsel %vm656, %v476, %v720
  %v785 = vsel %vm657, %v481, %v721
  %v786 = vsel %vm658, %v484, %v722
  %v787 = vsel %vm659, %v489, %v723
  %v788 = vsel %vm660, %v492, %v724
  %v789 = vsel %vm661, %v497, %v725
  %v790 = vsel %vm662, %v500, %v726
  %v791 = vsel %vm663, %v505, %v727
  %v792 = vsel %vm664, %v508, %v728
  %v793 = vsel %vm665, %v513, %v729
  %v794 = vsel %vm666, %v516, %v730
  %v795 = vsel %vm667, %v521, %v731
  %v796 = vsel %vm668, %v524, %v732
  %v797 = vsel %vm669, %v529, %v733
  %v798 = vsel %vm670, %v532, %v734
  %v799 = vsel %vm671, %v537, %v735
  %v800 = vsel %vm672, %v540, %v736
  %v801 = vsel %vm673, %v545, %v737
  %v802 = vsel %vm674, %v548, %v738
  %v803 = vsel %vm675, %v553, %v739
  %v804 = vsel %vm676, %v556, %v740
  %v805 = vsel %vm677, %v561, %v741
  %v806 = vsel %vm678, %v564, %v742
  %v807 = vsel %vm679, %v569, %v743
  %v808 = vsel %vm680, %v572, %v744
  %v809 = vsel %vm681, %v577, %v745
  %v810 = vsel %vm682, %v580, %v746
  %v811 = vsel %vm683, %v585, %v747
  %v812 = vsel %vm684, %v588, %v748
  %v813 = vsel %vm685, %v593, %v749
  %v814 = vsel %vm686, %v596, %v750
  %v815 = vsel %vm687, %v601, %v751
  %v816 = vsel %vm688, %v604, %v752
  %v817 = vsel %vm689, %v609, %v753
  %v818 = vsel %vm690, %v612, %v754
  %v819 = vsel %vm691, %v617, %v755
  %v820 = vsel %vm692, %v620, %v756
  %v821 = vsel %vm693, %v625, %v757
  %v822 = vsel %vm694, %v628, %v758
  %v823 = vpack.c.bf16 %v760, %v759
  %v824 = vpack.c.bf16 %v762, %v761
  %v825 = vpack.c.bf16 %v764, %v763
  %v826 = vpack.c.bf16 %v766, %v765
  %v827 = vpack.c.bf16 %v768, %v767
  %v828 = vpack.c.bf16 %v770, %v769
  %v829 = vpack.c.bf16 %v772, %v771
  %v830 = vpack.c.bf16 %v774, %v773
  %v831 = vpack.c.bf16 %v776, %v775
  %v832 = vpack.c.bf16 %v778, %v777
  %v833 = vpack.c.bf16 %v780, %v779
  %v834 = vpack.c.bf16 %v782, %v781
  %v835 = vpack.c.bf16 %v784, %v783
  %v836 = vpack.c.bf16 %v786, %v785
  %v837 = vpack.c.bf16 %v788, %v787
  %v838 = vpack.c.bf16 %v790, %v789
  %v839 = vpack.c.bf16 %v792, %v791
  %v840 = vpack.c.bf16 %v794, %v793
  %v841 = vpack.c.bf16 %v796, %v795
  %v842 = vpack.c.bf16 %v798, %v797
  %v843 = vpack.c.bf16 %v800, %v799
  %v844 = vpack.c.bf16 %v802, %v801
  %v845 = vpack.c.bf16 %v804, %v803
  %v846 = vpack.c.bf16 %v806, %v805
  %v847 = vpack.c.bf16 %v808, %v807
  %v848 = vpack.c.bf16 %v810, %v809
  %v849 = vpack.c.bf16 %v812, %v811
  %v850 = vpack.c.bf16 %v814, %v813
  %v851 = vpack.c.bf16 %v816, %v815
  %v852 = vpack.c.bf16 %v818, %v817
  %v853 = vpack.c.bf16 %v820, %v819
  %v854 = vpack.c.bf16 %v822, %v821
  %v887 = vunpack.c.l.b16 %v823
  %v888 = vunpack.c.h.b16 %v823
  %v889 = vunpack.c.l.b16 %v824
  %v890 = vunpack.c.h.b16 %v824
  %v891 = vunpack.c.l.b16 %v825
  %v892 = vunpack.c.h.b16 %v825
  %v893 = vunpack.c.l.b16 %v826
  %v894 = vunpack.c.h.b16 %v826
  %v895 = vunpack.c.l.b16 %v827
  %v896 = vunpack.c.h.b16 %v827
  %v897 = vunpack.c.l.b16 %v828
  %v898 = vunpack.c.h.b16 %v828
  %v899 = vunpack.c.l.b16 %v829
  %v900 = vunpack.c.h.b16 %v829
  %v901 = vunpack.c.l.b16 %v830
  %v902 = vunpack.c.h.b16 %v830
  %v903 = vunpack.c.l.b16 %v831
  %v904 = vunpack.c.h.b16 %v831
  %v905 = vunpack.c.l.b16 %v832
  %v906 = vunpack.c.h.b16 %v832
  %v907 = vunpack.c.l.b16 %v833
  %v908 = vunpack.c.h.b16 %v833
  %v909 = vunpack.c.l.b16 %v834
  %v910 = vunpack.c.h.b16 %v834
  %v911 = vunpack.c.l.b16 %v835
  %v912 = vunpack.c.h.b16 %v835
  %v913 = vunpack.c.l.b16 %v836
  %v914 = vunpack.c.h.b16 %v836
  %v915 = vunpack.c.l.b16 %v837
  %v916 = vunpack.c.h.b16 %v837
  %v917 = vunpack.c.l.b16 %v838
  %v918 = vunpack.c.h.b16 %v838
  %v919 = vunpack.c.l.b16 %v839
  %v920 = vunpack.c.h.b16 %v839
  %v921 = vunpack.c.l.b16 %v840
  %v922 = vunpack.c.h.b16 %v840
  %v923 = vunpack.c.l.b16 %v841
  %v924 = vunpack.c.h.b16 %v841
  %v925 = vunpack.c.l.b16 %v842
  %v926 = vunpack.c.h.b16 %v842
  %v927 = vunpack.c.l.b16 %v843
  %v928 = vunpack.c.h.b16 %v843
  %v929 = vunpack.c.l.b16 %v844
  %v930 = vunpack.c.h.b16 %v844
  %v931 = vunpack.c.l.b16 %v845
  %v932 = vunpack.c.h.b16 %v845
  %v933 = vunpack.c.l.b16 %v846
  %v934 = vunpack.c.h.b16 %v846
  %v935 = vunpack.c.l.b16 %v847
  %v936 = vunpack.c.h.b16 %v847
  %v937 = vunpack.c.l.b16 %v848
  %v938 = vunpack.c.h.b16 %v848
  %v939 = vunpack.c.l.b16 %v849
  %v940 = vunpack.c.h.b16 %v849
  %v941 = vunpack.c.l.b16 %v850
  %v942 = vunpack.c.h.b16 %v850
  %v943 = vunpack.c.l.b16 %v851
  %v944 = vunpack.c.h.b16 %v851
  %v945 = vunpack.c.l.b16 %v852
  %v946 = vunpack.c.h.b16 %v852
  %v947 = vunpack.c.l.b16 %v853
  %v948 = vunpack.c.h.b16 %v853
  %v949 = vunpack.c.l.b16 %v854
  %v950 = vunpack.c.h.b16 %v854
  %v951 = vpack.c.b16 %v887, %v887
  %v952 = vpack.c.b16 %v888, %v888
  %v953 = vpack.c.b16 %v889, %v889
  %v954 = vpack.c.b16 %v890, %v890
  %v955 = vpack.c.b16 %v891, %v891
  %v956 = vpack.c.b16 %v892, %v892
  %v957 = vpack.c.b16 %v893, %v893
  %v958 = vpack.c.b16 %v894, %v894
  %v959 = vpack.c.b16 %v895, %v895
  %v960 = vpack.c.b16 %v896, %v896
  %v961 = vpack.c.b16 %v897, %v897
  %v962 = vpack.c.b16 %v898, %v898
  %v963 = vpack.c.b16 %v899, %v899
  %v964 = vpack.c.b16 %v900, %v900
  %v965 = vpack.c.b16 %v901, %v901
  %v966 = vpack.c.b16 %v902, %v902
  %v967 = vpack.c.b16 %v903, %v903
  %v968 = vpack.c.b16 %v904, %v904
  %v969 = vpack.c.b16 %v905, %v905
  %v970 = vpack.c.b16 %v906, %v906
  %v971 = vpack.c.b16 %v907, %v907
  %v972 = vpack.c.b16 %v908, %v908
  %v973 = vpack.c.b16 %v909, %v909
  %v974 = vpack.c.b16 %v910, %v910
  %v975 = vpack.c.b16 %v911, %v911
  %v976 = vpack.c.b16 %v912, %v912
  %v977 = vpack.c.b16 %v913, %v913
  %v978 = vpack.c.b16 %v914, %v914
  %v979 = vpack.c.b16 %v915, %v915
  %v980 = vpack.c.b16 %v916, %v916
  %v981 = vpack.c.b16 %v917, %v917
  %v982 = vpack.c.b16 %v918, %v918
  %v983 = vpack.c.b16 %v919, %v919
  %v984 = vpack.c.b16 %v920, %v920
  %v985 = vpack.c.b16 %v921, %v921
  %v986 = vpack.c.b16 %v922, %v922
  %v987 = vpack.c.b16 %v923, %v923
  %v988 = vpack.c.b16 %v924, %v924
  %v989 = vpack.c.b16 %v925, %v925
  %v990 = vpack.c.b16 %v926, %v926
  %v991 = vpack.c.b16 %v927, %v927
  %v992 = vpack.c.b16 %v928, %v928
  %v993 = vpack.c.b16 %v929, %v929
  %v994 = vpack.c.b16 %v930, %v930
  %v995 = vpack.c.b16 %v931, %v931
  %v996 = vpack.c.b16 %v932, %v932
  %v997 = vpack.c.b16 %v933, %v933
  %v998 = vpack.c.b16 %v934, %v934
  %v999 = vpack.c.b16 %v935, %v935
  %v1000 = vpack.c.b16 %v936, %v936
  %v1001 = vpack.c.b16 %v937, %v937
  %v1002 = vpack.c.b16 %v938, %v938
  %v1003 = vpack.c.b16 %v939, %v939
  %v1004 = vpack.c.b16 %v940, %v940
  %v1005 = vpack.c.b16 %v941, %v941
  %v1006 = vpack.c.b16 %v942, %v942
  %v1007 = vpack.c.b16 %v943, %v943
  %v1008 = vpack.c.b16 %v944, %v944
  %v1009 = vpack.c.b16 %v945, %v945
  %v1010 = vpack.c.b16 %v946, %v946
  %v1011 = vpack.c.b16 %v947, %v947
  %v1012 = vpack.c.b16 %v948, %v948
  %v1013 = vpack.c.b16 %v949, %v949
  %v1014 = vpack.c.b16 %v950, %v950
  %1079 = vst [vmem:[%s3] sm:$0xf] %v951
  %1080 = vst [vmem:[%s3 + $0x4] sm:$0xf] %v952
  %1081 = vst [vmem:[%s3 + $0x8] sm:$0xf] %v953
  %1082 = vst [vmem:[%s3 + $0xc] sm:$0xf] %v954
  %1083 = vst [vmem:[%s3 + $0x10] sm:$0xf] %v955
  %1084 = vst [vmem:[%s3 + $0x14] sm:$0xf] %v956
  %1085 = vst [vmem:[%s3 + $0x18] sm:$0xf] %v957
  %1086 = vst [vmem:[%s3 + $0x1c] sm:$0xf] %v958
  %1087 = vst [vmem:[%s3 + $0x20] sm:$0xf] %v959
  %1088 = vst [vmem:[%s3 + $0x24] sm:$0xf] %v960
  %1089 = vst [vmem:[%s3 + $0x28] sm:$0xf] %v961
  %1090 = vst [vmem:[%s3 + $0x2c] sm:$0xf] %v962
  %1091 = vst [vmem:[%s3 + $0x30] sm:$0xf] %v963
  %1092 = vst [vmem:[%s3 + $0x34] sm:$0xf] %v964
  %1093 = vst [vmem:[%s3 + $0x38] sm:$0xf] %v965
  %1094 = vst [vmem:[%s3 + $0x3c] sm:$0xf] %v966
  %1095 = vst [vmem:[%s3 + $0x40] sm:$0xf] %v967
  %1096 = vst [vmem:[%s3 + $0x44] sm:$0xf] %v968
  %1097 = vst [vmem:[%s3 + $0x48] sm:$0xf] %v969
  %1098 = vst [vmem:[%s3 + $0x4c] sm:$0xf] %v970
  %1099 = vst [vmem:[%s3 + $0x50] sm:$0xf] %v971
  %1100 = vst [vmem:[%s3 + $0x54] sm:$0xf] %v972
  %1101 = vst [vmem:[%s3 + $0x58] sm:$0xf] %v973
  %1102 = vst [vmem:[%s3 + $0x5c] sm:$0xf] %v974
  %1103 = vst [vmem:[%s3 + $0x60] sm:$0xf] %v975
  %1104 = vst [vmem:[%s3 + $0x64] sm:$0xf] %v976
  %1105 = vst [vmem:[%s3 + $0x68] sm:$0xf] %v977
  %1106 = vst [vmem:[%s3 + $0x6c] sm:$0xf] %v978
  %1107 = vst [vmem:[%s3 + $0x70] sm:$0xf] %v979
  %1108 = vst [vmem:[%s3 + $0x74] sm:$0xf] %v980
  %1109 = vst [vmem:[%s3 + $0x78] sm:$0xf] %v981
  %1110 = vst [vmem:[%s3 + $0x7c] sm:$0xf] %v982
  %1111 = vst [vmem:[%s3 + $0x80] sm:$0xf] %v983
  %1112 = vst [vmem:[%s3 + $0x84] sm:$0xf] %v984
  %1113 = vst [vmem:[%s3 + $0x88] sm:$0xf] %v985
  %1114 = vst [vmem:[%s3 + $0x8c] sm:$0xf] %v986
  %1115 = vst [vmem:[%s3 + $0x90] sm:$0xf] %v987
  %1116 = vst [vmem:[%s3 + $0x94] sm:$0xf] %v988
  %1117 = vst [vmem:[%s3 + $0x98] sm:$0xf] %v989
  %1118 = vst [vmem:[%s3 + $0x9c] sm:$0xf] %v990
  %1119 = vst [vmem:[%s3 + $0xa0] sm:$0xf] %v991
  %1120 = vst [vmem:[%s3 + $0xa4] sm:$0xf] %v992
  %1121 = vst [vmem:[%s3 + $0xa8] sm:$0xf] %v993
  %1122 = vst [vmem:[%s3 + $0xac] sm:$0xf] %v994
  %1123 = vst [vmem:[%s3 + $0xb0] sm:$0xf] %v995
  %1124 = vst [vmem:[%s3 + $0xb4] sm:$0xf] %v996
  %1125 = vst [vmem:[%s3 + $0xb8] sm:$0xf] %v997
  %1126 = vst [vmem:[%s3 + $0xbc] sm:$0xf] %v998
  %1127 = vst [vmem:[%s3 + $0xc0] sm:$0xf] %v999
  %1128 = vst [vmem:[%s3 + $0xc4] sm:$0xf] %v1000
  %1129 = vst [vmem:[%s3 + $0xc8] sm:$0xf] %v1001
  %1130 = vst [vmem:[%s3 + $0xcc] sm:$0xf] %v1002
  %1131 = vst [vmem:[%s3 + $0xd0] sm:$0xf] %v1003
  %1132 = vst [vmem:[%s3 + $0xd4] sm:$0xf] %v1004
  %1133 = vst [vmem:[%s3 + $0xd8] sm:$0xf] %v1005
  %1134 = vst [vmem:[%s3 + $0xdc] sm:$0xf] %v1006
  %1135 = vst [vmem:[%s3 + $0xe0] sm:$0xf] %v1007
  %1136 = vst [vmem:[%s3 + $0xe4] sm:$0xf] %v1008
  %1137 = vst [vmem:[%s3 + $0xe8] sm:$0xf] %v1009
  %1138 = vst [vmem:[%s3 + $0xec] sm:$0xf] %v1010
  %1139 = vst [vmem:[%s3 + $0xf0] sm:$0xf] %v1011
  %1140 = vst [vmem:[%s3 + $0xf4] sm:$0xf] %v1012
  %1141 = vst [vmem:[%s3 + $0xf8] sm:$0xf] %v1013
  %1142 = vst [vmem:[%s3 + $0xfc] sm:$0xf] %v1014
  // Predicated region
  $region14: #{generator_forward.7} parent=0 // pred_check
    _
  $region15: #{generator_forward.7} parent=0 // pred_check_branch
    %1144 = sbr.rel (0) target = $region17
  $region16: #{generator_forward.7} parent=0 // pred_region
    _
  $region17: #{generator_forward.7} parent=0 // pred_fallthru
    _
  // Predicated region
  $region18: #{generator_forward.7} parent=0 // pred_check
    _
  $region19: #{generator_forward.7} parent=0 // pred_check_branch
    %1146 = sbr.rel (0) target = $region21
  $region20: #{generator_forward.7} parent=0 // pred_region
    _
  $region21: #{generator_forward.7} parent=0 // pred_fallthru
    _

// kernel: generator_forward.8
$region0: #{generator_forward.8}
  #allocation0 [shape = 'u32[]', space=smem, size = 0x4, offset = 0x4, fixed_abs, tag = 'smem constant byte address 0x4 - core index']
  #allocation1 [shape = 'u32[144,128]{1,0:T(1,128)}', space=vmem, size = 0x12000, scoped, tag = 'internal scratch']
  %s0 = inlined_call_operand.vmem [shape: bf16[128,512], index: 0, kind: input, shape index: {}]
  %s1 = inlined_call_operand.vmem [shape: bf16[512,128], index: 1, kind: input, shape index: {}]
  %s2 = inlined_call_operand.vmem [shape: f32[1,128], index: 2, kind: input, shape index: {}]
  %s3 = inlined_call_operand.vmem [shape: bf16[128,128], index: 3, kind: output, shape index: {}]
  %s4 = sld [smem:[#allocation0]]
  $region22: #{generator_forward.8} parent=0
    _
  %s6 = ssub.s32 1, %s4
  %s7 = scalar_select 0, %s6, %s4
  // Predicated region
  $region2: #{generator_forward.8} parent=0 // pred_check
    _
  $region3: #{generator_forward.8} parent=0 // pred_check_branch
    %9 = sbr.rel (0) target = $region5
  $region4: #{generator_forward.8} parent=0 // pred_region
    _
  $region5: #{generator_forward.8} parent=0 // pred_fallthru
    _
  // Predicated region
  $region6: #{generator_forward.8} parent=0 // pred_check
    _
  $region7: #{generator_forward.8} parent=0 // pred_check_branch
    %11 = sbr.rel (0) target = $region9
  $region8: #{generator_forward.8} parent=0 // pred_region
    _
  $region9: #{generator_forward.8} parent=0 // pred_fallthru
    _
  // Predicated region
  $region10: #{generator_forward.8} parent=0 // pred_check
    _
  $region11: #{generator_forward.8} parent=0 // pred_check_branch
    %13 = sbr.rel (0) target = $region13
  $region12: #{generator_forward.8} parent=0 // pred_region
    _
  $region13: #{generator_forward.8} parent=0 // pred_fallthru
    _
  %v15 = vld [vmem:[%s0] sm:$0xff]
  %v16 = vld [vmem:[%s0 + $0x8] sm:$0xff]
  %v17 = vld [vmem:[%s0 + $0x10] sm:$0xff]
  %v18 = vld [vmem:[%s0 + $0x18] sm:$0xff]
  %v19 = vld [vmem:[%s0 + $0x20] sm:$0xff]
  %v20 = vld [vmem:[%s0 + $0x28] sm:$0xff]
  %v21 = vld [vmem:[%s0 + $0x30] sm:$0xff]
  %v22 = vld [vmem:[%s0 + $0x38] sm:$0xff]
  %v23 = vld [vmem:[%s0 + $0x40] sm:$0xff]
  %v24 = vld [vmem:[%s0 + $0x48] sm:$0xff]
  %v25 = vld [vmem:[%s0 + $0x50] sm:$0xff]
  %v26 = vld [vmem:[%s0 + $0x58] sm:$0xff]
  %v27 = vld [vmem:[%s0 + $0x60] sm:$0xff]
  %v28 = vld [vmem:[%s0 + $0x68] sm:$0xff]
  %v29 = vld [vmem:[%s0 + $0x70] sm:$0xff]
  %v30 = vld [vmem:[%s0 + $0x78] sm:$0xff]
  %v31 = vld [vmem:[%s0 + $0x80] sm:$0xff]
  %v32 = vld [vmem:[%s0 + $0x88] sm:$0xff]
  %v33 = vld [vmem:[%s0 + $0x90] sm:$0xff]
  %v34 = vld [vmem:[%s0 + $0x98] sm:$0xff]
  %v35 = vld [vmem:[%s0 + $0xa0] sm:$0xff]
  %v36 = vld [vmem:[%s0 + $0xa8] sm:$0xff]
  %v37 = vld [vmem:[%s0 + $0xb0] sm:$0xff]
  %v38 = vld [vmem:[%s0 + $0xb8] sm:$0xff]
  %v39 = vld [vmem:[%s0 + $0xc0] sm:$0xff]
  %v40 = vld [vmem:[%s0 + $0xc8] sm:$0xff]
  %v41 = vld [vmem:[%s0 + $0xd0] sm:$0xff]
  %v42 = vld [vmem:[%s0 + $0xd8] sm:$0xff]
  %v43 = vld [vmem:[%s0 + $0xe0] sm:$0xff]
  %v44 = vld [vmem:[%s0 + $0xe8] sm:$0xff]
  %v45 = vld [vmem:[%s0 + $0xf0] sm:$0xff]
  %v46 = vld [vmem:[%s0 + $0xf8] sm:$0xff]
  %v47 = vld [vmem:[%s1] sm:$0xf]
  %v48 = vld [vmem:[%s1 + $0x4] sm:$0xf]
  %v49 = vld [vmem:[%s1 + $0x8] sm:$0xf]
  %v50 = vld [vmem:[%s1 + $0xc] sm:$0xf]
  %v51 = vld [vmem:[%s1 + $0x10] sm:$0xf]
  %v52 = vld [vmem:[%s1 + $0x14] sm:$0xf]
  %v53 = vld [vmem:[%s1 + $0x18] sm:$0xf]
  %v54 = vld [vmem:[%s1 + $0x1c] sm:$0xf]
  %v55 = vld [vmem:[%s1 + $0x20] sm:$0xf]
  %v56 = vld [vmem:[%s1 + $0x24] sm:$0xf]
  %v57 = vld [vmem:[%s1 + $0x28] sm:$0xf]
  %v58 = vld [vmem:[%s1 + $0x2c] sm:$0xf]
  %v59 = vld [vmem:[%s1 + $0x30] sm:$0xf]
  %v60 = vld [vmem:[%s1 + $0x34] sm:$0xf]
  %v61 = vld [vmem:[%s1 + $0x38] sm:$0xf]
  %v62 = vld [vmem:[%s1 + $0x3c] sm:$0xf]
  %v63 = vld [vmem:[%s1 + $0x40] sm:$0xf]
  %v64 = vld [vmem:[%s1 + $0x44] sm:$0xf]
  %v65 = vld [vmem:[%s1 + $0x48] sm:$0xf]
  %v66 = vld [vmem:[%s1 + $0x4c] sm:$0xf]
  %v67 = vld [vmem:[%s1 + $0x50] sm:$0xf]
  %v68 = vld [vmem:[%s1 + $0x54] sm:$0xf]
  %v69 = vld [vmem:[%s1 + $0x58] sm:$0xf]
  %v70 = vld [vmem:[%s1 + $0x5c] sm:$0xf]
  %v71 = vld [vmem:[%s1 + $0x60] sm:$0xf]
  %v72 = vld [vmem:[%s1 + $0x64] sm:$0xf]
  %v73 = vld [vmem:[%s1 + $0x68] sm:$0xf]
  %v74 = vld [vmem:[%s1 + $0x6c] sm:$0xf]
  %v75 = vld [vmem:[%s1 + $0x70] sm:$0xf]
  %v76 = vld [vmem:[%s1 + $0x74] sm:$0xf]
  %v77 = vld [vmem:[%s1 + $0x78] sm:$0xf]
  %v78 = vld [vmem:[%s1 + $0x7c] sm:$0xf]
  %v79 = vld [vmem:[%s1 + $0x80] sm:$0xf]
  %v80 = vld [vmem:[%s1 + $0x84] sm:$0xf]
  %v81 = vld [vmem:[%s1 + $0x88] sm:$0xf]
  %v82 = vld [vmem:[%s1 + $0x8c] sm:$0xf]
  %v83 = vld [vmem:[%s1 + $0x90] sm:$0xf]
  %v84 = vld [vmem:[%s1 + $0x94] sm:$0xf]
  %v85 = vld [vmem:[%s1 + $0x98] sm:$0xf]
  %v86 = vld [vmem:[%s1 + $0x9c] sm:$0xf]
  %v87 = vld [vmem:[%s1 + $0xa0] sm:$0xf]
  %v88 = vld [vmem:[%s1 + $0xa4] sm:$0xf]
  %v89 = vld [vmem:[%s1 + $0xa8] sm:$0xf]
  %v90 = vld [vmem:[%s1 + $0xac] sm:$0xf]
  %v91 = vld [vmem:[%s1 + $0xb0] sm:$0xf]
  %v92 = vld [vmem:[%s1 + $0xb4] sm:$0xf]
  %v93 = vld [vmem:[%s1 + $0xb8] sm:$0xf]
  %v94 = vld [vmem:[%s1 + $0xbc] sm:$0xf]
  %v95 = vld [vmem:[%s1 + $0xc0] sm:$0xf]
  %v96 = vld [vmem:[%s1 + $0xc4] sm:$0xf]
  %v97 = vld [vmem:[%s1 + $0xc8] sm:$0xf]
  %v98 = vld [vmem:[%s1 + $0xcc] sm:$0xf]
  %v99 = vld [vmem:[%s1 + $0xd0] sm:$0xf]
  %v100 = vld [vmem:[%s1 + $0xd4] sm:$0xf]
  %v101 = vld [vmem:[%s1 + $0xd8] sm:$0xf]
  %v102 = vld [vmem:[%s1 + $0xdc] sm:$0xf]
  %v103 = vld [vmem:[%s1 + $0xe0] sm:$0xf]
  %v104 = vld [vmem:[%s1 + $0xe4] sm:$0xf]
  %v105 = vld [vmem:[%s1 + $0xe8] sm:$0xf]
  %v106 = vld [vmem:[%s1 + $0xec] sm:$0xf]
  %v107 = vld [vmem:[%s1 + $0xf0] sm:$0xf]
  %v108 = vld [vmem:[%s1 + $0xf4] sm:$0xf]
  %v109 = vld [vmem:[%s1 + $0xf8] sm:$0xf]
  %v110 = vld [vmem:[%s1 + $0xfc] sm:$0xf]
  %v111 = vld [vmem:[%s2] sm:$0x1]
  %v113 = vlaneseq
  %v114 = vshrl.u32 %v113, 7
  %v115 = vsub.s32 0, %v114
  %v116 = vrot.slane %v111, %v115
  %v150 = vunpack.c.l.b16 %v15
  %v151 = vunpack.c.h.b16 %v15
  %v152 = vunpack.c.l.b16 %v16
  %v153 = vunpack.c.h.b16 %v16
  %v154 = vunpack.c.l.b16 %v17
  %v155 = vunpack.c.h.b16 %v17
  %v156 = vunpack.c.l.b16 %v18
  %v157 = vunpack.c.h.b16 %v18
  %v158 = vunpack.c.l.b16 %v19
  %v159 = vunpack.c.h.b16 %v19
  %v160 = vunpack.c.l.b16 %v20
  %v161 = vunpack.c.h.b16 %v20
  %v162 = vunpack.c.l.b16 %v21
  %v163 = vunpack.c.h.b16 %v21
  %v164 = vunpack.c.l.b16 %v22
  %v165 = vunpack.c.h.b16 %v22
  %v166 = vunpack.c.l.b16 %v23
  %v167 = vunpack.c.h.b16 %v23
  %v168 = vunpack.c.l.b16 %v24
  %v169 = vunpack.c.h.b16 %v24
  %v170 = vunpack.c.l.b16 %v25
  %v171 = vunpack.c.h.b16 %v25
  %v172 = vunpack.c.l.b16 %v26
  %v173 = vunpack.c.h.b16 %v26
  %v174 = vunpack.c.l.b16 %v27
  %v175 = vunpack.c.h.b16 %v27
  %v176 = vunpack.c.l.b16 %v28
  %v177 = vunpack.c.h.b16 %v28
  %v178 = vunpack.c.l.b16 %v29
  %v179 = vunpack.c.h.b16 %v29
  %v180 = vunpack.c.l.b16 %v30
  %v181 = vunpack.c.h.b16 %v30
  %v182 = vunpack.c.l.b16 %v31
  %v183 = vunpack.c.h.b16 %v31
  %v184 = vunpack.c.l.b16 %v32
  %v185 = vunpack.c.h.b16 %v32
  %v186 = vunpack.c.l.b16 %v33
  %v187 = vunpack.c.h.b16 %v33
  %v188 = vunpack.c.l.b16 %v34
  %v189 = vunpack.c.h.b16 %v34
  %v190 = vunpack.c.l.b16 %v35
  %v191 = vunpack.c.h.b16 %v35
  %v192 = vunpack.c.l.b16 %v36
  %v193 = vunpack.c.h.b16 %v36
  %v194 = vunpack.c.l.b16 %v37
  %v195 = vunpack.c.h.b16 %v37
  %v196 = vunpack.c.l.b16 %v38
  %v197 = vunpack.c.h.b16 %v38
  %v198 = vunpack.c.l.b16 %v39
  %v199 = vunpack.c.h.b16 %v39
  %v200 = vunpack.c.l.b16 %v40
  %v201 = vunpack.c.h.b16 %v40
  %v202 = vunpack.c.l.b16 %v41
  %v203 = vunpack.c.h.b16 %v41
  %v204 = vunpack.c.l.b16 %v42
  %v205 = vunpack.c.h.b16 %v42
  %v206 = vunpack.c.l.b16 %v43
  %v207 = vunpack.c.h.b16 %v43
  %v208 = vunpack.c.l.b16 %v44
  %v209 = vunpack.c.h.b16 %v44
  %v210 = vunpack.c.l.b16 %v45
  %v211 = vunpack.c.h.b16 %v45
  %v212 = vunpack.c.l.b16 %v46
  %v213 = vunpack.c.h.b16 %v46
  %v214 = vpack.c.b16 %v154, %v150
  %v215 = vpack.c.b16 %v155, %v151
  %v216 = vpack.c.b16 %v156, %v152
  %v217 = vpack.c.b16 %v157, %v153
  %v218 = vpack.c.b16 %v162, %v158
  %v219 = vpack.c.b16 %v163, %v159
  %v220 = vpack.c.b16 %v164, %v160
  %v221 = vpack.c.b16 %v165, %v161
  %v222 = vpack.c.b16 %v170, %v166
  %v223 = vpack.c.b16 %v171, %v167
  %v224 = vpack.c.b16 %v172, %v168
  %v225 = vpack.c.b16 %v173, %v169
  %v226 = vpack.c.b16 %v178, %v174
  %v227 = vpack.c.b16 %v179, %v175
  %v228 = vpack.c.b16 %v180, %v176
  %v229 = vpack.c.b16 %v181, %v177
  %v230 = vpack.c.b16 %v186, %v182
  %v231 = vpack.c.b16 %v187, %v183
  %v232 = vpack.c.b16 %v188, %v184
  %v233 = vpack.c.b16 %v189, %v185
  %v234 = vpack.c.b16 %v194, %v190
  %v235 = vpack.c.b16 %v195, %v191
  %v236 = vpack.c.b16 %v196, %v192
  %v237 = vpack.c.b16 %v197, %v193
  %v238 = vpack.c.b16 %v202, %v198
  %v239 = vpack.c.b16 %v203, %v199
  %v240 = vpack.c.b16 %v204, %v200
  %v241 = vpack.c.b16 %v205, %v201
  %v242 = vpack.c.b16 %v210, %v206
  %v243 = vpack.c.b16 %v211, %v207
  %v244 = vpack.c.b16 %v212, %v208
  %v245 = vpack.c.b16 %v213, %v209
  %v342 = vunpack.c.l.b16 %v47
  %v343 = vunpack.c.l.b16 %v48
  %v344 = vunpack.c.l.b16 %v49
  %v345 = vunpack.c.l.b16 %v50
  %v346 = vunpack.c.l.b16 %v51
  %v347 = vunpack.c.l.b16 %v52
  %v348 = vunpack.c.l.b16 %v53
  %v349 = vunpack.c.l.b16 %v54
  %v350 = vunpack.c.l.b16 %v55
  %v351 = vunpack.c.l.b16 %v56
  %v352 = vunpack.c.l.b16 %v57
  %v353 = vunpack.c.l.b16 %v58
  %v354 = vunpack.c.l.b16 %v59
  %v355 = vunpack.c.l.b16 %v60
  %v356 = vunpack.c.l.b16 %v61
  %v357 = vunpack.c.l.b16 %v62
  %v358 = vunpack.c.l.b16 %v63
  %v359 = vunpack.c.l.b16 %v64
  %v360 = vunpack.c.l.b16 %v65
  %v361 = vunpack.c.l.b16 %v66
  %v362 = vunpack.c.l.b16 %v67
  %v363 = vunpack.c.l.b16 %v68
  %v364 = vunpack.c.l.b16 %v69
  %v365 = vunpack.c.l.b16 %v70
  %v366 = vunpack.c.l.b16 %v71
  %v367 = vunpack.c.l.b16 %v72
  %v368 = vunpack.c.l.b16 %v73
  %v369 = vunpack.c.l.b16 %v74
  %v370 = vunpack.c.l.b16 %v75
  %v371 = vunpack.c.l.b16 %v76
  %v372 = vunpack.c.l.b16 %v77
  %v373 = vunpack.c.l.b16 %v78
  %v374 = vunpack.c.l.b16 %v79
  %v375 = vunpack.c.l.b16 %v80
  %v376 = vunpack.c.l.b16 %v81
  %v377 = vunpack.c.l.b16 %v82
  %v378 = vunpack.c.l.b16 %v83
  %v379 = vunpack.c.l.b16 %v84
  %v380 = vunpack.c.l.b16 %v85
  %v381 = vunpack.c.l.b16 %v86
  %v382 = vunpack.c.l.b16 %v87
  %v383 = vunpack.c.l.b16 %v88
  %v384 = vunpack.c.l.b16 %v89
  %v385 = vunpack.c.l.b16 %v90
  %v386 = vunpack.c.l.b16 %v91
  %v387 = vunpack.c.l.b16 %v92
  %v388 = vunpack.c.l.b16 %v93
  %v389 = vunpack.c.l.b16 %v94
  %v390 = vunpack.c.l.b16 %v95
  %v391 = vunpack.c.l.b16 %v96
  %v392 = vunpack.c.l.b16 %v97
  %v393 = vunpack.c.l.b16 %v98
  %v394 = vunpack.c.l.b16 %v99
  %v395 = vunpack.c.l.b16 %v100
  %v396 = vunpack.c.l.b16 %v101
  %v397 = vunpack.c.l.b16 %v102
  %v398 = vunpack.c.l.b16 %v103
  %v399 = vunpack.c.l.b16 %v104
  %v400 = vunpack.c.l.b16 %v105
  %v401 = vunpack.c.l.b16 %v106
  %v402 = vunpack.c.l.b16 %v107
  %v403 = vunpack.c.l.b16 %v108
  %v404 = vunpack.c.l.b16 %v109
  %v405 = vunpack.c.l.b16 %v110
  %v406 = vpack.c.b16 %v343, %v342
  %v407 = vpack.c.b16 %v345, %v344
  %v408 = vpack.c.b16 %v347, %v346
  %v409 = vpack.c.b16 %v349, %v348
  %v410 = vpack.c.b16 %v351, %v350
  %v411 = vpack.c.b16 %v353, %v352
  %v412 = vpack.c.b16 %v355, %v354
  %v413 = vpack.c.b16 %v357, %v356
  %v414 = vpack.c.b16 %v359, %v358
  %v415 = vpack.c.b16 %v361, %v360
  %v416 = vpack.c.b16 %v363, %v362
  %v417 = vpack.c.b16 %v365, %v364
  %v418 = vpack.c.b16 %v367, %v366
  %v419 = vpack.c.b16 %v369, %v368
  %v420 = vpack.c.b16 %v371, %v370
  %v421 = vpack.c.b16 %v373, %v372
  %v422 = vpack.c.b16 %v375, %v374
  %v423 = vpack.c.b16 %v377, %v376
  %v424 = vpack.c.b16 %v379, %v378
  %v425 = vpack.c.b16 %v381, %v380
  %v426 = vpack.c.b16 %v383, %v382
  %v427 = vpack.c.b16 %v385, %v384
  %v428 = vpack.c.b16 %v387, %v386
  %v429 = vpack.c.b16 %v389, %v388
  %v430 = vpack.c.b16 %v391, %v390
  %v431 = vpack.c.b16 %v393, %v392
  %v432 = vpack.c.b16 %v395, %v394
  %v433 = vpack.c.b16 %v397, %v396
  %v434 = vpack.c.b16 %v399, %v398
  %v435 = vpack.c.b16 %v401, %v400
  %v436 = vpack.c.b16 %v403, %v402
  %v437 = vpack.c.b16 %v405, %v404
  %470 = vmatprep.subr.bf16.mxu0 0
  %471 = vmatpush1.bf16.msra.mxu0 %v406
  %472 = vmatprep.subr.bf16.mxu0 0
  %473 = vmatpush1.bf16.msra.mxu0 %v407
  %474 = vmatprep.subr.bf16.mxu0 0
  %475 = vmatpush1.bf16.msra.mxu0 %v408
  %476 = vmatprep.subr.bf16.mxu0 0
  %477 = vmatpush1.bf16.msra.mxu0 %v409
  %478 = vmatprep.subr.bf16.mxu0 0
  %479 = vmatpush1.bf16.msra.mxu0 %v410
  %480 = vmatprep.subr.bf16.mxu0 0
  %481 = vmatpush1.bf16.msra.mxu0 %v411
  %482 = vmatprep.subr.bf16.mxu0 0
  %483 = vmatpush1.bf16.msra.mxu0 %v412
  %484 = vmatprep.subr.bf16.mxu0 0
  %485 = vmatpush1.bf16.msra.mxu0 %v413
  %486 = vmatprep.subr.bf16.mxu0 0
  %487 = vmatpush1.bf16.msra.mxu0 %v414
  %488 = vmatprep.subr.bf16.mxu0 0
  %489 = vmatpush1.bf16.msra.mxu0 %v415
  %490 = vmatprep.subr.bf16.mxu0 0
  %491 = vmatpush1.bf16.msra.mxu0 %v416
  %492 = vmatprep.subr.bf16.mxu0 0
  %493 = vmatpush1.bf16.msra.mxu0 %v417
  %494 = vmatprep.subr.bf16.mxu0 0
  %495 = vmatpush1.bf16.msra.mxu0 %v418
  %496 = vmatprep.subr.bf16.mxu0 0
  %497 = vmatpush1.bf16.msra.mxu0 %v419
  %498 = vmatprep.subr.bf16.mxu0 0
  %499 = vmatpush1.bf16.msra.mxu0 %v420
  %500 = vmatprep.subr.bf16.mxu0 0
  %501 = vmatpush1.bf16.msra.mxu0 %v421
  %502 = vmatprep.mubr.bf16.mxu0 %v215
  %503 = vmatmul.mubr.bf16.gmra.mrb[0].mxu0 %v214
  %v504 = vpop.f32.mrb[0].mxu0
  %v505 = vadd.f32 %v116, %v504
  %v506 = vpop.f32.mrb[0].mxu0
  %v507 = vpop.f32.mrb[0].mxu0
  %v508 = vadd.f32 %v116, %v507
  %v509 = vpop.f32.mrb[0].mxu0
  %510 = vmatprep.mubr.bf16.mxu0 %v219
  %511 = vmatmul.mubr.bf16.gmra.mrb[0].mxu0 %v218
  %v512 = vpop.f32.mrb[0].mxu0
  %v513 = vadd.f32 %v116, %v512
  %v514 = vpop.f32.mrb[0].mxu0
  %v515 = vpop.f32.mrb[0].mxu0
  %v516 = vadd.f32 %v116, %v515
  %v517 = vpop.f32.mrb[0].mxu0
  %518 = vmatprep.mubr.bf16.mxu0 %v223
  %519 = vmatmul.mubr.bf16.gmra.mrb[0].mxu0 %v222
  %v520 = vpop.f32.mrb[0].mxu0
  %v521 = vadd.f32 %v116, %v520
  %v522 = vpop.f32.mrb[0].mxu0
  %v523 = vpop.f32.mrb[0].mxu0
  %v524 = vadd.f32 %v116, %v523
  %v525 = vpop.f32.mrb[0].mxu0
  %526 = vmatprep.mubr.bf16.mxu0 %v227
  %527 = vmatmul.mubr.bf16.gmra.mrb[0].mxu0 %v226
  %v528 = vpop.f32.mrb[0].mxu0
  %v529 = vadd.f32 %v116, %v528
  %v530 = vpop.f32.mrb[0].mxu0
  %v531 = vpop.f32.mrb[0].mxu0
  %v532 = vadd.f32 %v116, %v531
  %v533 = vpop.f32.mrb[0].mxu0
  %534 = vmatprep.mubr.bf16.mxu0 %v231
  %535 = vmatmul.mubr.bf16.gmra.mrb[0].mxu0 %v230
  %v536 = vpop.f32.mrb[0].mxu0
  %v537 = vadd.f32 %v116, %v536
  %v538 = vpop.f32.mrb[0].mxu0
  %v539 = vpop.f32.mrb[0].mxu0
  %v540 = vadd.f32 %v116, %v539
  %v541 = vpop.f32.mrb[0].mxu0
  %542 = vmatprep.mubr.bf16.mxu0 %v235
  %543 = vmatmul.mubr.bf16.gmra.mrb[0].mxu0 %v234
  %v544 = vpop.f32.mrb[0].mxu0
  %v545 = vadd.f32 %v116, %v544
  %v546 = vpop.f32.mrb[0].mxu0
  %v547 = vpop.f32.mrb[0].mxu0
  %v548 = vadd.f32 %v116, %v547
  %v549 = vpop.f32.mrb[0].mxu0
  %550 = vmatprep.mubr.bf16.mxu0 %v239
  %551 = vmatmul.mubr.bf16.gmra.mrb[0].mxu0 %v238
  %v552 = vpop.f32.mrb[0].mxu0
  %v553 = vadd.f32 %v116, %v552
  %v554 = vpop.f32.mrb[0].mxu0
  %v555 = vpop.f32.mrb[0].mxu0
  %v556 = vadd.f32 %v116, %v555
  %v557 = vpop.f32.mrb[0].mxu0
  %558 = vmatprep.mubr.bf16.mxu0 %v243
  %559 = vmatmul.mubr.bf16.gmra.mrb[0].mxu0 %v242
  %v560 = vpop.f32.mrb[0].mxu0
  %v561 = vadd.f32 %v116, %v560
  %v562 = vpop.f32.mrb[0].mxu0
  %v563 = vpop.f32.mrb[0].mxu0
  %v564 = vadd.f32 %v116, %v563
  %v565 = vpop.f32.mrb[0].mxu0
  %566 = vdwg.mxu0
  %567 = vmatprep.subr.bf16.mxu0 0
  %568 = vmatpush1.bf16.msra.mxu0 %v422
  %569 = vmatprep.subr.bf16.mxu0 0
  %570 = vmatpush1.bf16.msra.mxu0 %v423
  %571 = vmatprep.subr.bf16.mxu0 0
  %572 = vmatpush1.bf16.msra.mxu0 %v424
  %573 = vmatprep.subr.bf16.mxu0 0
  %574 = vmatpush1.bf16.msra.mxu0 %v425
  %575 = vmatprep.subr.bf16.mxu0 0
  %576 = vmatpush1.bf16.msra.mxu0 %v426
  %577 = vmatprep.subr.bf16.mxu0 0
  %578 = vmatpush1.bf16.msra.mxu0 %v427
  %579 = vmatprep.subr.bf16.mxu0 0
  %580 = vmatpush1.bf16.msra.mxu0 %v428
  %581 = vmatprep.subr.bf16.mxu0 0
  %582 = vmatpush1.bf16.msra.mxu0 %v429
  %583 = vmatprep.subr.bf16.mxu0 0
  %584 = vmatpush1.bf16.msra.mxu0 %v430
  %585 = vmatprep.subr.bf16.mxu0 0
  %586 = vmatpush1.bf16.msra.mxu0 %v431
  %587 = vmatprep.subr.bf16.mxu0 0
  %588 = vmatpush1.bf16.msra.mxu0 %v432
  %589 = vmatprep.subr.bf16.mxu0 0
  %590 = vmatpush1.bf16.msra.mxu0 %v433
  %591 = vmatprep.subr.bf16.mxu0 0
  %592 = vmatpush1.bf16.msra.mxu0 %v434
  %593 = vmatprep.subr.bf16.mxu0 0
  %594 = vmatpush1.bf16.msra.mxu0 %v435
  %595 = vmatprep.subr.bf16.mxu0 0
  %596 = vmatpush1.bf16.msra.mxu0 %v436
  %597 = vmatprep.subr.bf16.mxu0 0
  %598 = vmatpush1.bf16.msra.mxu0 %v437
  %599 = vmatprep.mubr.bf16.mxu0 %v217
  %600 = vmatmul.mubr.bf16.gmra.mrb[0].mxu0 %v216
  %v601 = vpop.f32.mrb[0].mxu0
  %v602 = vadd.f32 %v505, %v601
  %v603 = vpop.f32.mrb[0].mxu0
  %v604 = vpop.f32.mrb[0].mxu0
  %v605 = vadd.f32 %v508, %v604
  %v606 = vpop.f32.mrb[0].mxu0
  %607 = vmatprep.mubr.bf16.mxu0 %v221
  %608 = vmatmul.mubr.bf16.gmra.mrb[0].mxu0 %v220
  %v609 = vpop.f32.mrb[0].mxu0
  %v610 = vadd.f32 %v513, %v609
  %v611 = vpop.f32.mrb[0].mxu0
  %v612 = vpop.f32.mrb[0].mxu0
  %v613 = vadd.f32 %v516, %v612
  %v614 = vpop.f32.mrb[0].mxu0
  %615 = vmatprep.mubr.bf16.mxu0 %v225
  %616 = vmatmul.mubr.bf16.gmra.mrb[0].mxu0 %v224
  %v617 = vpop.f32.mrb[0].mxu0
  %v618 = vadd.f32 %v521, %v617
  %v619 = vpop.f32.mrb[0].mxu0
  %v620 = vpop.f32.mrb[0].mxu0
  %v621 = vadd.f32 %v524, %v620
  %v622 = vpop.f32.mrb[0].mxu0
  %623 = vmatprep.mubr.bf16.mxu0 %v229
  %624 = vmatmul.mubr.bf16.gmra.mrb[0].mxu0 %v228
  %v625 = vpop.f32.mrb[0].mxu0
  %v626 = vadd.f32 %v529, %v625
  %v627 = vpop.f32.mrb[0].mxu0
  %v628 = vpop.f32.mrb[0].mxu0
  %v629 = vadd.f32 %v532, %v628
  %v630 = vpop.f32.mrb[0].mxu0
  %631 = vmatprep.mubr.bf16.mxu0 %v233
  %632 = vmatmul.mubr.bf16.gmra.mrb[0].mxu0 %v232
  %v633 = vpop.f32.mrb[0].mxu0
  %v634 = vadd.f32 %v537, %v633
  %v635 = vpop.f32.mrb[0].mxu0
  %v636 = vpop.f32.mrb[0].mxu0
  %v637 = vadd.f32 %v540, %v636
  %v638 = vpop.f32.mrb[0].mxu0
  %639 = vmatprep.mubr.bf16.mxu0 %v237
  %640 = vmatmul.mubr.bf16.gmra.mrb[0].mxu0 %v236
  %v641 = vpop.f32.mrb[0].mxu0
  %v642 = vadd.f32 %v545, %v641
  %v643 = vpop.f32.mrb[0].mxu0
  %v644 = vpop.f32.mrb[0].mxu0
  %v645 = vadd.f32 %v548, %v644
  %v646 = vpop.f32.mrb[0].mxu0
  %647 = vmatprep.mubr.bf16.mxu0 %v241
  %648 = vmatmul.mubr.bf16.gmra.mrb[0].mxu0 %v240
  %v649 = vpop.f32.mrb[0].mxu0
  %v650 = vadd.f32 %v553, %v649
  %v651 = vpop.f32.mrb[0].mxu0
  %v652 = vpop.f32.mrb[0].mxu0
  %v653 = vadd.f32 %v556, %v652
  %v654 = vpop.f32.mrb[0].mxu0
  %655 = vmatprep.mubr.bf16.mxu0 %v245
  %656 = vmatmul.mubr.bf16.gmra.mrb[0].mxu0 %v244
  %v657 = vpop.f32.mrb[0].mxu0
  %v658 = vadd.f32 %v561, %v657
  %v659 = vpop.f32.mrb[0].mxu0
  %v660 = vpop.f32.mrb[0].mxu0
  %v661 = vadd.f32 %v564, %v660
  %v662 = vpop.f32.mrb[0].mxu0
  %663 = vdwg.mxu0
  %vm664 = vcmp.ge.f32.partialorder %v602, 0.0
  %vm665 = vcmp.ge.f32.partialorder %v605, 0.0
  %vm666 = vcmp.ge.f32.partialorder %v610, 0.0
  %vm667 = vcmp.ge.f32.partialorder %v613, 0.0
  %vm668 = vcmp.ge.f32.partialorder %v618, 0.0
  %vm669 = vcmp.ge.f32.partialorder %v621, 0.0
  %vm670 = vcmp.ge.f32.partialorder %v626, 0.0
  %vm671 = vcmp.ge.f32.partialorder %v629, 0.0
  %vm672 = vcmp.ge.f32.partialorder %v634, 0.0
  %vm673 = vcmp.ge.f32.partialorder %v637, 0.0
  %vm674 = vcmp.ge.f32.partialorder %v642, 0.0
  %vm675 = vcmp.ge.f32.partialorder %v645, 0.0
  %vm676 = vcmp.ge.f32.partialorder %v650, 0.0
  %vm677 = vcmp.ge.f32.partialorder %v653, 0.0
  %vm678 = vcmp.ge.f32.partialorder %v658, 0.0
  %vm679 = vcmp.ge.f32.partialorder %v661, 0.0
  %v680 = vmul.f32 %v602, 0.05
  %v681 = vmul.f32 %v605, 0.05
  %v682 = vmul.f32 %v610, 0.05
  %v683 = vmul.f32 %v613, 0.05
  %v684 = vmul.f32 %v618, 0.05
  %v685 = vmul.f32 %v621, 0.05
  %v686 = vmul.f32 %v626, 0.05
  %v687 = vmul.f32 %v629, 0.05
  %v688 = vmul.f32 %v634, 0.05
  %v689 = vmul.f32 %v637, 0.05
  %v690 = vmul.f32 %v642, 0.05
  %v691 = vmul.f32 %v645, 0.05
  %v692 = vmul.f32 %v650, 0.05
  %v693 = vmul.f32 %v653, 0.05
  %v694 = vmul.f32 %v658, 0.05
  %v695 = vmul.f32 %v661, 0.05
  %v696 = vsel %vm664, %v602, %v680
  %v697 = vsel %vm665, %v605, %v681
  %v698 = vsel %vm666, %v610, %v682
  %v699 = vsel %vm667, %v613, %v683
  %v700 = vsel %vm668, %v618, %v684
  %v701 = vsel %vm669, %v621, %v685
  %v702 = vsel %vm670, %v626, %v686
  %v703 = vsel %vm671, %v629, %v687
  %v704 = vsel %vm672, %v634, %v688
  %v705 = vsel %vm673, %v637, %v689
  %v706 = vsel %vm674, %v642, %v690
  %v707 = vsel %vm675, %v645, %v691
  %v708 = vsel %vm676, %v650, %v692
  %v709 = vsel %vm677, %v653, %v693
  %v710 = vsel %vm678, %v658, %v694
  %v711 = vsel %vm679, %v661, %v695
  %v712 = vpack.c.bf16 %v697, %v696
  %v713 = vpack.c.bf16 %v699, %v698
  %v714 = vpack.c.bf16 %v701, %v700
  %v715 = vpack.c.bf16 %v703, %v702
  %v716 = vpack.c.bf16 %v705, %v704
  %v717 = vpack.c.bf16 %v707, %v706
  %v718 = vpack.c.bf16 %v709, %v708
  %v719 = vpack.c.bf16 %v711, %v710
  %v728 = vunpack.c.l.b16 %v712
  %v729 = vunpack.c.h.b16 %v712
  %v730 = vunpack.c.l.b16 %v713
  %v731 = vunpack.c.h.b16 %v713
  %v732 = vunpack.c.l.b16 %v714
  %v733 = vunpack.c.h.b16 %v714
  %v734 = vunpack.c.l.b16 %v715
  %v735 = vunpack.c.h.b16 %v715
  %v736 = vunpack.c.l.b16 %v716
  %v737 = vunpack.c.h.b16 %v716
  %v738 = vunpack.c.l.b16 %v717
  %v739 = vunpack.c.h.b16 %v717
  %v740 = vunpack.c.l.b16 %v718
  %v741 = vunpack.c.h.b16 %v718
  %v742 = vunpack.c.l.b16 %v719
  %v743 = vunpack.c.h.b16 %v719
  %v744 = vpack.c.b16 %v728, %v728
  %v745 = vpack.c.b16 %v729, %v729
  %v746 = vpack.c.b16 %v730, %v730
  %v747 = vpack.c.b16 %v731, %v731
  %v748 = vpack.c.b16 %v732, %v732
  %v749 = vpack.c.b16 %v733, %v733
  %v750 = vpack.c.b16 %v734, %v734
  %v751 = vpack.c.b16 %v735, %v735
  %v752 = vpack.c.b16 %v736, %v736
  %v753 = vpack.c.b16 %v737, %v737
  %v754 = vpack.c.b16 %v738, %v738
  %v755 = vpack.c.b16 %v739, %v739
  %v756 = vpack.c.b16 %v740, %v740
  %v757 = vpack.c.b16 %v741, %v741
  %v758 = vpack.c.b16 %v742, %v742
  %v759 = vpack.c.b16 %v743, %v743
  %776 = vst [vmem:[%s3] sm:$0xf] %v744
  %777 = vst [vmem:[%s3 + $0x4] sm:$0xf] %v745
  %778 = vst [vmem:[%s3 + $0x8] sm:$0xf] %v746
  %779 = vst [vmem:[%s3 + $0xc] sm:$0xf] %v747
  %780 = vst [vmem:[%s3 + $0x10] sm:$0xf] %v748
  %781 = vst [vmem:[%s3 + $0x14] sm:$0xf] %v749
  %782 = vst [vmem:[%s3 + $0x18] sm:$0xf] %v750
  %783 = vst [vmem:[%s3 + $0x1c] sm:$0xf] %v751
  %784 = vst [vmem:[%s3 + $0x20] sm:$0xf] %v752
  %785 = vst [vmem:[%s3 + $0x24] sm:$0xf] %v753
  %786 = vst [vmem:[%s3 + $0x28] sm:$0xf] %v754
  %787 = vst [vmem:[%s3 + $0x2c] sm:$0xf] %v755
  %788 = vst [vmem:[%s3 + $0x30] sm:$0xf] %v756
  %789 = vst [vmem:[%s3 + $0x34] sm:$0xf] %v757
  %790 = vst [vmem:[%s3 + $0x38] sm:$0xf] %v758
  %791 = vst [vmem:[%s3 + $0x3c] sm:$0xf] %v759
  // Predicated region
  $region14: #{generator_forward.8} parent=0 // pred_check
    _
  $region15: #{generator_forward.8} parent=0 // pred_check_branch
    %793 = sbr.rel (0) target = $region17
  $region16: #{generator_forward.8} parent=0 // pred_region
    _
  $region17: #{generator_forward.8} parent=0 // pred_fallthru
    _
  // Predicated region
  $region18: #{generator_forward.8} parent=0 // pred_check
    _
  $region19: #{generator_forward.8} parent=0 // pred_check_branch
    %795 = sbr.rel (0) target = $region21
  $region20: #{generator_forward.8} parent=0 // pred_region
    _
  $region21: #{generator_forward.8} parent=0 // pred_fallthru
    _

// kernel: generator_forward.9
$region0: #{generator_forward.9}
  #allocation0 [shape = 'u32[]', space=smem, size = 0x4, offset = 0x4, fixed_abs, tag = 'smem constant byte address 0x4 - core index']
  #allocation1 [shape = 'u32[144,128]{1,0:T(1,128)}', space=vmem, size = 0x12000, scoped, tag = 'internal scratch']
  %s0 = inlined_call_operand.vmem [shape: bf16[32,896], index: 0, kind: input, shape index: {}]
  %s1 = inlined_call_operand.vmem [shape: bf16[896,128], index: 1, kind: input, shape index: {}]
  %s2 = inlined_call_operand.vmem [shape: f32[1,128], index: 2, kind: input, shape index: {}]
  %s3 = inlined_call_operand.vmem [shape: bf16[32,128], index: 3, kind: output, shape index: {}]
  %s4 = sld [smem:[#allocation0]]
  $region22: #{generator_forward.9} parent=0
    _
  %s6 = ssub.s32 1, %s4
  %s7 = scalar_select 0, %s6, %s4
  // Predicated region
  $region2: #{generator_forward.9} parent=0 // pred_check
    _
  $region3: #{generator_forward.9} parent=0 // pred_check_branch
    %9 = sbr.rel (0) target = $region5
  $region4: #{generator_forward.9} parent=0 // pred_region
    _
  $region5: #{generator_forward.9} parent=0 // pred_fallthru
    _
  // Predicated region
  $region6: #{generator_forward.9} parent=0 // pred_check
    _
  $region7: #{generator_forward.9} parent=0 // pred_check_branch
    %11 = sbr.rel (0) target = $region9
  $region8: #{generator_forward.9} parent=0 // pred_region
    _
  $region9: #{generator_forward.9} parent=0 // pred_fallthru
    _
  // Predicated region
  $region10: #{generator_forward.9} parent=0 // pred_check
    _
  $region11: #{generator_forward.9} parent=0 // pred_check_branch
    %13 = sbr.rel (0) target = $region13
  $region12: #{generator_forward.9} parent=0 // pred_region
    _
  $region13: #{generator_forward.9} parent=0 // pred_fallthru
    _
  %v15 = vld [vmem:[%s0] sm:$0xff]
  %v16 = vld [vmem:[%s0 + $0x8] sm:$0xff]
  %v17 = vld [vmem:[%s0 + $0x10] sm:$0xff]
  %v18 = vld [vmem:[%s0 + $0x18] sm:$0xf]
  %v19 = vld [vmem:[%s0 + $0x1c] sm:$0xff]
  %v20 = vld [vmem:[%s0 + $0x24] sm:$0xff]
  %v21 = vld [vmem:[%s0 + $0x2c] sm:$0xff]
  %v22 = vld [vmem:[%s0 + $0x34] sm:$0xf]
  %v23 = vld [vmem:[%s0 + $0x38] sm:$0xff]
  %v24 = vld [vmem:[%s0 + $0x40] sm:$0xff]
  %v25 = vld [vmem:[%s0 + $0x48] sm:$0xff]
  %v26 = vld [vmem:[%s0 + $0x50] sm:$0xf]
  %v27 = vld [vmem:[%s0 + $0x54] sm:$0xff]
  %v28 = vld [vmem:[%s0 + $0x5c] sm:$0xff]
  %v29 = vld [vmem:[%s0 + $0x64] sm:$0xff]
  %v30 = vld [vmem:[%s0 + $0x6c] sm:$0xf]
  %v31 = vld [vmem:[%s1] sm:$0xf]
  %v32 = vld [vmem:[%s1 + $0x4] sm:$0xf]
  %v33 = vld [vmem:[%s1 + $0x8] sm:$0xf]
  %v34 = vld [vmem:[%s1 + $0xc] sm:$0xf]
  %v35 = vld [vmem:[%s1 + $0x10] sm:$0xf]
  %v36 = vld [vmem:[%s1 + $0x14] sm:$0xf]
  %v37 = vld [vmem:[%s1 + $0x18] sm:$0xf]
  %v38 = vld [vmem:[%s1 + $0x1c] sm:$0xf]
  %v39 = vld [vmem:[%s1 + $0x20] sm:$0xf]
  %v40 = vld [vmem:[%s1 + $0x24] sm:$0xf]
  %v41 = vld [vmem:[%s1 + $0x28] sm:$0xf]
  %v42 = vld [vmem:[%s1 + $0x2c] sm:$0xf]
  %v43 = vld [vmem:[%s1 + $0x30] sm:$0xf]
  %v44 = vld [vmem:[%s1 + $0x34] sm:$0xf]
  %v45 = vld [vmem:[%s1 + $0x38] sm:$0xf]
  %v46 = vld [vmem:[%s1 + $0x3c] sm:$0xf]
  %v47 = vld [vmem:[%s1 + $0x40] sm:$0xf]
  %v48 = vld [vmem:[%s1 + $0x44] sm:$0xf]
  %v49 = vld [vmem:[%s1 + $0x48] sm:$0xf]
  %v50 = vld [vmem:[%s1 + $0x4c] sm:$0xf]
  %v51 = vld [vmem:[%s1 + $0x50] sm:$0xf]
  %v52 = vld [vmem:[%s1 + $0x54] sm:$0xf]
  %v53 = vld [vmem:[%s1 + $0x58] sm:$0xf]
  %v54 = vld [vmem:[%s1 + $0x5c] sm:$0xf]
  %v55 = vld [vmem:[%s1 + $0x60] sm:$0xf]
  %v56 = vld [vmem:[%s1 + $0x64] sm:$0xf]
  %v57 = vld [vmem:[%s1 + $0x68] sm:$0xf]
  %v58 = vld [vmem:[%s1 + $0x6c] sm:$0xf]
  %v59 = vld [vmem:[%s1 + $0x70] sm:$0xf]
  %v60 = vld [vmem:[%s1 + $0x74] sm:$0xf]
  %v61 = vld [vmem:[%s1 + $0x78] sm:$0xf]
  %v62 = vld [vmem:[%s1 + $0x7c] sm:$0xf]
  %v63 = vld [vmem:[%s1 + $0x80] sm:$0xf]
  %v64 = vld [vmem:[%s1 + $0x84] sm:$0xf]
  %v65 = vld [vmem:[%s1 + $0x88] sm:$0xf]
  %v66 = vld [vmem:[%s1 + $0x8c] sm:$0xf]
  %v67 = vld [vmem:[%s1 + $0x90] sm:$0xf]
  %v68 = vld [vmem:[%s1 + $0x94] sm:$0xf]
  %v69 = vld [vmem:[%s1 + $0x98] sm:$0xf]
  %v70 = vld [vmem:[%s1 + $0x9c] sm:$0xf]
  %v71 = vld [vmem:[%s1 + $0xa0] sm:$0xf]
  %v72 = vld [vmem:[%s1 + $0xa4] sm:$0xf]
  %v73 = vld [vmem:[%s1 + $0xa8] sm:$0xf]
  %v74 = vld [vmem:[%s1 + $0xac] sm:$0xf]
  %v75 = vld [vmem:[%s1 + $0xb0] sm:$0xf]
  %v76 = vld [vmem:[%s1 + $0xb4] sm:$0xf]
  %v77 = vld [vmem:[%s1 + $0xb8] sm:$0xf]
  %v78 = vld [vmem:[%s1 + $0xbc] sm:$0xf]
  %v79 = vld [vmem:[%s1 + $0xc0] sm:$0xf]
  %v80 = vld [vmem:[%s1 + $0xc4] sm:$0xf]
  %v81 = vld [vmem:[%s1 + $0xc8] sm:$0xf]
  %v82 = vld [vmem:[%s1 + $0xcc] sm:$0xf]
  %v83 = vld [vmem:[%s1 + $0xd0] sm:$0xf]
  %v84 = vld [vmem:[%s1 + $0xd4] sm:$0xf]
  %v85 = vld [vmem:[%s1 + $0xd8] sm:$0xf]
  %v86 = vld [vmem:[%s1 + $0xdc] sm:$0xf]
  %v87 = vld [vmem:[%s1 + $0xe0] sm:$0xf]
  %v88 = vld [vmem:[%s1 + $0xe4] sm:$0xf]
  %v89 = vld [vmem:[%s1 + $0xe8] sm:$0xf]
  %v90 = vld [vmem:[%s1 + $0xec] sm:$0xf]
  %v91 = vld [vmem:[%s1 + $0xf0] sm:$0xf]
  %v92 = vld [vmem:[%s1 + $0xf4] sm:$0xf]
  %v93 = vld [vmem:[%s1 + $0xf8] sm:$0xf]
  %v94 = vld [vmem:[%s1 + $0xfc] sm:$0xf]
  %v95 = vld [vmem:[%s1 + $0x100] sm:$0xf]
  %v96 = vld [vmem:[%s1 + $0x104] sm:$0xf]
  %v97 = vld [vmem:[%s1 + $0x108] sm:$0xf]
  %v98 = vld [vmem:[%s1 + $0x10c] sm:$0xf]
  %v99 = vld [vmem:[%s1 + $0x110] sm:$0xf]
  %v100 = vld [vmem:[%s1 + $0x114] sm:$0xf]
  %v101 = vld [vmem:[%s1 + $0x118] sm:$0xf]
  %v102 = vld [vmem:[%s1 + $0x11c] sm:$0xf]
  %v103 = vld [vmem:[%s1 + $0x120] sm:$0xf]
  %v104 = vld [vmem:[%s1 + $0x124] sm:$0xf]
  %v105 = vld [vmem:[%s1 + $0x128] sm:$0xf]
  %v106 = vld [vmem:[%s1 + $0x12c] sm:$0xf]
  %v107 = vld [vmem:[%s1 + $0x130] sm:$0xf]
  %v108 = vld [vmem:[%s1 + $0x134] sm:$0xf]
  %v109 = vld [vmem:[%s1 + $0x138] sm:$0xf]
  %v110 = vld [vmem:[%s1 + $0x13c] sm:$0xf]
  %v111 = vld [vmem:[%s1 + $0x140] sm:$0xf]
  %v112 = vld [vmem:[%s1 + $0x144] sm:$0xf]
  %v113 = vld [vmem:[%s1 + $0x148] sm:$0xf]
  %v114 = vld [vmem:[%s1 + $0x14c] sm:$0xf]
  %v115 = vld [vmem:[%s1 + $0x150] sm:$0xf]
  %v116 = vld [vmem:[%s1 + $0x154] sm:$0xf]
  %v117 = vld [vmem:[%s1 + $0x158] sm:$0xf]
  %v118 = vld [vmem:[%s1 + $0x15c] sm:$0xf]
  %v119 = vld [vmem:[%s1 + $0x160] sm:$0xf]
  %v120 = vld [vmem:[%s1 + $0x164] sm:$0xf]
  %v121 = vld [vmem:[%s1 + $0x168] sm:$0xf]
  %v122 = vld [vmem:[%s1 + $0x16c] sm:$0xf]
  %v123 = vld [vmem:[%s1 + $0x170] sm:$0xf]
  %v124 = vld [vmem:[%s1 + $0x174] sm:$0xf]
  %v125 = vld [vmem:[%s1 + $0x178] sm:$0xf]
  %v126 = vld [vmem:[%s1 + $0x17c] sm:$0xf]
  %v127 = vld [vmem:[%s1 + $0x180] sm:$0xf]
  %v128 = vld [vmem:[%s1 + $0x184] sm:$0xf]
  %v129 = vld [vmem:[%s1 + $0x188] sm:$0xf]
  %v130 = vld [vmem:[%s1 + $0x18c] sm:$0xf]
  %v131 = vld [vmem:[%s1 + $0x190] sm:$0xf]
  %v132 = vld [vmem:[%s1 + $0x194] sm:$0xf]
  %v133 = vld [vmem:[%s1 + $0x198] sm:$0xf]
  %v134 = vld [vmem:[%s1 + $0x19c] sm:$0xf]
  %v135 = vld [vmem:[%s1 + $0x1a0] sm:$0xf]
  %v136 = vld [vmem:[%s1 + $0x1a4] sm:$0xf]
  %v137 = vld [vmem:[%s1 + $0x1a8] sm:$0xf]
  %v138 = vld [vmem:[%s1 + $0x1ac] sm:$0xf]
  %v139 = vld [vmem:[%s1 + $0x1b0] sm:$0xf]
  %v140 = vld [vmem:[%s1 + $0x1b4] sm:$0xf]
  %v141 = vld [vmem:[%s1 + $0x1b8] sm:$0xf]
  %v142 = vld [vmem:[%s1 + $0x1bc] sm:$0xf]
  %v143 = vld [vmem:[%s2] sm:$0x1]
  %v145 = vlaneseq
  %v146 = vshrl.u32 %v145, 7
  %v147 = vsub.s32 0, %v146
  %v148 = vrot.slane %v143, %v147
  %v166 = vunpack.c.l.b16 %v15
  %v167 = vunpack.c.h.b16 %v15
  %v168 = vunpack.c.l.b16 %v16
  %v169 = vunpack.c.h.b16 %v16
  %v170 = vunpack.c.l.b16 %v17
  %v171 = vunpack.c.h.b16 %v17
  %v172 = vunpack.c.l.b16 %v18
  %v173 = vunpack.c.l.b16 %v19
  %v174 = vunpack.c.h.b16 %v19
  %v175 = vunpack.c.l.b16 %v20
  %v176 = vunpack.c.h.b16 %v20
  %v177 = vunpack.c.l.b16 %v21
  %v178 = vunpack.c.h.b16 %v21
  %v179 = vunpack.c.l.b16 %v22
  %v180 = vunpack.c.l.b16 %v23
  %v181 = vunpack.c.h.b16 %v23
  %v182 = vunpack.c.l.b16 %v24
  %v183 = vunpack.c.h.b16 %v24
  %v184 = vunpack.c.l.b16 %v25
  %v185 = vunpack.c.h.b16 %v25
  %v186 = vunpack.c.l.b16 %v26
  %v187 = vunpack.c.l.b16 %v27
  %v188 = vunpack.c.h.b16 %v27
  %v189 = vunpack.c.l.b16 %v28
  %v190 = vunpack.c.h.b16 %v28
  %v191 = vunpack.c.l.b16 %v29
  %v192 = vunpack.c.h.b16 %v29
  %v193 = vunpack.c.l.b16 %v30
  %v194 = vpack.c.b16 %v173, %v166
  %v195 = vpack.c.b16 %v174, %v167
  %v196 = vpack.c.b16 %v175, %v168
  %v197 = vpack.c.b16 %v176, %v169
  %v198 = vpack.c.b16 %v177, %v170
  %v199 = vpack.c.b16 %v178, %v171
  %v200 = vpack.c.b16 %v179, %v172
  %v201 = vpack.c.b16 %v187, %v180
  %v202 = vpack.c.b16 %v188, %v181
  %v203 = vpack.c.b16 %v189, %v182
  %v204 = vpack.c.b16 %v190, %v183
  %v205 = vpack.c.b16 %v191, %v184
  %v206 = vpack.c.b16 %v192, %v185
  %v207 = vpack.c.b16 %v193, %v186
  %v334 = vunpack.c.l.b16 %v31
  %v335 = vunpack.c.l.b16 %v32
  %v336 = vunpack.c.l.b16 %v33
  %v337 = vunpack.c.l.b16 %v34
  %v338 = vunpack.c.l.b16 %v35
  %v339 = vunpack.c.l.b16 %v36
  %v340 = vunpack.c.l.b16 %v37
  %v341 = vunpack.c.l.b16 %v38
  %v342 = vunpack.c.l.b16 %v39
  %v343 = vunpack.c.l.b16 %v40
  %v344 = vunpack.c.l.b16 %v41
  %v345 = vunpack.c.l.b16 %v42
  %v346 = vunpack.c.l.b16 %v43
  %v347 = vunpack.c.l.b16 %v44
  %v348 = vunpack.c.l.b16 %v45
  %v349 = vunpack.c.l.b16 %v46
  %v350 = vunpack.c.l.b16 %v47
  %v351 = vunpack.c.l.b16 %v48
  %v352 = vunpack.c.l.b16 %v49
  %v353 = vunpack.c.l.b16 %v50
  %v354 = vunpack.c.l.b16 %v51
  %v355 = vunpack.c.l.b16 %v52
  %v356 = vunpack.c.l.b16 %v53
  %v357 = vunpack.c.l.b16 %v54
  %v358 = vunpack.c.l.b16 %v55
  %v359 = vunpack.c.l.b16 %v56
  %v360 = vunpack.c.l.b16 %v57
  %v361 = vunpack.c.l.b16 %v58
  %v362 = vunpack.c.l.b16 %v59
  %v363 = vunpack.c.l.b16 %v60
  %v364 = vunpack.c.l.b16 %v61
  %v365 = vunpack.c.l.b16 %v62
  %v366 = vunpack.c.l.b16 %v63
  %v367 = vunpack.c.l.b16 %v64
  %v368 = vunpack.c.l.b16 %v65
  %v369 = vunpack.c.l.b16 %v66
  %v370 = vunpack.c.l.b16 %v67
  %v371 = vunpack.c.l.b16 %v68
  %v372 = vunpack.c.l.b16 %v69
  %v373 = vunpack.c.l.b16 %v70
  %v374 = vunpack.c.l.b16 %v71
  %v375 = vunpack.c.l.b16 %v72
  %v376 = vunpack.c.l.b16 %v73
  %v377 = vunpack.c.l.b16 %v74
  %v378 = vunpack.c.l.b16 %v75
  %v379 = vunpack.c.l.b16 %v76
  %v380 = vunpack.c.l.b16 %v77
  %v381 = vunpack.c.l.b16 %v78
  %v382 = vunpack.c.l.b16 %v79
  %v383 = vunpack.c.l.b16 %v80
  %v384 = vunpack.c.l.b16 %v81
  %v385 = vunpack.c.l.b16 %v82
  %v386 = vunpack.c.l.b16 %v83
  %v387 = vunpack.c.l.b16 %v84
  %v388 = vunpack.c.l.b16 %v85
  %v389 = vunpack.c.l.b16 %v86
  %v390 = vunpack.c.l.b16 %v87
  %v391 = vunpack.c.l.b16 %v88
  %v392 = vunpack.c.l.b16 %v89
  %v393 = vunpack.c.l.b16 %v90
  %v394 = vunpack.c.l.b16 %v91
  %v395 = vunpack.c.l.b16 %v92
  %v396 = vunpack.c.l.b16 %v93
  %v397 = vunpack.c.l.b16 %v94
  %v398 = vunpack.c.l.b16 %v95
  %v399 = vunpack.c.l.b16 %v96
  %v400 = vunpack.c.l.b16 %v97
  %v401 = vunpack.c.l.b16 %v98
  %v402 = vunpack.c.l.b16 %v99
  %v403 = vunpack.c.l.b16 %v100
  %v404 = vunpack.c.l.b16 %v101
  %v405 = vunpack.c.l.b16 %v102
  %v406 = vunpack.c.l.b16 %v103
  %v407 = vunpack.c.l.b16 %v104
  %v408 = vunpack.c.l.b16 %v105
  %v409 = vunpack.c.l.b16 %v106
  %v410 = vunpack.c.l.b16 %v107
  %v411 = vunpack.c.l.b16 %v108
  %v412 = vunpack.c.l.b16 %v109
  %v413 = vunpack.c.l.b16 %v110
  %v414 = vunpack.c.l.b16 %v111
  %v415 = vunpack.c.l.b16 %v112
  %v416 = vunpack.c.l.b16 %v113
  %v417 = vunpack.c.l.b16 %v114
  %v418 = vunpack.c.l.b16 %v115
  %v419 = vunpack.c.l.b16 %v116
  %v420 = vunpack.c.l.b16 %v117
  %v421 = vunpack.c.l.b16 %v118
  %v422 = vunpack.c.l.b16 %v119
  %v423 = vunpack.c.l.b16 %v120
  %v424 = vunpack.c.l.b16 %v121
  %v425 = vunpack.c.l.b16 %v122
  %v426 = vunpack.c.l.b16 %v123
  %v427 = vunpack.c.l.b16 %v124
  %v428 = vunpack.c.l.b16 %v125
  %v429 = vunpack.c.l.b16 %v126
  %v430 = vunpack.c.l.b16 %v127
  %v431 = vunpack.c.l.b16 %v128
  %v432 = vunpack.c.l.b16 %v129
  %v433 = vunpack.c.l.b16 %v130
  %v434 = vunpack.c.l.b16 %v131
  %v435 = vunpack.c.l.b16 %v132
  %v436 = vunpack.c.l.b16 %v133
  %v437 = vunpack.c.l.b16 %v134
  %v438 = vunpack.c.l.b16 %v135
  %v439 = vunpack.c.l.b16 %v136
  %v440 = vunpack.c.l.b16 %v137
  %v441 = vunpack.c.l.b16 %v138
  %v442 = vunpack.c.l.b16 %v139
  %v443 = vunpack.c.l.b16 %v140
  %v444 = vunpack.c.l.b16 %v141
  %v445 = vunpack.c.l.b16 %v142
  %v446 = vpack.c.b16 %v335, %v334
  %v447 = vpack.c.b16 %v337, %v336
  %v448 = vpack.c.b16 %v339, %v338
  %v449 = vpack.c.b16 %v341, %v340
  %v450 = vpack.c.b16 %v343, %v342
  %v451 = vpack.c.b16 %v345, %v344
  %v452 = vpack.c.b16 %v347, %v346
  %v453 = vpack.c.b16 %v349, %v348
  %v454 = vpack.c.b16 %v351, %v350
  %v455 = vpack.c.b16 %v353, %v352
  %v456 = vpack.c.b16 %v355, %v354
  %v457 = vpack.c.b16 %v357, %v356
  %v458 = vpack.c.b16 %v359, %v358
  %v459 = vpack.c.b16 %v361, %v360
  %v460 = vpack.c.b16 %v363, %v362
  %v461 = vpack.c.b16 %v365, %v364
  %v462 = vpack.c.b16 %v367, %v366
  %v463 = vpack.c.b16 %v369, %v368
  %v464 = vpack.c.b16 %v371, %v370
  %v465 = vpack.c.b16 %v373, %v372
  %v466 = vpack.c.b16 %v375, %v374
  %v467 = vpack.c.b16 %v377, %v376
  %v468 = vpack.c.b16 %v379, %v378
  %v469 = vpack.c.b16 %v381, %v380
  %v470 = vpack.c.b16 %v383, %v382
  %v471 = vpack.c.b16 %v385, %v384
  %v472 = vpack.c.b16 %v387, %v386
  %v473 = vpack.c.b16 %v389, %v388
  %v474 = vpack.c.b16 %v391, %v390
  %v475 = vpack.c.b16 %v393, %v392
  %v476 = vpack.c.b16 %v395, %v394
  %v477 = vpack.c.b16 %v397, %v396
  %v478 = vpack.c.b16 %v399, %v398
  %v479 = vpack.c.b16 %v401, %v400
  %v480 = vpack.c.b16 %v403, %v402
  %v481 = vpack.c.b16 %v405, %v404
  %v482 = vpack.c.b16 %v407, %v406
  %v483 = vpack.c.b16 %v409, %v408
  %v484 = vpack.c.b16 %v411, %v410
  %v485 = vpack.c.b16 %v413, %v412
  %v486 = vpack.c.b16 %v415, %v414
  %v487 = vpack.c.b16 %v417, %v416
  %v488 = vpack.c.b16 %v419, %v418
  %v489 = vpack.c.b16 %v421, %v420
  %v490 = vpack.c.b16 %v423, %v422
  %v491 = vpack.c.b16 %v425, %v424
  %v492 = vpack.c.b16 %v427, %v426
  %v493 = vpack.c.b16 %v429, %v428
  %v494 = vpack.c.b16 %v431, %v430
  %v495 = vpack.c.b16 %v433, %v432
  %v496 = vpack.c.b16 %v435, %v434
  %v497 = vpack.c.b16 %v437, %v436
  %v498 = vpack.c.b16 %v439, %v438
  %v499 = vpack.c.b16 %v441, %v440
  %v500 = vpack.c.b16 %v443, %v442
  %v501 = vpack.c.b16 %v445, %v444
  %558 = vmatprep.subr.bf16.mxu0 0
  %559 = vmatpush1.bf16.msra.mxu0 %v446
  %560 = vmatprep.subr.bf16.mxu0 0
  %561 = vmatpush1.bf16.msra.mxu0 %v447
  %562 = vmatprep.subr.bf16.mxu0 0
  %563 = vmatpush1.bf16.msra.mxu0 %v448
  %564 = vmatprep.subr.bf16.mxu0 0
  %565 = vmatpush1.bf16.msra.mxu0 %v449
  %566 = vmatprep.subr.bf16.mxu0 0
  %567 = vmatpush1.bf16.msra.mxu0 %v450
  %568 = vmatprep.subr.bf16.mxu0 0
  %569 = vmatpush1.bf16.msra.mxu0 %v451
  %570 = vmatprep.subr.bf16.mxu0 0
  %571 = vmatpush1.bf16.msra.mxu0 %v452
  %572 = vmatprep.subr.bf16.mxu0 0
  %573 = vmatpush1.bf16.msra.mxu0 %v453
  %574 = vmatprep.subr.bf16.mxu0 0
  %575 = vmatpush1.bf16.msra.mxu0 %v454
  %576 = vmatprep.subr.bf16.mxu0 0
  %577 = vmatpush1.bf16.msra.mxu0 %v455
  %578 = vmatprep.subr.bf16.mxu0 0
  %579 = vmatpush1.bf16.msra.mxu0 %v456
  %580 = vmatprep.subr.bf16.mxu0 0
  %581 = vmatpush1.bf16.msra.mxu0 %v457
  %582 = vmatprep.subr.bf16.mxu0 0
  %583 = vmatpush1.bf16.msra.mxu0 %v458
  %584 = vmatprep.subr.bf16.mxu0 0
  %585 = vmatpush1.bf16.msra.mxu0 %v459
  %586 = vmatprep.subr.bf16.mxu0 0
  %587 = vmatpush1.bf16.msra.mxu0 %v460
  %588 = vmatprep.subr.bf16.mxu0 0
  %589 = vmatpush1.bf16.msra.mxu0 %v461
  %590 = vmatprep.mubr.bf16.mxu0 %v195
  %591 = vmatmul.mubr.bf16.gmra.mrb[0].mxu0 %v194
  %v592 = vpop.f32.mrb[0].mxu0
  %v593 = vadd.f32 %v148, %v592
  %v594 = vpop.f32.mrb[0].mxu0
  %v595 = vpop.f32.mrb[0].mxu0
  %v596 = vadd.f32 %v148, %v595
  %v597 = vpop.f32.mrb[0].mxu0
  %598 = vmatprep.mubr.bf16.mxu0 %v202
  %599 = vmatmul.mubr.bf16.gmra.mrb[0].mxu0 %v201
  %v600 = vpop.f32.mrb[0].mxu0
  %v601 = vadd.f32 %v148, %v600
  %v602 = vpop.f32.mrb[0].mxu0
  %v603 = vpop.f32.mrb[0].mxu0
  %v604 = vadd.f32 %v148, %v603
  %v605 = vpop.f32.mrb[0].mxu0
  %606 = vdwg.mxu0
  %607 = vmatprep.subr.bf16.mxu0 0
  %608 = vmatpush1.bf16.msra.mxu0 %v462
  %609 = vmatprep.subr.bf16.mxu0 0
  %610 = vmatpush1.bf16.msra.mxu0 %v463
  %611 = vmatprep.subr.bf16.mxu0 0
  %612 = vmatpush1.bf16.msra.mxu0 %v464
  %613 = vmatprep.subr.bf16.mxu0 0
  %614 = vmatpush1.bf16.msra.mxu0 %v465
  %615 = vmatprep.subr.bf16.mxu0 0
  %616 = vmatpush1.bf16.msra.mxu0 %v466
  %617 = vmatprep.subr.bf16.mxu0 0
  %618 = vmatpush1.bf16.msra.mxu0 %v467
  %619 = vmatprep.subr.bf16.mxu0 0
  %620 = vmatpush1.bf16.msra.mxu0 %v468
  %621 = vmatprep.subr.bf16.mxu0 0
  %622 = vmatpush1.bf16.msra.mxu0 %v469
  %623 = vmatprep.subr.bf16.mxu0 0
  %624 = vmatpush1.bf16.msra.mxu0 %v470
  %625 = vmatprep.subr.bf16.mxu0 0
  %626 = vmatpush1.bf16.msra.mxu0 %v471
  %627 = vmatprep.subr.bf16.mxu0 0
  %628 = vmatpush1.bf16.msra.mxu0 %v472
  %629 = vmatprep.subr.bf16.mxu0 0
  %630 = vmatpush1.bf16.msra.mxu0 %v473
  %631 = vmatprep.subr.bf16.mxu0 0
  %632 = vmatpush1.bf16.msra.mxu0 %v474
  %633 = vmatprep.subr.bf16.mxu0 0
  %634 = vmatpush1.bf16.msra.mxu0 %v475
  %635 = vmatprep.subr.bf16.mxu0 0
  %636 = vmatpush1.bf16.msra.mxu0 %v476
  %637 = vmatprep.subr.bf16.mxu0 0
  %638 = vmatpush1.bf16.msra.mxu0 %v477
  %639 = vmatprep.mubr.bf16.mxu0 %v197
  %640 = vmatmul.mubr.bf16.gmra.mrb[0].mxu0 %v196
  %v641 = vpop.f32.mrb[0].mxu0
  %v642 = vadd.f32 %v593, %v641
  %v643 = vpop.f32.mrb[0].mxu0
  %v644 = vpop.f32.mrb[0].mxu0
  %v645 = vadd.f32 %v596, %v644
  %v646 = vpop.f32.mrb[0].mxu0
  %647 = vmatprep.mubr.bf16.mxu0 %v204
  %648 = vmatmul.mubr.bf16.gmra.mrb[0].mxu0 %v203
  %v649 = vpop.f32.mrb[0].mxu0
  %v650 = vadd.f32 %v601, %v649
  %v651 = vpop.f32.mrb[0].mxu0
  %v652 = vpop.f32.mrb[0].mxu0
  %v653 = vadd.f32 %v604, %v652
  %v654 = vpop.f32.mrb[0].mxu0
  %655 = vdwg.mxu0
  %656 = vmatprep.subr.bf16.mxu0 0
  %657 = vmatpush1.bf16.msra.mxu0 %v478
  %658 = vmatprep.subr.bf16.mxu0 0
  %659 = vmatpush1.bf16.msra.mxu0 %v479
  %660 = vmatprep.subr.bf16.mxu0 0
  %661 = vmatpush1.bf16.msra.mxu0 %v480
  %662 = vmatprep.subr.bf16.mxu0 0
  %663 = vmatpush1.bf16.msra.mxu0 %v481
  %664 = vmatprep.subr.bf16.mxu0 0
  %665 = vmatpush1.bf16.msra.mxu0 %v482
  %666 = vmatprep.subr.bf16.mxu0 0
  %667 = vmatpush1.bf16.msra.mxu0 %v483
  %668 = vmatprep.subr.bf16.mxu0 0
  %669 = vmatpush1.bf16.msra.mxu0 %v484
  %670 = vmatprep.subr.bf16.mxu0 0
  %671 = vmatpush1.bf16.msra.mxu0 %v485
  %672 = vmatprep.subr.bf16.mxu0 0
  %673 = vmatpush1.bf16.msra.mxu0 %v486
  %674 = vmatprep.subr.bf16.mxu0 0
  %675 = vmatpush1.bf16.msra.mxu0 %v487
  %676 = vmatprep.subr.bf16.mxu0 0
  %677 = vmatpush1.bf16.msra.mxu0 %v488
  %678 = vmatprep.subr.bf16.mxu0 0
  %679 = vmatpush1.bf16.msra.mxu0 %v489
  %680 = vmatprep.subr.bf16.mxu0 0
  %681 = vmatpush1.bf16.msra.mxu0 %v490
  %682 = vmatprep.subr.bf16.mxu0 0
  %683 = vmatpush1.bf16.msra.mxu0 %v491
  %684 = vmatprep.subr.bf16.mxu0 0
  %685 = vmatpush1.bf16.msra.mxu0 %v492
  %686 = vmatprep.subr.bf16.mxu0 0
  %687 = vmatpush1.bf16.msra.mxu0 %v493
  %688 = vmatprep.mubr.bf16.mxu0 %v199
  %689 = vmatmul.mubr.bf16.gmra.mrb[0].mxu0 %v198
  %v690 = vpop.f32.mrb[0].mxu0
  %v691 = vadd.f32 %v642, %v690
  %v692 = vpop.f32.mrb[0].mxu0
  %v693 = vpop.f32.mrb[0].mxu0
  %v694 = vadd.f32 %v645, %v693
  %v695 = vpop.f32.mrb[0].mxu0
  %696 = vmatprep.mubr.bf16.mxu0 %v206
  %697 = vmatmul.mubr.bf16.gmra.mrb[0].mxu0 %v205
  %v698 = vpop.f32.mrb[0].mxu0
  %v699 = vadd.f32 %v650, %v698
  %v700 = vpop.f32.mrb[0].mxu0
  %v701 = vpop.f32.mrb[0].mxu0
  %v702 = vadd.f32 %v653, %v701
  %v703 = vpop.f32.mrb[0].mxu0
  %704 = vdwg.mxu0
  %705 = vmatprep.subr.bf16.mxu0 0
  %706 = vmatpush1.bf16.msra.mxu0 %v494
  %707 = vmatprep.subr.bf16.mxu0 0
  %708 = vmatpush1.bf16.msra.mxu0 %v495
  %709 = vmatprep.subr.bf16.mxu0 0
  %710 = vmatpush1.bf16.msra.mxu0 %v496
  %711 = vmatprep.subr.bf16.mxu0 0
  %712 = vmatpush1.bf16.msra.mxu0 %v497
  %713 = vmatprep.subr.bf16.mxu0 0
  %714 = vmatpush1.bf16.msra.mxu0 %v498
  %715 = vmatprep.subr.bf16.mxu0 0
  %716 = vmatpush1.bf16.msra.mxu0 %v499
  %717 = vmatprep.subr.bf16.mxu0 0
  %718 = vmatpush1.bf16.msra.mxu0 %v500
  %719 = vmatprep.subr.bf16.mxu0 0
  %720 = vmatpush1.bf16.msra.mxu0 %v501
  %721 = vmatprep.subr.bf16.mxu0 0
  %722 = vmatpush1.bf16.msra.mxu0 0
  %723 = vmatprep.subr.bf16.mxu0 0
  %724 = vmatpush1.bf16.msra.mxu0 0
  %725 = vmatprep.subr.bf16.mxu0 0
  %726 = vmatpush1.bf16.msra.mxu0 0
  %727 = vmatprep.subr.bf16.mxu0 0
  %728 = vmatpush1.bf16.msra.mxu0 0
  %729 = vmatprep.subr.bf16.mxu0 0
  %730 = vmatpush1.bf16.msra.mxu0 0
  %731 = vmatprep.subr.bf16.mxu0 0
  %732 = vmatpush1.bf16.msra.mxu0 0
  %733 = vmatprep.subr.bf16.mxu0 0
  %734 = vmatpush1.bf16.msra.mxu0 0
  %735 = vmatprep.subr.bf16.mxu0 0
  %736 = vmatpush1.bf16.msra.mxu0 0
  %737 = vmatprep.mubr.bf16.mxu0 0
  %738 = vmatmul.mubr.bf16.gmra.mrb[0].mxu0 %v200
  %v739 = vpop.f32.mrb[0].mxu0
  %v740 = vadd.f32 %v691, %v739
  %v741 = vpop.f32.mrb[0].mxu0
  %v742 = vpop.f32.mrb[0].mxu0
  %v743 = vadd.f32 %v694, %v742
  %v744 = vpop.f32.mrb[0].mxu0
  %745 = vmatprep.mubr.bf16.mxu0 0
  %746 = vmatmul.mubr.bf16.gmra.mrb[0].mxu0 %v207
  %v747 = vpop.f32.mrb[0].mxu0
  %v748 = vadd.f32 %v699, %v747
  %v749 = vpop.f32.mrb[0].mxu0
  %v750 = vpop.f32.mrb[0].mxu0
  %v751 = vadd.f32 %v702, %v750
  %v752 = vpop.f32.mrb[0].mxu0
  %753 = vdwg.mxu0
  %vm754 = vcmp.ge.f32.partialorder %v740, 0.0
  %vm755 = vcmp.ge.f32.partialorder %v743, 0.0
  %vm756 = vcmp.ge.f32.partialorder %v748, 0.0
  %vm757 = vcmp.ge.f32.partialorder %v751, 0.0
  %v758 = vmul.f32 %v740, 0.05
  %v759 = vmul.f32 %v743, 0.05
  %v760 = vmul.f32 %v748, 0.05
  %v761 = vmul.f32 %v751, 0.05
  %v762 = vsel %vm754, %v740, %v758
  %v763 = vsel %vm755, %v743, %v759
  %v764 = vsel %vm756, %v748, %v760
  %v765 = vsel %vm757, %v751, %v761
  %v766 = vpack.c.bf16 %v763, %v762
  %v767 = vpack.c.bf16 %v765, %v764
  %v770 = vunpack.c.l.b16 %v766
  %v771 = vunpack.c.h.b16 %v766
  %v772 = vunpack.c.l.b16 %v767
  %v773 = vunpack.c.h.b16 %v767
  %v774 = vpack.c.b16 %v770, %v770
  %v775 = vpack.c.b16 %v771, %v771
  %v776 = vpack.c.b16 %v772, %v772
  %v777 = vpack.c.b16 %v773, %v773
  %782 = vst [vmem:[%s3] sm:$0xf] %v774
  %783 = vst [vmem:[%s3 + $0x4] sm:$0xf] %v775
  %784 = vst [vmem:[%s3 + $0x8] sm:$0xf] %v776
  %785 = vst [vmem:[%s3 + $0xc] sm:$0xf] %v777
  // Predicated region
  $region14: #{generator_forward.9} parent=0 // pred_check
    _
  $region15: #{generator_forward.9} parent=0 // pred_check_branch
    %787 = sbr.rel (0) target = $region17
  $region16: #{generator_forward.9} parent=0 // pred_region
    _
  $region17: #{generator_forward.9} parent=0 // pred_fallthru
    _
  // Predicated region
  $region18: #{generator_forward.9} parent=0 // pred_check
    _
  $region19: #{generator_forward.9} parent=0 // pred_check_branch
    %789 = sbr.rel (0) target = $region21
  $region20: #{generator_forward.9} parent=0 // pred_region
    _
  $region21: #{generator_forward.9} parent=0 // pred_fallthru
    _

// kernel: generator_forward.10
$region0: #{generator_forward.10}
  #allocation0 [shape = 'u32[]', space=smem, size = 0x4, offset = 0x4, fixed_abs, tag = 'smem constant byte address 0x4 - core index']
  #allocation1 [shape = 'u32[144,128]{1,0:T(1,128)}', space=vmem, size = 0x12000, scoped, tag = 'internal scratch']
  %s0 = inlined_call_operand.vmem [shape: bf16[8,1024], index: 0, kind: input, shape index: {}]
  %s1 = inlined_call_operand.vmem [shape: bf16[8,128], index: 1, kind: input, shape index: {}]
  %s2 = inlined_call_operand.vmem [shape: bf16[1024,128], index: 2, kind: input, shape index: {}]
  %s3 = inlined_call_operand.vmem [shape: f32[1,128], index: 3, kind: input, shape index: {}]
  %s4 = inlined_call_operand.vmem [shape: bf16[128,128], index: 4, kind: input, shape index: {}]
  %s5 = inlined_call_operand.vmem [shape: f32[1,128], index: 5, kind: input, shape index: {}]
  %s6 = inlined_call_operand.vmem [shape: bf16[128,1024], index: 6, kind: input, shape index: {}]
  %s7 = inlined_call_operand.vmem [shape: bf16[128,1024], index: 7, kind: input, shape index: {}]
  %s8 = inlined_call_operand.vmem [shape: f32[1,1024], index: 8, kind: input, shape index: {}]
  %s9 = inlined_call_operand.vmem [shape: f32[8,128], index: 9, kind: output, shape index: {0}]
  %s10 = inlined_call_operand.vmem [shape: f32[8,128], index: 10, kind: output, shape index: {1}]
  %s11 = inlined_call_operand.vmem [shape: bf16[8,1024], index: 11, kind: output, shape index: {2}]
  %12 = xla_tuple %s9, %s10, %s11
  %s13 = sld [smem:[#allocation0]]
  $region62: #{generator_forward.10} parent=0
    _
  %s15 = ssub.s32 1, %s13
  %s16 = scalar_select 0, %s15, %s13
  // Predicated region
  $region2: #{generator_forward.10} parent=0 // pred_check
    _
  $region3: #{generator_forward.10} parent=0 // pred_check_branch
    %18 = sbr.rel (0) target = $region5
  $region4: #{generator_forward.10} parent=0 // pred_region
    _
  $region5: #{generator_forward.10} parent=0 // pred_fallthru
    _
  // Predicated region
  $region6: #{generator_forward.10} parent=0 // pred_check
    _
  $region7: #{generator_forward.10} parent=0 // pred_check_branch
    %20 = sbr.rel (0) target = $region9
  $region8: #{generator_forward.10} parent=0 // pred_region
    _
  $region9: #{generator_forward.10} parent=0 // pred_fallthru
    _
  // Predicated region
  $region10: #{generator_forward.10} parent=0 // pred_check
    _
  $region11: #{generator_forward.10} parent=0 // pred_check_branch
    %22 = sbr.rel (0) target = $region13
  $region12: #{generator_forward.10} parent=0 // pred_region
    _
  $region13: #{generator_forward.10} parent=0 // pred_fallthru
    _
  // Predicated region
  $region14: #{generator_forward.10} parent=0 // pred_check
    _
  $region15: #{generator_forward.10} parent=0 // pred_check_branch
    %24 = sbr.rel (0) target = $region17
  $region16: #{generator_forward.10} parent=0 // pred_region
    _
  $region17: #{generator_forward.10} parent=0 // pred_fallthru
    _
  // Predicated region
  $region18: #{generator_forward.10} parent=0 // pred_check
    _
  $region19: #{generator_forward.10} parent=0 // pred_check_branch
    %26 = sbr.rel (0) target = $region21
  $region20: #{generator_forward.10} parent=0 // pred_region
    _
  $region21: #{generator_forward.10} parent=0 // pred_fallthru
    _
  // Predicated region
  $region22: #{generator_forward.10} parent=0 // pred_check
    _
  $region23: #{generator_forward.10} parent=0 // pred_check_branch
    %28 = sbr.rel (0) target = $region25
  $region24: #{generator_forward.10} parent=0 // pred_region
    _
  $region25: #{generator_forward.10} parent=0 // pred_fallthru
    _
  // Predicated region
  $region26: #{generator_forward.10} parent=0 // pred_check
    _
  $region27: #{generator_forward.10} parent=0 // pred_check_branch
    %30 = sbr.rel (0) target = $region29
  $region28: #{generator_forward.10} parent=0 // pred_region
    _
  $region29: #{generator_forward.10} parent=0 // pred_fallthru
    _
  // Predicated region
  $region30: #{generator_forward.10} parent=0 // pred_check
    _
  $region31: #{generator_forward.10} parent=0 // pred_check_branch
    %32 = sbr.rel (0) target = $region33
  $region32: #{generator_forward.10} parent=0 // pred_region
    _
  $region33: #{generator_forward.10} parent=0 // pred_fallthru
    _
  // Predicated region
  $region34: #{generator_forward.10} parent=0 // pred_check
    _
  $region35: #{generator_forward.10} parent=0 // pred_check_branch
    %34 = sbr.rel (0) target = $region37
  $region36: #{generator_forward.10} parent=0 // pred_region
    _
  $region37: #{generator_forward.10} parent=0 // pred_fallthru
    _
  %v36 = vld [vmem:[%s0] sm:$0xff]
  %v37 = vld [vmem:[%s0 + $0x8] sm:$0xff]
  %v38 = vld [vmem:[%s0 + $0x10] sm:$0xff]
  %v39 = vld [vmem:[%s0 + $0x18] sm:$0xff]
  %v40 = vld [vmem:[%s2] sm:$0xf]
  %v41 = vld [vmem:[%s2 + $0x4] sm:$0xf]
  %v42 = vld [vmem:[%s2 + $0x8] sm:$0xf]
  %v43 = vld [vmem:[%s2 + $0xc] sm:$0xf]
  %v44 = vld [vmem:[%s2 + $0x10] sm:$0xf]
  %v45 = vld [vmem:[%s2 + $0x14] sm:$0xf]
  %v46 = vld [vmem:[%s2 + $0x18] sm:$0xf]
  %v47 = vld [vmem:[%s2 + $0x1c] sm:$0xf]
  %v48 = vld [vmem:[%s2 + $0x20] sm:$0xf]
  %v49 = vld [vmem:[%s2 + $0x24] sm:$0xf]
  %v50 = vld [vmem:[%s2 + $0x28] sm:$0xf]
  %v51 = vld [vmem:[%s2 + $0x2c] sm:$0xf]
  %v52 = vld [vmem:[%s2 + $0x30] sm:$0xf]
  %v53 = vld [vmem:[%s2 + $0x34] sm:$0xf]
  %v54 = vld [vmem:[%s2 + $0x38] sm:$0xf]
  %v55 = vld [vmem:[%s2 + $0x3c] sm:$0xf]
  %v56 = vld [vmem:[%s2 + $0x40] sm:$0xf]
  %v57 = vld [vmem:[%s2 + $0x44] sm:$0xf]
  %v58 = vld [vmem:[%s2 + $0x48] sm:$0xf]
  %v59 = vld [vmem:[%s2 + $0x4c] sm:$0xf]
  %v60 = vld [vmem:[%s2 + $0x50] sm:$0xf]
  %v61 = vld [vmem:[%s2 + $0x54] sm:$0xf]
  %v62 = vld [vmem:[%s2 + $0x58] sm:$0xf]
  %v63 = vld [vmem:[%s2 + $0x5c] sm:$0xf]
  %v64 = vld [vmem:[%s2 + $0x60] sm:$0xf]
  %v65 = vld [vmem:[%s2 + $0x64] sm:$0xf]
  %v66 = vld [vmem:[%s2 + $0x68] sm:$0xf]
  %v67 = vld [vmem:[%s2 + $0x6c] sm:$0xf]
  %v68 = vld [vmem:[%s2 + $0x70] sm:$0xf]
  %v69 = vld [vmem:[%s2 + $0x74] sm:$0xf]
  %v70 = vld [vmem:[%s2 + $0x78] sm:$0xf]
  %v71 = vld [vmem:[%s2 + $0x7c] sm:$0xf]
  %v72 = vld [vmem:[%s2 + $0x80] sm:$0xf]
  %v73 = vld [vmem:[%s2 + $0x84] sm:$0xf]
  %v74 = vld [vmem:[%s2 + $0x88] sm:$0xf]
  %v75 = vld [vmem:[%s2 + $0x8c] sm:$0xf]
  %v76 = vld [vmem:[%s2 + $0x90] sm:$0xf]
  %v77 = vld [vmem:[%s2 + $0x94] sm:$0xf]
  %v78 = vld [vmem:[%s2 + $0x98] sm:$0xf]
  %v79 = vld [vmem:[%s2 + $0x9c] sm:$0xf]
  %v80 = vld [vmem:[%s2 + $0xa0] sm:$0xf]
  %v81 = vld [vmem:[%s2 + $0xa4] sm:$0xf]
  %v82 = vld [vmem:[%s2 + $0xa8] sm:$0xf]
  %v83 = vld [vmem:[%s2 + $0xac] sm:$0xf]
  %v84 = vld [vmem:[%s2 + $0xb0] sm:$0xf]
  %v85 = vld [vmem:[%s2 + $0xb4] sm:$0xf]
  %v86 = vld [vmem:[%s2 + $0xb8] sm:$0xf]
  %v87 = vld [vmem:[%s2 + $0xbc] sm:$0xf]
  %v88 = vld [vmem:[%s2 + $0xc0] sm:$0xf]
  %v89 = vld [vmem:[%s2 + $0xc4] sm:$0xf]
  %v90 = vld [vmem:[%s2 + $0xc8] sm:$0xf]
  %v91 = vld [vmem:[%s2 + $0xcc] sm:$0xf]
  %v92 = vld [vmem:[%s2 + $0xd0] sm:$0xf]
  %v93 = vld [vmem:[%s2 + $0xd4] sm:$0xf]
  %v94 = vld [vmem:[%s2 + $0xd8] sm:$0xf]
  %v95 = vld [vmem:[%s2 + $0xdc] sm:$0xf]
  %v96 = vld [vmem:[%s2 + $0xe0] sm:$0xf]
  %v97 = vld [vmem:[%s2 + $0xe4] sm:$0xf]
  %v98 = vld [vmem:[%s2 + $0xe8] sm:$0xf]
  %v99 = vld [vmem:[%s2 + $0xec] sm:$0xf]
  %v100 = vld [vmem:[%s2 + $0xf0] sm:$0xf]
  %v101 = vld [vmem:[%s2 + $0xf4] sm:$0xf]
  %v102 = vld [vmem:[%s2 + $0xf8] sm:$0xf]
  %v103 = vld [vmem:[%s2 + $0xfc] sm:$0xf]
  %v104 = vld [vmem:[%s2 + $0x100] sm:$0xf]
  %v105 = vld [vmem:[%s2 + $0x104] sm:$0xf]
  %v106 = vld [vmem:[%s2 + $0x108] sm:$0xf]
  %v107 = vld [vmem:[%s2 + $0x10c] sm:$0xf]
  %v108 = vld [vmem:[%s2 + $0x110] sm:$0xf]
  %v109 = vld [vmem:[%s2 + $0x114] sm:$0xf]
  %v110 = vld [vmem:[%s2 + $0x118] sm:$0xf]
  %v111 = vld [vmem:[%s2 + $0x11c] sm:$0xf]
  %v112 = vld [vmem:[%s2 + $0x120] sm:$0xf]
  %v113 = vld [vmem:[%s2 + $0x124] sm:$0xf]
  %v114 = vld [vmem:[%s2 + $0x128] sm:$0xf]
  %v115 = vld [vmem:[%s2 + $0x12c] sm:$0xf]
  %v116 = vld [vmem:[%s2 + $0x130] sm:$0xf]
  %v117 = vld [vmem:[%s2 + $0x134] sm:$0xf]
  %v118 = vld [vmem:[%s2 + $0x138] sm:$0xf]
  %v119 = vld [vmem:[%s2 + $0x13c] sm:$0xf]
  %v120 = vld [vmem:[%s2 + $0x140] sm:$0xf]
  %v121 = vld [vmem:[%s2 + $0x144] sm:$0xf]
  %v122 = vld [vmem:[%s2 + $0x148] sm:$0xf]
  %v123 = vld [vmem:[%s2 + $0x14c] sm:$0xf]
  %v124 = vld [vmem:[%s2 + $0x150] sm:$0xf]
  %v125 = vld [vmem:[%s2 + $0x154] sm:$0xf]
  %v126 = vld [vmem:[%s2 + $0x158] sm:$0xf]
  %v127 = vld [vmem:[%s2 + $0x15c] sm:$0xf]
  %v128 = vld [vmem:[%s2 + $0x160] sm:$0xf]
  %v129 = vld [vmem:[%s2 + $0x164] sm:$0xf]
  %v130 = vld [vmem:[%s2 + $0x168] sm:$0xf]
  %v131 = vld [vmem:[%s2 + $0x16c] sm:$0xf]
  %v132 = vld [vmem:[%s2 + $0x170] sm:$0xf]
  %v133 = vld [vmem:[%s2 + $0x174] sm:$0xf]
  %v134 = vld [vmem:[%s2 + $0x178] sm:$0xf]
  %v135 = vld [vmem:[%s2 + $0x17c] sm:$0xf]
  %v136 = vld [vmem:[%s2 + $0x180] sm:$0xf]
  %v137 = vld [vmem:[%s2 + $0x184] sm:$0xf]
  %v138 = vld [vmem:[%s2 + $0x188] sm:$0xf]
  %v139 = vld [vmem:[%s2 + $0x18c] sm:$0xf]
  %v140 = vld [vmem:[%s2 + $0x190] sm:$0xf]
  %v141 = vld [vmem:[%s2 + $0x194] sm:$0xf]
  %v142 = vld [vmem:[%s2 + $0x198] sm:$0xf]
  %v143 = vld [vmem:[%s2 + $0x19c] sm:$0xf]
  %v144 = vld [vmem:[%s2 + $0x1a0] sm:$0xf]
  %v145 = vld [vmem:[%s2 + $0x1a4] sm:$0xf]
  %v146 = vld [vmem:[%s2 + $0x1a8] sm:$0xf]
  %v147 = vld [vmem:[%s2 + $0x1ac] sm:$0xf]
  %v148 = vld [vmem:[%s2 + $0x1b0] sm:$0xf]
  %v149 = vld [vmem:[%s2 + $0x1b4] sm:$0xf]
  %v150 = vld [vmem:[%s2 + $0x1b8] sm:$0xf]
  %v151 = vld [vmem:[%s2 + $0x1bc] sm:$0xf]
  %v152 = vld [vmem:[%s2 + $0x1c0] sm:$0xf]
  %v153 = vld [vmem:[%s2 + $0x1c4] sm:$0xf]
  %v154 = vld [vmem:[%s2 + $0x1c8] sm:$0xf]
  %v155 = vld [vmem:[%s2 + $0x1cc] sm:$0xf]
  %v156 = vld [vmem:[%s2 + $0x1d0] sm:$0xf]
  %v157 = vld [vmem:[%s2 + $0x1d4] sm:$0xf]
  %v158 = vld [vmem:[%s2 + $0x1d8] sm:$0xf]
  %v159 = vld [vmem:[%s2 + $0x1dc] sm:$0xf]
  %v160 = vld [vmem:[%s2 + $0x1e0] sm:$0xf]
  %v161 = vld [vmem:[%s2 + $0x1e4] sm:$0xf]
  %v162 = vld [vmem:[%s2 + $0x1e8] sm:$0xf]
  %v163 = vld [vmem:[%s2 + $0x1ec] sm:$0xf]
  %v164 = vld [vmem:[%s2 + $0x1f0] sm:$0xf]
  %v165 = vld [vmem:[%s2 + $0x1f4] sm:$0xf]
  %v166 = vld [vmem:[%s2 + $0x1f8] sm:$0xf]
  %v167 = vld [vmem:[%s2 + $0x1fc] sm:$0xf]
  %v168 = vld [vmem:[%s3] sm:$0x1]
  %v170 = vlaneseq
  %v171 = vshrl.u32 %v170, 7
  %v172 = vsub.s32 0, %v171
  %v173 = vrot.slane %v168, %v172
  %v179 = vunpack.c.l.b16 %v36
  %v180 = vunpack.c.h.b16 %v36
  %v181 = vunpack.c.l.b16 %v37
  %v182 = vunpack.c.h.b16 %v37
  %v183 = vunpack.c.l.b16 %v38
  %v184 = vunpack.c.h.b16 %v38
  %v185 = vunpack.c.l.b16 %v39
  %v186 = vunpack.c.h.b16 %v39
  %v187 = vpack.c.b16 %v179, %v179
  %v188 = vpack.c.b16 %v180, %v180
  %v189 = vpack.c.b16 %v181, %v181
  %v190 = vpack.c.b16 %v182, %v182
  %v191 = vpack.c.b16 %v183, %v183
  %v192 = vpack.c.b16 %v184, %v184
  %v193 = vpack.c.b16 %v185, %v185
  %v194 = vpack.c.b16 %v186, %v186
  %v331 = vunpack.c.l.b16 %v40
  %v332 = vunpack.c.l.b16 %v41
  %v333 = vunpack.c.l.b16 %v42
  %v334 = vunpack.c.l.b16 %v43
  %v335 = vunpack.c.l.b16 %v44
  %v336 = vunpack.c.l.b16 %v45
  %v337 = vunpack.c.l.b16 %v46
  %v338 = vunpack.c.l.b16 %v47
  %v339 = vunpack.c.l.b16 %v48
  %v340 = vunpack.c.l.b16 %v49
  %v341 = vunpack.c.l.b16 %v50
  %v342 = vunpack.c.l.b16 %v51
  %v343 = vunpack.c.l.b16 %v52
  %v344 = vunpack.c.l.b16 %v53
  %v345 = vunpack.c.l.b16 %v54
  %v346 = vunpack.c.l.b16 %v55
  %v347 = vunpack.c.l.b16 %v56
  %v348 = vunpack.c.l.b16 %v57
  %v349 = vunpack.c.l.b16 %v58
  %v350 = vunpack.c.l.b16 %v59
  %v351 = vunpack.c.l.b16 %v60
  %v352 = vunpack.c.l.b16 %v61
  %v353 = vunpack.c.l.b16 %v62
  %v354 = vunpack.c.l.b16 %v63
  %v355 = vunpack.c.l.b16 %v64
  %v356 = vunpack.c.l.b16 %v65
  %v357 = vunpack.c.l.b16 %v66
  %v358 = vunpack.c.l.b16 %v67
  %v359 = vunpack.c.l.b16 %v68
  %v360 = vunpack.c.l.b16 %v69
  %v361 = vunpack.c.l.b16 %v70
  %v362 = vunpack.c.l.b16 %v71
  %v363 = vunpack.c.l.b16 %v72
  %v364 = vunpack.c.l.b16 %v73
  %v365 = vunpack.c.l.b16 %v74
  %v366 = vunpack.c.l.b16 %v75
  %v367 = vunpack.c.l.b16 %v76
  %v368 = vunpack.c.l.b16 %v77
  %v369 = vunpack.c.l.b16 %v78
  %v370 = vunpack.c.l.b16 %v79
  %v371 = vunpack.c.l.b16 %v80
  %v372 = vunpack.c.l.b16 %v81
  %v373 = vunpack.c.l.b16 %v82
  %v374 = vunpack.c.l.b16 %v83
  %v375 = vunpack.c.l.b16 %v84
  %v376 = vunpack.c.l.b16 %v85
  %v377 = vunpack.c.l.b16 %v86
  %v378 = vunpack.c.l.b16 %v87
  %v379 = vunpack.c.l.b16 %v88
  %v380 = vunpack.c.l.b16 %v89
  %v381 = vunpack.c.l.b16 %v90
  %v382 = vunpack.c.l.b16 %v91
  %v383 = vunpack.c.l.b16 %v92
  %v384 = vunpack.c.l.b16 %v93
  %v385 = vunpack.c.l.b16 %v94
  %v386 = vunpack.c.l.b16 %v95
  %v387 = vunpack.c.l.b16 %v96
  %v388 = vunpack.c.l.b16 %v97
  %v389 = vunpack.c.l.b16 %v98
  %v390 = vunpack.c.l.b16 %v99
  %v391 = vunpack.c.l.b16 %v100
  %v392 = vunpack.c.l.b16 %v101
  %v393 = vunpack.c.l.b16 %v102
  %v394 = vunpack.c.l.b16 %v103
  %v395 = vunpack.c.l.b16 %v104
  %v396 = vunpack.c.l.b16 %v105
  %v397 = vunpack.c.l.b16 %v106
  %v398 = vunpack.c.l.b16 %v107
  %v399 = vunpack.c.l.b16 %v108
  %v400 = vunpack.c.l.b16 %v109
  %v401 = vunpack.c.l.b16 %v110
  %v402 = vunpack.c.l.b16 %v111
  %v403 = vunpack.c.l.b16 %v112
  %v404 = vunpack.c.l.b16 %v113
  %v405 = vunpack.c.l.b16 %v114
  %v406 = vunpack.c.l.b16 %v115
  %v407 = vunpack.c.l.b16 %v116
  %v408 = vunpack.c.l.b16 %v117
  %v409 = vunpack.c.l.b16 %v118
  %v410 = vunpack.c.l.b16 %v119
  %v411 = vunpack.c.l.b16 %v120
  %v412 = vunpack.c.l.b16 %v121
  %v413 = vunpack.c.l.b16 %v122
  %v414 = vunpack.c.l.b16 %v123
  %v415 = vunpack.c.l.b16 %v124
  %v416 = vunpack.c.l.b16 %v125
  %v417 = vunpack.c.l.b16 %v126
  %v418 = vunpack.c.l.b16 %v127
  %v419 = vunpack.c.l.b16 %v128
  %v420 = vunpack.c.l.b16 %v129
  %v421 = vunpack.c.l.b16 %v130
  %v422 = vunpack.c.l.b16 %v131
  %v423 = vunpack.c.l.b16 %v132
  %v424 = vunpack.c.l.b16 %v133
  %v425 = vunpack.c.l.b16 %v134
  %v426 = vunpack.c.l.b16 %v135
  %v427 = vunpack.c.l.b16 %v136
  %v428 = vunpack.c.l.b16 %v137
  %v429 = vunpack.c.l.b16 %v138
  %v430 = vunpack.c.l.b16 %v139
  %v431 = vunpack.c.l.b16 %v140
  %v432 = vunpack.c.l.b16 %v141
  %v433 = vunpack.c.l.b16 %v142
  %v434 = vunpack.c.l.b16 %v143
  %v435 = vunpack.c.l.b16 %v144
  %v436 = vunpack.c.l.b16 %v145
  %v437 = vunpack.c.l.b16 %v146
  %v438 = vunpack.c.l.b16 %v147
  %v439 = vunpack.c.l.b16 %v148
  %v440 = vunpack.c.l.b16 %v149
  %v441 = vunpack.c.l.b16 %v150
  %v442 = vunpack.c.l.b16 %v151
  %v443 = vunpack.c.l.b16 %v152
  %v444 = vunpack.c.l.b16 %v153
  %v445 = vunpack.c.l.b16 %v154
  %v446 = vunpack.c.l.b16 %v155
  %v447 = vunpack.c.l.b16 %v156
  %v448 = vunpack.c.l.b16 %v157
  %v449 = vunpack.c.l.b16 %v158
  %v450 = vunpack.c.l.b16 %v159
  %v451 = vunpack.c.l.b16 %v160
  %v452 = vunpack.c.l.b16 %v161
  %v453 = vunpack.c.l.b16 %v162
  %v454 = vunpack.c.l.b16 %v163
  %v455 = vunpack.c.l.b16 %v164
  %v456 = vunpack.c.l.b16 %v165
  %v457 = vunpack.c.l.b16 %v166
  %v458 = vunpack.c.l.b16 %v167
  %v459 = vpack.c.b16 %v332, %v331
  %v460 = vpack.c.b16 %v334, %v333
  %v461 = vpack.c.b16 %v336, %v335
  %v462 = vpack.c.b16 %v338, %v337
  %v463 = vpack.c.b16 %v340, %v339
  %v464 = vpack.c.b16 %v342, %v341
  %v465 = vpack.c.b16 %v344, %v343
  %v466 = vpack.c.b16 %v346, %v345
  %v467 = vpack.c.b16 %v348, %v347
  %v468 = vpack.c.b16 %v350, %v349
  %v469 = vpack.c.b16 %v352, %v351
  %v470 = vpack.c.b16 %v354, %v353
  %v471 = vpack.c.b16 %v356, %v355
  %v472 = vpack.c.b16 %v358, %v357
  %v473 = vpack.c.b16 %v360, %v359
  %v474 = vpack.c.b16 %v362, %v361
  %v475 = vpack.c.b16 %v364, %v363
  %v476 = vpack.c.b16 %v366, %v365
  %v477 = vpack.c.b16 %v368, %v367
  %v478 = vpack.c.b16 %v370, %v369
  %v479 = vpack.c.b16 %v372, %v371
  %v480 = vpack.c.b16 %v374, %v373
  %v481 = vpack.c.b16 %v376, %v375
  %v482 = vpack.c.b16 %v378, %v377
  %v483 = vpack.c.b16 %v380, %v379
  %v484 = vpack.c.b16 %v382, %v381
  %v485 = vpack.c.b16 %v384, %v383
  %v486 = vpack.c.b16 %v386, %v385
  %v487 = vpack.c.b16 %v388, %v387
  %v488 = vpack.c.b16 %v390, %v389
  %v489 = vpack.c.b16 %v392, %v391
  %v490 = vpack.c.b16 %v394, %v393
  %v491 = vpack.c.b16 %v396, %v395
  %v492 = vpack.c.b16 %v398, %v397
  %v493 = vpack.c.b16 %v400, %v399
  %v494 = vpack.c.b16 %v402, %v401
  %v495 = vpack.c.b16 %v404, %v403
  %v496 = vpack.c.b16 %v406, %v405
  %v497 = vpack.c.b16 %v408, %v407
  %v498 = vpack.c.b16 %v410, %v409
  %v499 = vpack.c.b16 %v412, %v411
  %v500 = vpack.c.b16 %v414, %v413
  %v501 = vpack.c.b16 %v416, %v415
  %v502 = vpack.c.b16 %v418, %v417
  %v503 = vpack.c.b16 %v420, %v419
  %v504 = vpack.c.b16 %v422, %v421
  %v505 = vpack.c.b16 %v424, %v423
  %v506 = vpack.c.b16 %v426, %v425
  %v507 = vpack.c.b16 %v428, %v427
  %v508 = vpack.c.b16 %v430, %v429
  %v509 = vpack.c.b16 %v432, %v431
  %v510 = vpack.c.b16 %v434, %v433
  %v511 = vpack.c.b16 %v436, %v435
  %v512 = vpack.c.b16 %v438, %v437
  %v513 = vpack.c.b16 %v440, %v439
  %v514 = vpack.c.b16 %v442, %v441
  %v515 = vpack.c.b16 %v444, %v443
  %v516 = vpack.c.b16 %v446, %v445
  %v517 = vpack.c.b16 %v448, %v447
  %v518 = vpack.c.b16 %v450, %v449
  %v519 = vpack.c.b16 %v452, %v451
  %v520 = vpack.c.b16 %v454, %v453
  %v521 = vpack.c.b16 %v456, %v455
  %v522 = vpack.c.b16 %v458, %v457
  %587 = vmatprep.subr.bf16.mxu0 0
  %588 = vmatpush1.bf16.msra.mxu0 %v459
  %589 = vmatprep.subr.bf16.mxu0 0
  %590 = vmatpush1.bf16.msra.mxu0 %v460
  %591 = vmatprep.subr.bf16.mxu0 0
  %592 = vmatpush1.bf16.msra.mxu0 %v461
  %593 = vmatprep.subr.bf16.mxu0 0
  %594 = vmatpush1.bf16.msra.mxu0 %v462
  %595 = vmatprep.subr.bf16.mxu0 0
  %596 = vmatpush1.bf16.msra.mxu0 %v463
  %597 = vmatprep.subr.bf16.mxu0 0
  %598 = vmatpush1.bf16.msra.mxu0 %v464
  %599 = vmatprep.subr.bf16.mxu0 0
  %600 = vmatpush1.bf16.msra.mxu0 %v465
  %601 = vmatprep.subr.bf16.mxu0 0
  %602 = vmatpush1.bf16.msra.mxu0 %v466
  %603 = vmatprep.subr.bf16.mxu0 0
  %604 = vmatpush1.bf16.msra.mxu0 %v467
  %605 = vmatprep.subr.bf16.mxu0 0
  %606 = vmatpush1.bf16.msra.mxu0 %v468
  %607 = vmatprep.subr.bf16.mxu0 0
  %608 = vmatpush1.bf16.msra.mxu0 %v469
  %609 = vmatprep.subr.bf16.mxu0 0
  %610 = vmatpush1.bf16.msra.mxu0 %v470
  %611 = vmatprep.subr.bf16.mxu0 0
  %612 = vmatpush1.bf16.msra.mxu0 %v471
  %613 = vmatprep.subr.bf16.mxu0 0
  %614 = vmatpush1.bf16.msra.mxu0 %v472
  %615 = vmatprep.subr.bf16.mxu0 0
  %616 = vmatpush1.bf16.msra.mxu0 %v473
  %617 = vmatprep.subr.bf16.mxu0 0
  %618 = vmatpush1.bf16.msra.mxu0 %v474
  %619 = vmatprep.mubr.bf16.mxu0 %v188
  %620 = vmatmul.mubr.bf16.gmra.mrb[0].mxu0 %v187
  %v621 = vpop.f32.mrb[0].mxu0
  %v622 = vadd.f32 %v173, %v621
  %v623 = vpop.f32.mrb[0].mxu0
  %v624 = vpop.f32.mrb[0].mxu0
  %v625 = vpop.f32.mrb[0].mxu0
  %626 = vdwg.mxu0
  %627 = vmatprep.subr.bf16.mxu0 0
  %628 = vmatpush1.bf16.msra.mxu0 %v475
  %629 = vmatprep.subr.bf16.mxu0 0
  %630 = vmatpush1.bf16.msra.mxu0 %v476
  %631 = vmatprep.subr.bf16.mxu0 0
  %632 = vmatpush1.bf16.msra.mxu0 %v477
  %633 = vmatprep.subr.bf16.mxu0 0
  %634 = vmatpush1.bf16.msra.mxu0 %v478
  %635 = vmatprep.subr.bf16.mxu0 0
  %636 = vmatpush1.bf16.msra.mxu0 %v479
  %637 = vmatprep.subr.bf16.mxu0 0
  %638 = vmatpush1.bf16.msra.mxu0 %v480
  %639 = vmatprep.subr.bf16.mxu0 0
  %640 = vmatpush1.bf16.msra.mxu0 %v481
  %641 = vmatprep.subr.bf16.mxu0 0
  %642 = vmatpush1.bf16.msra.mxu0 %v482
  %643 = vmatprep.subr.bf16.mxu0 0
  %644 = vmatpush1.bf16.msra.mxu0 %v483
  %645 = vmatprep.subr.bf16.mxu0 0
  %646 = vmatpush1.bf16.msra.mxu0 %v484
  %647 = vmatprep.subr.bf16.mxu0 0
  %648 = vmatpush1.bf16.msra.mxu0 %v485
  %649 = vmatprep.subr.bf16.mxu0 0
  %650 = vmatpush1.bf16.msra.mxu0 %v486
  %651 = vmatprep.subr.bf16.mxu0 0
  %652 = vmatpush1.bf16.msra.mxu0 %v487
  %653 = vmatprep.subr.bf16.mxu0 0
  %654 = vmatpush1.bf16.msra.mxu0 %v488
  %655 = vmatprep.subr.bf16.mxu0 0
  %656 = vmatpush1.bf16.msra.mxu0 %v489
  %657 = vmatprep.subr.bf16.mxu0 0
  %658 = vmatpush1.bf16.msra.mxu0 %v490
  %659 = vmatprep.mubr.bf16.mxu0 %v190
  %660 = vmatmul.mubr.bf16.gmra.mrb[0].mxu0 %v189
  %v661 = vpop.f32.mrb[0].mxu0
  %v662 = vadd.f32 %v622, %v661
  %v663 = vpop.f32.mrb[0].mxu0
  %v664 = vpop.f32.mrb[0].mxu0
  %v665 = vpop.f32.mrb[0].mxu0
  %666 = vdwg.mxu0
  %667 = vmatprep.subr.bf16.mxu0 0
  %668 = vmatpush1.bf16.msra.mxu0 %v491
  %669 = vmatprep.subr.bf16.mxu0 0
  %670 = vmatpush1.bf16.msra.mxu0 %v492
  %671 = vmatprep.subr.bf16.mxu0 0
  %672 = vmatpush1.bf16.msra.mxu0 %v493
  %673 = vmatprep.subr.bf16.mxu0 0
  %674 = vmatpush1.bf16.msra.mxu0 %v494
  %675 = vmatprep.subr.bf16.mxu0 0
  %676 = vmatpush1.bf16.msra.mxu0 %v495
  %677 = vmatprep.subr.bf16.mxu0 0
  %678 = vmatpush1.bf16.msra.mxu0 %v496
  %679 = vmatprep.subr.bf16.mxu0 0
  %680 = vmatpush1.bf16.msra.mxu0 %v497
  %681 = vmatprep.subr.bf16.mxu0 0
  %682 = vmatpush1.bf16.msra.mxu0 %v498
  %683 = vmatprep.subr.bf16.mxu0 0
  %684 = vmatpush1.bf16.msra.mxu0 %v499
  %685 = vmatprep.subr.bf16.mxu0 0
  %686 = vmatpush1.bf16.msra.mxu0 %v500
  %687 = vmatprep.subr.bf16.mxu0 0
  %688 = vmatpush1.bf16.msra.mxu0 %v501
  %689 = vmatprep.subr.bf16.mxu0 0
  %690 = vmatpush1.bf16.msra.mxu0 %v502
  %691 = vmatprep.subr.bf16.mxu0 0
  %692 = vmatpush1.bf16.msra.mxu0 %v503
  %693 = vmatprep.subr.bf16.mxu0 0
  %694 = vmatpush1.bf16.msra.mxu0 %v504
  %695 = vmatprep.subr.bf16.mxu0 0
  %696 = vmatpush1.bf16.msra.mxu0 %v505
  %697 = vmatprep.subr.bf16.mxu0 0
  %698 = vmatpush1.bf16.msra.mxu0 %v506
  %699 = vmatprep.mubr.bf16.mxu0 %v192
  %700 = vmatmul.mubr.bf16.gmra.mrb[0].mxu0 %v191
  %v701 = vpop.f32.mrb[0].mxu0
  %v702 = vadd.f32 %v662, %v701
  %v703 = vpop.f32.mrb[0].mxu0
  %v704 = vpop.f32.mrb[0].mxu0
  %v705 = vpop.f32.mrb[0].mxu0
  %706 = vdwg.mxu0
  %707 = vmatprep.subr.bf16.mxu0 0
  %708 = vmatpush1.bf16.msra.mxu0 %v507
  %709 = vmatprep.subr.bf16.mxu0 0
  %710 = vmatpush1.bf16.msra.mxu0 %v508
  %711 = vmatprep.subr.bf16.mxu0 0
  %712 = vmatpush1.bf16.msra.mxu0 %v509
  %713 = vmatprep.subr.bf16.mxu0 0
  %714 = vmatpush1.bf16.msra.mxu0 %v510
  %715 = vmatprep.subr.bf16.mxu0 0
  %716 = vmatpush1.bf16.msra.mxu0 %v511
  %717 = vmatprep.subr.bf16.mxu0 0
  %718 = vmatpush1.bf16.msra.mxu0 %v512
  %719 = vmatprep.subr.bf16.mxu0 0
  %720 = vmatpush1.bf16.msra.mxu0 %v513
  %721 = vmatprep.subr.bf16.mxu0 0
  %722 = vmatpush1.bf16.msra.mxu0 %v514
  %723 = vmatprep.subr.bf16.mxu0 0
  %724 = vmatpush1.bf16.msra.mxu0 %v515
  %725 = vmatprep.subr.bf16.mxu0 0
  %726 = vmatpush1.bf16.msra.mxu0 %v516
  %727 = vmatprep.subr.bf16.mxu0 0
  %728 = vmatpush1.bf16.msra.mxu0 %v517
  %729 = vmatprep.subr.bf16.mxu0 0
  %730 = vmatpush1.bf16.msra.mxu0 %v518
  %731 = vmatprep.subr.bf16.mxu0 0
  %732 = vmatpush1.bf16.msra.mxu0 %v519
  %733 = vmatprep.subr.bf16.mxu0 0
  %734 = vmatpush1.bf16.msra.mxu0 %v520
  %735 = vmatprep.subr.bf16.mxu0 0
  %736 = vmatpush1.bf16.msra.mxu0 %v521
  %737 = vmatprep.subr.bf16.mxu0 0
  %738 = vmatpush1.bf16.msra.mxu0 %v522
  %739 = vmatprep.mubr.bf16.mxu0 %v194
  %740 = vmatmul.mubr.bf16.gmra.mrb[0].mxu0 %v193
  %v741 = vpop.f32.mrb[0].mxu0
  %v742 = vadd.f32 %v702, %v741
  %v743 = vpop.f32.mrb[0].mxu0
  %v744 = vpop.f32.mrb[0].mxu0
  %v745 = vpop.f32.mrb[0].mxu0
  %746 = vdwg.mxu0
  %vm747 = vcmp.ge.f32.partialorder %v742, 0.0
  %v748 = vmul.f32 %v742, 0.05
  %v749 = vsel %vm747, %v742, %v748
  %750 = vst [vmem:[%s9] sm:$0xff] %v749
  %v751 = vpack.c.bf16 %v749, %v749
  %v752 = vld [vmem:[%s4] sm:$0xf]
  %v753 = vld [vmem:[%s4 + $0x4] sm:$0xf]
  %v754 = vld [vmem:[%s4 + $0x8] sm:$0xf]
  %v755 = vld [vmem:[%s4 + $0xc] sm:$0xf]
  %v756 = vld [vmem:[%s4 + $0x10] sm:$0xf]
  %v757 = vld [vmem:[%s4 + $0x14] sm:$0xf]
  %v758 = vld [vmem:[%s4 + $0x18] sm:$0xf]
  %v759 = vld [vmem:[%s4 + $0x1c] sm:$0xf]
  %v760 = vld [vmem:[%s4 + $0x20] sm:$0xf]
  %v761 = vld [vmem:[%s4 + $0x24] sm:$0xf]
  %v762 = vld [vmem:[%s4 + $0x28] sm:$0xf]
  %v763 = vld [vmem:[%s4 + $0x2c] sm:$0xf]
  %v764 = vld [vmem:[%s4 + $0x30] sm:$0xf]
  %v765 = vld [vmem:[%s4 + $0x34] sm:$0xf]
  %v766 = vld [vmem:[%s4 + $0x38] sm:$0xf]
  %v767 = vld [vmem:[%s4 + $0x3c] sm:$0xf]
  %v768 = vld [vmem:[%s5] sm:$0x1]
  %v770 = vlaneseq
  %v771 = vshrl.u32 %v770, 7
  %v772 = vsub.s32 0, %v771
  %v773 = vrot.slane %v768, %v772
  %v791 = vunpack.c.l.b16 %v752
  %v792 = vunpack.c.l.b16 %v753
  %v793 = vunpack.c.l.b16 %v754
  %v794 = vunpack.c.l.b16 %v755
  %v795 = vunpack.c.l.b16 %v756
  %v796 = vunpack.c.l.b16 %v757
  %v797 = vunpack.c.l.b16 %v758
  %v798 = vunpack.c.l.b16 %v759
  %v799 = vunpack.c.l.b16 %v760
  %v800 = vunpack.c.l.b16 %v761
  %v801 = vunpack.c.l.b16 %v762
  %v802 = vunpack.c.l.b16 %v763
  %v803 = vunpack.c.l.b16 %v764
  %v804 = vunpack.c.l.b16 %v765
  %v805 = vunpack.c.l.b16 %v766
  %v806 = vunpack.c.l.b16 %v767
  %v807 = vpack.c.b16 %v792, %v791
  %v808 = vpack.c.b16 %v794, %v793
  %v809 = vpack.c.b16 %v796, %v795
  %v810 = vpack.c.b16 %v798, %v797
  %v811 = vpack.c.b16 %v800, %v799
  %v812 = vpack.c.b16 %v802, %v801
  %v813 = vpack.c.b16 %v804, %v803
  %v814 = vpack.c.b16 %v806, %v805
  %823 = vmatprep.subr.bf16.mxu0 0
  %824 = vmatpush1.bf16.msra.mxu0 %v807
  %825 = vmatprep.subr.bf16.mxu0 0
  %826 = vmatpush1.bf16.msra.mxu0 %v808
  %827 = vmatprep.subr.bf16.mxu0 0
  %828 = vmatpush1.bf16.msra.mxu0 %v809
  %829 = vmatprep.subr.bf16.mxu0 0
  %830 = vmatpush1.bf16.msra.mxu0 %v810
  %831 = vmatprep.subr.bf16.mxu0 0
  %832 = vmatpush1.bf16.msra.mxu0 %v811
  %833 = vmatprep.subr.bf16.mxu0 0
  %834 = vmatpush1.bf16.msra.mxu0 %v812
  %835 = vmatprep.subr.bf16.mxu0 0
  %836 = vmatpush1.bf16.msra.mxu0 %v813
  %837 = vmatprep.subr.bf16.mxu0 0
  %838 = vmatpush1.bf16.msra.mxu0 %v814
  %839 = vmatprep.subr.bf16.mxu0 0
  %840 = vmatpush1.bf16.msra.mxu0 0
  %841 = vmatprep.subr.bf16.mxu0 0
  %842 = vmatpush1.bf16.msra.mxu0 0
  %843 = vmatprep.subr.bf16.mxu0 0
  %844 = vmatpush1.bf16.msra.mxu0 0
  %845 = vmatprep.subr.bf16.mxu0 0
  %846 = vmatpush1.bf16.msra.mxu0 0
  %847 = vmatprep.subr.bf16.mxu0 0
  %848 = vmatpush1.bf16.msra.mxu0 0
  %849 = vmatprep.subr.bf16.mxu0 0
  %850 = vmatpush1.bf16.msra.mxu0 0
  %851 = vmatprep.subr.bf16.mxu0 0
  %852 = vmatpush1.bf16.msra.mxu0 0
  %853 = vmatprep.subr.bf16.mxu0 0
  %854 = vmatpush1.bf16.msra.mxu0 0
  %855 = vmatprep.mubr.bf16.mxu0 0
  %856 = vmatmul.mubr.bf16.gmra.mrb[0].mxu0 %v751
  %v857 = vpop.f32.mrb[0].mxu0
  %v858 = vadd.f32 %v773, %v857
  %v859 = vpop.f32.mrb[0].mxu0
  %v860 = vpop.f32.mrb[0].mxu0
  %v861 = vpop.f32.mrb[0].mxu0
  %862 = vdwg.mxu0
  %863 = vst [vmem:[%s10] sm:$0xff] %v858
  %v864 = vld [vmem:[%s6] sm:$0xff]
  %v865 = vld [vmem:[%s6 + $0x8] sm:$0xff]
  %v866 = vld [vmem:[%s6 + $0x10] sm:$0xff]
  %v867 = vld [vmem:[%s6 + $0x18] sm:$0xff]
  %v868 = vld [vmem:[%s6 + $0x20] sm:$0xff]
  %v869 = vld [vmem:[%s6 + $0x28] sm:$0xff]
  %v870 = vld [vmem:[%s6 + $0x30] sm:$0xff]
  %v871 = vld [vmem:[%s6 + $0x38] sm:$0xff]
  %v872 = vld [vmem:[%s6 + $0x40] sm:$0xff]
  %v873 = vld [vmem:[%s6 + $0x48] sm:$0xff]
  %v874 = vld [vmem:[%s6 + $0x50] sm:$0xff]
  %v875 = vld [vmem:[%s6 + $0x58] sm:$0xff]
  %v876 = vld [vmem:[%s6 + $0x60] sm:$0xff]
  %v877 = vld [vmem:[%s6 + $0x68] sm:$0xff]
  %v878 = vld [vmem:[%s6 + $0x70] sm:$0xff]
  %v879 = vld [vmem:[%s6 + $0x78] sm:$0xff]
  %v880 = vld [vmem:[%s6 + $0x80] sm:$0xff]
  %v881 = vld [vmem:[%s6 + $0x88] sm:$0xff]
  %v882 = vld [vmem:[%s6 + $0x90] sm:$0xff]
  %v883 = vld [vmem:[%s6 + $0x98] sm:$0xff]
  %v884 = vld [vmem:[%s6 + $0xa0] sm:$0xff]
  %v885 = vld [vmem:[%s6 + $0xa8] sm:$0xff]
  %v886 = vld [vmem:[%s6 + $0xb0] sm:$0xff]
  %v887 = vld [vmem:[%s6 + $0xb8] sm:$0xff]
  %v888 = vld [vmem:[%s6 + $0xc0] sm:$0xff]
  %v889 = vld [vmem:[%s6 + $0xc8] sm:$0xff]
  %v890 = vld [vmem:[%s6 + $0xd0] sm:$0xff]
  %v891 = vld [vmem:[%s6 + $0xd8] sm:$0xff]
  %v892 = vld [vmem:[%s6 + $0xe0] sm:$0xff]
  %v893 = vld [vmem:[%s6 + $0xe8] sm:$0xff]
  %v894 = vld [vmem:[%s6 + $0xf0] sm:$0xff]
  %v895 = vld [vmem:[%s6 + $0xf8] sm:$0xff]
  %v896 = vld [vmem:[%s6 + $0x100] sm:$0xff]
  %v897 = vld [vmem:[%s6 + $0x108] sm:$0xff]
  %v898 = vld [vmem:[%s6 + $0x110] sm:$0xff]
  %v899 = vld [vmem:[%s6 + $0x118] sm:$0xff]
  %v900 = vld [vmem:[%s6 + $0x120] sm:$0xff]
  %v901 = vld [vmem:[%s6 + $0x128] sm:$0xff]
  %v902 = vld [vmem:[%s6 + $0x130] sm:$0xff]
  %v903 = vld [vmem:[%s6 + $0x138] sm:$0xff]
  %v904 = vld [vmem:[%s6 + $0x140] sm:$0xff]
  %v905 = vld [vmem:[%s6 + $0x148] sm:$0xff]
  %v906 = vld [vmem:[%s6 + $0x150] sm:$0xff]
  %v907 = vld [vmem:[%s6 + $0x158] sm:$0xff]
  %v908 = vld [vmem:[%s6 + $0x160] sm:$0xff]
  %v909 = vld [vmem:[%s6 + $0x168] sm:$0xff]
  %v910 = vld [vmem:[%s6 + $0x170] sm:$0xff]
  %v911 = vld [vmem:[%s6 + $0x178] sm:$0xff]
  %v912 = vld [vmem:[%s6 + $0x180] sm:$0xff]
  %v913 = vld [vmem:[%s6 + $0x188] sm:$0xff]
  %v914 = vld [vmem:[%s6 + $0x190] sm:$0xff]
  %v915 = vld [vmem:[%s6 + $0x198] sm:$0xff]
  %v916 = vld [vmem:[%s6 + $0x1a0] sm:$0xff]
  %v917 = vld [vmem:[%s6 + $0x1a8] sm:$0xff]
  %v918 = vld [vmem:[%s6 + $0x1b0] sm:$0xff]
  %v919 = vld [vmem:[%s6 + $0x1b8] sm:$0xff]
  %v920 = vld [vmem:[%s6 + $0x1c0] sm:$0xff]
  %v921 = vld [vmem:[%s6 + $0x1c8] sm:$0xff]
  %v922 = vld [vmem:[%s6 + $0x1d0] sm:$0xff]
  %v923 = vld [vmem:[%s6 + $0x1d8] sm:$0xff]
  %v924 = vld [vmem:[%s6 + $0x1e0] sm:$0xff]
  %v925 = vld [vmem:[%s6 + $0x1e8] sm:$0xff]
  %v926 = vld [vmem:[%s6 + $0x1f0] sm:$0xff]
  %v927 = vld [vmem:[%s6 + $0x1f8] sm:$0xff]
  %v928 = vld [vmem:[%s1] sm:$0xf]
  %v929 = vld [vmem:[%s7] sm:$0xff]
  %v930 = vld [vmem:[%s7 + $0x8] sm:$0xff]
  %v931 = vld [vmem:[%s7 + $0x10] sm:$0xff]
  %v932 = vld [vmem:[%s7 + $0x18] sm:$0xff]
  %v933 = vld [vmem:[%s7 + $0x20] sm:$0xff]
  %v934 = vld [vmem:[%s7 + $0x28] sm:$0xff]
  %v935 = vld [vmem:[%s7 + $0x30] sm:$0xff]
  %v936 = vld [vmem:[%s7 + $0x38] sm:$0xff]
  %v937 = vld [vmem:[%s7 + $0x40] sm:$0xff]
  %v938 = vld [vmem:[%s7 + $0x48] sm:$0xff]
  %v939 = vld [vmem:[%s7 + $0x50] sm:$0xff]
  %v940 = vld [vmem:[%s7 + $0x58] sm:$0xff]
  %v941 = vld [vmem:[%s7 + $0x60] sm:$0xff]
  %v942 = vld [vmem:[%s7 + $0x68] sm:$0xff]
  %v943 = vld [vmem:[%s7 + $0x70] sm:$0xff]
  %v944 = vld [vmem:[%s7 + $0x78] sm:$0xff]
  %v945 = vld [vmem:[%s7 + $0x80] sm:$0xff]
  %v946 = vld [vmem:[%s7 + $0x88] sm:$0xff]
  %v947 = vld [vmem:[%s7 + $0x90] sm:$0xff]
  %v948 = vld [vmem:[%s7 + $0x98] sm:$0xff]
  %v949 = vld [vmem:[%s7 + $0xa0] sm:$0xff]
  %v950 = vld [vmem:[%s7 + $0xa8] sm:$0xff]
  %v951 = vld [vmem:[%s7 + $0xb0] sm:$0xff]
  %v952 = vld [vmem:[%s7 + $0xb8] sm:$0xff]
  %v953 = vld [vmem:[%s7 + $0xc0] sm:$0xff]
  %v954 = vld [vmem:[%s7 + $0xc8] sm:$0xff]
  %v955 = vld [vmem:[%s7 + $0xd0] sm:$0xff]
  %v956 = vld [vmem:[%s7 + $0xd8] sm:$0xff]
  %v957 = vld [vmem:[%s7 + $0xe0] sm:$0xff]
  %v958 = vld [vmem:[%s7 + $0xe8] sm:$0xff]
  %v959 = vld [vmem:[%s7 + $0xf0] sm:$0xff]
  %v960 = vld [vmem:[%s7 + $0xf8] sm:$0xff]
  %v961 = vld [vmem:[%s7 + $0x100] sm:$0xff]
  %v962 = vld [vmem:[%s7 + $0x108] sm:$0xff]
  %v963 = vld [vmem:[%s7 + $0x110] sm:$0xff]
  %v964 = vld [vmem:[%s7 + $0x118] sm:$0xff]
  %v965 = vld [vmem:[%s7 + $0x120] sm:$0xff]
  %v966 = vld [vmem:[%s7 + $0x128] sm:$0xff]
  %v967 = vld [vmem:[%s7 + $0x130] sm:$0xff]
  %v968 = vld [vmem:[%s7 + $0x138] sm:$0xff]
  %v969 = vld [vmem:[%s7 + $0x140] sm:$0xff]
  %v970 = vld [vmem:[%s7 + $0x148] sm:$0xff]
  %v971 = vld [vmem:[%s7 + $0x150] sm:$0xff]
  %v972 = vld [vmem:[%s7 + $0x158] sm:$0xff]
  %v973 = vld [vmem:[%s7 + $0x160] sm:$0xff]
  %v974 = vld [vmem:[%s7 + $0x168] sm:$0xff]
  %v975 = vld [vmem:[%s7 + $0x170] sm:$0xff]
  %v976 = vld [vmem:[%s7 + $0x178] sm:$0xff]
  %v977 = vld [vmem:[%s7 + $0x180] sm:$0xff]
  %v978 = vld [vmem:[%s7 + $0x188] sm:$0xff]
  %v979 = vld [vmem:[%s7 + $0x190] sm:$0xff]
  %v980 = vld [vmem:[%s7 + $0x198] sm:$0xff]
  %v981 = vld [vmem:[%s7 + $0x1a0] sm:$0xff]
  %v982 = vld [vmem:[%s7 + $0x1a8] sm:$0xff]
  %v983 = vld [vmem:[%s7 + $0x1b0] sm:$0xff]
  %v984 = vld [vmem:[%s7 + $0x1b8] sm:$0xff]
  %v985 = vld [vmem:[%s7 + $0x1c0] sm:$0xff]
  %v986 = vld [vmem:[%s7 + $0x1c8] sm:$0xff]
  %v987 = vld [vmem:[%s7 + $0x1d0] sm:$0xff]
  %v988 = vld [vmem:[%s7 + $0x1d8] sm:$0xff]
  %v989 = vld [vmem:[%s7 + $0x1e0] sm:$0xff]
  %v990 = vld [vmem:[%s7 + $0x1e8] sm:$0xff]
  %v991 = vld [vmem:[%s7 + $0x1f0] sm:$0xff]
  %v992 = vld [vmem:[%s7 + $0x1f8] sm:$0xff]
  %v1057 = vunpack.c.l.b16 %v929
  %v1058 = vunpack.c.h.b16 %v929
  %v1059 = vunpack.c.l.b16 %v930
  %v1060 = vunpack.c.h.b16 %v930
  %v1061 = vunpack.c.l.b16 %v931
  %v1062 = vunpack.c.h.b16 %v931
  %v1063 = vunpack.c.l.b16 %v932
  %v1064 = vunpack.c.h.b16 %v932
  %v1065 = vunpack.c.l.b16 %v933
  %v1066 = vunpack.c.h.b16 %v933
  %v1067 = vunpack.c.l.b16 %v934
  %v1068 = vunpack.c.h.b16 %v934
  %v1069 = vunpack.c.l.b16 %v935
  %v1070 = vunpack.c.h.b16 %v935
  %v1071 = vunpack.c.l.b16 %v936
  %v1072 = vunpack.c.h.b16 %v936
  %v1073 = vunpack.c.l.b16 %v937
  %v1074 = vunpack.c.h.b16 %v937
  %v1075 = vunpack.c.l.b16 %v938
  %v1076 = vunpack.c.h.b16 %v938
  %v1077 = vunpack.c.l.b16 %v939
  %v1078 = vunpack.c.h.b16 %v939
  %v1079 = vunpack.c.l.b16 %v940
  %v1080 = vunpack.c.h.b16 %v940
  %v1081 = vunpack.c.l.b16 %v941
  %v1082 = vunpack.c.h.b16 %v941
  %v1083 = vunpack.c.l.b16 %v942
  %v1084 = vunpack.c.h.b16 %v942
  %v1085 = vunpack.c.l.b16 %v943
  %v1086 = vunpack.c.h.b16 %v943
  %v1087 = vunpack.c.l.b16 %v944
  %v1088 = vunpack.c.h.b16 %v944
  %v1089 = vunpack.c.l.b16 %v945
  %v1090 = vunpack.c.h.b16 %v945
  %v1091 = vunpack.c.l.b16 %v946
  %v1092 = vunpack.c.h.b16 %v946
  %v1093 = vunpack.c.l.b16 %v947
  %v1094 = vunpack.c.h.b16 %v947
  %v1095 = vunpack.c.l.b16 %v948
  %v1096 = vunpack.c.h.b16 %v948
  %v1097 = vunpack.c.l.b16 %v949
  %v1098 = vunpack.c.h.b16 %v949
  %v1099 = vunpack.c.l.b16 %v950
  %v1100 = vunpack.c.h.b16 %v950
  %v1101 = vunpack.c.l.b16 %v951
  %v1102 = vunpack.c.h.b16 %v951
  %v1103 = vunpack.c.l.b16 %v952
  %v1104 = vunpack.c.h.b16 %v952
  %v1105 = vunpack.c.l.b16 %v953
  %v1106 = vunpack.c.h.b16 %v953
  %v1107 = vunpack.c.l.b16 %v954
  %v1108 = vunpack.c.h.b16 %v954
  %v1109 = vunpack.c.l.b16 %v955
  %v1110 = vunpack.c.h.b16 %v955
  %v1111 = vunpack.c.l.b16 %v956
  %v1112 = vunpack.c.h.b16 %v956
  %v1113 = vunpack.c.l.b16 %v957
  %v1114 = vunpack.c.h.b16 %v957
  %v1115 = vunpack.c.l.b16 %v958
  %v1116 = vunpack.c.h.b16 %v958
  %v1117 = vunpack.c.l.b16 %v959
  %v1118 = vunpack.c.h.b16 %v959
  %v1119 = vunpack.c.l.b16 %v960
  %v1120 = vunpack.c.h.b16 %v960
  %v1121 = vunpack.c.l.b16 %v961
  %v1122 = vunpack.c.h.b16 %v961
  %v1123 = vunpack.c.l.b16 %v962
  %v1124 = vunpack.c.h.b16 %v962
  %v1125 = vunpack.c.l.b16 %v963
  %v1126 = vunpack.c.h.b16 %v963
  %v1127 = vunpack.c.l.b16 %v964
  %v1128 = vunpack.c.h.b16 %v964
  %v1129 = vunpack.c.l.b16 %v965
  %v1130 = vunpack.c.h.b16 %v965
  %v1131 = vunpack.c.l.b16 %v966
  %v1132 = vunpack.c.h.b16 %v966
  %v1133 = vunpack.c.l.b16 %v967
  %v1134 = vunpack.c.h.b16 %v967
  %v1135 = vunpack.c.l.b16 %v968
  %v1136 = vunpack.c.h.b16 %v968
  %v1137 = vunpack.c.l.b16 %v969
  %v1138 = vunpack.c.h.b16 %v969
  %v1139 = vunpack.c.l.b16 %v970
  %v1140 = vunpack.c.h.b16 %v970
  %v1141 = vunpack.c.l.b16 %v971
  %v1142 = vunpack.c.h.b16 %v971
  %v1143 = vunpack.c.l.b16 %v972
  %v1144 = vunpack.c.h.b16 %v972
  %v1145 = vunpack.c.l.b16 %v973
  %v1146 = vunpack.c.h.b16 %v973
  %v1147 = vunpack.c.l.b16 %v974
  %v1148 = vunpack.c.h.b16 %v974
  %v1149 = vunpack.c.l.b16 %v975
  %v1150 = vunpack.c.h.b16 %v975
  %v1151 = vunpack.c.l.b16 %v976
  %v1152 = vunpack.c.h.b16 %v976
  %v1153 = vunpack.c.l.b16 %v977
  %v1154 = vunpack.c.h.b16 %v977
  %v1155 = vunpack.c.l.b16 %v978
  %v1156 = vunpack.c.h.b16 %v978
  %v1157 = vunpack.c.l.b16 %v979
  %v1158 = vunpack.c.h.b16 %v979
  %v1159 = vunpack.c.l.b16 %v980
  %v1160 = vunpack.c.h.b16 %v980
  %v1161 = vunpack.c.l.b16 %v981
  %v1162 = vunpack.c.h.b16 %v981
  %v1163 = vunpack.c.l.b16 %v982
  %v1164 = vunpack.c.h.b16 %v982
  %v1165 = vunpack.c.l.b16 %v983
  %v1166 = vunpack.c.h.b16 %v983
  %v1167 = vunpack.c.l.b16 %v984
  %v1168 = vunpack.c.h.b16 %v984
  %v1169 = vunpack.c.l.b16 %v985
  %v1170 = vunpack.c.h.b16 %v985
  %v1171 = vunpack.c.l.b16 %v986
  %v1172 = vunpack.c.h.b16 %v986
  %v1173 = vunpack.c.l.b16 %v987
  %v1174 = vunpack.c.h.b16 %v987
  %v1175 = vunpack.c.l.b16 %v988
  %v1176 = vunpack.c.h.b16 %v988
  %v1177 = vunpack.c.l.b16 %v989
  %v1178 = vunpack.c.h.b16 %v989
  %v1179 = vunpack.c.l.b16 %v990
  %v1180 = vunpack.c.h.b16 %v990
  %v1181 = vunpack.c.l.b16 %v991
  %v1182 = vunpack.c.h.b16 %v991
  %v1183 = vunpack.c.l.b16 %v992
  %v1184 = vunpack.c.h.b16 %v992
  %v1185 = vpack.c.b16 %v1065, %v1057
  %v1186 = vpack.c.b16 %v1066, %v1058
  %v1187 = vpack.c.b16 %v1067, %v1059
  %v1188 = vpack.c.b16 %v1068, %v1060
  %v1189 = vpack.c.b16 %v1069, %v1061
  %v1190 = vpack.c.b16 %v1070, %v1062
  %v1191 = vpack.c.b16 %v1071, %v1063
  %v1192 = vpack.c.b16 %v1072, %v1064
  %v1193 = vpack.c.b16 %v1081, %v1073
  %v1194 = vpack.c.b16 %v1082, %v1074
  %v1195 = vpack.c.b16 %v1083, %v1075
  %v1196 = vpack.c.b16 %v1084, %v1076
  %v1197 = vpack.c.b16 %v1085, %v1077
  %v1198 = vpack.c.b16 %v1086, %v1078
  %v1199 = vpack.c.b16 %v1087, %v1079
  %v1200 = vpack.c.b16 %v1088, %v1080
  %v1201 = vpack.c.b16 %v1097, %v1089
  %v1202 = vpack.c.b16 %v1098, %v1090
  %v1203 = vpack.c.b16 %v1099, %v1091
  %v1204 = vpack.c.b16 %v1100, %v1092
  %v1205 = vpack.c.b16 %v1101, %v1093
  %v1206 = vpack.c.b16 %v1102, %v1094
  %v1207 = vpack.c.b16 %v1103, %v1095
  %v1208 = vpack.c.b16 %v1104, %v1096
  %v1209 = vpack.c.b16 %v1113, %v1105
  %v1210 = vpack.c.b16 %v1114, %v1106
  %v1211 = vpack.c.b16 %v1115, %v1107
  %v1212 = vpack.c.b16 %v1116, %v1108
  %v1213 = vpack.c.b16 %v1117, %v1109
  %v1214 = vpack.c.b16 %v1118, %v1110
  %v1215 = vpack.c.b16 %v1119, %v1111
  %v1216 = vpack.c.b16 %v1120, %v1112
  %v1217 = vpack.c.b16 %v1129, %v1121
  %v1218 = vpack.c.b16 %v1130, %v1122
  %v1219 = vpack.c.b16 %v1131, %v1123
  %v1220 = vpack.c.b16 %v1132, %v1124
  %v1221 = vpack.c.b16 %v1133, %v1125
  %v1222 = vpack.c.b16 %v1134, %v1126
  %v1223 = vpack.c.b16 %v1135, %v1127
  %v1224 = vpack.c.b16 %v1136, %v1128
  %v1225 = vpack.c.b16 %v1145, %v1137
  %v1226 = vpack.c.b16 %v1146, %v1138
  %v1227 = vpack.c.b16 %v1147, %v1139
  %v1228 = vpack.c.b16 %v1148, %v1140
  %v1229 = vpack.c.b16 %v1149, %v1141
  %v1230 = vpack.c.b16 %v1150, %v1142
  %v1231 = vpack.c.b16 %v1151, %v1143
  %v1232 = vpack.c.b16 %v1152, %v1144
  %v1233 = vpack.c.b16 %v1161, %v1153
  %v1234 = vpack.c.b16 %v1162, %v1154
  %v1235 = vpack.c.b16 %v1163, %v1155
  %v1236 = vpack.c.b16 %v1164, %v1156
  %v1237 = vpack.c.b16 %v1165, %v1157
  %v1238 = vpack.c.b16 %v1166, %v1158
  %v1239 = vpack.c.b16 %v1167, %v1159
  %v1240 = vpack.c.b16 %v1168, %v1160
  %v1241 = vpack.c.b16 %v1177, %v1169
  %v1242 = vpack.c.b16 %v1178, %v1170
  %v1243 = vpack.c.b16 %v1179, %v1171
  %v1244 = vpack.c.b16 %v1180, %v1172
  %v1245 = vpack.c.b16 %v1181, %v1173
  %v1246 = vpack.c.b16 %v1182, %v1174
  %v1247 = vpack.c.b16 %v1183, %v1175
  %v1248 = vpack.c.b16 %v1184, %v1176
  %1313 = vmatprep.subr.bf16.mxu0 %v1186
  %1314 = vmatpush1.bf16.msra.mxu0 %v1185
  %1315 = vmatprep.subr.bf16.mxu0 %v1194
  %1316 = vmatpush1.bf16.msra.mxu0 %v1193
  %1317 = vmatprep.subr.bf16.mxu0 %v1202
  %1318 = vmatpush1.bf16.msra.mxu0 %v1201
  %1319 = vmatprep.subr.bf16.mxu0 %v1210
  %1320 = vmatpush1.bf16.msra.mxu0 %v1209
  %1321 = vmatprep.subr.bf16.mxu0 %v1218
  %1322 = vmatpush1.bf16.msra.mxu0 %v1217
  %1323 = vmatprep.subr.bf16.mxu0 %v1226
  %1324 = vmatpush1.bf16.msra.mxu0 %v1225
  %1325 = vmatprep.subr.bf16.mxu0 %v1234
  %1326 = vmatpush1.bf16.msra.mxu0 %v1233
  %1327 = vmatprep.subr.bf16.mxu0 %v1242
  %1328 = vmatpush1.bf16.msra.mxu0 %v1241
  %1329 = vmatprep.subr.bf16.mxu0 0
  %1330 = vmatpush1.bf16.msra.mxu0 0
  %1331 = vmatprep.subr.bf16.mxu0 0
  %1332 = vmatpush1.bf16.msra.mxu0 0
  %1333 = vmatprep.subr.bf16.mxu0 0
  %1334 = vmatpush1.bf16.msra.mxu0 0
  %1335 = vmatprep.subr.bf16.mxu0 0
  %1336 = vmatpush1.bf16.msra.mxu0 0
  %1337 = vmatprep.subr.bf16.mxu0 0
  %1338 = vmatpush1.bf16.msra.mxu0 0
  %1339 = vmatprep.subr.bf16.mxu0 0
  %1340 = vmatpush1.bf16.msra.mxu0 0
  %1341 = vmatprep.subr.bf16.mxu0 0
  %1342 = vmatpush1.bf16.msra.mxu0 0
  %1343 = vmatprep.subr.bf16.mxu0 0
  %1344 = vmatpush1.bf16.msra.mxu0 0
  %1345 = vmatprep.mubr.bf16.mxu0 0
  %1346 = vmatmul.mubr.bf16.gmra.mrb[0].mxu0 %v928
  %v1347 = vpop.f32.mrb[0].mxu0
  %v1348 = vadd.f32 0.0, %v1347
  %v1349 = vpop.f32.mrb[0].mxu0
  %v1350 = vadd.f32 0.0, %v1349
  %v1351 = vpop.f32.mrb[0].mxu0
  %v1352 = vpop.f32.mrb[0].mxu0
  %1353 = vdwg.mxu0
  %1354 = vmatprep.subr.bf16.mxu0 %v1188
  %1355 = vmatpush1.bf16.msra.mxu0 %v1187
  %1356 = vmatprep.subr.bf16.mxu0 %v1196
  %1357 = vmatpush1.bf16.msra.mxu0 %v1195
  %1358 = vmatprep.subr.bf16.mxu0 %v1204
  %1359 = vmatpush1.bf16.msra.mxu0 %v1203
  %1360 = vmatprep.subr.bf16.mxu0 %v1212
  %1361 = vmatpush1.bf16.msra.mxu0 %v1211
  %1362 = vmatprep.subr.bf16.mxu0 %v1220
  %1363 = vmatpush1.bf16.msra.mxu0 %v1219
  %1364 = vmatprep.subr.bf16.mxu0 %v1228
  %1365 = vmatpush1.bf16.msra.mxu0 %v1227
  %1366 = vmatprep.subr.bf16.mxu0 %v1236
  %1367 = vmatpush1.bf16.msra.mxu0 %v1235
  %1368 = vmatprep.subr.bf16.mxu0 %v1244
  %1369 = vmatpush1.bf16.msra.mxu0 %v1243
  %1370 = vmatprep.subr.bf16.mxu0 0
  %1371 = vmatpush1.bf16.msra.mxu0 0
  %1372 = vmatprep.subr.bf16.mxu0 0
  %1373 = vmatpush1.bf16.msra.mxu0 0
  %1374 = vmatprep.subr.bf16.mxu0 0
  %1375 = vmatpush1.bf16.msra.mxu0 0
  %1376 = vmatprep.subr.bf16.mxu0 0
  %1377 = vmatpush1.bf16.msra.mxu0 0
  %1378 = vmatprep.subr.bf16.mxu0 0
  %1379 = vmatpush1.bf16.msra.mxu0 0
  %1380 = vmatprep.subr.bf16.mxu0 0
  %1381 = vmatpush1.bf16.msra.mxu0 0
  %1382 = vmatprep.subr.bf16.mxu0 0
  %1383 = vmatpush1.bf16.msra.mxu0 0
  %1384 = vmatprep.subr.bf16.mxu0 0
  %1385 = vmatpush1.bf16.msra.mxu0 0
  %1386 = vmatprep.mubr.bf16.mxu0 0
  %1387 = vmatmul.mubr.bf16.gmra.mrb[0].mxu0 %v928
  %v1388 = vpop.f32.mrb[0].mxu0
  %v1389 = vadd.f32 0.0, %v1388
  %v1390 = vpop.f32.mrb[0].mxu0
  %v1391 = vadd.f32 0.0, %v1390
  %v1392 = vpop.f32.mrb[0].mxu0
  %v1393 = vpop.f32.mrb[0].mxu0
  %1394 = vdwg.mxu0
  %1395 = vmatprep.subr.bf16.mxu0 %v1190
  %1396 = vmatpush1.bf16.msra.mxu0 %v1189
  %1397 = vmatprep.subr.bf16.mxu0 %v1198
  %1398 = vmatpush1.bf16.msra.mxu0 %v1197
  %1399 = vmatprep.subr.bf16.mxu0 %v1206
  %1400 = vmatpush1.bf16.msra.mxu0 %v1205
  %1401 = vmatprep.subr.bf16.mxu0 %v1214
  %1402 = vmatpush1.bf16.msra.mxu0 %v1213
  %1403 = vmatprep.subr.bf16.mxu0 %v1222
  %1404 = vmatpush1.bf16.msra.mxu0 %v1221
  %1405 = vmatprep.subr.bf16.mxu0 %v1230
  %1406 = vmatpush1.bf16.msra.mxu0 %v1229
  %1407 = vmatprep.subr.bf16.mxu0 %v1238
  %1408 = vmatpush1.bf16.msra.mxu0 %v1237
  %1409 = vmatprep.subr.bf16.mxu0 %v1246
  %1410 = vmatpush1.bf16.msra.mxu0 %v1245
  %1411 = vmatprep.subr.bf16.mxu0 0
  %1412 = vmatpush1.bf16.msra.mxu0 0
  %1413 = vmatprep.subr.bf16.mxu0 0
  %1414 = vmatpush1.bf16.msra.mxu0 0
  %1415 = vmatprep.subr.bf16.mxu0 0
  %1416 = vmatpush1.bf16.msra.mxu0 0
  %1417 = vmatprep.subr.bf16.mxu0 0
  %1418 = vmatpush1.bf16.msra.mxu0 0
  %1419 = vmatprep.subr.bf16.mxu0 0
  %1420 = vmatpush1.bf16.msra.mxu0 0
  %1421 = vmatprep.subr.bf16.mxu0 0
  %1422 = vmatpush1.bf16.msra.mxu0 0
  %1423 = vmatprep.subr.bf16.mxu0 0
  %1424 = vmatpush1.bf16.msra.mxu0 0
  %1425 = vmatprep.subr.bf16.mxu0 0
  %1426 = vmatpush1.bf16.msra.mxu0 0
  %1427 = vmatprep.mubr.bf16.mxu0 0
  %1428 = vmatmul.mubr.bf16.gmra.mrb[0].mxu0 %v928
  %v1429 = vpop.f32.mrb[0].mxu0
  %v1430 = vadd.f32 0.0, %v1429
  %v1431 = vpop.f32.mrb[0].mxu0
  %v1432 = vadd.f32 0.0, %v1431
  %v1433 = vpop.f32.mrb[0].mxu0
  %v1434 = vpop.f32.mrb[0].mxu0
  %1435 = vdwg.mxu0
  %1436 = vmatprep.subr.bf16.mxu0 %v1192
  %1437 = vmatpush1.bf16.msra.mxu0 %v1191
  %1438 = vmatprep.subr.bf16.mxu0 %v1200
  %1439 = vmatpush1.bf16.msra.mxu0 %v1199
  %1440 = vmatprep.subr.bf16.mxu0 %v1208
  %1441 = vmatpush1.bf16.msra.mxu0 %v1207
  %1442 = vmatprep.subr.bf16.mxu0 %v1216
  %1443 = vmatpush1.bf16.msra.mxu0 %v1215
  %1444 = vmatprep.subr.bf16.mxu0 %v1224
  %1445 = vmatpush1.bf16.msra.mxu0 %v1223
  %1446 = vmatprep.subr.bf16.mxu0 %v1232
  %1447 = vmatpush1.bf16.msra.mxu0 %v1231
  %1448 = vmatprep.subr.bf16.mxu0 %v1240
  %1449 = vmatpush1.bf16.msra.mxu0 %v1239
  %1450 = vmatprep.subr.bf16.mxu0 %v1248
  %1451 = vmatpush1.bf16.msra.mxu0 %v1247
  %1452 = vmatprep.subr.bf16.mxu0 0
  %1453 = vmatpush1.bf16.msra.mxu0 0
  %1454 = vmatprep.subr.bf16.mxu0 0
  %1455 = vmatpush1.bf16.msra.mxu0 0
  %1456 = vmatprep.subr.bf16.mxu0 0
  %1457 = vmatpush1.bf16.msra.mxu0 0
  %1458 = vmatprep.subr.bf16.mxu0 0
  %1459 = vmatpush1.bf16.msra.mxu0 0
  %1460 = vmatprep.subr.bf16.mxu0 0
  %1461 = vmatpush1.bf16.msra.mxu0 0
  %1462 = vmatprep.subr.bf16.mxu0 0
  %1463 = vmatpush1.bf16.msra.mxu0 0
  %1464 = vmatprep.subr.bf16.mxu0 0
  %1465 = vmatpush1.bf16.msra.mxu0 0
  %1466 = vmatprep.subr.bf16.mxu0 0
  %1467 = vmatpush1.bf16.msra.mxu0 0
  %1468 = vmatprep.mubr.bf16.mxu0 0
  %1469 = vmatmul.mubr.bf16.gmra.mrb[0].mxu0 %v928
  %v1470 = vpop.f32.mrb[0].mxu0
  %v1471 = vadd.f32 0.0, %v1470
  %v1472 = vpop.f32.mrb[0].mxu0
  %v1473 = vadd.f32 0.0, %v1472
  %v1474 = vpop.f32.mrb[0].mxu0
  %v1475 = vpop.f32.mrb[0].mxu0
  %1476 = vdwg.mxu0
  %v1541 = vunpack.c.l.b16 %v864
  %v1542 = vunpack.c.h.b16 %v864
  %v1543 = vunpack.c.l.b16 %v865
  %v1544 = vunpack.c.h.b16 %v865
  %v1545 = vunpack.c.l.b16 %v866
  %v1546 = vunpack.c.h.b16 %v866
  %v1547 = vunpack.c.l.b16 %v867
  %v1548 = vunpack.c.h.b16 %v867
  %v1549 = vunpack.c.l.b16 %v868
  %v1550 = vunpack.c.h.b16 %v868
  %v1551 = vunpack.c.l.b16 %v869
  %v1552 = vunpack.c.h.b16 %v869
  %v1553 = vunpack.c.l.b16 %v870
  %v1554 = vunpack.c.h.b16 %v870
  %v1555 = vunpack.c.l.b16 %v871
  %v1556 = vunpack.c.h.b16 %v871
  %v1557 = vunpack.c.l.b16 %v872
  %v1558 = vunpack.c.h.b16 %v872
  %v1559 = vunpack.c.l.b16 %v873
  %v1560 = vunpack.c.h.b16 %v873
  %v1561 = vunpack.c.l.b16 %v874
  %v1562 = vunpack.c.h.b16 %v874
  %v1563 = vunpack.c.l.b16 %v875
  %v1564 = vunpack.c.h.b16 %v875
  %v1565 = vunpack.c.l.b16 %v876
  %v1566 = vunpack.c.h.b16 %v876
  %v1567 = vunpack.c.l.b16 %v877
  %v1568 = vunpack.c.h.b16 %v877
  %v1569 = vunpack.c.l.b16 %v878
  %v1570 = vunpack.c.h.b16 %v878
  %v1571 = vunpack.c.l.b16 %v879
  %v1572 = vunpack.c.h.b16 %v879
  %v1573 = vunpack.c.l.b16 %v880
  %v1574 = vunpack.c.h.b16 %v880
  %v1575 = vunpack.c.l.b16 %v881
  %v1576 = vunpack.c.h.b16 %v881
  %v1577 = vunpack.c.l.b16 %v882
  %v1578 = vunpack.c.h.b16 %v882
  %v1579 = vunpack.c.l.b16 %v883
  %v1580 = vunpack.c.h.b16 %v883
  %v1581 = vunpack.c.l.b16 %v884
  %v1582 = vunpack.c.h.b16 %v884
  %v1583 = vunpack.c.l.b16 %v885
  %v1584 = vunpack.c.h.b16 %v885
  %v1585 = vunpack.c.l.b16 %v886
  %v1586 = vunpack.c.h.b16 %v886
  %v1587 = vunpack.c.l.b16 %v887
  %v1588 = vunpack.c.h.b16 %v887
  %v1589 = vunpack.c.l.b16 %v888
  %v1590 = vunpack.c.h.b16 %v888
  %v1591 = vunpack.c.l.b16 %v889
  %v1592 = vunpack.c.h.b16 %v889
  %v1593 = vunpack.c.l.b16 %v890
  %v1594 = vunpack.c.h.b16 %v890
  %v1595 = vunpack.c.l.b16 %v891
  %v1596 = vunpack.c.h.b16 %v891
  %v1597 = vunpack.c.l.b16 %v892
  %v1598 = vunpack.c.h.b16 %v892
  %v1599 = vunpack.c.l.b16 %v893
  %v1600 = vunpack.c.h.b16 %v893
  %v1601 = vunpack.c.l.b16 %v894
  %v1602 = vunpack.c.h.b16 %v894
  %v1603 = vunpack.c.l.b16 %v895
  %v1604 = vunpack.c.h.b16 %v895
  %v1605 = vunpack.c.l.b16 %v896
  %v1606 = vunpack.c.h.b16 %v896
  %v1607 = vunpack.c.l.b16 %v897
  %v1608 = vunpack.c.h.b16 %v897
  %v1609 = vunpack.c.l.b16 %v898
  %v1610 = vunpack.c.h.b16 %v898
  %v1611 = vunpack.c.l.b16 %v899
  %v1612 = vunpack.c.h.b16 %v899
  %v1613 = vunpack.c.l.b16 %v900
  %v1614 = vunpack.c.h.b16 %v900
  %v1615 = vunpack.c.l.b16 %v901
  %v1616 = vunpack.c.h.b16 %v901
  %v1617 = vunpack.c.l.b16 %v902
  %v1618 = vunpack.c.h.b16 %v902
  %v1619 = vunpack.c.l.b16 %v903
  %v1620 = vunpack.c.h.b16 %v903
  %v1621 = vunpack.c.l.b16 %v904
  %v1622 = vunpack.c.h.b16 %v904
  %v1623 = vunpack.c.l.b16 %v905
  %v1624 = vunpack.c.h.b16 %v905
  %v1625 = vunpack.c.l.b16 %v906
  %v1626 = vunpack.c.h.b16 %v906
  %v1627 = vunpack.c.l.b16 %v907
  %v1628 = vunpack.c.h.b16 %v907
  %v1629 = vunpack.c.l.b16 %v908
  %v1630 = vunpack.c.h.b16 %v908
  %v1631 = vunpack.c.l.b16 %v909
  %v1632 = vunpack.c.h.b16 %v909
  %v1633 = vunpack.c.l.b16 %v910
  %v1634 = vunpack.c.h.b16 %v910
  %v1635 = vunpack.c.l.b16 %v911
  %v1636 = vunpack.c.h.b16 %v911
  %v1637 = vunpack.c.l.b16 %v912
  %v1638 = vunpack.c.h.b16 %v912
  %v1639 = vunpack.c.l.b16 %v913
  %v1640 = vunpack.c.h.b16 %v913
  %v1641 = vunpack.c.l.b16 %v914
  %v1642 = vunpack.c.h.b16 %v914
  %v1643 = vunpack.c.l.b16 %v915
  %v1644 = vunpack.c.h.b16 %v915
  %v1645 = vunpack.c.l.b16 %v916
  %v1646 = vunpack.c.h.b16 %v916
  %v1647 = vunpack.c.l.b16 %v917
  %v1648 = vunpack.c.h.b16 %v917
  %v1649 = vunpack.c.l.b16 %v918
  %v1650 = vunpack.c.h.b16 %v918
  %v1651 = vunpack.c.l.b16 %v919
  %v1652 = vunpack.c.h.b16 %v919
  %v1653 = vunpack.c.l.b16 %v920
  %v1654 = vunpack.c.h.b16 %v920
  %v1655 = vunpack.c.l.b16 %v921
  %v1656 = vunpack.c.h.b16 %v921
  %v1657 = vunpack.c.l.b16 %v922
  %v1658 = vunpack.c.h.b16 %v922
  %v1659 = vunpack.c.l.b16 %v923
  %v1660 = vunpack.c.h.b16 %v923
  %v1661 = vunpack.c.l.b16 %v924
  %v1662 = vunpack.c.h.b16 %v924
  %v1663 = vunpack.c.l.b16 %v925
  %v1664 = vunpack.c.h.b16 %v925
  %v1665 = vunpack.c.l.b16 %v926
  %v1666 = vunpack.c.h.b16 %v926
  %v1667 = vunpack.c.l.b16 %v927
  %v1668 = vunpack.c.h.b16 %v927
  %v1669 = vpack.c.b16 %v1549, %v1541
  %v1670 = vpack.c.b16 %v1550, %v1542
  %v1671 = vpack.c.b16 %v1551, %v1543
  %v1672 = vpack.c.b16 %v1552, %v1544
  %v1673 = vpack.c.b16 %v1553, %v1545
  %v1674 = vpack.c.b16 %v1554, %v1546
  %v1675 = vpack.c.b16 %v1555, %v1547
  %v1676 = vpack.c.b16 %v1556, %v1548
  %v1677 = vpack.c.b16 %v1565, %v1557
  %v1678 = vpack.c.b16 %v1566, %v1558
  %v1679 = vpack.c.b16 %v1567, %v1559
  %v1680 = vpack.c.b16 %v1568, %v1560
  %v1681 = vpack.c.b16 %v1569, %v1561
  %v1682 = vpack.c.b16 %v1570, %v1562
  %v1683 = vpack.c.b16 %v1571, %v1563
  %v1684 = vpack.c.b16 %v1572, %v1564
  %v1685 = vpack.c.b16 %v1581, %v1573
  %v1686 = vpack.c.b16 %v1582, %v1574
  %v1687 = vpack.c.b16 %v1583, %v1575
  %v1688 = vpack.c.b16 %v1584, %v1576
  %v1689 = vpack.c.b16 %v1585, %v1577
  %v1690 = vpack.c.b16 %v1586, %v1578
  %v1691 = vpack.c.b16 %v1587, %v1579
  %v1692 = vpack.c.b16 %v1588, %v1580
  %v1693 = vpack.c.b16 %v1597, %v1589
  %v1694 = vpack.c.b16 %v1598, %v1590
  %v1695 = vpack.c.b16 %v1599, %v1591
  %v1696 = vpack.c.b16 %v1600, %v1592
  %v1697 = vpack.c.b16 %v1601, %v1593
  %v1698 = vpack.c.b16 %v1602, %v1594
  %v1699 = vpack.c.b16 %v1603, %v1595
  %v1700 = vpack.c.b16 %v1604, %v1596
  %v1701 = vpack.c.b16 %v1613, %v1605
  %v1702 = vpack.c.b16 %v1614, %v1606
  %v1703 = vpack.c.b16 %v1615, %v1607
  %v1704 = vpack.c.b16 %v1616, %v1608
  %v1705 = vpack.c.b16 %v1617, %v1609
  %v1706 = vpack.c.b16 %v1618, %v1610
  %v1707 = vpack.c.b16 %v1619, %v1611
  %v1708 = vpack.c.b16 %v1620, %v1612
  %v1709 = vpack.c.b16 %v1629, %v1621
  %v1710 = vpack.c.b16 %v1630, %v1622
  %v1711 = vpack.c.b16 %v1631, %v1623
  %v1712 = vpack.c.b16 %v1632, %v1624
  %v1713 = vpack.c.b16 %v1633, %v1625
  %v1714 = vpack.c.b16 %v1634, %v1626
  %v1715 = vpack.c.b16 %v1635, %v1627
  %v1716 = vpack.c.b16 %v1636, %v1628
  %v1717 = vpack.c.b16 %v1645, %v1637
  %v1718 = vpack.c.b16 %v1646, %v1638
  %v1719 = vpack.c.b16 %v1647, %v1639
  %v1720 = vpack.c.b16 %v1648, %v1640
  %v1721 = vpack.c.b16 %v1649, %v1641
  %v1722 = vpack.c.b16 %v1650, %v1642
  %v1723 = vpack.c.b16 %v1651, %v1643
  %v1724 = vpack.c.b16 %v1652, %v1644
  %v1725 = vpack.c.b16 %v1661, %v1653
  %v1726 = vpack.c.b16 %v1662, %v1654
  %v1727 = vpack.c.b16 %v1663, %v1655
  %v1728 = vpack.c.b16 %v1664, %v1656
  %v1729 = vpack.c.b16 %v1665, %v1657
  %v1730 = vpack.c.b16 %v1666, %v1658
  %v1731 = vpack.c.b16 %v1667, %v1659
  %v1732 = vpack.c.b16 %v1668, %v1660
  %1797 = vmatprep.subr.bf16.mxu0 %v1670
  %1798 = vmatpush1.bf16.msra.mxu0 %v1669
  %1799 = vmatprep.subr.bf16.mxu0 %v1678
  %1800 = vmatpush1.bf16.msra.mxu0 %v1677
  %1801 = vmatprep.subr.bf16.mxu0 %v1686
  %1802 = vmatpush1.bf16.msra.mxu0 %v1685
  %1803 = vmatprep.subr.bf16.mxu0 %v1694
  %1804 = vmatpush1.bf16.msra.mxu0 %v1693
  %1805 = vmatprep.subr.bf16.mxu0 %v1702
  %1806 = vmatpush1.bf16.msra.mxu0 %v1701
  %1807 = vmatprep.subr.bf16.mxu0 %v1710
  %1808 = vmatpush1.bf16.msra.mxu0 %v1709
  %1809 = vmatprep.subr.bf16.mxu0 %v1718
  %1810 = vmatpush1.bf16.msra.mxu0 %v1717
  %1811 = vmatprep.subr.bf16.mxu0 %v1726
  %1812 = vmatpush1.bf16.msra.mxu0 %v1725
  %1813 = vmatprep.subr.bf16.mxu0 0
  %1814 = vmatpush1.bf16.msra.mxu0 0
  %1815 = vmatprep.subr.bf16.mxu0 0
  %1816 = vmatpush1.bf16.msra.mxu0 0
  %1817 = vmatprep.subr.bf16.mxu0 0
  %1818 = vmatpush1.bf16.msra.mxu0 0
  %1819 = vmatprep.subr.bf16.mxu0 0
  %1820 = vmatpush1.bf16.msra.mxu0 0
  %1821 = vmatprep.subr.bf16.mxu0 0
  %1822 = vmatpush1.bf16.msra.mxu0 0
  %1823 = vmatprep.subr.bf16.mxu0 0
  %1824 = vmatpush1.bf16.msra.mxu0 0
  %1825 = vmatprep.subr.bf16.mxu0 0
  %1826 = vmatpush1.bf16.msra.mxu0 0
  %1827 = vmatprep.subr.bf16.mxu0 0
  %1828 = vmatpush1.bf16.msra.mxu0 0
  %1829 = vmatprep.mubr.bf16.mxu0 0
  %1830 = vmatmul.mubr.bf16.gmra.mrb[0].mxu0 %v751
  %v1831 = vpop.f32.mrb[0].mxu0
  %v1832 = vadd.f32 %v1348, %v1831
  %v1833 = vpop.f32.mrb[0].mxu0
  %v1834 = vadd.f32 %v1350, %v1833
  %v1835 = vpop.f32.mrb[0].mxu0
  %v1836 = vpop.f32.mrb[0].mxu0
  %1837 = vdwg.mxu0
  %1838 = vmatprep.subr.bf16.mxu0 %v1672
  %1839 = vmatpush1.bf16.msra.mxu0 %v1671
  %1840 = vmatprep.subr.bf16.mxu0 %v1680
  %1841 = vmatpush1.bf16.msra.mxu0 %v1679
  %1842 = vmatprep.subr.bf16.mxu0 %v1688
  %1843 = vmatpush1.bf16.msra.mxu0 %v1687
  %1844 = vmatprep.subr.bf16.mxu0 %v1696
  %1845 = vmatpush1.bf16.msra.mxu0 %v1695
  %1846 = vmatprep.subr.bf16.mxu0 %v1704
  %1847 = vmatpush1.bf16.msra.mxu0 %v1703
  %1848 = vmatprep.subr.bf16.mxu0 %v1712
  %1849 = vmatpush1.bf16.msra.mxu0 %v1711
  %1850 = vmatprep.subr.bf16.mxu0 %v1720
  %1851 = vmatpush1.bf16.msra.mxu0 %v1719
  %1852 = vmatprep.subr.bf16.mxu0 %v1728
  %1853 = vmatpush1.bf16.msra.mxu0 %v1727
  %1854 = vmatprep.subr.bf16.mxu0 0
  %1855 = vmatpush1.bf16.msra.mxu0 0
  %1856 = vmatprep.subr.bf16.mxu0 0
  %1857 = vmatpush1.bf16.msra.mxu0 0
  %1858 = vmatprep.subr.bf16.mxu0 0
  %1859 = vmatpush1.bf16.msra.mxu0 0
  %1860 = vmatprep.subr.bf16.mxu0 0
  %1861 = vmatpush1.bf16.msra.mxu0 0
  %1862 = vmatprep.subr.bf16.mxu0 0
  %1863 = vmatpush1.bf16.msra.mxu0 0
  %1864 = vmatprep.subr.bf16.mxu0 0
  %1865 = vmatpush1.bf16.msra.mxu0 0
  %1866 = vmatprep.subr.bf16.mxu0 0
  %1867 = vmatpush1.bf16.msra.mxu0 0
  %1868 = vmatprep.subr.bf16.mxu0 0
  %1869 = vmatpush1.bf16.msra.mxu0 0
  %1870 = vmatprep.mubr.bf16.mxu0 0
  %1871 = vmatmul.mubr.bf16.gmra.mrb[0].mxu0 %v751
  %v1872 = vpop.f32.mrb[0].mxu0
  %v1873 = vadd.f32 %v1389, %v1872
  %v1874 = vpop.f32.mrb[0].mxu0
  %v1875 = vadd.f32 %v1391, %v1874
  %v1876 = vpop.f32.mrb[0].mxu0
  %v1877 = vpop.f32.mrb[0].mxu0
  %1878 = vdwg.mxu0
  %1879 = vmatprep.subr.bf16.mxu0 %v1674
  %1880 = vmatpush1.bf16.msra.mxu0 %v1673
  %1881 = vmatprep.subr.bf16.mxu0 %v1682
  %1882 = vmatpush1.bf16.msra.mxu0 %v1681
  %1883 = vmatprep.subr.bf16.mxu0 %v1690
  %1884 = vmatpush1.bf16.msra.mxu0 %v1689
  %1885 = vmatprep.subr.bf16.mxu0 %v1698
  %1886 = vmatpush1.bf16.msra.mxu0 %v1697
  %1887 = vmatprep.subr.bf16.mxu0 %v1706
  %1888 = vmatpush1.bf16.msra.mxu0 %v1705
  %1889 = vmatprep.subr.bf16.mxu0 %v1714
  %1890 = vmatpush1.bf16.msra.mxu0 %v1713
  %1891 = vmatprep.subr.bf16.mxu0 %v1722
  %1892 = vmatpush1.bf16.msra.mxu0 %v1721
  %1893 = vmatprep.subr.bf16.mxu0 %v1730
  %1894 = vmatpush1.bf16.msra.mxu0 %v1729
  %1895 = vmatprep.subr.bf16.mxu0 0
  %1896 = vmatpush1.bf16.msra.mxu0 0
  %1897 = vmatprep.subr.bf16.mxu0 0
  %1898 = vmatpush1.bf16.msra.mxu0 0
  %1899 = vmatprep.subr.bf16.mxu0 0
  %1900 = vmatpush1.bf16.msra.mxu0 0
  %1901 = vmatprep.subr.bf16.mxu0 0
  %1902 = vmatpush1.bf16.msra.mxu0 0
  %1903 = vmatprep.subr.bf16.mxu0 0
  %1904 = vmatpush1.bf16.msra.mxu0 0
  %1905 = vmatprep.subr.bf16.mxu0 0
  %1906 = vmatpush1.bf16.msra.mxu0 0
  %1907 = vmatprep.subr.bf16.mxu0 0
  %1908 = vmatpush1.bf16.msra.mxu0 0
  %1909 = vmatprep.subr.bf16.mxu0 0
  %1910 = vmatpush1.bf16.msra.mxu0 0
  %1911 = vmatprep.mubr.bf16.mxu0 0
  %1912 = vmatmul.mubr.bf16.gmra.mrb[0].mxu0 %v751
  %v1913 = vpop.f32.mrb[0].mxu0
  %v1914 = vadd.f32 %v1430, %v1913
  %v1915 = vpop.f32.mrb[0].mxu0
  %v1916 = vadd.f32 %v1432, %v1915
  %v1917 = vpop.f32.mrb[0].mxu0
  %v1918 = vpop.f32.mrb[0].mxu0
  %1919 = vdwg.mxu0
  %1920 = vmatprep.subr.bf16.mxu0 %v1676
  %1921 = vmatpush1.bf16.msra.mxu0 %v1675
  %1922 = vmatprep.subr.bf16.mxu0 %v1684
  %1923 = vmatpush1.bf16.msra.mxu0 %v1683
  %1924 = vmatprep.subr.bf16.mxu0 %v1692
  %1925 = vmatpush1.bf16.msra.mxu0 %v1691
  %1926 = vmatprep.subr.bf16.mxu0 %v1700
  %1927 = vmatpush1.bf16.msra.mxu0 %v1699
  %1928 = vmatprep.subr.bf16.mxu0 %v1708
  %1929 = vmatpush1.bf16.msra.mxu0 %v1707
  %1930 = vmatprep.subr.bf16.mxu0 %v1716
  %1931 = vmatpush1.bf16.msra.mxu0 %v1715
  %1932 = vmatprep.subr.bf16.mxu0 %v1724
  %1933 = vmatpush1.bf16.msra.mxu0 %v1723
  %1934 = vmatprep.subr.bf16.mxu0 %v1732
  %1935 = vmatpush1.bf16.msra.mxu0 %v1731
  %1936 = vmatprep.subr.bf16.mxu0 0
  %1937 = vmatpush1.bf16.msra.mxu0 0
  %1938 = vmatprep.subr.bf16.mxu0 0
  %1939 = vmatpush1.bf16.msra.mxu0 0
  %1940 = vmatprep.subr.bf16.mxu0 0
  %1941 = vmatpush1.bf16.msra.mxu0 0
  %1942 = vmatprep.subr.bf16.mxu0 0
  %1943 = vmatpush1.bf16.msra.mxu0 0
  %1944 = vmatprep.subr.bf16.mxu0 0
  %1945 = vmatpush1.bf16.msra.mxu0 0
  %1946 = vmatprep.subr.bf16.mxu0 0
  %1947 = vmatpush1.bf16.msra.mxu0 0
  %1948 = vmatprep.subr.bf16.mxu0 0
  %1949 = vmatpush1.bf16.msra.mxu0 0
  %1950 = vmatprep.subr.bf16.mxu0 0
  %1951 = vmatpush1.bf16.msra.mxu0 0
  %1952 = vmatprep.mubr.bf16.mxu0 0
  %1953 = vmatmul.mubr.bf16.gmra.mrb[0].mxu0 %v751
  %v1954 = vpop.f32.mrb[0].mxu0
  %v1955 = vadd.f32 %v1471, %v1954
  %v1956 = vpop.f32.mrb[0].mxu0
  %v1957 = vadd.f32 %v1473, %v1956
  %v1958 = vpop.f32.mrb[0].mxu0
  %v1959 = vpop.f32.mrb[0].mxu0
  %1960 = vdwg.mxu0
  %v1961 = vld [vmem:[%s8] sm:$0xff]
  %v1963 = vlaneseq
  %v1964 = vshrl.u32 %v1963, 7
  %v1965 = vsub.s32 0, %v1964
  %v1966 = vrot.slane %v1961, %v1965
  %v1967 = vlaneseq
  %v1968 = vshrl.u32 %v1967, 7
  %v1969 = vsub.s32 1, %v1968
  %v1970 = vrot.slane %v1961, %v1969
  %v1971 = vlaneseq
  %v1972 = vshrl.u32 %v1971, 7
  %v1973 = vsub.s32 2, %v1972
  %v1974 = vrot.slane %v1961, %v1973
  %v1975 = vlaneseq
  %v1976 = vshrl.u32 %v1975, 7
  %v1977 = vsub.s32 3, %v1976
  %v1978 = vrot.slane %v1961, %v1977
  %v1979 = vlaneseq
  %v1980 = vshrl.u32 %v1979, 7
  %v1981 = vsub.s32 4, %v1980
  %v1982 = vrot.slane %v1961, %v1981
  %v1983 = vlaneseq
  %v1984 = vshrl.u32 %v1983, 7
  %v1985 = vsub.s32 5, %v1984
  %v1986 = vrot.slane %v1961, %v1985
  %v1987 = vlaneseq
  %v1988 = vshrl.u32 %v1987, 7
  %v1989 = vsub.s32 6, %v1988
  %v1990 = vrot.slane %v1961, %v1989
  %v1991 = vlaneseq
  %v1992 = vshrl.u32 %v1991, 7
  %v1993 = vsub.s32 7, %v1992
  %v1994 = vrot.slane %v1961, %v1993
  %v2003 = vadd.f32 %v1832, %v1966
  %v2004 = vadd.f32 %v1834, %v1970
  %v2005 = vadd.f32 %v1873, %v1974
  %v2006 = vadd.f32 %v1875, %v1978
  %v2007 = vadd.f32 %v1914, %v1982
  %v2008 = vadd.f32 %v1916, %v1986
  %v2009 = vadd.f32 %v1955, %v1990
  %v2010 = vadd.f32 %v1957, %v1994
  %vm2011 = vcmp.ge.f32.partialorder %v2003, 0.0
  %vm2012 = vcmp.ge.f32.partialorder %v2004, 0.0
  %vm2013 = vcmp.ge.f32.partialorder %v2005, 0.0
  %vm2014 = vcmp.ge.f32.partialorder %v2006, 0.0
  %vm2015 = vcmp.ge.f32.partialorder %v2007, 0.0
  %vm2016 = vcmp.ge.f32.partialorder %v2008, 0.0
  %vm2017 = vcmp.ge.f32.partialorder %v2009, 0.0
  %vm2018 = vcmp.ge.f32.partialorder %v2010, 0.0
  %v2019 = vmul.f32 %v2003, 0.05
  %v2020 = vmul.f32 %v2004, 0.05
  %v2021 = vmul.f32 %v2005, 0.05
  %v2022 = vmul.f32 %v2006, 0.05
  %v2023 = vmul.f32 %v2007, 0.05
  %v2024 = vmul.f32 %v2008, 0.05
  %v2025 = vmul.f32 %v2009, 0.05
  %v2026 = vmul.f32 %v2010, 0.05
  %v2027 = vsel %vm2011, %v2003, %v2019
  %v2028 = vsel %vm2012, %v2004, %v2020
  %v2029 = vsel %vm2013, %v2005, %v2021
  %v2030 = vsel %vm2014, %v2006, %v2022
  %v2031 = vsel %vm2015, %v2007, %v2023
  %v2032 = vsel %vm2016, %v2008, %v2024
  %v2033 = vsel %vm2017, %v2009, %v2025
  %v2034 = vsel %vm2018, %v2010, %v2026
  %v2035 = vpack.c.bf16 %v2027, %v2027
  %v2036 = vpack.c.bf16 %v2028, %v2028
  %v2037 = vpack.c.bf16 %v2029, %v2029
  %v2038 = vpack.c.bf16 %v2030, %v2030
  %v2039 = vpack.c.bf16 %v2031, %v2031
  %v2040 = vpack.c.bf16 %v2032, %v2032
  %v2041 = vpack.c.bf16 %v2033, %v2033
  %v2042 = vpack.c.bf16 %v2034, %v2034
  %v2051 = vunpack.c.l.b16 %v2035
  %v2052 = vunpack.c.l.b16 %v2036
  %v2053 = vunpack.c.l.b16 %v2037
  %v2054 = vunpack.c.l.b16 %v2038
  %v2055 = vunpack.c.l.b16 %v2039
  %v2056 = vunpack.c.l.b16 %v2040
  %v2057 = vunpack.c.l.b16 %v2041
  %v2058 = vunpack.c.l.b16 %v2042
  %v2059 = vpack.c.b16 %v2052, %v2051
  %v2060 = vpack.c.b16 %v2054, %v2053
  %v2061 = vpack.c.b16 %v2056, %v2055
  %v2062 = vpack.c.b16 %v2058, %v2057
  %2067 = vst [vmem:[%s11] sm:$0xff] %v2059
  %2068 = vst [vmem:[%s11 + $0x8] sm:$0xff] %v2060
  %2069 = vst [vmem:[%s11 + $0x10] sm:$0xff] %v2061
  %2070 = vst [vmem:[%s11 + $0x18] sm:$0xff] %v2062
  // Predicated region
  $region38: #{generator_forward.10} parent=0 // pred_check
    _
  $region39: #{generator_forward.10} parent=0 // pred_check_branch
    %2072 = sbr.rel (0) target = $region41
  $region40: #{generator_forward.10} parent=0 // pred_region
    _
  $region41: #{generator_forward.10} parent=0 // pred_fallthru
    _
  // Predicated region
  $region42: #{generator_forward.10} parent=0 // pred_check
    _
  $region43: #{generator_forward.10} parent=0 // pred_check_branch
    %2074 = sbr.rel (0) target = $region45
  $region44: #{generator_forward.10} parent=0 // pred_region
    _
  $region45: #{generator_forward.10} parent=0 // pred_fallthru
    _
  // Predicated region
  $region46: #{generator_forward.10} parent=0 // pred_check
    _
  $region47: #{generator_forward.10} parent=0 // pred_check_branch
    %2076 = sbr.rel (0) target = $region49
  $region48: #{generator_forward.10} parent=0 // pred_region
    _
  $region49: #{generator_forward.10} parent=0 // pred_fallthru
    _
  // Predicated region
  $region50: #{generator_forward.10} parent=0 // pred_check
    _
  $region51: #{generator_forward.10} parent=0 // pred_check_branch
    %2078 = sbr.rel (0) target = $region53
  $region52: #{generator_forward.10} parent=0 // pred_region
    _
  $region53: #{generator_forward.10} parent=0 // pred_fallthru
    _
  // Predicated region
  $region54: #{generator_forward.10} parent=0 // pred_check
    _
  $region55: #{generator_forward.10} parent=0 // pred_check_branch
    %2080 = sbr.rel (0) target = $region57
  $region56: #{generator_forward.10} parent=0 // pred_region
    _
  $region57: #{generator_forward.10} parent=0 // pred_fallthru
    _
  // Predicated region
  $region58: #{generator_forward.10} parent=0 // pred_check
    _
  $region59: #{generator_forward.10} parent=0 // pred_check_branch
    %2082 = sbr.rel (0) target = $region61
  $region60: #{generator_forward.10} parent=0 // pred_region
    _
  $region61: #{generator_forward.10} parent=0 // pred_fallthru
    _

// kernel: generator_forward.11
$region0: #{generator_forward.11}
  #allocation0 [shape = 'u32[]', space=smem, size = 0x4, offset = 0x4, fixed_abs, tag = 'smem constant byte address 0x4 - core index']
  #allocation1 [shape = 'u32[144,128]{1,0:T(1,128)}', space=vmem, size = 0x12000, scoped, tag = 'internal scratch']
  %s0 = inlined_call_operand.vmem [shape: bf16[32,640], index: 0, kind: input, shape index: {}]
  %s1 = inlined_call_operand.vmem [shape: bf16[640,128], index: 1, kind: input, shape index: {}]
  %s2 = inlined_call_operand.vmem [shape: f32[1,128], index: 2, kind: input, shape index: {}]
  %s3 = inlined_call_operand.vmem [shape: bf16[32,128], index: 3, kind: output, shape index: {}]
  %s4 = sld [smem:[#allocation0]]
  $region22: #{generator_forward.11} parent=0
    _
  %s6 = ssub.s32 1, %s4
  %s7 = scalar_select 0, %s6, %s4
  // Predicated region
  $region2: #{generator_forward.11} parent=0 // pred_check
    _
  $region3: #{generator_forward.11} parent=0 // pred_check_branch
    %9 = sbr.rel (0) target = $region5
  $region4: #{generator_forward.11} parent=0 // pred_region
    _
  $region5: #{generator_forward.11} parent=0 // pred_fallthru
    _
  // Predicated region
  $region6: #{generator_forward.11} parent=0 // pred_check
    _
  $region7: #{generator_forward.11} parent=0 // pred_check_branch
    %11 = sbr.rel (0) target = $region9
  $region8: #{generator_forward.11} parent=0 // pred_region
    _
  $region9: #{generator_forward.11} parent=0 // pred_fallthru
    _
  // Predicated region
  $region10: #{generator_forward.11} parent=0 // pred_check
    _
  $region11: #{generator_forward.11} parent=0 // pred_check_branch
    %13 = sbr.rel (0) target = $region13
  $region12: #{generator_forward.11} parent=0 // pred_region
    _
  $region13: #{generator_forward.11} parent=0 // pred_fallthru
    _
  %v15 = vld [vmem:[%s0] sm:$0xff]
  %v16 = vld [vmem:[%s0 + $0x8] sm:$0xff]
  %v17 = vld [vmem:[%s0 + $0x10] sm:$0xf]
  %v18 = vld [vmem:[%s0 + $0x14] sm:$0xff]
  %v19 = vld [vmem:[%s0 + $0x1c] sm:$0xff]
  %v20 = vld [vmem:[%s0 + $0x24] sm:$0xf]
  %v21 = vld [vmem:[%s0 + $0x28] sm:$0xff]
  %v22 = vld [vmem:[%s0 + $0x30] sm:$0xff]
  %v23 = vld [vmem:[%s0 + $0x38] sm:$0xf]
  %v24 = vld [vmem:[%s0 + $0x3c] sm:$0xff]
  %v25 = vld [vmem:[%s0 + $0x44] sm:$0xff]
  %v26 = vld [vmem:[%s0 + $0x4c] sm:$0xf]
  %v27 = vld [vmem:[%s1] sm:$0xf]
  %v28 = vld [vmem:[%s1 + $0x4] sm:$0xf]
  %v29 = vld [vmem:[%s1 + $0x8] sm:$0xf]
  %v30 = vld [vmem:[%s1 + $0xc] sm:$0xf]
  %v31 = vld [vmem:[%s1 + $0x10] sm:$0xf]
  %v32 = vld [vmem:[%s1 + $0x14] sm:$0xf]
  %v33 = vld [vmem:[%s1 + $0x18] sm:$0xf]
  %v34 = vld [vmem:[%s1 + $0x1c] sm:$0xf]
  %v35 = vld [vmem:[%s1 + $0x20] sm:$0xf]
  %v36 = vld [vmem:[%s1 + $0x24] sm:$0xf]
  %v37 = vld [vmem:[%s1 + $0x28] sm:$0xf]
  %v38 = vld [vmem:[%s1 + $0x2c] sm:$0xf]
  %v39 = vld [vmem:[%s1 + $0x30] sm:$0xf]
  %v40 = vld [vmem:[%s1 + $0x34] sm:$0xf]
  %v41 = vld [vmem:[%s1 + $0x38] sm:$0xf]
  %v42 = vld [vmem:[%s1 + $0x3c] sm:$0xf]
  %v43 = vld [vmem:[%s1 + $0x40] sm:$0xf]
  %v44 = vld [vmem:[%s1 + $0x44] sm:$0xf]
  %v45 = vld [vmem:[%s1 + $0x48] sm:$0xf]
  %v46 = vld [vmem:[%s1 + $0x4c] sm:$0xf]
  %v47 = vld [vmem:[%s1 + $0x50] sm:$0xf]
  %v48 = vld [vmem:[%s1 + $0x54] sm:$0xf]
  %v49 = vld [vmem:[%s1 + $0x58] sm:$0xf]
  %v50 = vld [vmem:[%s1 + $0x5c] sm:$0xf]
  %v51 = vld [vmem:[%s1 + $0x60] sm:$0xf]
  %v52 = vld [vmem:[%s1 + $0x64] sm:$0xf]
  %v53 = vld [vmem:[%s1 + $0x68] sm:$0xf]
  %v54 = vld [vmem:[%s1 + $0x6c] sm:$0xf]
  %v55 = vld [vmem:[%s1 + $0x70] sm:$0xf]
  %v56 = vld [vmem:[%s1 + $0x74] sm:$0xf]
  %v57 = vld [vmem:[%s1 + $0x78] sm:$0xf]
  %v58 = vld [vmem:[%s1 + $0x7c] sm:$0xf]
  %v59 = vld [vmem:[%s1 + $0x80] sm:$0xf]
  %v60 = vld [vmem:[%s1 + $0x84] sm:$0xf]
  %v61 = vld [vmem:[%s1 + $0x88] sm:$0xf]
  %v62 = vld [vmem:[%s1 + $0x8c] sm:$0xf]
  %v63 = vld [vmem:[%s1 + $0x90] sm:$0xf]
  %v64 = vld [vmem:[%s1 + $0x94] sm:$0xf]
  %v65 = vld [vmem:[%s1 + $0x98] sm:$0xf]
  %v66 = vld [vmem:[%s1 + $0x9c] sm:$0xf]
  %v67 = vld [vmem:[%s1 + $0xa0] sm:$0xf]
  %v68 = vld [vmem:[%s1 + $0xa4] sm:$0xf]
  %v69 = vld [vmem:[%s1 + $0xa8] sm:$0xf]
  %v70 = vld [vmem:[%s1 + $0xac] sm:$0xf]
  %v71 = vld [vmem:[%s1 + $0xb0] sm:$0xf]
  %v72 = vld [vmem:[%s1 + $0xb4] sm:$0xf]
  %v73 = vld [vmem:[%s1 + $0xb8] sm:$0xf]
  %v74 = vld [vmem:[%s1 + $0xbc] sm:$0xf]
  %v75 = vld [vmem:[%s1 + $0xc0] sm:$0xf]
  %v76 = vld [vmem:[%s1 + $0xc4] sm:$0xf]
  %v77 = vld [vmem:[%s1 + $0xc8] sm:$0xf]
  %v78 = vld [vmem:[%s1 + $0xcc] sm:$0xf]
  %v79 = vld [vmem:[%s1 + $0xd0] sm:$0xf]
  %v80 = vld [vmem:[%s1 + $0xd4] sm:$0xf]
  %v81 = vld [vmem:[%s1 + $0xd8] sm:$0xf]
  %v82 = vld [vmem:[%s1 + $0xdc] sm:$0xf]
  %v83 = vld [vmem:[%s1 + $0xe0] sm:$0xf]
  %v84 = vld [vmem:[%s1 + $0xe4] sm:$0xf]
  %v85 = vld [vmem:[%s1 + $0xe8] sm:$0xf]
  %v86 = vld [vmem:[%s1 + $0xec] sm:$0xf]
  %v87 = vld [vmem:[%s1 + $0xf0] sm:$0xf]
  %v88 = vld [vmem:[%s1 + $0xf4] sm:$0xf]
  %v89 = vld [vmem:[%s1 + $0xf8] sm:$0xf]
  %v90 = vld [vmem:[%s1 + $0xfc] sm:$0xf]
  %v91 = vld [vmem:[%s1 + $0x100] sm:$0xf]
  %v92 = vld [vmem:[%s1 + $0x104] sm:$0xf]
  %v93 = vld [vmem:[%s1 + $0x108] sm:$0xf]
  %v94 = vld [vmem:[%s1 + $0x10c] sm:$0xf]
  %v95 = vld [vmem:[%s1 + $0x110] sm:$0xf]
  %v96 = vld [vmem:[%s1 + $0x114] sm:$0xf]
  %v97 = vld [vmem:[%s1 + $0x118] sm:$0xf]
  %v98 = vld [vmem:[%s1 + $0x11c] sm:$0xf]
  %v99 = vld [vmem:[%s1 + $0x120] sm:$0xf]
  %v100 = vld [vmem:[%s1 + $0x124] sm:$0xf]
  %v101 = vld [vmem:[%s1 + $0x128] sm:$0xf]
  %v102 = vld [vmem:[%s1 + $0x12c] sm:$0xf]
  %v103 = vld [vmem:[%s1 + $0x130] sm:$0xf]
  %v104 = vld [vmem:[%s1 + $0x134] sm:$0xf]
  %v105 = vld [vmem:[%s1 + $0x138] sm:$0xf]
  %v106 = vld [vmem:[%s1 + $0x13c] sm:$0xf]
  %v107 = vld [vmem:[%s2] sm:$0x1]
  %v109 = vlaneseq
  %v110 = vshrl.u32 %v109, 7
  %v111 = vsub.s32 0, %v110
  %v112 = vrot.slane %v107, %v111
  %v126 = vunpack.c.l.b16 %v15
  %v127 = vunpack.c.h.b16 %v15
  %v128 = vunpack.c.l.b16 %v16
  %v129 = vunpack.c.h.b16 %v16
  %v130 = vunpack.c.l.b16 %v17
  %v131 = vunpack.c.l.b16 %v18
  %v132 = vunpack.c.h.b16 %v18
  %v133 = vunpack.c.l.b16 %v19
  %v134 = vunpack.c.h.b16 %v19
  %v135 = vunpack.c.l.b16 %v20
  %v136 = vunpack.c.l.b16 %v21
  %v137 = vunpack.c.h.b16 %v21
  %v138 = vunpack.c.l.b16 %v22
  %v139 = vunpack.c.h.b16 %v22
  %v140 = vunpack.c.l.b16 %v23
  %v141 = vunpack.c.l.b16 %v24
  %v142 = vunpack.c.h.b16 %v24
  %v143 = vunpack.c.l.b16 %v25
  %v144 = vunpack.c.h.b16 %v25
  %v145 = vunpack.c.l.b16 %v26
  %v146 = vpack.c.b16 %v131, %v126
  %v147 = vpack.c.b16 %v132, %v127
  %v148 = vpack.c.b16 %v133, %v128
  %v149 = vpack.c.b16 %v134, %v129
  %v150 = vpack.c.b16 %v135, %v130
  %v151 = vpack.c.b16 %v141, %v136
  %v152 = vpack.c.b16 %v142, %v137
  %v153 = vpack.c.b16 %v143, %v138
  %v154 = vpack.c.b16 %v144, %v139
  %v155 = vpack.c.b16 %v145, %v140
  %v246 = vunpack.c.l.b16 %v27
  %v247 = vunpack.c.l.b16 %v28
  %v248 = vunpack.c.l.b16 %v29
  %v249 = vunpack.c.l.b16 %v30
  %v250 = vunpack.c.l.b16 %v31
  %v251 = vunpack.c.l.b16 %v32
  %v252 = vunpack.c.l.b16 %v33
  %v253 = vunpack.c.l.b16 %v34
  %v254 = vunpack.c.l.b16 %v35
  %v255 = vunpack.c.l.b16 %v36
  %v256 = vunpack.c.l.b16 %v37
  %v257 = vunpack.c.l.b16 %v38
  %v258 = vunpack.c.l.b16 %v39
  %v259 = vunpack.c.l.b16 %v40
  %v260 = vunpack.c.l.b16 %v41
  %v261 = vunpack.c.l.b16 %v42
  %v262 = vunpack.c.l.b16 %v43
  %v263 = vunpack.c.l.b16 %v44
  %v264 = vunpack.c.l.b16 %v45
  %v265 = vunpack.c.l.b16 %v46
  %v266 = vunpack.c.l.b16 %v47
  %v267 = vunpack.c.l.b16 %v48
  %v268 = vunpack.c.l.b16 %v49
  %v269 = vunpack.c.l.b16 %v50
  %v270 = vunpack.c.l.b16 %v51
  %v271 = vunpack.c.l.b16 %v52
  %v272 = vunpack.c.l.b16 %v53
  %v273 = vunpack.c.l.b16 %v54
  %v274 = vunpack.c.l.b16 %v55
  %v275 = vunpack.c.l.b16 %v56
  %v276 = vunpack.c.l.b16 %v57
  %v277 = vunpack.c.l.b16 %v58
  %v278 = vunpack.c.l.b16 %v59
  %v279 = vunpack.c.l.b16 %v60
  %v280 = vunpack.c.l.b16 %v61
  %v281 = vunpack.c.l.b16 %v62
  %v282 = vunpack.c.l.b16 %v63
  %v283 = vunpack.c.l.b16 %v64
  %v284 = vunpack.c.l.b16 %v65
  %v285 = vunpack.c.l.b16 %v66
  %v286 = vunpack.c.l.b16 %v67
  %v287 = vunpack.c.l.b16 %v68
  %v288 = vunpack.c.l.b16 %v69
  %v289 = vunpack.c.l.b16 %v70
  %v290 = vunpack.c.l.b16 %v71
  %v291 = vunpack.c.l.b16 %v72
  %v292 = vunpack.c.l.b16 %v73
  %v293 = vunpack.c.l.b16 %v74
  %v294 = vunpack.c.l.b16 %v75
  %v295 = vunpack.c.l.b16 %v76
  %v296 = vunpack.c.l.b16 %v77
  %v297 = vunpack.c.l.b16 %v78
  %v298 = vunpack.c.l.b16 %v79
  %v299 = vunpack.c.l.b16 %v80
  %v300 = vunpack.c.l.b16 %v81
  %v301 = vunpack.c.l.b16 %v82
  %v302 = vunpack.c.l.b16 %v83
  %v303 = vunpack.c.l.b16 %v84
  %v304 = vunpack.c.l.b16 %v85
  %v305 = vunpack.c.l.b16 %v86
  %v306 = vunpack.c.l.b16 %v87
  %v307 = vunpack.c.l.b16 %v88
  %v308 = vunpack.c.l.b16 %v89
  %v309 = vunpack.c.l.b16 %v90
  %v310 = vunpack.c.l.b16 %v91
  %v311 = vunpack.c.l.b16 %v92
  %v312 = vunpack.c.l.b16 %v93
  %v313 = vunpack.c.l.b16 %v94
  %v314 = vunpack.c.l.b16 %v95
  %v315 = vunpack.c.l.b16 %v96
  %v316 = vunpack.c.l.b16 %v97
  %v317 = vunpack.c.l.b16 %v98
  %v318 = vunpack.c.l.b16 %v99
  %v319 = vunpack.c.l.b16 %v100
  %v320 = vunpack.c.l.b16 %v101
  %v321 = vunpack.c.l.b16 %v102
  %v322 = vunpack.c.l.b16 %v103
  %v323 = vunpack.c.l.b16 %v104
  %v324 = vunpack.c.l.b16 %v105
  %v325 = vunpack.c.l.b16 %v106
  %v326 = vpack.c.b16 %v247, %v246
  %v327 = vpack.c.b16 %v249, %v248
  %v328 = vpack.c.b16 %v251, %v250
  %v329 = vpack.c.b16 %v253, %v252
  %v330 = vpack.c.b16 %v255, %v254
  %v331 = vpack.c.b16 %v257, %v256
  %v332 = vpack.c.b16 %v259, %v258
  %v333 = vpack.c.b16 %v261, %v260
  %v334 = vpack.c.b16 %v263, %v262
  %v335 = vpack.c.b16 %v265, %v264
  %v336 = vpack.c.b16 %v267, %v266
  %v337 = vpack.c.b16 %v269, %v268
  %v338 = vpack.c.b16 %v271, %v270
  %v339 = vpack.c.b16 %v273, %v272
  %v340 = vpack.c.b16 %v275, %v274
  %v341 = vpack.c.b16 %v277, %v276
  %v342 = vpack.c.b16 %v279, %v278
  %v343 = vpack.c.b16 %v281, %v280
  %v344 = vpack.c.b16 %v283, %v282
  %v345 = vpack.c.b16 %v285, %v284
  %v346 = vpack.c.b16 %v287, %v286
  %v347 = vpack.c.b16 %v289, %v288
  %v348 = vpack.c.b16 %v291, %v290
  %v349 = vpack.c.b16 %v293, %v292
  %v350 = vpack.c.b16 %v295, %v294
  %v351 = vpack.c.b16 %v297, %v296
  %v352 = vpack.c.b16 %v299, %v298
  %v353 = vpack.c.b16 %v301, %v300
  %v354 = vpack.c.b16 %v303, %v302
  %v355 = vpack.c.b16 %v305, %v304
  %v356 = vpack.c.b16 %v307, %v306
  %v357 = vpack.c.b16 %v309, %v308
  %v358 = vpack.c.b16 %v311, %v310
  %v359 = vpack.c.b16 %v313, %v312
  %v360 = vpack.c.b16 %v315, %v314
  %v361 = vpack.c.b16 %v317, %v316
  %v362 = vpack.c.b16 %v319, %v318
  %v363 = vpack.c.b16 %v321, %v320
  %v364 = vpack.c.b16 %v323, %v322
  %v365 = vpack.c.b16 %v325, %v324
  %406 = vmatprep.subr.bf16.mxu0 0
  %407 = vmatpush1.bf16.msra.mxu0 %v326
  %408 = vmatprep.subr.bf16.mxu0 0
  %409 = vmatpush1.bf16.msra.mxu0 %v327
  %410 = vmatprep.subr.bf16.mxu0 0
  %411 = vmatpush1.bf16.msra.mxu0 %v328
  %412 = vmatprep.subr.bf16.mxu0 0
  %413 = vmatpush1.bf16.msra.mxu0 %v329
  %414 = vmatprep.subr.bf16.mxu0 0
  %415 = vmatpush1.bf16.msra.mxu0 %v330
  %416 = vmatprep.subr.bf16.mxu0 0
  %417 = vmatpush1.bf16.msra.mxu0 %v331
  %418 = vmatprep.subr.bf16.mxu0 0
  %419 = vmatpush1.bf16.msra.mxu0 %v332
  %420 = vmatprep.subr.bf16.mxu0 0
  %421 = vmatpush1.bf16.msra.mxu0 %v333
  %422 = vmatprep.subr.bf16.mxu0 0
  %423 = vmatpush1.bf16.msra.mxu0 %v334
  %424 = vmatprep.subr.bf16.mxu0 0
  %425 = vmatpush1.bf16.msra.mxu0 %v335
  %426 = vmatprep.subr.bf16.mxu0 0
  %427 = vmatpush1.bf16.msra.mxu0 %v336
  %428 = vmatprep.subr.bf16.mxu0 0
  %429 = vmatpush1.bf16.msra.mxu0 %v337
  %430 = vmatprep.subr.bf16.mxu0 0
  %431 = vmatpush1.bf16.msra.mxu0 %v338
  %432 = vmatprep.subr.bf16.mxu0 0
  %433 = vmatpush1.bf16.msra.mxu0 %v339
  %434 = vmatprep.subr.bf16.mxu0 0
  %435 = vmatpush1.bf16.msra.mxu0 %v340
  %436 = vmatprep.subr.bf16.mxu0 0
  %437 = vmatpush1.bf16.msra.mxu0 %v341
  %438 = vmatprep.mubr.bf16.mxu0 %v147
  %439 = vmatmul.mubr.bf16.gmra.mrb[0].mxu0 %v146
  %v440 = vpop.f32.mrb[0].mxu0
  %v441 = vadd.f32 %v112, %v440
  %v442 = vpop.f32.mrb[0].mxu0
  %v443 = vpop.f32.mrb[0].mxu0
  %v444 = vadd.f32 %v112, %v443
  %v445 = vpop.f32.mrb[0].mxu0
  %446 = vmatprep.mubr.bf16.mxu0 %v152
  %447 = vmatmul.mubr.bf16.gmra.mrb[0].mxu0 %v151
  %v448 = vpop.f32.mrb[0].mxu0
  %v449 = vadd.f32 %v112, %v448
  %v450 = vpop.f32.mrb[0].mxu0
  %v451 = vpop.f32.mrb[0].mxu0
  %v452 = vadd.f32 %v112, %v451
  %v453 = vpop.f32.mrb[0].mxu0
  %454 = vdwg.mxu0
  %455 = vmatprep.subr.bf16.mxu0 0
  %456 = vmatpush1.bf16.msra.mxu0 %v342
  %457 = vmatprep.subr.bf16.mxu0 0
  %458 = vmatpush1.bf16.msra.mxu0 %v343
  %459 = vmatprep.subr.bf16.mxu0 0
  %460 = vmatpush1.bf16.msra.mxu0 %v344
  %461 = vmatprep.subr.bf16.mxu0 0
  %462 = vmatpush1.bf16.msra.mxu0 %v345
  %463 = vmatprep.subr.bf16.mxu0 0
  %464 = vmatpush1.bf16.msra.mxu0 %v346
  %465 = vmatprep.subr.bf16.mxu0 0
  %466 = vmatpush1.bf16.msra.mxu0 %v347
  %467 = vmatprep.subr.bf16.mxu0 0
  %468 = vmatpush1.bf16.msra.mxu0 %v348
  %469 = vmatprep.subr.bf16.mxu0 0
  %470 = vmatpush1.bf16.msra.mxu0 %v349
  %471 = vmatprep.subr.bf16.mxu0 0
  %472 = vmatpush1.bf16.msra.mxu0 %v350
  %473 = vmatprep.subr.bf16.mxu0 0
  %474 = vmatpush1.bf16.msra.mxu0 %v351
  %475 = vmatprep.subr.bf16.mxu0 0
  %476 = vmatpush1.bf16.msra.mxu0 %v352
  %477 = vmatprep.subr.bf16.mxu0 0
  %478 = vmatpush1.bf16.msra.mxu0 %v353
  %479 = vmatprep.subr.bf16.mxu0 0
  %480 = vmatpush1.bf16.msra.mxu0 %v354
  %481 = vmatprep.subr.bf16.mxu0 0
  %482 = vmatpush1.bf16.msra.mxu0 %v355
  %483 = vmatprep.subr.bf16.mxu0 0
  %484 = vmatpush1.bf16.msra.mxu0 %v356
  %485 = vmatprep.subr.bf16.mxu0 0
  %486 = vmatpush1.bf16.msra.mxu0 %v357
  %487 = vmatprep.mubr.bf16.mxu0 %v149
  %488 = vmatmul.mubr.bf16.gmra.mrb[0].mxu0 %v148
  %v489 = vpop.f32.mrb[0].mxu0
  %v490 = vadd.f32 %v441, %v489
  %v491 = vpop.f32.mrb[0].mxu0
  %v492 = vpop.f32.mrb[0].mxu0
  %v493 = vadd.f32 %v444, %v492
  %v494 = vpop.f32.mrb[0].mxu0
  %495 = vmatprep.mubr.bf16.mxu0 %v154
  %496 = vmatmul.mubr.bf16.gmra.mrb[0].mxu0 %v153
  %v497 = vpop.f32.mrb[0].mxu0
  %v498 = vadd.f32 %v449, %v497
  %v499 = vpop.f32.mrb[0].mxu0
  %v500 = vpop.f32.mrb[0].mxu0
  %v501 = vadd.f32 %v452, %v500
  %v502 = vpop.f32.mrb[0].mxu0
  %503 = vdwg.mxu0
  %504 = vmatprep.subr.bf16.mxu0 0
  %505 = vmatpush1.bf16.msra.mxu0 %v358
  %506 = vmatprep.subr.bf16.mxu0 0
  %507 = vmatpush1.bf16.msra.mxu0 %v359
  %508 = vmatprep.subr.bf16.mxu0 0
  %509 = vmatpush1.bf16.msra.mxu0 %v360
  %510 = vmatprep.subr.bf16.mxu0 0
  %511 = vmatpush1.bf16.msra.mxu0 %v361
  %512 = vmatprep.subr.bf16.mxu0 0
  %513 = vmatpush1.bf16.msra.mxu0 %v362
  %514 = vmatprep.subr.bf16.mxu0 0
  %515 = vmatpush1.bf16.msra.mxu0 %v363
  %516 = vmatprep.subr.bf16.mxu0 0
  %517 = vmatpush1.bf16.msra.mxu0 %v364
  %518 = vmatprep.subr.bf16.mxu0 0
  %519 = vmatpush1.bf16.msra.mxu0 %v365
  %520 = vmatprep.subr.bf16.mxu0 0
  %521 = vmatpush1.bf16.msra.mxu0 0
  %522 = vmatprep.subr.bf16.mxu0 0
  %523 = vmatpush1.bf16.msra.mxu0 0
  %524 = vmatprep.subr.bf16.mxu0 0
  %525 = vmatpush1.bf16.msra.mxu0 0
  %526 = vmatprep.subr.bf16.mxu0 0
  %527 = vmatpush1.bf16.msra.mxu0 0
  %528 = vmatprep.subr.bf16.mxu0 0
  %529 = vmatpush1.bf16.msra.mxu0 0
  %530 = vmatprep.subr.bf16.mxu0 0
  %531 = vmatpush1.bf16.msra.mxu0 0
  %532 = vmatprep.subr.bf16.mxu0 0
  %533 = vmatpush1.bf16.msra.mxu0 0
  %534 = vmatprep.subr.bf16.mxu0 0
  %535 = vmatpush1.bf16.msra.mxu0 0
  %536 = vmatprep.mubr.bf16.mxu0 0
  %537 = vmatmul.mubr.bf16.gmra.mrb[0].mxu0 %v150
  %v538 = vpop.f32.mrb[0].mxu0
  %v539 = vadd.f32 %v490, %v538
  %v540 = vpop.f32.mrb[0].mxu0
  %v541 = vpop.f32.mrb[0].mxu0
  %v542 = vadd.f32 %v493, %v541
  %v543 = vpop.f32.mrb[0].mxu0
  %544 = vmatprep.mubr.bf16.mxu0 0
  %545 = vmatmul.mubr.bf16.gmra.mrb[0].mxu0 %v155
  %v546 = vpop.f32.mrb[0].mxu0
  %v547 = vadd.f32 %v498, %v546
  %v548 = vpop.f32.mrb[0].mxu0
  %v549 = vpop.f32.mrb[0].mxu0
  %v550 = vadd.f32 %v501, %v549
  %v551 = vpop.f32.mrb[0].mxu0
  %552 = vdwg.mxu0
  %vm553 = vcmp.ge.f32.partialorder %v539, 0.0
  %vm554 = vcmp.ge.f32.partialorder %v542, 0.0
  %vm555 = vcmp.ge.f32.partialorder %v547, 0.0
  %vm556 = vcmp.ge.f32.partialorder %v550, 0.0
  %v557 = vmul.f32 %v539, 0.05
  %v558 = vmul.f32 %v542, 0.05
  %v559 = vmul.f32 %v547, 0.05
  %v560 = vmul.f32 %v550, 0.05
  %v561 = vsel %vm553, %v539, %v557
  %v562 = vsel %vm554, %v542, %v558
  %v563 = vsel %vm555, %v547, %v559
  %v564 = vsel %vm556, %v550, %v560
  %v565 = vpack.c.bf16 %v562, %v561
  %v566 = vpack.c.bf16 %v564, %v563
  %v569 = vunpack.c.l.b16 %v565
  %v570 = vunpack.c.h.b16 %v565
  %v571 = vunpack.c.l.b16 %v566
  %v572 = vunpack.c.h.b16 %v566
  %v573 = vpack.c.b16 %v569, %v569
  %v574 = vpack.c.b16 %v570, %v570
  %v575 = vpack.c.b16 %v571, %v571
  %v576 = vpack.c.b16 %v572, %v572
  %581 = vst [vmem:[%s3] sm:$0xf] %v573
  %582 = vst [vmem:[%s3 + $0x4] sm:$0xf] %v574
  %583 = vst [vmem:[%s3 + $0x8] sm:$0xf] %v575
  %584 = vst [vmem:[%s3 + $0xc] sm:$0xf] %v576
  // Predicated region
  $region14: #{generator_forward.11} parent=0 // pred_check
    _
  $region15: #{generator_forward.11} parent=0 // pred_check_branch
    %586 = sbr.rel (0) target = $region17
  $region16: #{generator_forward.11} parent=0 // pred_region
    _
  $region17: #{generator_forward.11} parent=0 // pred_fallthru
    _
  // Predicated region
  $region18: #{generator_forward.11} parent=0 // pred_check
    _
  $region19: #{generator_forward.11} parent=0 // pred_check_branch
    %588 = sbr.rel (0) target = $region21
  $region20: #{generator_forward.11} parent=0 // pred_region
    _
  $region21: #{generator_forward.11} parent=0 // pred_fallthru
    _

// kernel: generator_forward.12
$region0: #{generator_forward.12}
  #allocation0 [shape = 'u32[]', space=smem, size = 0x4, offset = 0x4, fixed_abs, tag = 'smem constant byte address 0x4 - core index']
  #allocation1 [shape = 'u32[144,128]{1,0:T(1,128)}', space=vmem, size = 0x12000, scoped, tag = 'internal scratch']
  %s0 = inlined_call_operand.vmem [shape: bf16[128,384], index: 0, kind: input, shape index: {}]
  %s1 = inlined_call_operand.vmem [shape: bf16[384,128], index: 1, kind: input, shape index: {}]
  %s2 = inlined_call_operand.vmem [shape: f32[1,128], index: 2, kind: input, shape index: {}]
  %s3 = inlined_call_operand.vmem [shape: bf16[128,128], index: 3, kind: output, shape index: {}]
  %s4 = sld [smem:[#allocation0]]
  $region22: #{generator_forward.12} parent=0
    _
  %s6 = ssub.s32 1, %s4
  %s7 = scalar_select 0, %s6, %s4
  // Predicated region
  $region2: #{generator_forward.12} parent=0 // pred_check
    _
  $region3: #{generator_forward.12} parent=0 // pred_check_branch
    %9 = sbr.rel (0) target = $region5
  $region4: #{generator_forward.12} parent=0 // pred_region
    _
  $region5: #{generator_forward.12} parent=0 // pred_fallthru
    _
  // Predicated region
  $region6: #{generator_forward.12} parent=0 // pred_check
    _
  $region7: #{generator_forward.12} parent=0 // pred_check_branch
    %11 = sbr.rel (0) target = $region9
  $region8: #{generator_forward.12} parent=0 // pred_region
    _
  $region9: #{generator_forward.12} parent=0 // pred_fallthru
    _
  // Predicated region
  $region10: #{generator_forward.12} parent=0 // pred_check
    _
  $region11: #{generator_forward.12} parent=0 // pred_check_branch
    %13 = sbr.rel (0) target = $region13
  $region12: #{generator_forward.12} parent=0 // pred_region
    _
  $region13: #{generator_forward.12} parent=0 // pred_fallthru
    _
  %v15 = vld [vmem:[%s0] sm:$0xff]
  %v16 = vld [vmem:[%s0 + $0x8] sm:$0xf]
  %v17 = vld [vmem:[%s0 + $0xc] sm:$0xff]
  %v18 = vld [vmem:[%s0 + $0x14] sm:$0xf]
  %v19 = vld [vmem:[%s0 + $0x18] sm:$0xff]
  %v20 = vld [vmem:[%s0 + $0x20] sm:$0xf]
  %v21 = vld [vmem:[%s0 + $0x24] sm:$0xff]
  %v22 = vld [vmem:[%s0 + $0x2c] sm:$0xf]
  %v23 = vld [vmem:[%s0 + $0x30] sm:$0xff]
  %v24 = vld [vmem:[%s0 + $0x38] sm:$0xf]
  %v25 = vld [vmem:[%s0 + $0x3c] sm:$0xff]
  %v26 = vld [vmem:[%s0 + $0x44] sm:$0xf]
  %v27 = vld [vmem:[%s0 + $0x48] sm:$0xff]
  %v28 = vld [vmem:[%s0 + $0x50] sm:$0xf]
  %v29 = vld [vmem:[%s0 + $0x54] sm:$0xff]
  %v30 = vld [vmem:[%s0 + $0x5c] sm:$0xf]
  %v31 = vld [vmem:[%s0 + $0x60] sm:$0xff]
  %v32 = vld [vmem:[%s0 + $0x68] sm:$0xf]
  %v33 = vld [vmem:[%s0 + $0x6c] sm:$0xff]
  %v34 = vld [vmem:[%s0 + $0x74] sm:$0xf]
  %v35 = vld [vmem:[%s0 + $0x78] sm:$0xff]
  %v36 = vld [vmem:[%s0 + $0x80] sm:$0xf]
  %v37 = vld [vmem:[%s0 + $0x84] sm:$0xff]
  %v38 = vld [vmem:[%s0 + $0x8c] sm:$0xf]
  %v39 = vld [vmem:[%s0 + $0x90] sm:$0xff]
  %v40 = vld [vmem:[%s0 + $0x98] sm:$0xf]
  %v41 = vld [vmem:[%s0 + $0x9c] sm:$0xff]
  %v42 = vld [vmem:[%s0 + $0xa4] sm:$0xf]
  %v43 = vld [vmem:[%s0 + $0xa8] sm:$0xff]
  %v44 = vld [vmem:[%s0 + $0xb0] sm:$0xf]
  %v45 = vld [vmem:[%s0 + $0xb4] sm:$0xff]
  %v46 = vld [vmem:[%s0 + $0xbc] sm:$0xf]
  %v47 = vld [vmem:[%s1] sm:$0xf]
  %v48 = vld [vmem:[%s1 + $0x4] sm:$0xf]
  %v49 = vld [vmem:[%s1 + $0x8] sm:$0xf]
  %v50 = vld [vmem:[%s1 + $0xc] sm:$0xf]
  %v51 = vld [vmem:[%s1 + $0x10] sm:$0xf]
  %v52 = vld [vmem:[%s1 + $0x14] sm:$0xf]
  %v53 = vld [vmem:[%s1 + $0x18] sm:$0xf]
  %v54 = vld [vmem:[%s1 + $0x1c] sm:$0xf]
  %v55 = vld [vmem:[%s1 + $0x20] sm:$0xf]
  %v56 = vld [vmem:[%s1 + $0x24] sm:$0xf]
  %v57 = vld [vmem:[%s1 + $0x28] sm:$0xf]
  %v58 = vld [vmem:[%s1 + $0x2c] sm:$0xf]
  %v59 = vld [vmem:[%s1 + $0x30] sm:$0xf]
  %v60 = vld [vmem:[%s1 + $0x34] sm:$0xf]
  %v61 = vld [vmem:[%s1 + $0x38] sm:$0xf]
  %v62 = vld [vmem:[%s1 + $0x3c] sm:$0xf]
  %v63 = vld [vmem:[%s1 + $0x40] sm:$0xf]
  %v64 = vld [vmem:[%s1 + $0x44] sm:$0xf]
  %v65 = vld [vmem:[%s1 + $0x48] sm:$0xf]
  %v66 = vld [vmem:[%s1 + $0x4c] sm:$0xf]
  %v67 = vld [vmem:[%s1 + $0x50] sm:$0xf]
  %v68 = vld [vmem:[%s1 + $0x54] sm:$0xf]
  %v69 = vld [vmem:[%s1 + $0x58] sm:$0xf]
  %v70 = vld [vmem:[%s1 + $0x5c] sm:$0xf]
  %v71 = vld [vmem:[%s1 + $0x60] sm:$0xf]
  %v72 = vld [vmem:[%s1 + $0x64] sm:$0xf]
  %v73 = vld [vmem:[%s1 + $0x68] sm:$0xf]
  %v74 = vld [vmem:[%s1 + $0x6c] sm:$0xf]
  %v75 = vld [vmem:[%s1 + $0x70] sm:$0xf]
  %v76 = vld [vmem:[%s1 + $0x74] sm:$0xf]
  %v77 = vld [vmem:[%s1 + $0x78] sm:$0xf]
  %v78 = vld [vmem:[%s1 + $0x7c] sm:$0xf]
  %v79 = vld [vmem:[%s1 + $0x80] sm:$0xf]
  %v80 = vld [vmem:[%s1 + $0x84] sm:$0xf]
  %v81 = vld [vmem:[%s1 + $0x88] sm:$0xf]
  %v82 = vld [vmem:[%s1 + $0x8c] sm:$0xf]
  %v83 = vld [vmem:[%s1 + $0x90] sm:$0xf]
  %v84 = vld [vmem:[%s1 + $0x94] sm:$0xf]
  %v85 = vld [vmem:[%s1 + $0x98] sm:$0xf]
  %v86 = vld [vmem:[%s1 + $0x9c] sm:$0xf]
  %v87 = vld [vmem:[%s1 + $0xa0] sm:$0xf]
  %v88 = vld [vmem:[%s1 + $0xa4] sm:$0xf]
  %v89 = vld [vmem:[%s1 + $0xa8] sm:$0xf]
  %v90 = vld [vmem:[%s1 + $0xac] sm:$0xf]
  %v91 = vld [vmem:[%s1 + $0xb0] sm:$0xf]
  %v92 = vld [vmem:[%s1 + $0xb4] sm:$0xf]
  %v93 = vld [vmem:[%s1 + $0xb8] sm:$0xf]
  %v94 = vld [vmem:[%s1 + $0xbc] sm:$0xf]
  %v95 = vld [vmem:[%s2] sm:$0x1]
  %v97 = vlaneseq
  %v98 = vshrl.u32 %v97, 7
  %v99 = vsub.s32 0, %v98
  %v100 = vrot.slane %v95, %v99
  %v134 = vunpack.c.l.b16 %v15
  %v135 = vunpack.c.h.b16 %v15
  %v136 = vunpack.c.l.b16 %v16
  %v137 = vunpack.c.l.b16 %v17
  %v138 = vunpack.c.h.b16 %v17
  %v139 = vunpack.c.l.b16 %v18
  %v140 = vunpack.c.l.b16 %v19
  %v141 = vunpack.c.h.b16 %v19
  %v142 = vunpack.c.l.b16 %v20
  %v143 = vunpack.c.l.b16 %v21
  %v144 = vunpack.c.h.b16 %v21
  %v145 = vunpack.c.l.b16 %v22
  %v146 = vunpack.c.l.b16 %v23
  %v147 = vunpack.c.h.b16 %v23
  %v148 = vunpack.c.l.b16 %v24
  %v149 = vunpack.c.l.b16 %v25
  %v150 = vunpack.c.h.b16 %v25
  %v151 = vunpack.c.l.b16 %v26
  %v152 = vunpack.c.l.b16 %v27
  %v153 = vunpack.c.h.b16 %v27
  %v154 = vunpack.c.l.b16 %v28
  %v155 = vunpack.c.l.b16 %v29
  %v156 = vunpack.c.h.b16 %v29
  %v157 = vunpack.c.l.b16 %v30
  %v158 = vunpack.c.l.b16 %v31
  %v159 = vunpack.c.h.b16 %v31
  %v160 = vunpack.c.l.b16 %v32
  %v161 = vunpack.c.l.b16 %v33
  %v162 = vunpack.c.h.b16 %v33
  %v163 = vunpack.c.l.b16 %v34
  %v164 = vunpack.c.l.b16 %v35
  %v165 = vunpack.c.h.b16 %v35
  %v166 = vunpack.c.l.b16 %v36
  %v167 = vunpack.c.l.b16 %v37
  %v168 = vunpack.c.h.b16 %v37
  %v169 = vunpack.c.l.b16 %v38
  %v170 = vunpack.c.l.b16 %v39
  %v171 = vunpack.c.h.b16 %v39
  %v172 = vunpack.c.l.b16 %v40
  %v173 = vunpack.c.l.b16 %v41
  %v174 = vunpack.c.h.b16 %v41
  %v175 = vunpack.c.l.b16 %v42
  %v176 = vunpack.c.l.b16 %v43
  %v177 = vunpack.c.h.b16 %v43
  %v178 = vunpack.c.l.b16 %v44
  %v179 = vunpack.c.l.b16 %v45
  %v180 = vunpack.c.h.b16 %v45
  %v181 = vunpack.c.l.b16 %v46
  %v182 = vpack.c.b16 %v137, %v134
  %v183 = vpack.c.b16 %v138, %v135
  %v184 = vpack.c.b16 %v139, %v136
  %v185 = vpack.c.b16 %v143, %v140
  %v186 = vpack.c.b16 %v144, %v141
  %v187 = vpack.c.b16 %v145, %v142
  %v188 = vpack.c.b16 %v149, %v146
  %v189 = vpack.c.b16 %v150, %v147
  %v190 = vpack.c.b16 %v151, %v148
  %v191 = vpack.c.b16 %v155, %v152
  %v192 = vpack.c.b16 %v156, %v153
  %v193 = vpack.c.b16 %v157, %v154
  %v194 = vpack.c.b16 %v161, %v158
  %v195 = vpack.c.b16 %v162, %v159
  %v196 = vpack.c.b16 %v163, %v160
  %v197 = vpack.c.b16 %v167, %v164
  %v198 = vpack.c.b16 %v168, %v165
  %v199 = vpack.c.b16 %v169, %v166
  %v200 = vpack.c.b16 %v173, %v170
  %v201 = vpack.c.b16 %v174, %v171
  %v202 = vpack.c.b16 %v175, %v172
  %v203 = vpack.c.b16 %v179, %v176
  %v204 = vpack.c.b16 %v180, %v177
  %v205 = vpack.c.b16 %v181, %v178
  %v278 = vunpack.c.l.b16 %v47
  %v279 = vunpack.c.l.b16 %v48
  %v280 = vunpack.c.l.b16 %v49
  %v281 = vunpack.c.l.b16 %v50
  %v282 = vunpack.c.l.b16 %v51
  %v283 = vunpack.c.l.b16 %v52
  %v284 = vunpack.c.l.b16 %v53
  %v285 = vunpack.c.l.b16 %v54
  %v286 = vunpack.c.l.b16 %v55
  %v287 = vunpack.c.l.b16 %v56
  %v288 = vunpack.c.l.b16 %v57
  %v289 = vunpack.c.l.b16 %v58
  %v290 = vunpack.c.l.b16 %v59
  %v291 = vunpack.c.l.b16 %v60
  %v292 = vunpack.c.l.b16 %v61
  %v293 = vunpack.c.l.b16 %v62
  %v294 = vunpack.c.l.b16 %v63
  %v295 = vunpack.c.l.b16 %v64
  %v296 = vunpack.c.l.b16 %v65
  %v297 = vunpack.c.l.b16 %v66
  %v298 = vunpack.c.l.b16 %v67
  %v299 = vunpack.c.l.b16 %v68
  %v300 = vunpack.c.l.b16 %v69
  %v301 = vunpack.c.l.b16 %v70
  %v302 = vunpack.c.l.b16 %v71
  %v303 = vunpack.c.l.b16 %v72
  %v304 = vunpack.c.l.b16 %v73
  %v305 = vunpack.c.l.b16 %v74
  %v306 = vunpack.c.l.b16 %v75
  %v307 = vunpack.c.l.b16 %v76
  %v308 = vunpack.c.l.b16 %v77
  %v309 = vunpack.c.l.b16 %v78
  %v310 = vunpack.c.l.b16 %v79
  %v311 = vunpack.c.l.b16 %v80
  %v312 = vunpack.c.l.b16 %v81
  %v313 = vunpack.c.l.b16 %v82
  %v314 = vunpack.c.l.b16 %v83
  %v315 = vunpack.c.l.b16 %v84
  %v316 = vunpack.c.l.b16 %v85
  %v317 = vunpack.c.l.b16 %v86
  %v318 = vunpack.c.l.b16 %v87
  %v319 = vunpack.c.l.b16 %v88
  %v320 = vunpack.c.l.b16 %v89
  %v321 = vunpack.c.l.b16 %v90
  %v322 = vunpack.c.l.b16 %v91
  %v323 = vunpack.c.l.b16 %v92
  %v324 = vunpack.c.l.b16 %v93
  %v325 = vunpack.c.l.b16 %v94
  %v326 = vpack.c.b16 %v279, %v278
  %v327 = vpack.c.b16 %v281, %v280
  %v328 = vpack.c.b16 %v283, %v282
  %v329 = vpack.c.b16 %v285, %v284
  %v330 = vpack.c.b16 %v287, %v286
  %v331 = vpack.c.b16 %v289, %v288
  %v332 = vpack.c.b16 %v291, %v290
  %v333 = vpack.c.b16 %v293, %v292
  %v334 = vpack.c.b16 %v295, %v294
  %v335 = vpack.c.b16 %v297, %v296
  %v336 = vpack.c.b16 %v299, %v298
  %v337 = vpack.c.b16 %v301, %v300
  %v338 = vpack.c.b16 %v303, %v302
  %v339 = vpack.c.b16 %v305, %v304
  %v340 = vpack.c.b16 %v307, %v306
  %v341 = vpack.c.b16 %v309, %v308
  %v342 = vpack.c.b16 %v311, %v310
  %v343 = vpack.c.b16 %v313, %v312
  %v344 = vpack.c.b16 %v315, %v314
  %v345 = vpack.c.b16 %v317, %v316
  %v346 = vpack.c.b16 %v319, %v318
  %v347 = vpack.c.b16 %v321, %v320
  %v348 = vpack.c.b16 %v323, %v322
  %v349 = vpack.c.b16 %v325, %v324
  %374 = vmatprep.subr.bf16.mxu0 0
  %375 = vmatpush1.bf16.msra.mxu0 %v326
  %376 = vmatprep.subr.bf16.mxu0 0
  %377 = vmatpush1.bf16.msra.mxu0 %v327
  %378 = vmatprep.subr.bf16.mxu0 0
  %379 = vmatpush1.bf16.msra.mxu0 %v328
  %380 = vmatprep.subr.bf16.mxu0 0
  %381 = vmatpush1.bf16.msra.mxu0 %v329
  %382 = vmatprep.subr.bf16.mxu0 0
  %383 = vmatpush1.bf16.msra.mxu0 %v330
  %384 = vmatprep.subr.bf16.mxu0 0
  %385 = vmatpush1.bf16.msra.mxu0 %v331
  %386 = vmatprep.subr.bf16.mxu0 0
  %387 = vmatpush1.bf16.msra.mxu0 %v332
  %388 = vmatprep.subr.bf16.mxu0 0
  %389 = vmatpush1.bf16.msra.mxu0 %v333
  %390 = vmatprep.subr.bf16.mxu0 0
  %391 = vmatpush1.bf16.msra.mxu0 %v334
  %392 = vmatprep.subr.bf16.mxu0 0
  %393 = vmatpush1.bf16.msra.mxu0 %v335
  %394 = vmatprep.subr.bf16.mxu0 0
  %395 = vmatpush1.bf16.msra.mxu0 %v336
  %396 = vmatprep.subr.bf16.mxu0 0
  %397 = vmatpush1.bf16.msra.mxu0 %v337
  %398 = vmatprep.subr.bf16.mxu0 0
  %399 = vmatpush1.bf16.msra.mxu0 %v338
  %400 = vmatprep.subr.bf16.mxu0 0
  %401 = vmatpush1.bf16.msra.mxu0 %v339
  %402 = vmatprep.subr.bf16.mxu0 0
  %403 = vmatpush1.bf16.msra.mxu0 %v340
  %404 = vmatprep.subr.bf16.mxu0 0
  %405 = vmatpush1.bf16.msra.mxu0 %v341
  %406 = vmatprep.mubr.bf16.mxu0 %v183
  %407 = vmatmul.mubr.bf16.gmra.mrb[0].mxu0 %v182
  %v408 = vpop.f32.mrb[0].mxu0
  %v409 = vadd.f32 %v100, %v408
  %v410 = vpop.f32.mrb[0].mxu0
  %v411 = vpop.f32.mrb[0].mxu0
  %v412 = vadd.f32 %v100, %v411
  %v413 = vpop.f32.mrb[0].mxu0
  %414 = vmatprep.mubr.bf16.mxu0 %v186
  %415 = vmatmul.mubr.bf16.gmra.mrb[0].mxu0 %v185
  %v416 = vpop.f32.mrb[0].mxu0
  %v417 = vadd.f32 %v100, %v416
  %v418 = vpop.f32.mrb[0].mxu0
  %v419 = vpop.f32.mrb[0].mxu0
  %v420 = vadd.f32 %v100, %v419
  %v421 = vpop.f32.mrb[0].mxu0
  %422 = vmatprep.mubr.bf16.mxu0 %v189
  %423 = vmatmul.mubr.bf16.gmra.mrb[0].mxu0 %v188
  %v424 = vpop.f32.mrb[0].mxu0
  %v425 = vadd.f32 %v100, %v424
  %v426 = vpop.f32.mrb[0].mxu0
  %v427 = vpop.f32.mrb[0].mxu0
  %v428 = vadd.f32 %v100, %v427
  %v429 = vpop.f32.mrb[0].mxu0
  %430 = vmatprep.mubr.bf16.mxu0 %v192
  %431 = vmatmul.mubr.bf16.gmra.mrb[0].mxu0 %v191
  %v432 = vpop.f32.mrb[0].mxu0
  %v433 = vadd.f32 %v100, %v432
  %v434 = vpop.f32.mrb[0].mxu0
  %v435 = vpop.f32.mrb[0].mxu0
  %v436 = vadd.f32 %v100, %v435
  %v437 = vpop.f32.mrb[0].mxu0
  %438 = vmatprep.mubr.bf16.mxu0 %v195
  %439 = vmatmul.mubr.bf16.gmra.mrb[0].mxu0 %v194
  %v440 = vpop.f32.mrb[0].mxu0
  %v441 = vadd.f32 %v100, %v440
  %v442 = vpop.f32.mrb[0].mxu0
  %v443 = vpop.f32.mrb[0].mxu0
  %v444 = vadd.f32 %v100, %v443
  %v445 = vpop.f32.mrb[0].mxu0
  %446 = vmatprep.mubr.bf16.mxu0 %v198
  %447 = vmatmul.mubr.bf16.gmra.mrb[0].mxu0 %v197
  %v448 = vpop.f32.mrb[0].mxu0
  %v449 = vadd.f32 %v100, %v448
  %v450 = vpop.f32.mrb[0].mxu0
  %v451 = vpop.f32.mrb[0].mxu0
  %v452 = vadd.f32 %v100, %v451
  %v453 = vpop.f32.mrb[0].mxu0
  %454 = vmatprep.mubr.bf16.mxu0 %v201
  %455 = vmatmul.mubr.bf16.gmra.mrb[0].mxu0 %v200
  %v456 = vpop.f32.mrb[0].mxu0
  %v457 = vadd.f32 %v100, %v456
  %v458 = vpop.f32.mrb[0].mxu0
  %v459 = vpop.f32.mrb[0].mxu0
  %v460 = vadd.f32 %v100, %v459
  %v461 = vpop.f32.mrb[0].mxu0
  %462 = vmatprep.mubr.bf16.mxu0 %v204
  %463 = vmatmul.mubr.bf16.gmra.mrb[0].mxu0 %v203
  %v464 = vpop.f32.mrb[0].mxu0
  %v465 = vadd.f32 %v100, %v464
  %v466 = vpop.f32.mrb[0].mxu0
  %v467 = vpop.f32.mrb[0].mxu0
  %v468 = vadd.f32 %v100, %v467
  %v469 = vpop.f32.mrb[0].mxu0
  %470 = vdwg.mxu0
  %471 = vmatprep.subr.bf16.mxu0 0
  %472 = vmatpush1.bf16.msra.mxu0 %v342
  %473 = vmatprep.subr.bf16.mxu0 0
  %474 = vmatpush1.bf16.msra.mxu0 %v343
  %475 = vmatprep.subr.bf16.mxu0 0
  %476 = vmatpush1.bf16.msra.mxu0 %v344
  %477 = vmatprep.subr.bf16.mxu0 0
  %478 = vmatpush1.bf16.msra.mxu0 %v345
  %479 = vmatprep.subr.bf16.mxu0 0
  %480 = vmatpush1.bf16.msra.mxu0 %v346
  %481 = vmatprep.subr.bf16.mxu0 0
  %482 = vmatpush1.bf16.msra.mxu0 %v347
  %483 = vmatprep.subr.bf16.mxu0 0
  %484 = vmatpush1.bf16.msra.mxu0 %v348
  %485 = vmatprep.subr.bf16.mxu0 0
  %486 = vmatpush1.bf16.msra.mxu0 %v349
  %487 = vmatprep.subr.bf16.mxu0 0
  %488 = vmatpush1.bf16.msra.mxu0 0
  %489 = vmatprep.subr.bf16.mxu0 0
  %490 = vmatpush1.bf16.msra.mxu0 0
  %491 = vmatprep.subr.bf16.mxu0 0
  %492 = vmatpush1.bf16.msra.mxu0 0
  %493 = vmatprep.subr.bf16.mxu0 0
  %494 = vmatpush1.bf16.msra.mxu0 0
  %495 = vmatprep.subr.bf16.mxu0 0
  %496 = vmatpush1.bf16.msra.mxu0 0
  %497 = vmatprep.subr.bf16.mxu0 0
  %498 = vmatpush1.bf16.msra.mxu0 0
  %499 = vmatprep.subr.bf16.mxu0 0
  %500 = vmatpush1.bf16.msra.mxu0 0
  %501 = vmatprep.subr.bf16.mxu0 0
  %502 = vmatpush1.bf16.msra.mxu0 0
  %503 = vmatprep.mubr.bf16.mxu0 0
  %504 = vmatmul.mubr.bf16.gmra.mrb[0].mxu0 %v184
  %v505 = vpop.f32.mrb[0].mxu0
  %v506 = vadd.f32 %v409, %v505
  %v507 = vpop.f32.mrb[0].mxu0
  %v508 = vpop.f32.mrb[0].mxu0
  %v509 = vadd.f32 %v412, %v508
  %v510 = vpop.f32.mrb[0].mxu0
  %511 = vmatprep.mubr.bf16.mxu0 0
  %512 = vmatmul.mubr.bf16.gmra.mrb[0].mxu0 %v187
  %v513 = vpop.f32.mrb[0].mxu0
  %v514 = vadd.f32 %v417, %v513
  %v515 = vpop.f32.mrb[0].mxu0
  %v516 = vpop.f32.mrb[0].mxu0
  %v517 = vadd.f32 %v420, %v516
  %v518 = vpop.f32.mrb[0].mxu0
  %519 = vmatprep.mubr.bf16.mxu0 0
  %520 = vmatmul.mubr.bf16.gmra.mrb[0].mxu0 %v190
  %v521 = vpop.f32.mrb[0].mxu0
  %v522 = vadd.f32 %v425, %v521
  %v523 = vpop.f32.mrb[0].mxu0
  %v524 = vpop.f32.mrb[0].mxu0
  %v525 = vadd.f32 %v428, %v524
  %v526 = vpop.f32.mrb[0].mxu0
  %527 = vmatprep.mubr.bf16.mxu0 0
  %528 = vmatmul.mubr.bf16.gmra.mrb[0].mxu0 %v193
  %v529 = vpop.f32.mrb[0].mxu0
  %v530 = vadd.f32 %v433, %v529
  %v531 = vpop.f32.mrb[0].mxu0
  %v532 = vpop.f32.mrb[0].mxu0
  %v533 = vadd.f32 %v436, %v532
  %v534 = vpop.f32.mrb[0].mxu0
  %535 = vmatprep.mubr.bf16.mxu0 0
  %536 = vmatmul.mubr.bf16.gmra.mrb[0].mxu0 %v196
  %v537 = vpop.f32.mrb[0].mxu0
  %v538 = vadd.f32 %v441, %v537
  %v539 = vpop.f32.mrb[0].mxu0
  %v540 = vpop.f32.mrb[0].mxu0
  %v541 = vadd.f32 %v444, %v540
  %v542 = vpop.f32.mrb[0].mxu0
  %543 = vmatprep.mubr.bf16.mxu0 0
  %544 = vmatmul.mubr.bf16.gmra.mrb[0].mxu0 %v199
  %v545 = vpop.f32.mrb[0].mxu0
  %v546 = vadd.f32 %v449, %v545
  %v547 = vpop.f32.mrb[0].mxu0
  %v548 = vpop.f32.mrb[0].mxu0
  %v549 = vadd.f32 %v452, %v548
  %v550 = vpop.f32.mrb[0].mxu0
  %551 = vmatprep.mubr.bf16.mxu0 0
  %552 = vmatmul.mubr.bf16.gmra.mrb[0].mxu0 %v202
  %v553 = vpop.f32.mrb[0].mxu0
  %v554 = vadd.f32 %v457, %v553
  %v555 = vpop.f32.mrb[0].mxu0
  %v556 = vpop.f32.mrb[0].mxu0
  %v557 = vadd.f32 %v460, %v556
  %v558 = vpop.f32.mrb[0].mxu0
  %559 = vmatprep.mubr.bf16.mxu0 0
  %560 = vmatmul.mubr.bf16.gmra.mrb[0].mxu0 %v205
  %v561 = vpop.f32.mrb[0].mxu0
  %v562 = vadd.f32 %v465, %v561
  %v563 = vpop.f32.mrb[0].mxu0
  %v564 = vpop.f32.mrb[0].mxu0
  %v565 = vadd.f32 %v468, %v564
  %v566 = vpop.f32.mrb[0].mxu0
  %567 = vdwg.mxu0
  %vm568 = vcmp.ge.f32.partialorder %v506, 0.0
  %vm569 = vcmp.ge.f32.partialorder %v509, 0.0
  %vm570 = vcmp.ge.f32.partialorder %v514, 0.0
  %vm571 = vcmp.ge.f32.partialorder %v517, 0.0
  %vm572 = vcmp.ge.f32.partialorder %v522, 0.0
  %vm573 = vcmp.ge.f32.partialorder %v525, 0.0
  %vm574 = vcmp.ge.f32.partialorder %v530, 0.0
  %vm575 = vcmp.ge.f32.partialorder %v533, 0.0
  %vm576 = vcmp.ge.f32.partialorder %v538, 0.0
  %vm577 = vcmp.ge.f32.partialorder %v541, 0.0
  %vm578 = vcmp.ge.f32.partialorder %v546, 0.0
  %vm579 = vcmp.ge.f32.partialorder %v549, 0.0
  %vm580 = vcmp.ge.f32.partialorder %v554, 0.0
  %vm581 = vcmp.ge.f32.partialorder %v557, 0.0
  %vm582 = vcmp.ge.f32.partialorder %v562, 0.0
  %vm583 = vcmp.ge.f32.partialorder %v565, 0.0
  %v584 = vmul.f32 %v506, 0.05
  %v585 = vmul.f32 %v509, 0.05
  %v586 = vmul.f32 %v514, 0.05
  %v587 = vmul.f32 %v517, 0.05
  %v588 = vmul.f32 %v522, 0.05
  %v589 = vmul.f32 %v525, 0.05
  %v590 = vmul.f32 %v530, 0.05
  %v591 = vmul.f32 %v533, 0.05
  %v592 = vmul.f32 %v538, 0.05
  %v593 = vmul.f32 %v541, 0.05
  %v594 = vmul.f32 %v546, 0.05
  %v595 = vmul.f32 %v549, 0.05
  %v596 = vmul.f32 %v554, 0.05
  %v597 = vmul.f32 %v557, 0.05
  %v598 = vmul.f32 %v562, 0.05
  %v599 = vmul.f32 %v565, 0.05
  %v600 = vsel %vm568, %v506, %v584
  %v601 = vsel %vm569, %v509, %v585
  %v602 = vsel %vm570, %v514, %v586
  %v603 = vsel %vm571, %v517, %v587
  %v604 = vsel %vm572, %v522, %v588
  %v605 = vsel %vm573, %v525, %v589
  %v606 = vsel %vm574, %v530, %v590
  %v607 = vsel %vm575, %v533, %v591
  %v608 = vsel %vm576, %v538, %v592
  %v609 = vsel %vm577, %v541, %v593
  %v610 = vsel %vm578, %v546, %v594
  %v611 = vsel %vm579, %v549, %v595
  %v612 = vsel %vm580, %v554, %v596
  %v613 = vsel %vm581, %v557, %v597
  %v614 = vsel %vm582, %v562, %v598
  %v615 = vsel %vm583, %v565, %v599
  %v616 = vpack.c.bf16 %v601, %v600
  %v617 = vpack.c.bf16 %v603, %v602
  %v618 = vpack.c.bf16 %v605, %v604
  %v619 = vpack.c.bf16 %v607, %v606
  %v620 = vpack.c.bf16 %v609, %v608
  %v621 = vpack.c.bf16 %v611, %v610
  %v622 = vpack.c.bf16 %v613, %v612
  %v623 = vpack.c.bf16 %v615, %v614
  %v632 = vunpack.c.l.b16 %v616
  %v633 = vunpack.c.h.b16 %v616
  %v634 = vunpack.c.l.b16 %v617
  %v635 = vunpack.c.h.b16 %v617
  %v636 = vunpack.c.l.b16 %v618
  %v637 = vunpack.c.h.b16 %v618
  %v638 = vunpack.c.l.b16 %v619
  %v639 = vunpack.c.h.b16 %v619
  %v640 = vunpack.c.l.b16 %v620
  %v641 = vunpack.c.h.b16 %v620
  %v642 = vunpack.c.l.b16 %v621
  %v643 = vunpack.c.h.b16 %v621
  %v644 = vunpack.c.l.b16 %v622
  %v645 = vunpack.c.h.b16 %v622
  %v646 = vunpack.c.l.b16 %v623
  %v647 = vunpack.c.h.b16 %v623
  %v648 = vpack.c.b16 %v632, %v632
  %v649 = vpack.c.b16 %v633, %v633
  %v650 = vpack.c.b16 %v634, %v634
  %v651 = vpack.c.b16 %v635, %v635
  %v652 = vpack.c.b16 %v636, %v636
  %v653 = vpack.c.b16 %v637, %v637
  %v654 = vpack.c.b16 %v638, %v638
  %v655 = vpack.c.b16 %v639, %v639
  %v656 = vpack.c.b16 %v640, %v640
  %v657 = vpack.c.b16 %v641, %v641
  %v658 = vpack.c.b16 %v642, %v642
  %v659 = vpack.c.b16 %v643, %v643
  %v660 = vpack.c.b16 %v644, %v644
  %v661 = vpack.c.b16 %v645, %v645
  %v662 = vpack.c.b16 %v646, %v646
  %v663 = vpack.c.b16 %v647, %v647
  %680 = vst [vmem:[%s3] sm:$0xf] %v648
  %681 = vst [vmem:[%s3 + $0x4] sm:$0xf] %v649
  %682 = vst [vmem:[%s3 + $0x8] sm:$0xf] %v650
  %683 = vst [vmem:[%s3 + $0xc] sm:$0xf] %v651
  %684 = vst [vmem:[%s3 + $0x10] sm:$0xf] %v652
  %685 = vst [vmem:[%s3 + $0x14] sm:$0xf] %v653
  %686 = vst [vmem:[%s3 + $0x18] sm:$0xf] %v654
  %687 = vst [vmem:[%s3 + $0x1c] sm:$0xf] %v655
  %688 = vst [vmem:[%s3 + $0x20] sm:$0xf] %v656
  %689 = vst [vmem:[%s3 + $0x24] sm:$0xf] %v657
  %690 = vst [vmem:[%s3 + $0x28] sm:$0xf] %v658
  %691 = vst [vmem:[%s3 + $0x2c] sm:$0xf] %v659
  %692 = vst [vmem:[%s3 + $0x30] sm:$0xf] %v660
  %693 = vst [vmem:[%s3 + $0x34] sm:$0xf] %v661
  %694 = vst [vmem:[%s3 + $0x38] sm:$0xf] %v662
  %695 = vst [vmem:[%s3 + $0x3c] sm:$0xf] %v663
  // Predicated region
  $region14: #{generator_forward.12} parent=0 // pred_check
    _
  $region15: #{generator_forward.12} parent=0 // pred_check_branch
    %697 = sbr.rel (0) target = $region17
  $region16: #{generator_forward.12} parent=0 // pred_region
    _
  $region17: #{generator_forward.12} parent=0 // pred_fallthru
    _
  // Predicated region
  $region18: #{generator_forward.12} parent=0 // pred_check
    _
  $region19: #{generator_forward.12} parent=0 // pred_check_branch
    %699 = sbr.rel (0) target = $region21
  $region20: #{generator_forward.12} parent=0 // pred_region
    _
  $region21: #{generator_forward.12} parent=0 // pred_fallthru
    _

// kernel: generator_forward.13
$region0: #{generator_forward.13}
  #allocation0 [shape = 'u32[]', space=smem, size = 0x4, offset = 0x4, fixed_abs, tag = 'smem constant byte address 0x4 - core index']
  #allocation1 [shape = 'u32[144,128]{1,0:T(1,128)}', space=vmem, size = 0x12000, scoped, tag = 'internal scratch']
  %s0 = inlined_call_operand.vmem [shape: bf16[512,256], index: 0, kind: input, shape index: {}]
  %s1 = inlined_call_operand.vmem [shape: bf16[256,128], index: 1, kind: input, shape index: {}]
  %s2 = inlined_call_operand.vmem [shape: f32[1,128], index: 2, kind: input, shape index: {}]
  %s3 = inlined_call_operand.vmem [shape: f32[512,128], index: 3, kind: output, shape index: {}]
  %s4 = sld [smem:[#allocation0]]
  $region22: #{generator_forward.13} parent=0
    _
  %s6 = ssub.s32 1, %s4
  %s7 = scalar_select 0, %s6, %s4
  // Predicated region
  $region2: #{generator_forward.13} parent=0 // pred_check
    _
  $region3: #{generator_forward.13} parent=0 // pred_check_branch
    %9 = sbr.rel (0) target = $region5
  $region4: #{generator_forward.13} parent=0 // pred_region
    _
  $region5: #{generator_forward.13} parent=0 // pred_fallthru
    _
  // Predicated region
  $region6: #{generator_forward.13} parent=0 // pred_check
    _
  $region7: #{generator_forward.13} parent=0 // pred_check_branch
    %11 = sbr.rel (0) target = $region9
  $region8: #{generator_forward.13} parent=0 // pred_region
    _
  $region9: #{generator_forward.13} parent=0 // pred_fallthru
    _
  // Predicated region
  $region10: #{generator_forward.13} parent=0 // pred_check
    _
  $region11: #{generator_forward.13} parent=0 // pred_check_branch
    %13 = sbr.rel (0) target = $region13
  $region12: #{generator_forward.13} parent=0 // pred_region
    _
  $region13: #{generator_forward.13} parent=0 // pred_fallthru
    _
  %v15 = vld [vmem:[%s0] sm:$0xff]
  %v16 = vld [vmem:[%s0 + $0x8] sm:$0xff]
  %v17 = vld [vmem:[%s0 + $0x10] sm:$0xff]
  %v18 = vld [vmem:[%s0 + $0x18] sm:$0xff]
  %v19 = vld [vmem:[%s0 + $0x20] sm:$0xff]
  %v20 = vld [vmem:[%s0 + $0x28] sm:$0xff]
  %v21 = vld [vmem:[%s0 + $0x30] sm:$0xff]
  %v22 = vld [vmem:[%s0 + $0x38] sm:$0xff]
  %v23 = vld [vmem:[%s0 + $0x40] sm:$0xff]
  %v24 = vld [vmem:[%s0 + $0x48] sm:$0xff]
  %v25 = vld [vmem:[%s0 + $0x50] sm:$0xff]
  %v26 = vld [vmem:[%s0 + $0x58] sm:$0xff]
  %v27 = vld [vmem:[%s0 + $0x60] sm:$0xff]
  %v28 = vld [vmem:[%s0 + $0x68] sm:$0xff]
  %v29 = vld [vmem:[%s0 + $0x70] sm:$0xff]
  %v30 = vld [vmem:[%s0 + $0x78] sm:$0xff]
  %v31 = vld [vmem:[%s0 + $0x80] sm:$0xff]
  %v32 = vld [vmem:[%s0 + $0x88] sm:$0xff]
  %v33 = vld [vmem:[%s0 + $0x90] sm:$0xff]
  %v34 = vld [vmem:[%s0 + $0x98] sm:$0xff]
  %v35 = vld [vmem:[%s0 + $0xa0] sm:$0xff]
  %v36 = vld [vmem:[%s0 + $0xa8] sm:$0xff]
  %v37 = vld [vmem:[%s0 + $0xb0] sm:$0xff]
  %v38 = vld [vmem:[%s0 + $0xb8] sm:$0xff]
  %v39 = vld [vmem:[%s0 + $0xc0] sm:$0xff]
  %v40 = vld [vmem:[%s0 + $0xc8] sm:$0xff]
  %v41 = vld [vmem:[%s0 + $0xd0] sm:$0xff]
  %v42 = vld [vmem:[%s0 + $0xd8] sm:$0xff]
  %v43 = vld [vmem:[%s0 + $0xe0] sm:$0xff]
  %v44 = vld [vmem:[%s0 + $0xe8] sm:$0xff]
  %v45 = vld [vmem:[%s0 + $0xf0] sm:$0xff]
  %v46 = vld [vmem:[%s0 + $0xf8] sm:$0xff]
  %v47 = vld [vmem:[%s0 + $0x100] sm:$0xff]
  %v48 = vld [vmem:[%s0 + $0x108] sm:$0xff]
  %v49 = vld [vmem:[%s0 + $0x110] sm:$0xff]
  %v50 = vld [vmem:[%s0 + $0x118] sm:$0xff]
  %v51 = vld [vmem:[%s0 + $0x120] sm:$0xff]
  %v52 = vld [vmem:[%s0 + $0x128] sm:$0xff]
  %v53 = vld [vmem:[%s0 + $0x130] sm:$0xff]
  %v54 = vld [vmem:[%s0 + $0x138] sm:$0xff]
  %v55 = vld [vmem:[%s0 + $0x140] sm:$0xff]
  %v56 = vld [vmem:[%s0 + $0x148] sm:$0xff]
  %v57 = vld [vmem:[%s0 + $0x150] sm:$0xff]
  %v58 = vld [vmem:[%s0 + $0x158] sm:$0xff]
  %v59 = vld [vmem:[%s0 + $0x160] sm:$0xff]
  %v60 = vld [vmem:[%s0 + $0x168] sm:$0xff]
  %v61 = vld [vmem:[%s0 + $0x170] sm:$0xff]
  %v62 = vld [vmem:[%s0 + $0x178] sm:$0xff]
  %v63 = vld [vmem:[%s0 + $0x180] sm:$0xff]
  %v64 = vld [vmem:[%s0 + $0x188] sm:$0xff]
  %v65 = vld [vmem:[%s0 + $0x190] sm:$0xff]
  %v66 = vld [vmem:[%s0 + $0x198] sm:$0xff]
  %v67 = vld [vmem:[%s0 + $0x1a0] sm:$0xff]
  %v68 = vld [vmem:[%s0 + $0x1a8] sm:$0xff]
  %v69 = vld [vmem:[%s0 + $0x1b0] sm:$0xff]
  %v70 = vld [vmem:[%s0 + $0x1b8] sm:$0xff]
  %v71 = vld [vmem:[%s0 + $0x1c0] sm:$0xff]
  %v72 = vld [vmem:[%s0 + $0x1c8] sm:$0xff]
  %v73 = vld [vmem:[%s0 + $0x1d0] sm:$0xff]
  %v74 = vld [vmem:[%s0 + $0x1d8] sm:$0xff]
  %v75 = vld [vmem:[%s0 + $0x1e0] sm:$0xff]
  %v76 = vld [vmem:[%s0 + $0x1e8] sm:$0xff]
  %v77 = vld [vmem:[%s0 + $0x1f0] sm:$0xff]
  %v78 = vld [vmem:[%s0 + $0x1f8] sm:$0xff]
  %v79 = vld [vmem:[%s1] sm:$0xf]
  %v80 = vld [vmem:[%s1 + $0x4] sm:$0xf]
  %v81 = vld [vmem:[%s1 + $0x8] sm:$0xf]
  %v82 = vld [vmem:[%s1 + $0xc] sm:$0xf]
  %v83 = vld [vmem:[%s1 + $0x10] sm:$0xf]
  %v84 = vld [vmem:[%s1 + $0x14] sm:$0xf]
  %v85 = vld [vmem:[%s1 + $0x18] sm:$0xf]
  %v86 = vld [vmem:[%s1 + $0x1c] sm:$0xf]
  %v87 = vld [vmem:[%s1 + $0x20] sm:$0xf]
  %v88 = vld [vmem:[%s1 + $0x24] sm:$0xf]
  %v89 = vld [vmem:[%s1 + $0x28] sm:$0xf]
  %v90 = vld [vmem:[%s1 + $0x2c] sm:$0xf]
  %v91 = vld [vmem:[%s1 + $0x30] sm:$0xf]
  %v92 = vld [vmem:[%s1 + $0x34] sm:$0xf]
  %v93 = vld [vmem:[%s1 + $0x38] sm:$0xf]
  %v94 = vld [vmem:[%s1 + $0x3c] sm:$0xf]
  %v95 = vld [vmem:[%s1 + $0x40] sm:$0xf]
  %v96 = vld [vmem:[%s1 + $0x44] sm:$0xf]
  %v97 = vld [vmem:[%s1 + $0x48] sm:$0xf]
  %v98 = vld [vmem:[%s1 + $0x4c] sm:$0xf]
  %v99 = vld [vmem:[%s1 + $0x50] sm:$0xf]
  %v100 = vld [vmem:[%s1 + $0x54] sm:$0xf]
  %v101 = vld [vmem:[%s1 + $0x58] sm:$0xf]
  %v102 = vld [vmem:[%s1 + $0x5c] sm:$0xf]
  %v103 = vld [vmem:[%s1 + $0x60] sm:$0xf]
  %v104 = vld [vmem:[%s1 + $0x64] sm:$0xf]
  %v105 = vld [vmem:[%s1 + $0x68] sm:$0xf]
  %v106 = vld [vmem:[%s1 + $0x6c] sm:$0xf]
  %v107 = vld [vmem:[%s1 + $0x70] sm:$0xf]
  %v108 = vld [vmem:[%s1 + $0x74] sm:$0xf]
  %v109 = vld [vmem:[%s1 + $0x78] sm:$0xf]
  %v110 = vld [vmem:[%s1 + $0x7c] sm:$0xf]
  %v111 = vld [vmem:[%s2] sm:$0x1]
  %v113 = vlaneseq
  %v114 = vshrl.u32 %v113, 7
  %v115 = vsub.s32 0, %v114
  %v116 = vrot.slane %v111, %v115
  %v182 = vunpack.c.l.b16 %v15
  %v183 = vunpack.c.h.b16 %v15
  %v184 = vunpack.c.l.b16 %v16
  %v185 = vunpack.c.h.b16 %v16
  %v186 = vunpack.c.l.b16 %v17
  %v187 = vunpack.c.h.b16 %v17
  %v188 = vunpack.c.l.b16 %v18
  %v189 = vunpack.c.h.b16 %v18
  %v190 = vunpack.c.l.b16 %v19
  %v191 = vunpack.c.h.b16 %v19
  %v192 = vunpack.c.l.b16 %v20
  %v193 = vunpack.c.h.b16 %v20
  %v194 = vunpack.c.l.b16 %v21
  %v195 = vunpack.c.h.b16 %v21
  %v196 = vunpack.c.l.b16 %v22
  %v197 = vunpack.c.h.b16 %v22
  %v198 = vunpack.c.l.b16 %v23
  %v199 = vunpack.c.h.b16 %v23
  %v200 = vunpack.c.l.b16 %v24
  %v201 = vunpack.c.h.b16 %v24
  %v202 = vunpack.c.l.b16 %v25
  %v203 = vunpack.c.h.b16 %v25
  %v204 = vunpack.c.l.b16 %v26
  %v205 = vunpack.c.h.b16 %v26
  %v206 = vunpack.c.l.b16 %v27
  %v207 = vunpack.c.h.b16 %v27
  %v208 = vunpack.c.l.b16 %v28
  %v209 = vunpack.c.h.b16 %v28
  %v210 = vunpack.c.l.b16 %v29
  %v211 = vunpack.c.h.b16 %v29
  %v212 = vunpack.c.l.b16 %v30
  %v213 = vunpack.c.h.b16 %v30
  %v214 = vunpack.c.l.b16 %v31
  %v215 = vunpack.c.h.b16 %v31
  %v216 = vunpack.c.l.b16 %v32
  %v217 = vunpack.c.h.b16 %v32
  %v218 = vunpack.c.l.b16 %v33
  %v219 = vunpack.c.h.b16 %v33
  %v220 = vunpack.c.l.b16 %v34
  %v221 = vunpack.c.h.b16 %v34
  %v222 = vunpack.c.l.b16 %v35
  %v223 = vunpack.c.h.b16 %v35
  %v224 = vunpack.c.l.b16 %v36
  %v225 = vunpack.c.h.b16 %v36
  %v226 = vunpack.c.l.b16 %v37
  %v227 = vunpack.c.h.b16 %v37
  %v228 = vunpack.c.l.b16 %v38
  %v229 = vunpack.c.h.b16 %v38
  %v230 = vunpack.c.l.b16 %v39
  %v231 = vunpack.c.h.b16 %v39
  %v232 = vunpack.c.l.b16 %v40
  %v233 = vunpack.c.h.b16 %v40
  %v234 = vunpack.c.l.b16 %v41
  %v235 = vunpack.c.h.b16 %v41
  %v236 = vunpack.c.l.b16 %v42
  %v237 = vunpack.c.h.b16 %v42
  %v238 = vunpack.c.l.b16 %v43
  %v239 = vunpack.c.h.b16 %v43
  %v240 = vunpack.c.l.b16 %v44
  %v241 = vunpack.c.h.b16 %v44
  %v242 = vunpack.c.l.b16 %v45
  %v243 = vunpack.c.h.b16 %v45
  %v244 = vunpack.c.l.b16 %v46
  %v245 = vunpack.c.h.b16 %v46
  %v246 = vunpack.c.l.b16 %v47
  %v247 = vunpack.c.h.b16 %v47
  %v248 = vunpack.c.l.b16 %v48
  %v249 = vunpack.c.h.b16 %v48
  %v250 = vunpack.c.l.b16 %v49
  %v251 = vunpack.c.h.b16 %v49
  %v252 = vunpack.c.l.b16 %v50
  %v253 = vunpack.c.h.b16 %v50
  %v254 = vunpack.c.l.b16 %v51
  %v255 = vunpack.c.h.b16 %v51
  %v256 = vunpack.c.l.b16 %v52
  %v257 = vunpack.c.h.b16 %v52
  %v258 = vunpack.c.l.b16 %v53
  %v259 = vunpack.c.h.b16 %v53
  %v260 = vunpack.c.l.b16 %v54
  %v261 = vunpack.c.h.b16 %v54
  %v262 = vunpack.c.l.b16 %v55
  %v263 = vunpack.c.h.b16 %v55
  %v264 = vunpack.c.l.b16 %v56
  %v265 = vunpack.c.h.b16 %v56
  %v266 = vunpack.c.l.b16 %v57
  %v267 = vunpack.c.h.b16 %v57
  %v268 = vunpack.c.l.b16 %v58
  %v269 = vunpack.c.h.b16 %v58
  %v270 = vunpack.c.l.b16 %v59
  %v271 = vunpack.c.h.b16 %v59
  %v272 = vunpack.c.l.b16 %v60
  %v273 = vunpack.c.h.b16 %v60
  %v274 = vunpack.c.l.b16 %v61
  %v275 = vunpack.c.h.b16 %v61
  %v276 = vunpack.c.l.b16 %v62
  %v277 = vunpack.c.h.b16 %v62
  %v278 = vunpack.c.l.b16 %v63
  %v279 = vunpack.c.h.b16 %v63
  %v280 = vunpack.c.l.b16 %v64
  %v281 = vunpack.c.h.b16 %v64
  %v282 = vunpack.c.l.b16 %v65
  %v283 = vunpack.c.h.b16 %v65
  %v284 = vunpack.c.l.b16 %v66
  %v285 = vunpack.c.h.b16 %v66
  %v286 = vunpack.c.l.b16 %v67
  %v287 = vunpack.c.h.b16 %v67
  %v288 = vunpack.c.l.b16 %v68
  %v289 = vunpack.c.h.b16 %v68
  %v290 = vunpack.c.l.b16 %v69
  %v291 = vunpack.c.h.b16 %v69
  %v292 = vunpack.c.l.b16 %v70
  %v293 = vunpack.c.h.b16 %v70
  %v294 = vunpack.c.l.b16 %v71
  %v295 = vunpack.c.h.b16 %v71
  %v296 = vunpack.c.l.b16 %v72
  %v297 = vunpack.c.h.b16 %v72
  %v298 = vunpack.c.l.b16 %v73
  %v299 = vunpack.c.h.b16 %v73
  %v300 = vunpack.c.l.b16 %v74
  %v301 = vunpack.c.h.b16 %v74
  %v302 = vunpack.c.l.b16 %v75
  %v303 = vunpack.c.h.b16 %v75
  %v304 = vunpack.c.l.b16 %v76
  %v305 = vunpack.c.h.b16 %v76
  %v306 = vunpack.c.l.b16 %v77
  %v307 = vunpack.c.h.b16 %v77
  %v308 = vunpack.c.l.b16 %v78
  %v309 = vunpack.c.h.b16 %v78
  %v310 = vpack.c.b16 %v184, %v182
  %v311 = vpack.c.b16 %v185, %v183
  %v312 = vpack.c.b16 %v188, %v186
  %v313 = vpack.c.b16 %v189, %v187
  %v314 = vpack.c.b16 %v192, %v190
  %v315 = vpack.c.b16 %v193, %v191
  %v316 = vpack.c.b16 %v196, %v194
  %v317 = vpack.c.b16 %v197, %v195
  %v318 = vpack.c.b16 %v200, %v198
  %v319 = vpack.c.b16 %v201, %v199
  %v320 = vpack.c.b16 %v204, %v202
  %v321 = vpack.c.b16 %v205, %v203
  %v322 = vpack.c.b16 %v208, %v206
  %v323 = vpack.c.b16 %v209, %v207
  %v324 = vpack.c.b16 %v212, %v210
  %v325 = vpack.c.b16 %v213, %v211
  %v326 = vpack.c.b16 %v216, %v214
  %v327 = vpack.c.b16 %v217, %v215
  %v328 = vpack.c.b16 %v220, %v218
  %v329 = vpack.c.b16 %v221, %v219
  %v330 = vpack.c.b16 %v224, %v222
  %v331 = vpack.c.b16 %v225, %v223
  %v332 = vpack.c.b16 %v228, %v226
  %v333 = vpack.c.b16 %v229, %v227
  %v334 = vpack.c.b16 %v232, %v230
  %v335 = vpack.c.b16 %v233, %v231
  %v336 = vpack.c.b16 %v236, %v234
  %v337 = vpack.c.b16 %v237, %v235
  %v338 = vpack.c.b16 %v240, %v238
  %v339 = vpack.c.b16 %v241, %v239
  %v340 = vpack.c.b16 %v244, %v242
  %v341 = vpack.c.b16 %v245, %v243
  %v342 = vpack.c.b16 %v248, %v246
  %v343 = vpack.c.b16 %v249, %v247
  %v344 = vpack.c.b16 %v252, %v250
  %v345 = vpack.c.b16 %v253, %v251
  %v346 = vpack.c.b16 %v256, %v254
  %v347 = vpack.c.b16 %v257, %v255
  %v348 = vpack.c.b16 %v260, %v258
  %v349 = vpack.c.b16 %v261, %v259
  %v350 = vpack.c.b16 %v264, %v262
  %v351 = vpack.c.b16 %v265, %v263
  %v352 = vpack.c.b16 %v268, %v266
  %v353 = vpack.c.b16 %v269, %v267
  %v354 = vpack.c.b16 %v272, %v270
  %v355 = vpack.c.b16 %v273, %v271
  %v356 = vpack.c.b16 %v276, %v274
  %v357 = vpack.c.b16 %v277, %v275
  %v358 = vpack.c.b16 %v280, %v278
  %v359 = vpack.c.b16 %v281, %v279
  %v360 = vpack.c.b16 %v284, %v282
  %v361 = vpack.c.b16 %v285, %v283
  %v362 = vpack.c.b16 %v288, %v286
  %v363 = vpack.c.b16 %v289, %v287
  %v364 = vpack.c.b16 %v292, %v290
  %v365 = vpack.c.b16 %v293, %v291
  %v366 = vpack.c.b16 %v296, %v294
  %v367 = vpack.c.b16 %v297, %v295
  %v368 = vpack.c.b16 %v300, %v298
  %v369 = vpack.c.b16 %v301, %v299
  %v370 = vpack.c.b16 %v304, %v302
  %v371 = vpack.c.b16 %v305, %v303
  %v372 = vpack.c.b16 %v308, %v306
  %v373 = vpack.c.b16 %v309, %v307
  %v470 = vunpack.c.l.b16 %v79
  %v471 = vunpack.c.l.b16 %v80
  %v472 = vunpack.c.l.b16 %v81
  %v473 = vunpack.c.l.b16 %v82
  %v474 = vunpack.c.l.b16 %v83
  %v475 = vunpack.c.l.b16 %v84
  %v476 = vunpack.c.l.b16 %v85
  %v477 = vunpack.c.l.b16 %v86
  %v478 = vunpack.c.l.b16 %v87
  %v479 = vunpack.c.l.b16 %v88
  %v480 = vunpack.c.l.b16 %v89
  %v481 = vunpack.c.l.b16 %v90
  %v482 = vunpack.c.l.b16 %v91
  %v483 = vunpack.c.l.b16 %v92
  %v484 = vunpack.c.l.b16 %v93
  %v485 = vunpack.c.l.b16 %v94
  %v486 = vunpack.c.l.b16 %v95
  %v487 = vunpack.c.l.b16 %v96
  %v488 = vunpack.c.l.b16 %v97
  %v489 = vunpack.c.l.b16 %v98
  %v490 = vunpack.c.l.b16 %v99
  %v491 = vunpack.c.l.b16 %v100
  %v492 = vunpack.c.l.b16 %v101
  %v493 = vunpack.c.l.b16 %v102
  %v494 = vunpack.c.l.b16 %v103
  %v495 = vunpack.c.l.b16 %v104
  %v496 = vunpack.c.l.b16 %v105
  %v497 = vunpack.c.l.b16 %v106
  %v498 = vunpack.c.l.b16 %v107
  %v499 = vunpack.c.l.b16 %v108
  %v500 = vunpack.c.l.b16 %v109
  %v501 = vunpack.c.l.b16 %v110
  %v502 = vpack.c.b16 %v471, %v470
  %v503 = vpack.c.b16 %v473, %v472
  %v504 = vpack.c.b16 %v475, %v474
  %v505 = vpack.c.b16 %v477, %v476
  %v506 = vpack.c.b16 %v479, %v478
  %v507 = vpack.c.b16 %v481, %v480
  %v508 = vpack.c.b16 %v483, %v482
  %v509 = vpack.c.b16 %v485, %v484
  %v510 = vpack.c.b16 %v487, %v486
  %v511 = vpack.c.b16 %v489, %v488
  %v512 = vpack.c.b16 %v491, %v490
  %v513 = vpack.c.b16 %v493, %v492
  %v514 = vpack.c.b16 %v495, %v494
  %v515 = vpack.c.b16 %v497, %v496
  %v516 = vpack.c.b16 %v499, %v498
  %v517 = vpack.c.b16 %v501, %v500
  %534 = vmatprep.subr.bf16.mxu0 0
  %535 = vmatpush1.bf16.msra.mxu0 %v502
  %536 = vmatprep.subr.bf16.mxu0 0
  %537 = vmatpush1.bf16.msra.mxu0 %v503
  %538 = vmatprep.subr.bf16.mxu0 0
  %539 = vmatpush1.bf16.msra.mxu0 %v504
  %540 = vmatprep.subr.bf16.mxu0 0
  %541 = vmatpush1.bf16.msra.mxu0 %v505
  %542 = vmatprep.subr.bf16.mxu0 0
  %543 = vmatpush1.bf16.msra.mxu0 %v506
  %544 = vmatprep.subr.bf16.mxu0 0
  %545 = vmatpush1.bf16.msra.mxu0 %v507
  %546 = vmatprep.subr.bf16.mxu0 0
  %547 = vmatpush1.bf16.msra.mxu0 %v508
  %548 = vmatprep.subr.bf16.mxu0 0
  %549 = vmatpush1.bf16.msra.mxu0 %v509
  %550 = vmatprep.subr.bf16.mxu0 0
  %551 = vmatpush1.bf16.msra.mxu0 %v510
  %552 = vmatprep.subr.bf16.mxu0 0
  %553 = vmatpush1.bf16.msra.mxu0 %v511
  %554 = vmatprep.subr.bf16.mxu0 0
  %555 = vmatpush1.bf16.msra.mxu0 %v512
  %556 = vmatprep.subr.bf16.mxu0 0
  %557 = vmatpush1.bf16.msra.mxu0 %v513
  %558 = vmatprep.subr.bf16.mxu0 0
  %559 = vmatpush1.bf16.msra.mxu0 %v514
  %560 = vmatprep.subr.bf16.mxu0 0
  %561 = vmatpush1.bf16.msra.mxu0 %v515
  %562 = vmatprep.subr.bf16.mxu0 0
  %563 = vmatpush1.bf16.msra.mxu0 %v516
  %564 = vmatprep.subr.bf16.mxu0 0
  %565 = vmatpush1.bf16.msra.mxu0 %v517
  %566 = vmatprep.mubr.bf16.mxu0 %v311
  %567 = vmatmul.mubr.bf16.gmra.mrb[0].mxu0 %v310
  %v568 = vpop.f32.mrb[0].mxu0
  %v569 = vadd.f32 %v116, %v568
  %v570 = vpop.f32.mrb[0].mxu0
  %v571 = vpop.f32.mrb[0].mxu0
  %v572 = vadd.f32 %v116, %v571
  %v573 = vpop.f32.mrb[0].mxu0
  %574 = vmatprep.mubr.bf16.mxu0 %v313
  %575 = vmatmul.mubr.bf16.gmra.mrb[0].mxu0 %v312
  %v576 = vpop.f32.mrb[0].mxu0
  %v577 = vadd.f32 %v116, %v576
  %v578 = vpop.f32.mrb[0].mxu0
  %v579 = vpop.f32.mrb[0].mxu0
  %v580 = vadd.f32 %v116, %v579
  %v581 = vpop.f32.mrb[0].mxu0
  %582 = vmatprep.mubr.bf16.mxu0 %v315
  %583 = vmatmul.mubr.bf16.gmra.mrb[0].mxu0 %v314
  %v584 = vpop.f32.mrb[0].mxu0
  %v585 = vadd.f32 %v116, %v584
  %v586 = vpop.f32.mrb[0].mxu0
  %v587 = vpop.f32.mrb[0].mxu0
  %v588 = vadd.f32 %v116, %v587
  %v589 = vpop.f32.mrb[0].mxu0
  %590 = vmatprep.mubr.bf16.mxu0 %v317
  %591 = vmatmul.mubr.bf16.gmra.mrb[0].mxu0 %v316
  %v592 = vpop.f32.mrb[0].mxu0
  %v593 = vadd.f32 %v116, %v592
  %v594 = vpop.f32.mrb[0].mxu0
  %v595 = vpop.f32.mrb[0].mxu0
  %v596 = vadd.f32 %v116, %v595
  %v597 = vpop.f32.mrb[0].mxu0
  %598 = vmatprep.mubr.bf16.mxu0 %v319
  %599 = vmatmul.mubr.bf16.gmra.mrb[0].mxu0 %v318
  %v600 = vpop.f32.mrb[0].mxu0
  %v601 = vadd.f32 %v116, %v600
  %v602 = vpop.f32.mrb[0].mxu0
  %v603 = vpop.f32.mrb[0].mxu0
  %v604 = vadd.f32 %v116, %v603
  %v605 = vpop.f32.mrb[0].mxu0
  %606 = vmatprep.mubr.bf16.mxu0 %v321
  %607 = vmatmul.mubr.bf16.gmra.mrb[0].mxu0 %v320
  %v608 = vpop.f32.mrb[0].mxu0
  %v609 = vadd.f32 %v116, %v608
  %v610 = vpop.f32.mrb[0].mxu0
  %v611 = vpop.f32.mrb[0].mxu0
  %v612 = vadd.f32 %v116, %v611
  %v613 = vpop.f32.mrb[0].mxu0
  %614 = vmatprep.mubr.bf16.mxu0 %v323
  %615 = vmatmul.mubr.bf16.gmra.mrb[0].mxu0 %v322
  %v616 = vpop.f32.mrb[0].mxu0
  %v617 = vadd.f32 %v116, %v616
  %v618 = vpop.f32.mrb[0].mxu0
  %v619 = vpop.f32.mrb[0].mxu0
  %v620 = vadd.f32 %v116, %v619
  %v621 = vpop.f32.mrb[0].mxu0
  %622 = vmatprep.mubr.bf16.mxu0 %v325
  %623 = vmatmul.mubr.bf16.gmra.mrb[0].mxu0 %v324
  %v624 = vpop.f32.mrb[0].mxu0
  %v625 = vadd.f32 %v116, %v624
  %v626 = vpop.f32.mrb[0].mxu0
  %v627 = vpop.f32.mrb[0].mxu0
  %v628 = vadd.f32 %v116, %v627
  %v629 = vpop.f32.mrb[0].mxu0
  %630 = vmatprep.mubr.bf16.mxu0 %v327
  %631 = vmatmul.mubr.bf16.gmra.mrb[0].mxu0 %v326
  %v632 = vpop.f32.mrb[0].mxu0
  %v633 = vadd.f32 %v116, %v632
  %v634 = vpop.f32.mrb[0].mxu0
  %v635 = vpop.f32.mrb[0].mxu0
  %v636 = vadd.f32 %v116, %v635
  %v637 = vpop.f32.mrb[0].mxu0
  %638 = vmatprep.mubr.bf16.mxu0 %v329
  %639 = vmatmul.mubr.bf16.gmra.mrb[0].mxu0 %v328
  %v640 = vpop.f32.mrb[0].mxu0
  %v641 = vadd.f32 %v116, %v640
  %v642 = vpop.f32.mrb[0].mxu0
  %v643 = vpop.f32.mrb[0].mxu0
  %v644 = vadd.f32 %v116, %v643
  %v645 = vpop.f32.mrb[0].mxu0
  %646 = vmatprep.mubr.bf16.mxu0 %v331
  %647 = vmatmul.mubr.bf16.gmra.mrb[0].mxu0 %v330
  %v648 = vpop.f32.mrb[0].mxu0
  %v649 = vadd.f32 %v116, %v648
  %v650 = vpop.f32.mrb[0].mxu0
  %v651 = vpop.f32.mrb[0].mxu0
  %v652 = vadd.f32 %v116, %v651
  %v653 = vpop.f32.mrb[0].mxu0
  %654 = vmatprep.mubr.bf16.mxu0 %v333
  %655 = vmatmul.mubr.bf16.gmra.mrb[0].mxu0 %v332
  %v656 = vpop.f32.mrb[0].mxu0
  %v657 = vadd.f32 %v116, %v656
  %v658 = vpop.f32.mrb[0].mxu0
  %v659 = vpop.f32.mrb[0].mxu0
  %v660 = vadd.f32 %v116, %v659
  %v661 = vpop.f32.mrb[0].mxu0
  %662 = vmatprep.mubr.bf16.mxu0 %v335
  %663 = vmatmul.mubr.bf16.gmra.mrb[0].mxu0 %v334
  %v664 = vpop.f32.mrb[0].mxu0
  %v665 = vadd.f32 %v116, %v664
  %v666 = vpop.f32.mrb[0].mxu0
  %v667 = vpop.f32.mrb[0].mxu0
  %v668 = vadd.f32 %v116, %v667
  %v669 = vpop.f32.mrb[0].mxu0
  %670 = vmatprep.mubr.bf16.mxu0 %v337
  %671 = vmatmul.mubr.bf16.gmra.mrb[0].mxu0 %v336
  %v672 = vpop.f32.mrb[0].mxu0
  %v673 = vadd.f32 %v116, %v672
  %v674 = vpop.f32.mrb[0].mxu0
  %v675 = vpop.f32.mrb[0].mxu0
  %v676 = vadd.f32 %v116, %v675
  %v677 = vpop.f32.mrb[0].mxu0
  %678 = vmatprep.mubr.bf16.mxu0 %v339
  %679 = vmatmul.mubr.bf16.gmra.mrb[0].mxu0 %v338
  %v680 = vpop.f32.mrb[0].mxu0
  %v681 = vadd.f32 %v116, %v680
  %v682 = vpop.f32.mrb[0].mxu0
  %v683 = vpop.f32.mrb[0].mxu0
  %v684 = vadd.f32 %v116, %v683
  %v685 = vpop.f32.mrb[0].mxu0
  %686 = vmatprep.mubr.bf16.mxu0 %v341
  %687 = vmatmul.mubr.bf16.gmra.mrb[0].mxu0 %v340
  %v688 = vpop.f32.mrb[0].mxu0
  %v689 = vadd.f32 %v116, %v688
  %v690 = vpop.f32.mrb[0].mxu0
  %v691 = vpop.f32.mrb[0].mxu0
  %v692 = vadd.f32 %v116, %v691
  %v693 = vpop.f32.mrb[0].mxu0
  %694 = vmatprep.mubr.bf16.mxu0 %v343
  %695 = vmatmul.mubr.bf16.gmra.mrb[0].mxu0 %v342
  %v696 = vpop.f32.mrb[0].mxu0
  %v697 = vadd.f32 %v116, %v696
  %v698 = vpop.f32.mrb[0].mxu0
  %v699 = vpop.f32.mrb[0].mxu0
  %v700 = vadd.f32 %v116, %v699
  %v701 = vpop.f32.mrb[0].mxu0
  %702 = vmatprep.mubr.bf16.mxu0 %v345
  %703 = vmatmul.mubr.bf16.gmra.mrb[0].mxu0 %v344
  %v704 = vpop.f32.mrb[0].mxu0
  %v705 = vadd.f32 %v116, %v704
  %v706 = vpop.f32.mrb[0].mxu0
  %v707 = vpop.f32.mrb[0].mxu0
  %v708 = vadd.f32 %v116, %v707
  %v709 = vpop.f32.mrb[0].mxu0
  %710 = vmatprep.mubr.bf16.mxu0 %v347
  %711 = vmatmul.mubr.bf16.gmra.mrb[0].mxu0 %v346
  %v712 = vpop.f32.mrb[0].mxu0
  %v713 = vadd.f32 %v116, %v712
  %v714 = vpop.f32.mrb[0].mxu0
  %v715 = vpop.f32.mrb[0].mxu0
  %v716 = vadd.f32 %v116, %v715
  %v717 = vpop.f32.mrb[0].mxu0
  %718 = vmatprep.mubr.bf16.mxu0 %v349
  %719 = vmatmul.mubr.bf16.gmra.mrb[0].mxu0 %v348
  %v720 = vpop.f32.mrb[0].mxu0
  %v721 = vadd.f32 %v116, %v720
  %v722 = vpop.f32.mrb[0].mxu0
  %v723 = vpop.f32.mrb[0].mxu0
  %v724 = vadd.f32 %v116, %v723
  %v725 = vpop.f32.mrb[0].mxu0
  %726 = vmatprep.mubr.bf16.mxu0 %v351
  %727 = vmatmul.mubr.bf16.gmra.mrb[0].mxu0 %v350
  %v728 = vpop.f32.mrb[0].mxu0
  %v729 = vadd.f32 %v116, %v728
  %v730 = vpop.f32.mrb[0].mxu0
  %v731 = vpop.f32.mrb[0].mxu0
  %v732 = vadd.f32 %v116, %v731
  %v733 = vpop.f32.mrb[0].mxu0
  %734 = vmatprep.mubr.bf16.mxu0 %v353
  %735 = vmatmul.mubr.bf16.gmra.mrb[0].mxu0 %v352
  %v736 = vpop.f32.mrb[0].mxu0
  %v737 = vadd.f32 %v116, %v736
  %v738 = vpop.f32.mrb[0].mxu0
  %v739 = vpop.f32.mrb[0].mxu0
  %v740 = vadd.f32 %v116, %v739
  %v741 = vpop.f32.mrb[0].mxu0
  %742 = vmatprep.mubr.bf16.mxu0 %v355
  %743 = vmatmul.mubr.bf16.gmra.mrb[0].mxu0 %v354
  %v744 = vpop.f32.mrb[0].mxu0
  %v745 = vadd.f32 %v116, %v744
  %v746 = vpop.f32.mrb[0].mxu0
  %v747 = vpop.f32.mrb[0].mxu0
  %v748 = vadd.f32 %v116, %v747
  %v749 = vpop.f32.mrb[0].mxu0
  %750 = vmatprep.mubr.bf16.mxu0 %v357
  %751 = vmatmul.mubr.bf16.gmra.mrb[0].mxu0 %v356
  %v752 = vpop.f32.mrb[0].mxu0
  %v753 = vadd.f32 %v116, %v752
  %v754 = vpop.f32.mrb[0].mxu0
  %v755 = vpop.f32.mrb[0].mxu0
  %v756 = vadd.f32 %v116, %v755
  %v757 = vpop.f32.mrb[0].mxu0
  %758 = vmatprep.mubr.bf16.mxu0 %v359
  %759 = vmatmul.mubr.bf16.gmra.mrb[0].mxu0 %v358
  %v760 = vpop.f32.mrb[0].mxu0
  %v761 = vadd.f32 %v116, %v760
  %v762 = vpop.f32.mrb[0].mxu0
  %v763 = vpop.f32.mrb[0].mxu0
  %v764 = vadd.f32 %v116, %v763
  %v765 = vpop.f32.mrb[0].mxu0
  %766 = vmatprep.mubr.bf16.mxu0 %v361
  %767 = vmatmul.mubr.bf16.gmra.mrb[0].mxu0 %v360
  %v768 = vpop.f32.mrb[0].mxu0
  %v769 = vadd.f32 %v116, %v768
  %v770 = vpop.f32.mrb[0].mxu0
  %v771 = vpop.f32.mrb[0].mxu0
  %v772 = vadd.f32 %v116, %v771
  %v773 = vpop.f32.mrb[0].mxu0
  %774 = vmatprep.mubr.bf16.mxu0 %v363
  %775 = vmatmul.mubr.bf16.gmra.mrb[0].mxu0 %v362
  %v776 = vpop.f32.mrb[0].mxu0
  %v777 = vadd.f32 %v116, %v776
  %v778 = vpop.f32.mrb[0].mxu0
  %v779 = vpop.f32.mrb[0].mxu0
  %v780 = vadd.f32 %v116, %v779
  %v781 = vpop.f32.mrb[0].mxu0
  %782 = vmatprep.mubr.bf16.mxu0 %v365
  %783 = vmatmul.mubr.bf16.gmra.mrb[0].mxu0 %v364
  %v784 = vpop.f32.mrb[0].mxu0
  %v785 = vadd.f32 %v116, %v784
  %v786 = vpop.f32.mrb[0].mxu0
  %v787 = vpop.f32.mrb[0].mxu0
  %v788 = vadd.f32 %v116, %v787
  %v789 = vpop.f32.mrb[0].mxu0
  %790 = vmatprep.mubr.bf16.mxu0 %v367
  %791 = vmatmul.mubr.bf16.gmra.mrb[0].mxu0 %v366
  %v792 = vpop.f32.mrb[0].mxu0
  %v793 = vadd.f32 %v116, %v792
  %v794 = vpop.f32.mrb[0].mxu0
  %v795 = vpop.f32.mrb[0].mxu0
  %v796 = vadd.f32 %v116, %v795
  %v797 = vpop.f32.mrb[0].mxu0
  %798 = vmatprep.mubr.bf16.mxu0 %v369
  %799 = vmatmul.mubr.bf16.gmra.mrb[0].mxu0 %v368
  %v800 = vpop.f32.mrb[0].mxu0
  %v801 = vadd.f32 %v116, %v800
  %v802 = vpop.f32.mrb[0].mxu0
  %v803 = vpop.f32.mrb[0].mxu0
  %v804 = vadd.f32 %v116, %v803
  %v805 = vpop.f32.mrb[0].mxu0
  %806 = vmatprep.mubr.bf16.mxu0 %v371
  %807 = vmatmul.mubr.bf16.gmra.mrb[0].mxu0 %v370
  %v808 = vpop.f32.mrb[0].mxu0
  %v809 = vadd.f32 %v116, %v808
  %v810 = vpop.f32.mrb[0].mxu0
  %v811 = vpop.f32.mrb[0].mxu0
  %v812 = vadd.f32 %v116, %v811
  %v813 = vpop.f32.mrb[0].mxu0
  %814 = vmatprep.mubr.bf16.mxu0 %v373
  %815 = vmatmul.mubr.bf16.gmra.mrb[0].mxu0 %v372
  %v816 = vpop.f32.mrb[0].mxu0
  %v817 = vadd.f32 %v116, %v816
  %v818 = vpop.f32.mrb[0].mxu0
  %v819 = vpop.f32.mrb[0].mxu0
  %v820 = vadd.f32 %v116, %v819
  %v821 = vpop.f32.mrb[0].mxu0
  %822 = vdwg.mxu0
  %v823 = vtanh.pop %v569
  %v824 = vtanh.pop %v572
  %v825 = vtanh.pop %v577
  %v826 = vtanh.pop %v580
  %v827 = vtanh.pop %v585
  %v828 = vtanh.pop %v588
  %v829 = vtanh.pop %v593
  %v830 = vtanh.pop %v596
  %v831 = vtanh.pop %v601
  %v832 = vtanh.pop %v604
  %v833 = vtanh.pop %v609
  %v834 = vtanh.pop %v612
  %v835 = vtanh.pop %v617
  %v836 = vtanh.pop %v620
  %v837 = vtanh.pop %v625
  %v838 = vtanh.pop %v628
  %v839 = vtanh.pop %v633
  %v840 = vtanh.pop %v636
  %v841 = vtanh.pop %v641
  %v842 = vtanh.pop %v644
  %v843 = vtanh.pop %v649
  %v844 = vtanh.pop %v652
  %v845 = vtanh.pop %v657
  %v846 = vtanh.pop %v660
  %v847 = vtanh.pop %v665
  %v848 = vtanh.pop %v668
  %v849 = vtanh.pop %v673
  %v850 = vtanh.pop %v676
  %v851 = vtanh.pop %v681
  %v852 = vtanh.pop %v684
  %v853 = vtanh.pop %v689
  %v854 = vtanh.pop %v692
  %v855 = vtanh.pop %v697
  %v856 = vtanh.pop %v700
  %v857 = vtanh.pop %v705
  %v858 = vtanh.pop %v708
  %v859 = vtanh.pop %v713
  %v860 = vtanh.pop %v716
  %v861 = vtanh.pop %v721
  %v862 = vtanh.pop %v724
  %v863 = vtanh.pop %v729
  %v864 = vtanh.pop %v732
  %v865 = vtanh.pop %v737
  %v866 = vtanh.pop %v740
  %v867 = vtanh.pop %v745
  %v868 = vtanh.pop %v748
  %v869 = vtanh.pop %v753
  %v870 = vtanh.pop %v756
  %v871 = vtanh.pop %v761
  %v872 = vtanh.pop %v764
  %v873 = vtanh.pop %v769
  %v874 = vtanh.pop %v772
  %v875 = vtanh.pop %v777
  %v876 = vtanh.pop %v780
  %v877 = vtanh.pop %v785
  %v878 = vtanh.pop %v788
  %v879 = vtanh.pop %v793
  %v880 = vtanh.pop %v796
  %v881 = vtanh.pop %v801
  %v882 = vtanh.pop %v804
  %v883 = vtanh.pop %v809
  %v884 = vtanh.pop %v812
  %v885 = vtanh.pop %v817
  %v886 = vtanh.pop %v820
  %887 = vst [vmem:[%s3] sm:$0xff] %v823
  %888 = vst [vmem:[%s3 + $0x8] sm:$0xff] %v824
  %889 = vst [vmem:[%s3 + $0x10] sm:$0xff] %v825
  %890 = vst [vmem:[%s3 + $0x18] sm:$0xff] %v826
  %891 = vst [vmem:[%s3 + $0x20] sm:$0xff] %v827
  %892 = vst [vmem:[%s3 + $0x28] sm:$0xff] %v828
  %893 = vst [vmem:[%s3 + $0x30] sm:$0xff] %v829
  %894 = vst [vmem:[%s3 + $0x38] sm:$0xff] %v830
  %895 = vst [vmem:[%s3 + $0x40] sm:$0xff] %v831
  %896 = vst [vmem:[%s3 + $0x48] sm:$0xff] %v832
  %897 = vst [vmem:[%s3 + $0x50] sm:$0xff] %v833
  %898 = vst [vmem:[%s3 + $0x58] sm:$0xff] %v834
  %899 = vst [vmem:[%s3 + $0x60] sm:$0xff] %v835
  %900 = vst [vmem:[%s3 + $0x68] sm:$0xff] %v836
  %901 = vst [vmem:[%s3 + $0x70] sm:$0xff] %v837
  %902 = vst [vmem:[%s3 + $0x78] sm:$0xff] %v838
  %903 = vst [vmem:[%s3 + $0x80] sm:$0xff] %v839
  %904 = vst [vmem:[%s3 + $0x88] sm:$0xff] %v840
  %905 = vst [vmem:[%s3 + $0x90] sm:$0xff] %v841
  %906 = vst [vmem:[%s3 + $0x98] sm:$0xff] %v842
  %907 = vst [vmem:[%s3 + $0xa0] sm:$0xff] %v843
  %908 = vst [vmem:[%s3 + $0xa8] sm:$0xff] %v844
  %909 = vst [vmem:[%s3 + $0xb0] sm:$0xff] %v845
  %910 = vst [vmem:[%s3 + $0xb8] sm:$0xff] %v846
  %911 = vst [vmem:[%s3 + $0xc0] sm:$0xff] %v847
  %912 = vst [vmem:[%s3 + $0xc8] sm:$0xff] %v848
  %913 = vst [vmem:[%s3 + $0xd0] sm:$0xff] %v849
  %914 = vst [vmem:[%s3 + $0xd8] sm:$0xff] %v850
  %915 = vst [vmem:[%s3 + $0xe0] sm:$0xff] %v851
  %916 = vst [vmem:[%s3 + $0xe8] sm:$0xff] %v852
  %917 = vst [vmem:[%s3 + $0xf0] sm:$0xff] %v853
  %918 = vst [vmem:[%s3 + $0xf8] sm:$0xff] %v854
  %919 = vst [vmem:[%s3 + $0x100] sm:$0xff] %v855
  %920 = vst [vmem:[%s3 + $0x108] sm:$0xff] %v856
  %921 = vst [vmem:[%s3 + $0x110] sm:$0xff] %v857
  %922 = vst [vmem:[%s3 + $0x118] sm:$0xff] %v858
  %923 = vst [vmem:[%s3 + $0x120] sm:$0xff] %v859
  %924 = vst [vmem:[%s3 + $0x128] sm:$0xff] %v860
  %925 = vst [vmem:[%s3 + $0x130] sm:$0xff] %v861
  %926 = vst [vmem:[%s3 + $0x138] sm:$0xff] %v862
  %927 = vst [vmem:[%s3 + $0x140] sm:$0xff] %v863
  %928 = vst [vmem:[%s3 + $0x148] sm:$0xff] %v864
  %929 = vst [vmem:[%s3 + $0x150] sm:$0xff] %v865
  %930 = vst [vmem:[%s3 + $0x158] sm:$0xff] %v866
  %931 = vst [vmem:[%s3 + $0x160] sm:$0xff] %v867
  %932 = vst [vmem:[%s3 + $0x168] sm:$0xff] %v868
  %933 = vst [vmem:[%s3 + $0x170] sm:$0xff] %v869
  %934 = vst [vmem:[%s3 + $0x178] sm:$0xff] %v870
  %935 = vst [vmem:[%s3 + $0x180] sm:$0xff] %v871
  %936 = vst [vmem:[%s3 + $0x188] sm:$0xff] %v872
  %937 = vst [vmem:[%s3 + $0x190] sm:$0xff] %v873
  %938 = vst [vmem:[%s3 + $0x198] sm:$0xff] %v874
  %939 = vst [vmem:[%s3 + $0x1a0] sm:$0xff] %v875
  %940 = vst [vmem:[%s3 + $0x1a8] sm:$0xff] %v876
  %941 = vst [vmem:[%s3 + $0x1b0] sm:$0xff] %v877
  %942 = vst [vmem:[%s3 + $0x1b8] sm:$0xff] %v878
  %943 = vst [vmem:[%s3 + $0x1c0] sm:$0xff] %v879
  %944 = vst [vmem:[%s3 + $0x1c8] sm:$0xff] %v880
  %945 = vst [vmem:[%s3 + $0x1d0] sm:$0xff] %v881
  %946 = vst [vmem:[%s3 + $0x1d8] sm:$0xff] %v882
  %947 = vst [vmem:[%s3 + $0x1e0] sm:$0xff] %v883
  %948 = vst [vmem:[%s3 + $0x1e8] sm:$0xff] %v884
  %949 = vst [vmem:[%s3 + $0x1f0] sm:$0xff] %v885
  %950 = vst [vmem:[%s3 + $0x1f8] sm:$0xff] %v886
  // Predicated region
  $region14: #{generator_forward.13} parent=0 // pred_check
    _
  $region15: #{generator_forward.13} parent=0 // pred_check_branch
    %952 = sbr.rel (0) target = $region17
  $region16: #{generator_forward.13} parent=0 // pred_region
    _
  $region17: #{generator_forward.13} parent=0 // pred_fallthru
    _
  // Predicated region
  $region18: #{generator_forward.13} parent=0 // pred_check
    _
  $region19: #{generator_forward.13} parent=0 // pred_check_branch
    %954 = sbr.rel (0) target = $region21
  $region20: #{generator_forward.13} parent=0 // pred_region
    _
  $region21: #{generator_forward.13} parent=0 // pred_fallthru
    _

</llo_original>
